<compile_context>
chip_gen: v6e
topology: v6e:2x2x1
jax: 0.10.0
libtpu: 0.0.40
codegen_flags: <defaults>
</compile_context>

<pallas_src>
import functools
import math

import jax
import jax.numpy as jnp
from jax import lax
from jax.experimental import pallas as pl
from jax.experimental.pallas import tpu as pltpu  # noqa: F401  (TPU backend assumed)

# ----------------------------- small synthetic config -----------------------------
B, L = 2, 8
VOCAB, TYPE_VOCAB, MAX_POS = 32, 2, 32
E = 32               # dim_embedding (BERT hidden size)
BERT_HEADS = 4
BERT_FF = 64
BERT_LAYERS = 1      # TODO(synk): a real bert_cfg would give a deep stack; reduced to 1 layer here
D_MODEL = 32
N_HEAD = 4
FF_DIM = 64
NUM_LAYERS = 2
N_TAGS = 8
SCALE = False        # attn_type='adatrans', scale=False -> no 1/sqrt(d) in TENER attention
LN_EPS = 1e-5
MM_DTYPE = jnp.bfloat16   # MXU operand dtype (accumulation stays f32; VPU math stays f32)


# ================================ in-kernel helpers ================================
def _act(y, act):
    if act == "gelu":          # BERT gelu (tanh approximation)
        return 0.5 * y * (1.0 + jnp.tanh(0.7978845608028654 * (y + 0.044715 * y * y * y)))
    if act == "leaky_relu":    # nn.LeakyReLU(), negative_slope=0.01
        return jnp.where(y >= 0.0, y, 0.01 * y)
    return y


def _ln(x, g, b, eps):
    mu = jnp.mean(x, axis=-1, keepdims=True)
    var = jnp.mean((x - mu) * (x - mu), axis=-1, keepdims=True)
    return (x - mu) * lax.rsqrt(var + eps) * g + b


def _mm(a, w):
    return jnp.dot(a.astype(MM_DTYPE), w.astype(MM_DTYPE), preferred_element_type=jnp.float32)


# ================================ Pallas kernels ==================================
def _linear_kernel(*refs, act, has_bias):
    if has_bias:
        x_ref, w_ref, b_ref, o_ref = refs
    else:
        x_ref, w_ref, o_ref = refs
    y = _mm(x_ref[...], w_ref[...])
    if has_bias:
        y = y + b_ref[...]
    o_ref[...] = _act(y, act)


def linear(x, w, b=None, act=None):
    """Single-block (no grid) matmul + bias + activation; whole tensors stay in VMEM."""
    M, _ = x.shape
    N = w.shape[1]
    args = [x, w] + ([] if b is None else [b.reshape(1, N)])
    return pl.pallas_call(
        functools.partial(_linear_kernel, act=act, has_bias=b is not None),
        out_shape=jax.ShapeDtypeStruct((M, N), jnp.float32),
    )(*args)


def _layernorm_kernel(x_ref, g_ref, b_ref, o_ref, *, eps):
    o_ref[...] = _ln(x_ref[...], g_ref[...], b_ref[...], eps)


def layernorm(x, g, b, eps=LN_EPS):
    M, D = x.shape
    return pl.pallas_call(
        functools.partial(_layernorm_kernel, eps=eps),
        out_shape=jax.ShapeDtypeStruct((M, D), jnp.float32),
    )(x, g.reshape(1, D), b.reshape(1, D))


def _attn_kernel(*refs, has_pb, inv_scale):
    if has_pb:
        q_ref, k_ref, v_ref, pb_ref, m_ref, o_ref = refs
    else:
        q_ref, k_ref, v_ref, m_ref, o_ref = refs
    q = q_ref[...]
    if inv_scale != 1.0:       # fold 1/sqrt(d) into q (O(L*hd)) instead of the (L,L) scores
        q = q * inv_scale
    s = jnp.einsum("bqd,bkd->bqk", q.astype(MM_DTYPE), k_ref[...].astype(MM_DTYPE),
                   preferred_element_type=jnp.float32)        # (B*H, L, L)
    if has_pb:
        s = s + pb_ref[...]                                   # relative-position bias (TENER)
    s = jnp.where(m_ref[...] > 0.5, s, -1e30)                 # masked_fill over keys
    s = s - jnp.max(s, axis=-1, keepdims=True)
    p = jnp.exp(s)
    p = p * pl.reciprocal(jnp.sum(p, axis=-1, keepdims=True), approx=True)   # softmax
    o_ref[...] = jnp.einsum("bqk,bkd->bqd", p.astype(MM_DTYPE), v_ref[...].astype(MM_DTYPE),
                            preferred_element_type=jnp.float32)


def attention(q, k, v, mask_bh, pos_bias=None, scale=1.0):
    """All (batch, head) pairs processed in one grid step; q/k/v are (B*H, L, hd)."""
    BH, Lv, hd = q.shape
    has_pb = pos_bias is not None
    args = [q, k, v] + ([pos_bias] if has_pb else []) + [mask_bh]
    return pl.pallas_call(
        functools.partial(_attn_kernel, has_pb=has_pb, inv_scale=1.0 / scale),
        out_shape=jax.ShapeDtypeStruct((BH, Lv, hd), jnp.float32),
    )(*args)


def _post_block_kernel(*refs, act, has_proj, eps):
    if has_proj:
        (x_ref, a_ref, wo_ref, bo_ref, g1_ref, be1_ref,
         w1_ref, b1_ref, w2_ref, b2_ref, g2_ref, be2_ref, o_ref) = refs
    else:
        (x_ref, a_ref, g1_ref, be1_ref,
         w1_ref, b1_ref, w2_ref, b2_ref, g2_ref, be2_ref, o_ref) = refs
    a = a_ref[...]
    if has_proj:
        a = _mm(a, wo_ref[...]) + bo_ref[...]                 # BERT attention output projection
    x1 = _ln(x_ref[...] + a, g1_ref[...], be1_ref[...], eps)  # residual + LN1
    h = _act(_mm(x1, w1_ref[...]) + b1_ref[...], act)         # FFN up-proj + activation
    y = x1 + _mm(h, w2_ref[...]) + b2_ref[...]                # FFN down-proj + residual
    o_ref[...] = _ln(y, g2_ref[...], be2_ref[...], eps)       # LN2


def post_attn_block(x, attn_out, ln1_g, ln1_b, w1, b1, w2, b2, ln2_g, ln2_b, *,
                    act, wo=None, bo=None, eps=LN_EPS):
    """Fused [out-proj] + residual + LN1 + FFN + residual + LN2 in one launch."""
    M, D = x.shape
    has_proj = wo is not None
    args = [x, attn_out]
    if has_proj:
        args += [wo, bo.reshape(1, -1)]
    args += [ln1_g.reshape(1, D), ln1_b.reshape(1, D),
             w1, b1.reshape(1, -1), w2, b2.reshape(1, -1),
             ln2_g.reshape(1, D), ln2_b.reshape(1, D)]
    return pl.pallas_call(
        functools.partial(_post_block_kernel, act=act, has_proj=has_proj, eps=eps),
        out_shape=jax.ShapeDtypeStruct((M, D), jnp.float32),
    )(*args)


def _head_crf_kernel(x_ref, w_ref, b_ref, mask_ref, transT_ref, start_ref, end_ref,
                     logp_ref, z_ref, *, seq_len, batch):
    # fused out_fc + log_softmax (kept in f32 for CRF numerics)
    z = jnp.dot(x_ref[...], w_ref[...], preferred_element_type=jnp.float32) + b_ref[...]
    zmax = jnp.max(z, axis=-1, keepdims=True)
    zs = z - zmax
    logp = zs - jnp.log(jnp.sum(jnp.exp(zs), axis=-1, keepdims=True))   # (L*B, T), time-major
    logp_ref[...] = logp                                                # exported for gold-score glue

    # CRF forward-algorithm normalizer, fully unrolled over the static sequence length
    transT = transT_ref[...]                                            # (T_cur, T_prev)
    alpha = logp[0:batch] + start_ref[...]                              # (B, T)
    for t in range(1, seq_len):
        emit = logp[t * batch:(t + 1) * batch]                          # (B, T)
        tmp = alpha[:, None, :] + emit[:, :, None] + transT[None, :, :] # (B, Tcur, Tprev)
        mx = jnp.max(tmp, axis=-1, keepdims=True)
        new = jnp.log(jnp.sum(jnp.exp(tmp - mx), axis=-1)) + mx[..., 0] # logsumexp over prev
        m = mask_ref[t * batch:(t + 1) * batch]                         # (B, 1)
        alpha = new * m + alpha * (1.0 - m)
    alpha = alpha + end_ref[...]
    mx = jnp.max(alpha, axis=-1, keepdims=True)
    z_ref[...] = jnp.log(jnp.sum(jnp.exp(alpha - mx), axis=-1, keepdims=True)) + mx


def head_crf(x_tm, mask_tm, w, b, trans, start, end, *, seq_len, batch):
    M, _ = x_tm.shape
    T = w.shape[1]
    logp, z = pl.pallas_call(
        functools.partial(_head_crf_kernel, seq_len=seq_len, batch=batch),
        out_shape=(jax.ShapeDtypeStruct((M, T), jnp.float32),
                   jax.ShapeDtypeStruct((batch, 1), jnp.float32)),
    )(x_tm, w, b.reshape(1, T), mask_tm, trans.T, start.reshape(1, T), end.reshape(1, T))
    return logp, z[:, 0]


# ================================ JAX glue =========================================
def split_heads_flat(x, n_head):
    Bv, Lv, D = x.shape
    hd = D // n_head
    return x.reshape(Bv, Lv, n_head, hd).transpose(0, 2, 1, 3).reshape(Bv * n_head, Lv, hd)


def merge_heads_flat(x_bh, Bv, n_head):
    _, Lv, hd = x_bh.shape
    return x_bh.reshape(Bv, n_head, Lv, hd).transpose(0, 2, 1, 3).reshape(Bv * Lv, n_head * hd)


def make_key_mask(maskf, n_head):
    Bv, Lv = maskf.shape
    return jnp.broadcast_to(maskf[:, None, None, :], (Bv, n_head, 1, Lv)).reshape(Bv * n_head, 1, Lv)


def rel_sinusoidal_pos_embed(seq_len, dim):
    # relative positions -L .. L-1, per-head-dim sinusoids (TENER RelativeSinusoidalPositionalEmbedding)
    half = dim // 2
    freq = math.log(10000.0) / (half - 1)
    inv = jnp.exp(jnp.arange(half, dtype=jnp.float32) * -freq)
    pos = jnp.arange(-seq_len, seq_len, dtype=jnp.float32)[:, None] * inv[None, :]
    return jnp.concatenate([jnp.sin(pos), jnp.cos(pos)], axis=1)   # (2L, dim)


def build_rel_pos_matrix(seq_len, head_dim):
    # Bakes the TENER _shift / _transpose_shift gathers into one static block-diagonal
    # matrix so pos_bias = [q + r_w_bias, k] @ M_pos is a single small matmul at runtime:
    # no data-dependent gather and no (B,H,L,2L) intermediates materialized in HBM.
    R = rel_sinusoidal_pos_embed(seq_len, head_dim)                    # (2L, hd)
    r = jnp.arange(seq_len)
    G_bd = R[seq_len + r[None, :] - r[:, None]]                        # [i,k,:] = R[L + k - i]
    G_e = R[seq_len + r[:, None] - r[None, :]]                         # [i,k,:] = R[L + i - k]
    eye = jnp.eye(seq_len, dtype=jnp.float32)
    M_bd = jnp.einsum("pi,ikd->pdik", eye, G_bd).reshape(seq_len * head_dim, seq_len * seq_len)
    M_e = jnp.einsum("pk,ikd->pdik", eye, G_e).reshape(seq_len * head_dim, seq_len * seq_len)
    return jnp.concatenate([M_bd, M_e], axis=0)                        # (2*L*hd, L*L)


def bert_layer(p, x, mask_bh):
    Bv, Lv, D = x.shape
    hd = D // BERT_HEADS
    xf = x.reshape(Bv * Lv, D)
    qkv = linear(xf, p["w_qkv"], p["b_qkv"])                           # fused Q/K/V projection
    qkv = qkv.reshape(Bv, Lv, 3, BERT_HEADS, hd).transpose(2, 0, 3, 1, 4)
    q = qkv[0].reshape(Bv * BERT_HEADS, Lv, hd)
    k = qkv[1].reshape(Bv * BERT_HEADS, Lv, hd)
    v = qkv[2].reshape(Bv * BERT_HEADS, Lv, hd)
    ctx = attention(q, k, v, mask_bh, pos_bias=None, scale=math.sqrt(hd))
    ctx = merge_heads_flat(ctx, Bv, BERT_HEADS)
    y = post_attn_block(xf, ctx, p["ln1_g"], p["ln1_b"],
                        p["w_ff1"], p["b_ff1"], p["w_ff2"], p["b_ff2"],
                        p["ln2_g"], p["ln2_b"], act="gelu", wo=p["wo"], bo=p["bo"])
    return y.reshape(Bv, Lv, D)


def bert_forward(p, ids, segs, maskf):
    Bv, Lv = ids.shape
    x = p["word_emb"][ids] + p["pos_emb"][jnp.arange(Lv)][None, :, :] + p["type_emb"][segs]
    x = layernorm(x.reshape(Bv * Lv, E), p["emb_ln_g"], p["emb_ln_b"]).reshape(Bv, Lv, E)
    mask_bh = make_key_mask(maskf, BERT_HEADS)
    for lp in p["layers"]:
        x = bert_layer(lp, x, mask_bh)
    return x


def tener_layer(p, x, mask_bh, M_pos):
    Bv, Lv, D = x.shape
    hd = D // N_HEAD
    BH = Bv * N_HEAD
    xf = x.reshape(Bv * Lv, D)
    qv = linear(xf, p["w_qv"])                                         # qv_linear (bias=False)
    q = split_heads_flat(qv[:, :D].reshape(Bv, Lv, D), N_HEAD)         # (B*H, L, hd)
    v = split_heads_flat(qv[:, D:].reshape(Bv, Lv, D), N_HEAD)
    k = split_heads_flat(x, N_HEAD)                                    # adatrans: un-projected keys

    r_w = jnp.broadcast_to(p["r_w_bias"][None, :, None, :], (Bv, N_HEAD, 1, hd)).reshape(BH, 1, hd)
    r_r = jnp.broadcast_to(p["r_r_bias"][None, :, None, :], (Bv, N_HEAD, 1, hd)).reshape(BH, 1, hd)
    # relative-position bias via the pre-shifted matrix (one tiny XLA dot; no Pallas launches,
    # no runtime gather, no (B,H,L,2L) intermediates)
    pos_in = jnp.concatenate([(q + r_w).reshape(BH, Lv * hd), k.reshape(BH, Lv * hd)], axis=-1)
    pos_bias = (pos_in @ M_pos).reshape(BH, Lv, Lv)

    scale = math.sqrt(hd) if SCALE else 1.0
    ctx = attention(q + r_r, k, v, mask_bh, pos_bias=pos_bias, scale=scale)
    ctx = merge_heads_flat(ctx, Bv, N_HEAD)                            # no out-proj in RelativeMultiHeadAttn
    y = post_attn_block(xf, ctx, p["ln1_g"], p["ln1_b"],
                        p["w_ff1"], p["b_ff1"], p["w_ff2"], p["b_ff2"],
                        p["ln2_g"], p["ln2_b"], act="leaky_relu")
    return y.reshape(Bv, Lv, D)


def crf_gold_score(logp_lbt, tags_lb, mask_lb, trans, start, end):
    # TODO(synk): tag-indexed gathers (gold path) kept in plain JAX; viterbi_decode not implemented.
    Lv, Bv, _ = logp_lbt.shape
    maskf = mask_lb.astype(jnp.float32)
    trans_score = trans[tags_lb[:-1], tags_lb[1:]] * maskf[1:]
    emit = jnp.take_along_axis(logp_lbt, tags_lb[..., None], axis=-1)[..., 0] * maskf
    score = jnp.sum(trans_score + emit[:-1], axis=0) + emit[-1]
    st = start[tags_lb[0]]
    last_idx = jnp.sum(mask_lb.astype(jnp.int32), axis=0) - 1
    ed = end[tags_lb[last_idx, jnp.arange(Bv)]]
    return score + st + ed


def tener_forward(params, inputs_idx, target, segments):
    Bv, Lv = inputs_idx.shape
    mask = inputs_idx != 0                                             # mask = inputs_idx.ne(0)
    maskf = mask.astype(jnp.float32)

    chars = bert_forward(params["bert"], inputs_idx, segments, maskf)  # (B, L, E)
    chars = linear(chars.reshape(Bv * Lv, E), params["in_fc_w"], params["in_fc_b"])
    chars = chars.reshape(Bv, Lv, D_MODEL)

    M_pos = build_rel_pos_matrix(Lv, D_MODEL // N_HEAD)
    mask_bh = make_key_mask(maskf, N_HEAD)
    for lp in params["tener_layers"]:
        chars = tener_layer(lp, chars, mask_bh, M_pos)

    # fc_dropout: identity (eval). out_fc + log_softmax + CRF normalizer fused into one kernel.
    x_tm = jnp.transpose(chars, (1, 0, 2)).reshape(Lv * Bv, D_MODEL)   # time-major layout
    mask_tm = jnp.transpose(maskf, (1, 0)).reshape(Lv * Bv, 1)
    logp_tm, z = head_crf(x_tm, mask_tm, params["out_fc_w"], params["out_fc_b"],
                          params["crf_trans"], params["crf_start"], params["crf_end"],
                          seq_len=Lv, batch=Bv)

    logp_lbt = logp_tm.reshape(Lv, Bv, N_TAGS)
    tags_lb = jnp.transpose(target, (1, 0))
    mask_lb = jnp.transpose(mask, (1, 0))
    gold = crf_gold_score(logp_lbt, tags_lb, mask_lb,
                          params["crf_trans"], params["crf_start"], params["crf_end"])
    return z - gold                                                    # {'loss': loss}, shape (B,)


# ================================ parameters ========================================
def init_params(key):
    it = iter(jax.random.split(key, 128))

    def nrm(shape, s=0.02):
        return jax.random.normal(next(it), shape, jnp.float32) * s

    zeros = lambda s: jnp.zeros(s, jnp.float32)
    ones = lambda s: jnp.ones(s, jnp.float32)

    bert_layers = []
    for _ in range(BERT_LAYERS):
        bert_layers.append(dict(
            w_qkv=nrm((E, 3 * E)), b_qkv=zeros((3 * E,)),              # fused Q/K/V projection
            wo=nrm((E, E)), bo=zeros((E,)),
            ln1_g=ones((E,)), ln1_b=zeros((E,)),
            w_ff1=nrm((E, BERT_FF)), b_ff1=zeros((BERT_FF,)),
            w_ff2=nrm((BERT_FF, E)), b_ff2=zeros((E,)),
            ln2_g=ones((E,)), ln2_b=zeros((E,)),
        ))
    bert = dict(word_emb=nrm((VOCAB, E)), pos_emb=nrm((MAX_POS, E)),
                type_emb=nrm((TYPE_VOCAB, E)),
                emb_ln_g=ones((E,)), emb_ln_b=zeros((E,)), layers=bert_layers)

    hd = D_MODEL // N_HEAD
    tener_layers = []
    for _ in range(NUM_LAYERS):
        tener_layers.append(dict(
            w_qv=nrm((D_MODEL, 2 * D_MODEL)),                          # qv_linear, bias=False
            r_r_bias=nrm((N_HEAD, hd), 0.1), r_w_bias=nrm((N_HEAD, hd), 0.1),
            ln1_g=ones((D_MODEL,)), ln1_b=zeros((D_MODEL,)),
            w_ff1=nrm((D_MODEL, FF_DIM)), b_ff1=zeros((FF_DIM,)),
            w_ff2=nrm((FF_DIM, D_MODEL)), b_ff2=zeros((D_MODEL,)),
            ln2_g=ones((D_MODEL,)), ln2_b=zeros((D_MODEL,)),
        ))

    return dict(
        bert=bert,
        in_fc_w=nrm((E, D_MODEL)), in_fc_b=zeros((D_MODEL,)),
        tener_layers=tener_layers,
        out_fc_w=nrm((D_MODEL, N_TAGS)), out_fc_b=zeros((N_TAGS,)),
        crf_trans=nrm((N_TAGS, N_TAGS), 1.0),
        crf_start=nrm((N_TAGS,), 1.0), crf_end=nrm((N_TAGS,), 1.0),
    )


if __name__ == "__main__":
    key = jax.random.PRNGKey(0)
    kp, k1, k2 = jax.random.split(key, 3)
    params = init_params(kp)

    inputs_idx = jax.random.randint(k1, (B, L), 1, VOCAB, dtype=jnp.int32)
    inputs_idx = inputs_idx.at[1, L - 2:].set(0)        # trailing padding -> mask = ne(0)
    segments = jnp.concatenate(
        [jnp.zeros((B, L // 2), jnp.int32), jnp.ones((B, L - L // 2), jnp.int32)], axis=1)
    target = jax.random.randint(k2, (B, L), 0, N_TAGS, dtype=jnp.int32)

    loss = jax.jit(tener_forward)(params, inputs_idx, target, segments)
    loss = jax.block_until_ready(loss)
    assert loss.shape == (B,) and bool(jnp.all(jnp.isfinite(loss)))
    print("KERNEL_OK")
</pallas_src>

<mosaic_0001>
module attributes {stable_mosaic.version = 11 : i64} {
  func.func @_linear_kernel(%arg0: memref<16x32xf32, #tpu.memory_space<vmem>>, %arg1: memref<32x96xf32, #tpu.memory_space<vmem>>, %arg2: memref<1x96xf32, #tpu.memory_space<vmem>>, %arg3: memref<16x96xf32, #tpu.memory_space<vmem>>) attributes {dimension_semantics = [], scalar_prefetch = 0 : i64, scratch_operands = 0 : i64, tpu.core_type = #tpu.core_type<tc>} {
    %c0 = arith.constant 0 : index
    %c0_0 = arith.constant 0 : index
    %0 = vector.load %arg0[%c0, %c0_0] : memref<16x32xf32, #tpu.memory_space<vmem>>, vector<16x32xf32>
    %c0_1 = arith.constant 0 : index
    %c0_2 = arith.constant 0 : index
    %1 = vector.load %arg1[%c0_1, %c0_2] : memref<32x96xf32, #tpu.memory_space<vmem>>, vector<32x96xf32>
    %2 = arith.truncf %0 : vector<16x32xf32> to vector<16x32xbf16>
    %3 = arith.truncf %1 : vector<32x96xf32> to vector<32x96xbf16>
    %cst = arith.constant dense<0.000000e+00> : vector<16x96xf32>
    %4 = tpu.matmul %2, %3, %cst {dimension_numbers = #tpu.dot_dimension_numbers<[1], [0], [0], [1], [0, 0, 1, 1], [], []>} : vector<16x32xbf16>, vector<32x96xbf16>, vector<16x96xf32> -> vector<16x96xf32>
    %c0_3 = arith.constant 0 : index
    %c0_4 = arith.constant 0 : index
    %5 = vector.load %arg2[%c0_3, %c0_4] : memref<1x96xf32, #tpu.memory_space<vmem>>, vector<1x96xf32>
    %6 = vector.broadcast %5 : vector<1x96xf32> to vector<16x96xf32>
    %7 = arith.addf %4, %6 : vector<16x96xf32>
    %c0_5 = arith.constant 0 : index
    %c0_6 = arith.constant 0 : index
    %8 = vector.load %arg3[%c0_5, %c0_6] : memref<16x96xf32, #tpu.memory_space<vmem>>, vector<16x96xf32>
    tpu.vector_store %arg3[%c0_5, %c0_6], %7 {strides = array<i32>} : memref<16x96xf32, #tpu.memory_space<vmem>>, vector<16x96xf32>,
    return
  }
}

module attributes {stable_mosaic.version = 11 : i64} {
  func.func @_layernorm_kernel(%arg0: memref<16x32xf32, #tpu.memory_space<vmem>>, %arg1: memref<1x32xf32, #tpu.memory_space<vmem>>, %arg2: memref<1x32xf32, #tpu.memory_space<vmem>>, %arg3: memref<16x32xf32, #tpu.memory_space<vmem>>) attributes {dimension_semantics = [], scalar_prefetch = 0 : i64, scratch_operands = 0 : i64, tpu.core_type = #tpu.core_type<tc>} {
    %c0 = arith.constant 0 : index
    %c0_0 = arith.constant 0 : index
    %0 = vector.load %arg0[%c0, %c0_0] : memref<16x32xf32, #tpu.memory_space<vmem>>, vector<16x32xf32>
    %c0_1 = arith.constant 0 : index
    %c0_2 = arith.constant 0 : index
    %1 = vector.load %arg1[%c0_1, %c0_2] : memref<1x32xf32, #tpu.memory_space<vmem>>, vector<1x32xf32>
    %c0_3 = arith.constant 0 : index
    %c0_4 = arith.constant 0 : index
    %2 = vector.load %arg2[%c0_3, %c0_4] : memref<1x32xf32, #tpu.memory_space<vmem>>, vector<1x32xf32>
    %cst = arith.constant dense<0.000000e+00> : vector<16xf32>
    %3 = vector.multi_reduction <add>, %0, %cst [1] : vector<16x32xf32> to vector<16xf32>
    %4 = vector.shape_cast %3 : vector<16xf32> to vector<16x1xf32>
    %cst_5 = arith.constant 3.200000e+01 : f32
    %5 = vector.broadcast %cst_5 : f32 to vector<16x1xf32>
    %6 = arith.divf %4, %5 : vector<16x1xf32>
    %7 = vector.broadcast %6 : vector<16x1xf32> to vector<16x32xf32>
    %8 = arith.subf %0, %7 : vector<16x32xf32>
    %9 = vector.broadcast %6 : vector<16x1xf32> to vector<16x32xf32>
    %10 = arith.subf %0, %9 : vector<16x32xf32>
    %11 = arith.mulf %8, %10 : vector<16x32xf32>
    %cst_6 = arith.constant dense<0.000000e+00> : vector<16xf32>
    %12 = vector.multi_reduction <add>, %11, %cst_6 [1] : vector<16x32xf32> to vector<16xf32>
    %13 = vector.shape_cast %12 : vector<16xf32> to vector<16x1xf32>
    %cst_7 = arith.constant 3.200000e+01 : f32
    %14 = vector.broadcast %cst_7 : f32 to vector<16x1xf32>
    %15 = arith.divf %13, %14 : vector<16x1xf32>
    %16 = vector.broadcast %6 : vector<16x1xf32> to vector<16x32xf32>
    %17 = arith.subf %0, %16 : vector<16x32xf32>
    %cst_8 = arith.constant 9.99999974E-6 : f32
    %18 = vector.broadcast %cst_8 : f32 to vector<16x1xf32>
    %19 = arith.addf %15, %18 : vector<16x1xf32>
    %20 = math.rsqrt %19 : vector<16x1xf32>
    %21 = vector.broadcast %20 : vector<16x1xf32> to vector<16x32xf32>
    %22 = arith.mulf %17, %21 : vector<16x32xf32>
    %23 = vector.broadcast %1 : vector<1x32xf32> to vector<16x32xf32>
    %24 = arith.mulf %22, %23 : vector<16x32xf32>
    %25 = vector.broadcast %2 : vector<1x32xf32> to vector<16x32xf32>
    %26 = arith.addf %24, %25 : vector<16x32xf32>
    %c0_9 = arith.constant 0 : index
    %c0_10 = arith.constant 0 : index
    %27 = vector.load %arg3[%c0_9, %c0_10] : memref<16x32xf32, #tpu.memory_space<vmem>>, vector<16x32xf32>
    tpu.vector_store %arg3[%c0_9, %c0_10], %26 {strides = array<i32>} : memref<16x32xf32, #tpu.memory_space<vmem>>, vector<16x32xf32>,
    return
  }
}

module attributes {stable_mosaic.version = 11 : i64} {
  func.func @_attn_kernel(%arg0: memref<8x8x8xf32, #tpu.memory_space<vmem>>, %arg1: memref<8x8x8xf32, #tpu.memory_space<vmem>>, %arg2: memref<8x8x8xf32, #tpu.memory_space<vmem>>, %arg3: memref<8x1x8xf32, #tpu.memory_space<vmem>>, %arg4: memref<8x8x8xf32, #tpu.memory_space<vmem>>) attributes {dimension_semantics = [], scalar_prefetch = 0 : i64, scratch_operands = 0 : i64, tpu.core_type = #tpu.core_type<tc>} {
    %c0 = arith.constant 0 : index
    %c0_0 = arith.constant 0 : index
    %c0_1 = arith.constant 0 : index
    %0 = vector.load %arg0[%c0, %c0_0, %c0_1] : memref<8x8x8xf32, #tpu.memory_space<vmem>>, vector<8x8x8xf32>
    %cst = arith.constant 0.353553385 : f32
    %1 = vector.broadcast %cst : f32 to vector<8x8x8xf32>
    %2 = arith.mulf %0, %1 : vector<8x8x8xf32>
    %3 = arith.truncf %2 : vector<8x8x8xf32> to vector<8x8x8xbf16>
    %c0_2 = arith.constant 0 : index
    %c0_3 = arith.constant 0 : index
    %c0_4 = arith.constant 0 : index
    %4 = vector.load %arg1[%c0_2, %c0_3, %c0_4] : memref<8x8x8xf32, #tpu.memory_space<vmem>>, vector<8x8x8xf32>
    %5 = arith.truncf %4 : vector<8x8x8xf32> to vector<8x8x8xbf16>
    "tpu.trace_start"() <{level = 10 : i32, message = "bqd,bkd->bqk"}> : () -> ()
    %cst_5 = arith.constant dense<0.000000e+00> : vector<8x8x8xf32>
    %6 = tpu.matmul %3, %5, %cst_5 {dimension_numbers = #tpu.dot_dimension_numbers<[2], [2], [1], [1], [0, 0, 0, 1, 1, 1], [0], [0]>} : vector<8x8x8xbf16>, vector<8x8x8xbf16>, vector<8x8x8xf32> -> vector<8x8x8xf32>
    "tpu.trace_stop"() : () -> ()
    %c0_6 = arith.constant 0 : index
    %c0_7 = arith.constant 0 : index
    %c0_8 = arith.constant 0 : index
    %7 = vector.load %arg3[%c0_6, %c0_7, %c0_8] : memref<8x1x8xf32, #tpu.memory_space<vmem>>, vector<8x1x8xf32>
    %cst_9 = arith.constant 5.000000e-01 : f32
    %8 = vector.broadcast %cst_9 : f32 to vector<8x1x8xf32>
    %9 = arith.cmpf ogt, %7, %8 : vector<8x1x8xf32>
    %cst_10 = arith.constant -1.000000e+30 : f32
    %10 = vector.shape_cast %9 : vector<8x1x8xi1> to vector<8x1x8xi1>
    %11 = vector.broadcast %10 : vector<8x1x8xi1> to vector<8x8x8xi1>
    %12 = vector.broadcast %cst_10 : f32 to vector<8x8x8xf32>
    %13 = arith.select %11, %6, %12 : vector<8x8x8xi1>, vector<8x8x8xf32>
    %cst_11 = arith.constant dense<0xFF800000> : vector<8x8xf32>
    %14 = vector.multi_reduction <maximumf>, %13, %cst_11 [2] : vector<8x8x8xf32> to vector<8x8xf32>
    %15 = vector.shape_cast %14 : vector<8x8xf32> to vector<8x8x1xf32>
    %16 = vector.broadcast %15 : vector<8x8x1xf32> to vector<8x8x8xf32>
    %17 = arith.subf %13, %16 : vector<8x8x8xf32>
    %18 = math.exp %17 : vector<8x8x8xf32>
    %cst_12 = arith.constant dense<0.000000e+00> : vector<8x8xf32>
    %19 = vector.multi_reduction <add>, %18, %cst_12 [2] : vector<8x8x8xf32> to vector<8x8xf32>
    %20 = vector.shape_cast %19 : vector<8x8xf32> to vector<8x8x1xf32>
    %21 = tpu.reciprocal %20 {approx = true} : vector<8x8x1xf32> -> vector<8x8x1xf32>
    %22 = vector.broadcast %21 : vector<8x8x1xf32> to vector<8x8x8xf32>
    %23 = arith.mulf %18, %22 : vector<8x8x8xf32>
    %24 = arith.truncf %23 : vector<8x8x8xf32> to vector<8x8x8xbf16>
    %c0_13 = arith.constant 0 : index
    %c0_14 = arith.constant 0 : index
    %c0_15 = arith.constant 0 : index
    %25 = vector.load %arg2[%c0_13, %c0_14, %c0_15] : memref<8x8x8xf32, #tpu.memory_space<vmem>>, vector<8x8x8xf32>
    %26 = arith.truncf %25 : vector<8x8x8xf32> to vector<8x8x8xbf16>
    "tpu.trace_start"() <{level = 10 : i32, message = "bqk,bkd->bqd"}> : () -> ()
    %cst_16 = arith.constant dense<0.000000e+00> : vector<8x8x8xf32>
    %27 = tpu.matmul %24, %26, %cst_16 {dimension_numbers = #tpu.dot_dimension_numbers<[2], [1], [1], [2], [0, 0, 0, 1, 1, 2], [0], [0]>} : vector<8x8x8xbf16>, vector<8x8x8xbf16>, vector<8x8x8xf32> -> vector<8x8x8xf32>
    "tpu.trace_stop"() : () -> ()
    %c0_17 = arith.constant 0 : index
    %c0_18 = arith.constant 0 : index
    %c0_19 = arith.constant 0 : index
    %28 = vector.load %arg4[%c0_17, %c0_18, %c0_19] : memref<8x8x8xf32, #tpu.memory_space<vmem>>, vector<8x8x8xf32>
    tpu.vector_store %arg4[%c0_17, %c0_18, %c0_19], %27 {strides = array<i32>} : memref<8x8x8xf32, #tpu.memory_space<vmem>>, vector<8x8x8xf32>,
    return
  }
}

module attributes {stable_mosaic.version = 11 : i64} {
  func.func @_post_block_kernel(%arg0: memref<16x32xf32, #tpu.memory_space<vmem>>, %arg1: memref<16x32xf32, #tpu.memory_space<vmem>>, %arg2: memref<32x32xf32, #tpu.memory_space<vmem>>, %arg3: memref<1x32xf32, #tpu.memory_space<vmem>>, %arg4: memref<1x32xf32, #tpu.memory_space<vmem>>, %arg5: memref<1x32xf32, #tpu.memory_space<vmem>>, %arg6: memref<32x64xf32, #tpu.memory_space<vmem>>, %arg7: memref<1x64xf32, #tpu.memory_space<vmem>>, %arg8: memref<64x32xf32, #tpu.memory_space<vmem>>, %arg9: memref<1x32xf32, #tpu.memory_space<vmem>>, %arg10: memref<1x32xf32, #tpu.memory_space<vmem>>, %arg11: memref<1x32xf32, #tpu.memory_space<vmem>>, %arg12: memref<16x32xf32, #tpu.memory_space<vmem>>) attributes {dimension_semantics = [], scalar_prefetch = 0 : i64, scratch_operands = 0 : i64, tpu.core_type = #tpu.core_type<tc>} {
    %c0 = arith.constant 0 : index
    %c0_0 = arith.constant 0 : index
    %0 = vector.load %arg1[%c0, %c0_0] : memref<16x32xf32, #tpu.memory_space<vmem>>, vector<16x32xf32>
    %c0_1 = arith.constant 0 : index
    %c0_2 = arith.constant 0 : index
    %1 = vector.load %arg2[%c0_1, %c0_2] : memref<32x32xf32, #tpu.memory_space<vmem>>, vector<32x32xf32>
    %2 = arith.truncf %0 : vector<16x32xf32> to vector<16x32xbf16>
    %3 = arith.truncf %1 : vector<32x32xf32> to vector<32x32xbf16>
    %cst = arith.constant dense<0.000000e+00> : vector<16x32xf32>
    %4 = tpu.matmul %2, %3, %cst {dimension_numbers = #tpu.dot_dimension_numbers<[1], [0], [0], [1], [0, 0, 1, 1], [], []>} : vector<16x32xbf16>, vector<32x32xbf16>, vector<16x32xf32> -> vector<16x32xf32>
    %c0_3 = arith.constant 0 : index
    %c0_4 = arith.constant 0 : index
    %5 = vector.load %arg3[%c0_3, %c0_4] : memref<1x32xf32, #tpu.memory_space<vmem>>, vector<1x32xf32>
    %6 = vector.broadcast %5 : vector<1x32xf32> to vector<16x32xf32>
    %7 = arith.addf %4, %6 : vector<16x32xf32>
    %c0_5 = arith.constant 0 : index
    %c0_6 = arith.constant 0 : index
    %8 = vector.load %arg0[%c0_5, %c0_6] : memref<16x32xf32, #tpu.memory_space<vmem>>, vector<16x32xf32>
    %9 = arith.addf %8, %7 : vector<16x32xf32>
    %c0_7 = arith.constant 0 : index
    %c0_8 = arith.constant 0 : index
    %10 = vector.load %arg4[%c0_7, %c0_8] : memref<1x32xf32, #tpu.memory_space<vmem>>, vector<1x32xf32>
    %c0_9 = arith.constant 0 : index
    %c0_10 = arith.constant 0 : index
    %11 = vector.load %arg5[%c0_9, %c0_10] : memref<1x32xf32, #tpu.memory_space<vmem>>, vector<1x32xf32>
    %cst_11 = arith.constant dense<0.000000e+00> : vector<16xf32>
    %12 = vector.multi_reduction <add>, %9, %cst_11 [1] : vector<16x32xf32> to vector<16xf32>
    %13 = vector.shape_cast %12 : vector<16xf32> to vector<16x1xf32>
    %cst_12 = arith.constant 3.200000e+01 : f32
    %14 = vector.broadcast %cst_12 : f32 to vector<16x1xf32>
    %15 = arith.divf %13, %14 : vector<16x1xf32>
    %16 = vector.broadcast %15 : vector<16x1xf32> to vector<16x32xf32>
    %17 = arith.subf %9, %16 : vector<16x32xf32>
    %18 = vector.broadcast %15 : vector<16x1xf32> to vector<16x32xf32>
    %19 = arith.subf %9, %18 : vector<16x32xf32>
    %20 = arith.mulf %17, %19 : vector<16x32xf32>
    %cst_13 = arith.constant dense<0.000000e+00> : vector<16xf32>
    %21 = vector.multi_reduction <add>, %20, %cst_13 [1] : vector<16x32xf32> to vector<16xf32>
    %22 = vector.shape_cast %21 : vector<16xf32> to vector<16x1xf32>
    %cst_14 = arith.constant 3.200000e+01 : f32
    %23 = vector.broadcast %cst_14 : f32 to vector<16x1xf32>
    %24 = arith.divf %22, %23 : vector<16x1xf32>
    %25 = vector.broadcast %15 : vector<16x1xf32> to vector<16x32xf32>
    %26 = arith.subf %9, %25 : vector<16x32xf32>
    %cst_15 = arith.constant 9.99999974E-6 : f32
    %27 = vector.broadcast %cst_15 : f32 to vector<16x1xf32>
    %28 = arith.addf %24, %27 : vector<16x1xf32>
    %29 = math.rsqrt %28 : vector<16x1xf32>
    %30 = vector.broadcast %29 : vector<16x1xf32> to vector<16x32xf32>
    %31 = arith.mulf %26, %30 : vector<16x32xf32>
    %32 = vector.broadcast %10 : vector<1x32xf32> to vector<16x32xf32>
    %33 = arith.mulf %31, %32 : vector<16x32xf32>
    %34 = vector.broadcast %11 : vector<1x32xf32> to vector<16x32xf32>
    %35 = arith.addf %33, %34 : vector<16x32xf32>
    %c0_16 = arith.constant 0 : index
    %c0_17 = arith.constant 0 : index
    %36 = vector.load %arg6[%c0_16, %c0_17] : memref<32x64xf32, #tpu.memory_space<vmem>>, vector<32x64xf32>
    %37 = arith.truncf %35 : vector<16x32xf32> to vector<16x32xbf16>
    %38 = arith.truncf %36 : vector<32x64xf32> to vector<32x64xbf16>
    %cst_18 = arith.constant dense<0.000000e+00> : vector<16x64xf32>
    %39 = tpu.matmul %37, %38, %cst_18 {dimension_numbers = #tpu.dot_dimension_numbers<[1], [0], [0], [1], [0, 0, 1, 1], [], []>} : vector<16x32xbf16>, vector<32x64xbf16>, vector<16x64xf32> -> vector<16x64xf32>
    %c0_19 = arith.constant 0 : index
    %c0_20 = arith.constant 0 : index
    %40 = vector.load %arg7[%c0_19, %c0_20] : memref<1x64xf32, #tpu.memory_space<vmem>>, vector<1x64xf32>
    %41 = vector.broadcast %40 : vector<1x64xf32> to vector<16x64xf32>
    %42 = arith.addf %39, %41 : vector<16x64xf32>
    %cst_21 = arith.constant 5.000000e-01 : f32
    %43 = vector.broadcast %cst_21 : f32 to vector<16x64xf32>
    %44 = arith.mulf %43, %42 : vector<16x64xf32>
    %cst_22 = arith.constant 4.471500e-02 : f32
    %45 = vector.broadcast %cst_22 : f32 to vector<16x64xf32>
    %46 = arith.mulf %45, %42 : vector<16x64xf32>
    %47 = arith.mulf %46, %42 : vector<16x64xf32>
    %48 = arith.mulf %47, %42 : vector<16x64xf32>
    %49 = arith.addf %42, %48 : vector<16x64xf32>
    %cst_23 = arith.constant 0.797884583 : f32
    %50 = vector.broadcast %cst_23 : f32 to vector<16x64xf32>
    %51 = arith.mulf %50, %49 : vector<16x64xf32>
    %52 = math.tanh %51 : vector<16x64xf32>
    %cst_24 = arith.constant 1.000000e+00 : f32
    %53 = vector.broadcast %cst_24 : f32 to vector<16x64xf32>
    %54 = arith.addf %53, %52 : vector<16x64xf32>
    %55 = arith.mulf %44, %54 : vector<16x64xf32>
    %c0_25 = arith.constant 0 : index
    %c0_26 = arith.constant 0 : index
    %56 = vector.load %arg8[%c0_25, %c0_26] : memref<64x32xf32, #tpu.memory_space<vmem>>, vector<64x32xf32>
    %57 = arith.truncf %55 : vector<16x64xf32> to vector<16x64xbf16>
    %58 = arith.truncf %56 : vector<64x32xf32> to vector<64x32xbf16>
    %cst_27 = arith.constant dense<0.000000e+00> : vector<16x32xf32>
    %59 = tpu.matmul %57, %58, %cst_27 {dimension_numbers = #tpu.dot_dimension_numbers<[1], [0], [0], [1], [0, 0, 1, 1], [], []>} : vector<16x64xbf16>, vector<64x32xbf16>, vector<16x32xf32> -> vector<16x32xf32>
    %60 = arith.addf %35, %59 : vector<16x32xf32>
    %c0_28 = arith.constant 0 : index
    %c0_29 = arith.constant 0 : index
    %61 = vector.load %arg9[%c0_28, %c0_29] : memref<1x32xf32, #tpu.memory_space<vmem>>, vector<1x32xf32>
    %62 = vector.broadcast %61 : vector<1x32xf32> to vector<16x32xf32>
    %63 = arith.addf %60, %62 : vector<16x32xf32>
    %c0_30 = arith.constant 0 : index
    %c0_31 = arith.constant 0 : index
    %64 = vector.load %arg10[%c0_30, %c0_31] : memref<1x32xf32, #tpu.memory_space<vmem>>, vector<1x32xf32>
    %c0_32 = arith.constant 0 : index
    %c0_33 = arith.constant 0 : index
    %65 = vector.load %arg11[%c0_32, %c0_33] : memref<1x32xf32, #tpu.memory_space<vmem>>, vector<1x32xf32>
    %cst_34 = arith.constant dense<0.000000e+00> : vector<16xf32>
    %66 = vector.multi_reduction <add>, %63, %cst_34 [1] : vector<16x32xf32> to vector<16xf32>
    %67 = vector.shape_cast %66 : vector<16xf32> to vector<16x1xf32>
    %cst_35 = arith.constant 3.200000e+01 : f32
    %68 = vector.broadcast %cst_35 : f32 to vector<16x1xf32>
    %69 = arith.divf %67, %68 : vector<16x1xf32>
    %70 = vector.broadcast %69 : vector<16x1xf32> to vector<16x32xf32>
    %71 = arith.subf %63, %70 : vector<16x32xf32>
    %72 = vector.broadcast %69 : vector<16x1xf32> to vector<16x32xf32>
    %73 = arith.subf %63, %72 : vector<16x32xf32>
    %74 = arith.mulf %71, %73 : vector<16x32xf32>
    %cst_36 = arith.constant dense<0.000000e+00> : vector<16xf32>
    %75 = vector.multi_reduction <add>, %74, %cst_36 [1] : vector<16x32xf32> to vector<16xf32>
    %76 = vector.shape_cast %75 : vector<16xf32> to vector<16x1xf32>
    %cst_37 = arith.constant 3.200000e+01 : f32
    %77 = vector.broadcast %cst_37 : f32 to vector<16x1xf32>
    %78 = arith.divf %76, %77 : vector<16x1xf32>
    %79 = vector.broadcast %69 : vector<16x1xf32> to vector<16x32xf32>
    %80 = arith.subf %63, %79 : vector<16x32xf32>
    %cst_38 = arith.constant 9.99999974E-6 : f32
    %81 = vector.broadcast %cst_38 : f32 to vector<16x1xf32>
    %82 = arith.addf %78, %81 : vector<16x1xf32>
    %83 = math.rsqrt %82 : vector<16x1xf32>
    %84 = vector.broadcast %83 : vector<16x1xf32> to vector<16x32xf32>
    %85 = arith.mulf %80, %84 : vector<16x32xf32>
    %86 = vector.broadcast %64 : vector<1x32xf32> to vector<16x32xf32>
    %87 = arith.mulf %85, %86 : vector<16x32xf32>
    %88 = vector.broadcast %65 : vector<1x32xf32> to vector<16x32xf32>
    %89 = arith.addf %87, %88 : vector<16x32xf32>
    %c0_39 = arith.constant 0 : index
    %c0_40 = arith.constant 0 : index
    %90 = vector.load %arg12[%c0_39, %c0_40] : memref<16x32xf32, #tpu.memory_space<vmem>>, vector<16x32xf32>
    tpu.vector_store %arg12[%c0_39, %c0_40], %89 {strides = array<i32>} : memref<16x32xf32, #tpu.memory_space<vmem>>, vector<16x32xf32>,
    return
  }
}

module attributes {stable_mosaic.version = 11 : i64} {
  func.func @_linear_kernel(%arg0: memref<16x32xf32, #tpu.memory_space<vmem>>, %arg1: memref<32x64xf32, #tpu.memory_space<vmem>>, %arg2: memref<16x64xf32, #tpu.memory_space<vmem>>) attributes {dimension_semantics = [], scalar_prefetch = 0 : i64, scratch_operands = 0 : i64, tpu.core_type = #tpu.core_type<tc>} {
    %c0 = arith.constant 0 : index
    %c0_0 = arith.constant 0 : index
    %0 = vector.load %arg0[%c0, %c0_0] : memref<16x32xf32, #tpu.memory_space<vmem>>, vector<16x32xf32>
    %c0_1 = arith.constant 0 : index
    %c0_2 = arith.constant 0 : index
    %1 = vector.load %arg1[%c0_1, %c0_2] : memref<32x64xf32, #tpu.memory_space<vmem>>, vector<32x64xf32>
    %2 = arith.truncf %0 : vector<16x32xf32> to vector<16x32xbf16>
    %3 = arith.truncf %1 : vector<32x64xf32> to vector<32x64xbf16>
    %cst = arith.constant dense<0.000000e+00> : vector<16x64xf32>
    %4 = tpu.matmul %2, %3, %cst {dimension_numbers = #tpu.dot_dimension_numbers<[1], [0], [0], [1], [0, 0, 1, 1], [], []>} : vector<16x32xbf16>, vector<32x64xbf16>, vector<16x64xf32> -> vector<16x64xf32>
    %c0_3 = arith.constant 0 : index
    %c0_4 = arith.constant 0 : index
    %5 = vector.load %arg2[%c0_3, %c0_4] : memref<16x64xf32, #tpu.memory_space<vmem>>, vector<16x64xf32>
    tpu.vector_store %arg2[%c0_3, %c0_4], %4 {strides = array<i32>} : memref<16x64xf32, #tpu.memory_space<vmem>>, vector<16x64xf32>,
    return
  }
}

module attributes {stable_mosaic.version = 11 : i64} {
  func.func @_linear_kernel(%arg0: memref<16x32xf32, #tpu.memory_space<vmem>>, %arg1: memref<32x32xf32, #tpu.memory_space<vmem>>, %arg2: memref<1x32xf32, #tpu.memory_space<vmem>>, %arg3: memref<16x32xf32, #tpu.memory_space<vmem>>) attributes {dimension_semantics = [], scalar_prefetch = 0 : i64, scratch_operands = 0 : i64, tpu.core_type = #tpu.core_type<tc>} {
    %c0 = arith.constant 0 : index
    %c0_0 = arith.constant 0 : index
    %0 = vector.load %arg0[%c0, %c0_0] : memref<16x32xf32, #tpu.memory_space<vmem>>, vector<16x32xf32>
    %c0_1 = arith.constant 0 : index
    %c0_2 = arith.constant 0 : index
    %1 = vector.load %arg1[%c0_1, %c0_2] : memref<32x32xf32, #tpu.memory_space<vmem>>, vector<32x32xf32>
    %2 = arith.truncf %0 : vector<16x32xf32> to vector<16x32xbf16>
    %3 = arith.truncf %1 : vector<32x32xf32> to vector<32x32xbf16>
    %cst = arith.constant dense<0.000000e+00> : vector<16x32xf32>
    %4 = tpu.matmul %2, %3, %cst {dimension_numbers = #tpu.dot_dimension_numbers<[1], [0], [0], [1], [0, 0, 1, 1], [], []>} : vector<16x32xbf16>, vector<32x32xbf16>, vector<16x32xf32> -> vector<16x32xf32>
    %c0_3 = arith.constant 0 : index
    %c0_4 = arith.constant 0 : index
    %5 = vector.load %arg2[%c0_3, %c0_4] : memref<1x32xf32, #tpu.memory_space<vmem>>, vector<1x32xf32>
    %6 = vector.broadcast %5 : vector<1x32xf32> to vector<16x32xf32>
    %7 = arith.addf %4, %6 : vector<16x32xf32>
    %c0_5 = arith.constant 0 : index
    %c0_6 = arith.constant 0 : index
    %8 = vector.load %arg3[%c0_5, %c0_6] : memref<16x32xf32, #tpu.memory_space<vmem>>, vector<16x32xf32>
    tpu.vector_store %arg3[%c0_5, %c0_6], %7 {strides = array<i32>} : memref<16x32xf32, #tpu.memory_space<vmem>>, vector<16x32xf32>,
    return
  }
}

module attributes {stable_mosaic.version = 11 : i64} {
  func.func @_attn_kernel(%arg0: memref<8x8x8xf32, #tpu.memory_space<vmem>>, %arg1: memref<8x8x8xf32, #tpu.memory_space<vmem>>, %arg2: memref<8x8x8xf32, #tpu.memory_space<vmem>>, %arg3: memref<8x8x8xf32, #tpu.memory_space<vmem>>, %arg4: memref<8x1x8xf32, #tpu.memory_space<vmem>>, %arg5: memref<8x8x8xf32, #tpu.memory_space<vmem>>) attributes {dimension_semantics = [], scalar_prefetch = 0 : i64, scratch_operands = 0 : i64, tpu.core_type = #tpu.core_type<tc>} {
    %c0 = arith.constant 0 : index
    %c0_0 = arith.constant 0 : index
    %c0_1 = arith.constant 0 : index
    %0 = vector.load %arg0[%c0, %c0_0, %c0_1] : memref<8x8x8xf32, #tpu.memory_space<vmem>>, vector<8x8x8xf32>
    %1 = arith.truncf %0 : vector<8x8x8xf32> to vector<8x8x8xbf16>
    %c0_2 = arith.constant 0 : index
    %c0_3 = arith.constant 0 : index
    %c0_4 = arith.constant 0 : index
    %2 = vector.load %arg1[%c0_2, %c0_3, %c0_4] : memref<8x8x8xf32, #tpu.memory_space<vmem>>, vector<8x8x8xf32>
    %3 = arith.truncf %2 : vector<8x8x8xf32> to vector<8x8x8xbf16>
    "tpu.trace_start"() <{level = 10 : i32, message = "bqd,bkd->bqk"}> : () -> ()
    %cst = arith.constant dense<0.000000e+00> : vector<8x8x8xf32>
    %4 = tpu.matmul %1, %3, %cst {dimension_numbers = #tpu.dot_dimension_numbers<[2], [2], [1], [1], [0, 0, 0, 1, 1, 1], [0], [0]>} : vector<8x8x8xbf16>, vector<8x8x8xbf16>, vector<8x8x8xf32> -> vector<8x8x8xf32>
    "tpu.trace_stop"() : () -> ()
    %c0_5 = arith.constant 0 : index
    %c0_6 = arith.constant 0 : index
    %c0_7 = arith.constant 0 : index
    %5 = vector.load %arg3[%c0_5, %c0_6, %c0_7] : memref<8x8x8xf32, #tpu.memory_space<vmem>>, vector<8x8x8xf32>
    %6 = arith.addf %4, %5 : vector<8x8x8xf32>
    %c0_8 = arith.constant 0 : index
    %c0_9 = arith.constant 0 : index
    %c0_10 = arith.constant 0 : index
    %7 = vector.load %arg4[%c0_8, %c0_9, %c0_10] : memref<8x1x8xf32, #tpu.memory_space<vmem>>, vector<8x1x8xf32>
    %cst_11 = arith.constant 5.000000e-01 : f32
    %8 = vector.broadcast %cst_11 : f32 to vector<8x1x8xf32>
    %9 = arith.cmpf ogt, %7, %8 : vector<8x1x8xf32>
    %cst_12 = arith.constant -1.000000e+30 : f32
    %10 = vector.shape_cast %9 : vector<8x1x8xi1> to vector<8x1x8xi1>
    %11 = vector.broadcast %10 : vector<8x1x8xi1> to vector<8x8x8xi1>
    %12 = vector.broadcast %cst_12 : f32 to vector<8x8x8xf32>
    %13 = arith.select %11, %6, %12 : vector<8x8x8xi1>, vector<8x8x8xf32>
    %cst_13 = arith.constant dense<0xFF800000> : vector<8x8xf32>
    %14 = vector.multi_reduction <maximumf>, %13, %cst_13 [2] : vector<8x8x8xf32> to vector<8x8xf32>
    %15 = vector.shape_cast %14 : vector<8x8xf32> to vector<8x8x1xf32>
    %16 = vector.broadcast %15 : vector<8x8x1xf32> to vector<8x8x8xf32>
    %17 = arith.subf %13, %16 : vector<8x8x8xf32>
    %18 = math.exp %17 : vector<8x8x8xf32>
    %cst_14 = arith.constant dense<0.000000e+00> : vector<8x8xf32>
    %19 = vector.multi_reduction <add>, %18, %cst_14 [2] : vector<8x8x8xf32> to vector<8x8xf32>
    %20 = vector.shape_cast %19 : vector<8x8xf32> to vector<8x8x1xf32>
    %21 = tpu.reciprocal %20 {approx = true} : vector<8x8x1xf32> -> vector<8x8x1xf32>
    %22 = vector.broadcast %21 : vector<8x8x1xf32> to vector<8x8x8xf32>
    %23 = arith.mulf %18, %22 : vector<8x8x8xf32>
    %24 = arith.truncf %23 : vector<8x8x8xf32> to vector<8x8x8xbf16>
    %c0_15 = arith.constant 0 : index
    %c0_16 = arith.constant 0 : index
    %c0_17 = arith.constant 0 : index
    %25 = vector.load %arg2[%c0_15, %c0_16, %c0_17] : memref<8x8x8xf32, #tpu.memory_space<vmem>>, vector<8x8x8xf32>
    %26 = arith.truncf %25 : vector<8x8x8xf32> to vector<8x8x8xbf16>
    "tpu.trace_start"() <{level = 10 : i32, message = "bqk,bkd->bqd"}> : () -> ()
    %cst_18 = arith.constant dense<0.000000e+00> : vector<8x8x8xf32>
    %27 = tpu.matmul %24, %26, %cst_18 {dimension_numbers = #tpu.dot_dimension_numbers<[2], [1], [1], [2], [0, 0, 0, 1, 1, 2], [0], [0]>} : vector<8x8x8xbf16>, vector<8x8x8xbf16>, vector<8x8x8xf32> -> vector<8x8x8xf32>
    "tpu.trace_stop"() : () -> ()
    %c0_19 = arith.constant 0 : index
    %c0_20 = arith.constant 0 : index
    %c0_21 = arith.constant 0 : index
    %28 = vector.load %arg5[%c0_19, %c0_20, %c0_21] : memref<8x8x8xf32, #tpu.memory_space<vmem>>, vector<8x8x8xf32>
    tpu.vector_store %arg5[%c0_19, %c0_20, %c0_21], %27 {strides = array<i32>} : memref<8x8x8xf32, #tpu.memory_space<vmem>>, vector<8x8x8xf32>,
    return
  }
}

module attributes {stable_mosaic.version = 11 : i64} {
  func.func @_post_block_kernel(%arg0: memref<16x32xf32, #tpu.memory_space<vmem>>, %arg1: memref<16x32xf32, #tpu.memory_space<vmem>>, %arg2: memref<1x32xf32, #tpu.memory_space<vmem>>, %arg3: memref<1x32xf32, #tpu.memory_space<vmem>>, %arg4: memref<32x64xf32, #tpu.memory_space<vmem>>, %arg5: memref<1x64xf32, #tpu.memory_space<vmem>>, %arg6: memref<64x32xf32, #tpu.memory_space<vmem>>, %arg7: memref<1x32xf32, #tpu.memory_space<vmem>>, %arg8: memref<1x32xf32, #tpu.memory_space<vmem>>, %arg9: memref<1x32xf32, #tpu.memory_space<vmem>>, %arg10: memref<16x32xf32, #tpu.memory_space<vmem>>) attributes {dimension_semantics = [], scalar_prefetch = 0 : i64, scratch_operands = 0 : i64, tpu.core_type = #tpu.core_type<tc>} {
    %c0 = arith.constant 0 : index
    %c0_0 = arith.constant 0 : index
    %0 = vector.load %arg1[%c0, %c0_0] : memref<16x32xf32, #tpu.memory_space<vmem>>, vector<16x32xf32>
    %c0_1 = arith.constant 0 : index
    %c0_2 = arith.constant 0 : index
    %1 = vector.load %arg0[%c0_1, %c0_2] : memref<16x32xf32, #tpu.memory_space<vmem>>, vector<16x32xf32>
    %2 = arith.addf %1, %0 : vector<16x32xf32>
    %c0_3 = arith.constant 0 : index
    %c0_4 = arith.constant 0 : index
    %3 = vector.load %arg2[%c0_3, %c0_4] : memref<1x32xf32, #tpu.memory_space<vmem>>, vector<1x32xf32>
    %c0_5 = arith.constant 0 : index
    %c0_6 = arith.constant 0 : index
    %4 = vector.load %arg3[%c0_5, %c0_6] : memref<1x32xf32, #tpu.memory_space<vmem>>, vector<1x32xf32>
    %cst = arith.constant dense<0.000000e+00> : vector<16xf32>
    %5 = vector.multi_reduction <add>, %2, %cst [1] : vector<16x32xf32> to vector<16xf32>
    %6 = vector.shape_cast %5 : vector<16xf32> to vector<16x1xf32>
    %cst_7 = arith.constant 3.200000e+01 : f32
    %7 = vector.broadcast %cst_7 : f32 to vector<16x1xf32>
    %8 = arith.divf %6, %7 : vector<16x1xf32>
    %9 = vector.broadcast %8 : vector<16x1xf32> to vector<16x32xf32>
    %10 = arith.subf %2, %9 : vector<16x32xf32>
    %11 = vector.broadcast %8 : vector<16x1xf32> to vector<16x32xf32>
    %12 = arith.subf %2, %11 : vector<16x32xf32>
    %13 = arith.mulf %10, %12 : vector<16x32xf32>
    %cst_8 = arith.constant dense<0.000000e+00> : vector<16xf32>
    %14 = vector.multi_reduction <add>, %13, %cst_8 [1] : vector<16x32xf32> to vector<16xf32>
    %15 = vector.shape_cast %14 : vector<16xf32> to vector<16x1xf32>
    %cst_9 = arith.constant 3.200000e+01 : f32
    %16 = vector.broadcast %cst_9 : f32 to vector<16x1xf32>
    %17 = arith.divf %15, %16 : vector<16x1xf32>
    %18 = vector.broadcast %8 : vector<16x1xf32> to vector<16x32xf32>
    %19 = arith.subf %2, %18 : vector<16x32xf32>
    %cst_10 = arith.constant 9.99999974E-6 : f32
    %20 = vector.broadcast %cst_10 : f32 to vector<16x1xf32>
    %21 = arith.addf %17, %20 : vector<16x1xf32>
    %22 = math.rsqrt %21 : vector<16x1xf32>
    %23 = vector.broadcast %22 : vector<16x1xf32> to vector<16x32xf32>
    %24 = arith.mulf %19, %23 : vector<16x32xf32>
    %25 = vector.broadcast %3 : vector<1x32xf32> to vector<16x32xf32>
    %26 = arith.mulf %24, %25 : vector<16x32xf32>
    %27 = vector.broadcast %4 : vector<1x32xf32> to vector<16x32xf32>
    %28 = arith.addf %26, %27 : vector<16x32xf32>
    %c0_11 = arith.constant 0 : index
    %c0_12 = arith.constant 0 : index
    %29 = vector.load %arg4[%c0_11, %c0_12] : memref<32x64xf32, #tpu.memory_space<vmem>>, vector<32x64xf32>
    %30 = arith.truncf %28 : vector<16x32xf32> to vector<16x32xbf16>
    %31 = arith.truncf %29 : vector<32x64xf32> to vector<32x64xbf16>
    %cst_13 = arith.constant dense<0.000000e+00> : vector<16x64xf32>
    %32 = tpu.matmul %30, %31, %cst_13 {dimension_numbers = #tpu.dot_dimension_numbers<[1], [0], [0], [1], [0, 0, 1, 1], [], []>} : vector<16x32xbf16>, vector<32x64xbf16>, vector<16x64xf32> -> vector<16x64xf32>
    %c0_14 = arith.constant 0 : index
    %c0_15 = arith.constant 0 : index
    %33 = vector.load %arg5[%c0_14, %c0_15] : memref<1x64xf32, #tpu.memory_space<vmem>>, vector<1x64xf32>
    %34 = vector.broadcast %33 : vector<1x64xf32> to vector<16x64xf32>
    %35 = arith.addf %32, %34 : vector<16x64xf32>
    %cst_16 = arith.constant 0.000000e+00 : f32
    %36 = vector.broadcast %cst_16 : f32 to vector<16x64xf32>
    %37 = arith.cmpf oge, %35, %36 : vector<16x64xf32>
    %cst_17 = arith.constant 0.00999999977 : f32
    %38 = vector.broadcast %cst_17 : f32 to vector<16x64xf32>
    %39 = arith.mulf %38, %35 : vector<16x64xf32>
    %40 = arith.select %37, %35, %39 : vector<16x64xi1>, vector<16x64xf32>
    %c0_18 = arith.constant 0 : index
    %c0_19 = arith.constant 0 : index
    %41 = vector.load %arg6[%c0_18, %c0_19] : memref<64x32xf32, #tpu.memory_space<vmem>>, vector<64x32xf32>
    %42 = arith.truncf %40 : vector<16x64xf32> to vector<16x64xbf16>
    %43 = arith.truncf %41 : vector<64x32xf32> to vector<64x32xbf16>
    %cst_20 = arith.constant dense<0.000000e+00> : vector<16x32xf32>
    %44 = tpu.matmul %42, %43, %cst_20 {dimension_numbers = #tpu.dot_dimension_numbers<[1], [0], [0], [1], [0, 0, 1, 1], [], []>} : vector<16x64xbf16>, vector<64x32xbf16>, vector<16x32xf32> -> vector<16x32xf32>
    %45 = arith.addf %28, %44 : vector<16x32xf32>
    %c0_21 = arith.constant 0 : index
    %c0_22 = arith.constant 0 : index
    %46 = vector.load %arg7[%c0_21, %c0_22] : memref<1x32xf32, #tpu.memory_space<vmem>>, vector<1x32xf32>
    %47 = vector.broadcast %46 : vector<1x32xf32> to vector<16x32xf32>
    %48 = arith.addf %45, %47 : vector<16x32xf32>
    %c0_23 = arith.constant 0 : index
    %c0_24 = arith.constant 0 : index
    %49 = vector.load %arg8[%c0_23, %c0_24] : memref<1x32xf32, #tpu.memory_space<vmem>>, vector<1x32xf32>
    %c0_25 = arith.constant 0 : index
    %c0_26 = arith.constant 0 : index
    %50 = vector.load %arg9[%c0_25, %c0_26] : memref<1x32xf32, #tpu.memory_space<vmem>>, vector<1x32xf32>
    %cst_27 = arith.constant dense<0.000000e+00> : vector<16xf32>
    %51 = vector.multi_reduction <add>, %48, %cst_27 [1] : vector<16x32xf32> to vector<16xf32>
    %52 = vector.shape_cast %51 : vector<16xf32> to vector<16x1xf32>
    %cst_28 = arith.constant 3.200000e+01 : f32
    %53 = vector.broadcast %cst_28 : f32 to vector<16x1xf32>
    %54 = arith.divf %52, %53 : vector<16x1xf32>
    %55 = vector.broadcast %54 : vector<16x1xf32> to vector<16x32xf32>
    %56 = arith.subf %48, %55 : vector<16x32xf32>
    %57 = vector.broadcast %54 : vector<16x1xf32> to vector<16x32xf32>
    %58 = arith.subf %48, %57 : vector<16x32xf32>
    %59 = arith.mulf %56, %58 : vector<16x32xf32>
    %cst_29 = arith.constant dense<0.000000e+00> : vector<16xf32>
    %60 = vector.multi_reduction <add>, %59, %cst_29 [1] : vector<16x32xf32> to vector<16xf32>
    %61 = vector.shape_cast %60 : vector<16xf32> to vector<16x1xf32>
    %cst_30 = arith.constant 3.200000e+01 : f32
    %62 = vector.broadcast %cst_30 : f32 to vector<16x1xf32>
    %63 = arith.divf %61, %62 : vector<16x1xf32>
    %64 = vector.broadcast %54 : vector<16x1xf32> to vector<16x32xf32>
    %65 = arith.subf %48, %64 : vector<16x32xf32>
    %cst_31 = arith.constant 9.99999974E-6 : f32
    %66 = vector.broadcast %cst_31 : f32 to vector<16x1xf32>
    %67 = arith.addf %63, %66 : vector<16x1xf32>
    %68 = math.rsqrt %67 : vector<16x1xf32>
    %69 = vector.broadcast %68 : vector<16x1xf32> to vector<16x32xf32>
    %70 = arith.mulf %65, %69 : vector<16x32xf32>
    %71 = vector.broadcast %49 : vector<1x32xf32> to vector<16x32xf32>
    %72 = arith.mulf %70, %71 : vector<16x32xf32>
    %73 = vector.broadcast %50 : vector<1x32xf32> to vector<16x32xf32>
    %74 = arith.addf %72, %73 : vector<16x32xf32>
    %c0_32 = arith.constant 0 : index
    %c0_33 = arith.constant 0 : index
    %75 = vector.load %arg10[%c0_32, %c0_33] : memref<16x32xf32, #tpu.memory_space<vmem>>, vector<16x32xf32>
    tpu.vector_store %arg10[%c0_32, %c0_33], %74 {strides = array<i32>} : memref<16x32xf32, #tpu.memory_space<vmem>>, vector<16x32xf32>,
    return
  }
}

module attributes {stable_mosaic.version = 11 : i64} {
  func.func @_head_crf_kernel(%arg0: memref<16x32xf32, #tpu.memory_space<vmem>>, %arg1: memref<32x8xf32, #tpu.memory_space<vmem>>, %arg2: memref<1x8xf32, #tpu.memory_space<vmem>>, %arg3: memref<16x1xf32, #tpu.memory_space<vmem>>, %arg4: memref<8x8xf32, #tpu.memory_space<vmem>>, %arg5: memref<1x8xf32, #tpu.memory_space<vmem>>, %arg6: memref<1x8xf32, #tpu.memory_space<vmem>>, %arg7: memref<16x8xf32, #tpu.memory_space<vmem>>, %arg8: memref<2x1xf32, #tpu.memory_space<vmem>>) attributes {dimension_semantics = [], scalar_prefetch = 0 : i64, scratch_operands = 0 : i64, tpu.core_type = #tpu.core_type<tc>} {
    %c0 = arith.constant 0 : index
    %c0_0 = arith.constant 0 : index
    %0 = vector.load %arg0[%c0, %c0_0] : memref<16x32xf32, #tpu.memory_space<vmem>>, vector<16x32xf32>
    %c0_1 = arith.constant 0 : index
    %c0_2 = arith.constant 0 : index
    %1 = vector.load %arg1[%c0_1, %c0_2] : memref<32x8xf32, #tpu.memory_space<vmem>>, vector<32x8xf32>
    %cst = arith.constant dense<0.000000e+00> : vector<16x8xf32>
    %2 = tpu.matmul %0, %1, %cst {dimension_numbers = #tpu.dot_dimension_numbers<[1], [0], [0], [1], [0, 0, 1, 1], [], []>} : vector<16x32xf32>, vector<32x8xf32>, vector<16x8xf32> -> vector<16x8xf32>
    %c0_3 = arith.constant 0 : index
    %c0_4 = arith.constant 0 : index
    %3 = vector.load %arg2[%c0_3, %c0_4] : memref<1x8xf32, #tpu.memory_space<vmem>>, vector<1x8xf32>
    %4 = vector.broadcast %3 : vector<1x8xf32> to vector<16x8xf32>
    %5 = arith.addf %2, %4 : vector<16x8xf32>
    %cst_5 = arith.constant dense<0xFF800000> : vector<16xf32>
    %6 = vector.multi_reduction <maximumf>, %5, %cst_5 [1] : vector<16x8xf32> to vector<16xf32>
    %7 = vector.shape_cast %6 : vector<16xf32> to vector<16x1xf32>
    %8 = vector.broadcast %7 : vector<16x1xf32> to vector<16x8xf32>
    %9 = arith.subf %5, %8 : vector<16x8xf32>
    %10 = math.exp %9 : vector<16x8xf32>
    %cst_6 = arith.constant dense<0.000000e+00> : vector<16xf32>
    %11 = vector.multi_reduction <add>, %10, %cst_6 [1] : vector<16x8xf32> to vector<16xf32>
    %12 = vector.shape_cast %11 : vector<16xf32> to vector<16x1xf32>
    %13 = math.log %12 : vector<16x1xf32>
    %14 = vector.broadcast %13 : vector<16x1xf32> to vector<16x8xf32>
    %15 = arith.subf %9, %14 : vector<16x8xf32>
    %c0_7 = arith.constant 0 : index
    %c0_8 = arith.constant 0 : index
    %16 = vector.load %arg7[%c0_7, %c0_8] : memref<16x8xf32, #tpu.memory_space<vmem>>, vector<16x8xf32>
    tpu.vector_store %arg7[%c0_7, %c0_8], %15 {strides = array<i32>} : memref<16x8xf32, #tpu.memory_space<vmem>>, vector<16x8xf32>,
    %c0_9 = arith.constant 0 : index
    %c0_10 = arith.constant 0 : index
    %17 = vector.load %arg4[%c0_9, %c0_10] : memref<8x8xf32, #tpu.memory_space<vmem>>, vector<8x8xf32>
    %18 = vector.extract_strided_slice %15 {offsets = [0, 0], sizes = [2, 8], strides = [1, 1]} : vector<16x8xf32> to vector<2x8xf32>
    %c0_11 = arith.constant 0 : index
    %c0_12 = arith.constant 0 : index
    %19 = vector.load %arg5[%c0_11, %c0_12] : memref<1x8xf32, #tpu.memory_space<vmem>>, vector<1x8xf32>
    %20 = vector.broadcast %19 : vector<1x8xf32> to vector<2x8xf32>
    %21 = arith.addf %18, %20 : vector<2x8xf32>
    %22 = vector.extract_strided_slice %15 {offsets = [2, 0], sizes = [2, 8], strides = [1, 1]} : vector<16x8xf32> to vector<2x8xf32>
    %23 = vector.shape_cast %21 : vector<2x8xf32> to vector<2x1x8xf32>
    %24 = vector.shape_cast %22 : vector<2x8xf32> to vector<2x8x1xf32>
    %25 = vector.broadcast %23 : vector<2x1x8xf32> to vector<2x8x8xf32>
    %26 = vector.broadcast %24 : vector<2x8x1xf32> to vector<2x8x8xf32>
    %27 = arith.addf %25, %26 : vector<2x8x8xf32>
    %28 = vector.shape_cast %17 : vector<8x8xf32> to vector<1x8x8xf32>
    %29 = vector.broadcast %28 : vector<1x8x8xf32> to vector<2x8x8xf32>
    %30 = arith.addf %27, %29 : vector<2x8x8xf32>
    %cst_13 = arith.constant dense<0xFF800000> : vector<2x8xf32>
    %31 = vector.multi_reduction <maximumf>, %30, %cst_13 [2] : vector<2x8x8xf32> to vector<2x8xf32>
    %32 = vector.shape_cast %31 : vector<2x8xf32> to vector<2x8x1xf32>
    %33 = vector.broadcast %32 : vector<2x8x1xf32> to vector<2x8x8xf32>
    %34 = arith.subf %30, %33 : vector<2x8x8xf32>
    %35 = math.exp %34 : vector<2x8x8xf32>
    %cst_14 = arith.constant dense<0.000000e+00> : vector<2x8xf32>
    %36 = vector.multi_reduction <add>, %35, %cst_14 [2] : vector<2x8x8xf32> to vector<2x8xf32>
    %37 = math.log %36 : vector<2x8xf32>
    %38 = vector.shape_cast %32 : vector<2x8x1xf32> to vector<2x8xf32>
    %39 = arith.addf %37, %38 : vector<2x8xf32>
    %c2 = arith.constant 2 : index
    %c0_15 = arith.constant 0 : index
    %40 = vector.load %arg3[%c2, %c0_15] : memref<16x1xf32, #tpu.memory_space<vmem>>, vector<2x1xf32>
    %41 = vector.broadcast %40 : vector<2x1xf32> to vector<2x8xf32>
    %42 = arith.mulf %39, %41 : vector<2x8xf32>
    %cst_16 = arith.constant 1.000000e+00 : f32
    %43 = vector.broadcast %cst_16 : f32 to vector<2x1xf32>
    %44 = arith.subf %43, %40 : vector<2x1xf32>
    %45 = vector.broadcast %44 : vector<2x1xf32> to vector<2x8xf32>
    %46 = arith.mulf %21, %45 : vector<2x8xf32>
    %47 = arith.addf %42, %46 : vector<2x8xf32>
    %48 = vector.extract_strided_slice %15 {offsets = [4, 0], sizes = [2, 8], strides = [1, 1]} : vector<16x8xf32> to vector<2x8xf32>
    %49 = vector.shape_cast %47 : vector<2x8xf32> to vector<2x1x8xf32>
    %50 = vector.shape_cast %48 : vector<2x8xf32> to vector<2x8x1xf32>
    %51 = vector.broadcast %49 : vector<2x1x8xf32> to vector<2x8x8xf32>
    %52 = vector.broadcast %50 : vector<2x8x1xf32> to vector<2x8x8xf32>
    %53 = arith.addf %51, %52 : vector<2x8x8xf32>
    %54 = vector.shape_cast %17 : vector<8x8xf32> to vector<1x8x8xf32>
    %55 = vector.broadcast %54 : vector<1x8x8xf32> to vector<2x8x8xf32>
    %56 = arith.addf %53, %55 : vector<2x8x8xf32>
    %cst_17 = arith.constant dense<0xFF800000> : vector<2x8xf32>
    %57 = vector.multi_reduction <maximumf>, %56, %cst_17 [2] : vector<2x8x8xf32> to vector<2x8xf32>
    %58 = vector.shape_cast %57 : vector<2x8xf32> to vector<2x8x1xf32>
    %59 = vector.broadcast %58 : vector<2x8x1xf32> to vector<2x8x8xf32>
    %60 = arith.subf %56, %59 : vector<2x8x8xf32>
    %61 = math.exp %60 : vector<2x8x8xf32>
    %cst_18 = arith.constant dense<0.000000e+00> : vector<2x8xf32>
    %62 = vector.multi_reduction <add>, %61, %cst_18 [2] : vector<2x8x8xf32> to vector<2x8xf32>
    %63 = math.log %62 : vector<2x8xf32>
    %64 = vector.shape_cast %58 : vector<2x8x1xf32> to vector<2x8xf32>
    %65 = arith.addf %63, %64 : vector<2x8xf32>
    %c4 = arith.constant 4 : index
    %c0_19 = arith.constant 0 : index
    %66 = vector.load %arg3[%c4, %c0_19] : memref<16x1xf32, #tpu.memory_space<vmem>>, vector<2x1xf32>
    %67 = vector.broadcast %66 : vector<2x1xf32> to vector<2x8xf32>
    %68 = arith.mulf %65, %67 : vector<2x8xf32>
    %cst_20 = arith.constant 1.000000e+00 : f32
    %69 = vector.broadcast %cst_20 : f32 to vector<2x1xf32>
    %70 = arith.subf %69, %66 : vector<2x1xf32>
    %71 = vector.broadcast %70 : vector<2x1xf32> to vector<2x8xf32>
    %72 = arith.mulf %47, %71 : vector<2x8xf32>
    %73 = arith.addf %68, %72 : vector<2x8xf32>
    %74 = vector.extract_strided_slice %15 {offsets = [6, 0], sizes = [2, 8], strides = [1, 1]} : vector<16x8xf32> to vector<2x8xf32>
    %75 = vector.shape_cast %73 : vector<2x8xf32> to vector<2x1x8xf32>
    %76 = vector.shape_cast %74 : vector<2x8xf32> to vector<2x8x1xf32>
    %77 = vector.broadcast %75 : vector<2x1x8xf32> to vector<2x8x8xf32>
    %78 = vector.broadcast %76 : vector<2x8x1xf32> to vector<2x8x8xf32>
    %79 = arith.addf %77, %78 : vector<2x8x8xf32>
    %80 = vector.shape_cast %17 : vector<8x8xf32> to vector<1x8x8xf32>
    %81 = vector.broadcast %80 : vector<1x8x8xf32> to vector<2x8x8xf32>
    %82 = arith.addf %79, %81 : vector<2x8x8xf32>
    %cst_21 = arith.constant dense<0xFF800000> : vector<2x8xf32>
    %83 = vector.multi_reduction <maximumf>, %82, %cst_21 [2] : vector<2x8x8xf32> to vector<2x8xf32>
    %84 = vector.shape_cast %83 : vector<2x8xf32> to vector<2x8x1xf32>
    %85 = vector.broadcast %84 : vector<2x8x1xf32> to vector<2x8x8xf32>
    %86 = arith.subf %82, %85 : vector<2x8x8xf32>
    %87 = math.exp %86 : vector<2x8x8xf32>
    %cst_22 = arith.constant dense<0.000000e+00> : vector<2x8xf32>
    %88 = vector.multi_reduction <add>, %87, %cst_22 [2] : vector<2x8x8xf32> to vector<2x8xf32>
    %89 = math.log %88 : vector<2x8xf32>
    %90 = vector.shape_cast %84 : vector<2x8x1xf32> to vector<2x8xf32>
    %91 = arith.addf %89, %90 : vector<2x8xf32>
    %c6 = arith.constant 6 : index
    %c0_23 = arith.constant 0 : index
    %92 = vector.load %arg3[%c6, %c0_23] : memref<16x1xf32, #tpu.memory_space<vmem>>, vector<2x1xf32>
    %93 = vector.broadcast %92 : vector<2x1xf32> to vector<2x8xf32>
    %94 = arith.mulf %91, %93 : vector<2x8xf32>
    %cst_24 = arith.constant 1.000000e+00 : f32
    %95 = vector.broadcast %cst_24 : f32 to vector<2x1xf32>
    %96 = arith.subf %95, %92 : vector<2x1xf32>
    %97 = vector.broadcast %96 : vector<2x1xf32> to vector<2x8xf32>
    %98 = arith.mulf %73, %97 : vector<2x8xf32>
    %99 = arith.addf %94, %98 : vector<2x8xf32>
    %100 = vector.extract_strided_slice %15 {offsets = [8, 0], sizes = [2, 8], strides = [1, 1]} : vector<16x8xf32> to vector<2x8xf32>
    %101 = vector.shape_cast %99 : vector<2x8xf32> to vector<2x1x8xf32>
    %102 = vector.shape_cast %100 : vector<2x8xf32> to vector<2x8x1xf32>
    %103 = vector.broadcast %101 : vector<2x1x8xf32> to vector<2x8x8xf32>
    %104 = vector.broadcast %102 : vector<2x8x1xf32> to vector<2x8x8xf32>
    %105 = arith.addf %103, %104 : vector<2x8x8xf32>
    %106 = vector.shape_cast %17 : vector<8x8xf32> to vector<1x8x8xf32>
    %107 = vector.broadcast %106 : vector<1x8x8xf32> to vector<2x8x8xf32>
    %108 = arith.addf %105, %107 : vector<2x8x8xf32>
    %cst_25 = arith.constant dense<0xFF800000> : vector<2x8xf32>
    %109 = vector.multi_reduction <maximumf>, %108, %cst_25 [2] : vector<2x8x8xf32> to vector<2x8xf32>
    %110 = vector.shape_cast %109 : vector<2x8xf32> to vector<2x8x1xf32>
    %111 = vector.broadcast %110 : vector<2x8x1xf32> to vector<2x8x8xf32>
    %112 = arith.subf %108, %111 : vector<2x8x8xf32>
    %113 = math.exp %112 : vector<2x8x8xf32>
    %cst_26 = arith.constant dense<0.000000e+00> : vector<2x8xf32>
    %114 = vector.multi_reduction <add>, %113, %cst_26 [2] : vector<2x8x8xf32> to vector<2x8xf32>
    %115 = math.log %114 : vector<2x8xf32>
    %116 = vector.shape_cast %110 : vector<2x8x1xf32> to vector<2x8xf32>
    %117 = arith.addf %115, %116 : vector<2x8xf32>
    %c8 = arith.constant 8 : index
    %c0_27 = arith.constant 0 : index
    %118 = vector.load %arg3[%c8, %c0_27] : memref<16x1xf32, #tpu.memory_space<vmem>>, vector<2x1xf32>
    %119 = vector.broadcast %118 : vector<2x1xf32> to vector<2x8xf32>
    %120 = arith.mulf %117, %119 : vector<2x8xf32>
    %cst_28 = arith.constant 1.000000e+00 : f32
    %121 = vector.broadcast %cst_28 : f32 to vector<2x1xf32>
    %122 = arith.subf %121, %118 : vector<2x1xf32>
    %123 = vector.broadcast %122 : vector<2x1xf32> to vector<2x8xf32>
    %124 = arith.mulf %99, %123 : vector<2x8xf32>
    %125 = arith.addf %120, %124 : vector<2x8xf32>
    %126 = vector.extract_strided_slice %15 {offsets = [10, 0], sizes = [2, 8], strides = [1, 1]} : vector<16x8xf32> to vector<2x8xf32>
    %127 = vector.shape_cast %125 : vector<2x8xf32> to vector<2x1x8xf32>
    %128 = vector.shape_cast %126 : vector<2x8xf32> to vector<2x8x1xf32>
    %129 = vector.broadcast %127 : vector<2x1x8xf32> to vector<2x8x8xf32>
    %130 = vector.broadcast %128 : vector<2x8x1xf32> to vector<2x8x8xf32>
    %131 = arith.addf %129, %130 : vector<2x8x8xf32>
    %132 = vector.shape_cast %17 : vector<8x8xf32> to vector<1x8x8xf32>
    %133 = vector.broadcast %132 : vector<1x8x8xf32> to vector<2x8x8xf32>
    %134 = arith.addf %131, %133 : vector<2x8x8xf32>
    %cst_29 = arith.constant dense<0xFF800000> : vector<2x8xf32>
    %135 = vector.multi_reduction <maximumf>, %134, %cst_29 [2] : vector<2x8x8xf32> to vector<2x8xf32>
    %136 = vector.shape_cast %135 : vector<2x8xf32> to vector<2x8x1xf32>
    %137 = vector.broadcast %136 : vector<2x8x1xf32> to vector<2x8x8xf32>
    %138 = arith.subf %134, %137 : vector<2x8x8xf32>
    %139 = math.exp %138 : vector<2x8x8xf32>
    %cst_30 = arith.constant dense<0.000000e+00> : vector<2x8xf32>
    %140 = vector.multi_reduction <add>, %139, %cst_30 [2] : vector<2x8x8xf32> to vector<2x8xf32>
    %141 = math.log %140 : vector<2x8xf32>
    %142 = vector.shape_cast %136 : vector<2x8x1xf32> to vector<2x8xf32>
    %143 = arith.addf %141, %142 : vector<2x8xf32>
    %c10 = arith.constant 10 : index
    %c0_31 = arith.constant 0 : index
    %144 = vector.load %arg3[%c10, %c0_31] : memref<16x1xf32, #tpu.memory_space<vmem>>, vector<2x1xf32>
    %145 = vector.broadcast %144 : vector<2x1xf32> to vector<2x8xf32>
    %146 = arith.mulf %143, %145 : vector<2x8xf32>
    %cst_32 = arith.constant 1.000000e+00 : f32
    %147 = vector.broadcast %cst_32 : f32 to vector<2x1xf32>
    %148 = arith.subf %147, %144 : vector<2x1xf32>
    %149 = vector.broadcast %148 : vector<2x1xf32> to vector<2x8xf32>
    %150 = arith.mulf %125, %149 : vector<2x8xf32>
    %151 = arith.addf %146, %150 : vector<2x8xf32>
    %152 = vector.extract_strided_slice %15 {offsets = [12, 0], sizes = [2, 8], strides = [1, 1]} : vector<16x8xf32> to vector<2x8xf32>
    %153 = vector.shape_cast %151 : vector<2x8xf32> to vector<2x1x8xf32>
    %154 = vector.shape_cast %152 : vector<2x8xf32> to vector<2x8x1xf32>
    %155 = vector.broadcast %153 : vector<2x1x8xf32> to vector<2x8x8xf32>
    %156 = vector.broadcast %154 : vector<2x8x1xf32> to vector<2x8x8xf32>
    %157 = arith.addf %155, %156 : vector<2x8x8xf32>
    %158 = vector.shape_cast %17 : vector<8x8xf32> to vector<1x8x8xf32>
    %159 = vector.broadcast %158 : vector<1x8x8xf32> to vector<2x8x8xf32>
    %160 = arith.addf %157, %159 : vector<2x8x8xf32>
    %cst_33 = arith.constant dense<0xFF800000> : vector<2x8xf32>
    %161 = vector.multi_reduction <maximumf>, %160, %cst_33 [2] : vector<2x8x8xf32> to vector<2x8xf32>
    %162 = vector.shape_cast %161 : vector<2x8xf32> to vector<2x8x1xf32>
    %163 = vector.broadcast %162 : vector<2x8x1xf32> to vector<2x8x8xf32>
    %164 = arith.subf %160, %163 : vector<2x8x8xf32>
    %165 = math.exp %164 : vector<2x8x8xf32>
    %cst_34 = arith.constant dense<0.000000e+00> : vector<2x8xf32>
    %166 = vector.multi_reduction <add>, %165, %cst_34 [2] : vector<2x8x8xf32> to vector<2x8xf32>
    %167 = math.log %166 : vector<2x8xf32>
    %168 = vector.shape_cast %162 : vector<2x8x1xf32> to vector<2x8xf32>
    %169 = arith.addf %167, %168 : vector<2x8xf32>
    %c12 = arith.constant 12 : index
    %c0_35 = arith.constant 0 : index
    %170 = vector.load %arg3[%c12, %c0_35] : memref<16x1xf32, #tpu.memory_space<vmem>>, vector<2x1xf32>
    %171 = vector.broadcast %170 : vector<2x1xf32> to vector<2x8xf32>
    %172 = arith.mulf %169, %171 : vector<2x8xf32>
    %cst_36 = arith.constant 1.000000e+00 : f32
    %173 = vector.broadcast %cst_36 : f32 to vector<2x1xf32>
    %174 = arith.subf %173, %170 : vector<2x1xf32>
    %175 = vector.broadcast %174 : vector<2x1xf32> to vector<2x8xf32>
    %176 = arith.mulf %151, %175 : vector<2x8xf32>
    %177 = arith.addf %172, %176 : vector<2x8xf32>
    %178 = vector.extract_strided_slice %15 {offsets = [14, 0], sizes = [2, 8], strides = [1, 1]} : vector<16x8xf32> to vector<2x8xf32>
    %179 = vector.shape_cast %177 : vector<2x8xf32> to vector<2x1x8xf32>
    %180 = vector.shape_cast %178 : vector<2x8xf32> to vector<2x8x1xf32>
    %181 = vector.broadcast %179 : vector<2x1x8xf32> to vector<2x8x8xf32>
    %182 = vector.broadcast %180 : vector<2x8x1xf32> to vector<2x8x8xf32>
    %183 = arith.addf %181, %182 : vector<2x8x8xf32>
    %184 = vector.shape_cast %17 : vector<8x8xf32> to vector<1x8x8xf32>
    %185 = vector.broadcast %184 : vector<1x8x8xf32> to vector<2x8x8xf32>
    %186 = arith.addf %183, %185 : vector<2x8x8xf32>
    %cst_37 = arith.constant dense<0xFF800000> : vector<2x8xf32>
    %187 = vector.multi_reduction <maximumf>, %186, %cst_37 [2] : vector<2x8x8xf32> to vector<2x8xf32>
    %188 = vector.shape_cast %187 : vector<2x8xf32> to vector<2x8x1xf32>
    %189 = vector.broadcast %188 : vector<2x8x1xf32> to vector<2x8x8xf32>
    %190 = arith.subf %186, %189 : vector<2x8x8xf32>
    %191 = math.exp %190 : vector<2x8x8xf32>
    %cst_38 = arith.constant dense<0.000000e+00> : vector<2x8xf32>
    %192 = vector.multi_reduction <add>, %191, %cst_38 [2] : vector<2x8x8xf32> to vector<2x8xf32>
    %193 = math.log %192 : vector<2x8xf32>
    %194 = vector.shape_cast %188 : vector<2x8x1xf32> to vector<2x8xf32>
    %195 = arith.addf %193, %194 : vector<2x8xf32>
    %c14 = arith.constant 14 : index
    %c0_39 = arith.constant 0 : index
    %196 = vector.load %arg3[%c14, %c0_39] : memref<16x1xf32, #tpu.memory_space<vmem>>, vector<2x1xf32>
    %197 = vector.broadcast %196 : vector<2x1xf32> to vector<2x8xf32>
    %198 = arith.mulf %195, %197 : vector<2x8xf32>
    %cst_40 = arith.constant 1.000000e+00 : f32
    %199 = vector.broadcast %cst_40 : f32 to vector<2x1xf32>
    %200 = arith.subf %199, %196 : vector<2x1xf32>
    %201 = vector.broadcast %200 : vector<2x1xf32> to vector<2x8xf32>
    %202 = arith.mulf %177, %201 : vector<2x8xf32>
    %203 = arith.addf %198, %202 : vector<2x8xf32>
    %c0_41 = arith.constant 0 : index
    %c0_42 = arith.constant 0 : index
    %204 = vector.load %arg6[%c0_41, %c0_42] : memref<1x8xf32, #tpu.memory_space<vmem>>, vector<1x8xf32>
    %205 = vector.broadcast %204 : vector<1x8xf32> to vector<2x8xf32>
    %206 = arith.addf %203, %205 : vector<2x8xf32>
    %cst_43 = arith.constant dense<0xFF800000> : vector<2xf32>
    %207 = vector.multi_reduction <maximumf>, %206, %cst_43 [1] : vector<2x8xf32> to vector<2xf32>
    %208 = vector.shape_cast %207 : vector<2xf32> to vector<2x1xf32>
    %209 = vector.broadcast %208 : vector<2x1xf32> to vector<2x8xf32>
    %210 = arith.subf %206, %209 : vector<2x8xf32>
    %211 = math.exp %210 : vector<2x8xf32>
    %cst_44 = arith.constant dense<0.000000e+00> : vector<2xf32>
    %212 = vector.multi_reduction <add>, %211, %cst_44 [1] : vector<2x8xf32> to vector<2xf32>
    %213 = vector.shape_cast %212 : vector<2xf32> to vector<2x1xf32>
    %214 = math.log %213 : vector<2x1xf32>
    %215 = arith.addf %214, %208 : vector<2x1xf32>
    %c0_45 = arith.constant 0 : index
    %c0_46 = arith.constant 0 : index
    %216 = vector.load %arg8[%c0_45, %c0_46] : memref<2x1xf32, #tpu.memory_space<vmem>>, vector<2x1xf32>
    tpu.vector_store %arg8[%c0_45, %c0_46], %215 {strides = array<i32>} : memref<2x1xf32, #tpu.memory_space<vmem>>, vector<2x1xf32>,
    return
  }
}

</mosaic_0001>

<llo_original>
// kernel: tener_forward.13
$region0: #{tener_forward.13}
  #allocation0 [shape = 'u32[]', space=smem, size = 0x4, offset = 0x4, fixed_abs, tag = 'smem constant byte address 0x4 - core index']
  #allocation1 [shape = 'u32[144,128]{1,0:T(1,128)}', space=vmem, size = 0x12000, scoped, tag = 'internal scratch']
  %s0 = inlined_call_operand.vmem [shape: f32[16,32], index: 0, kind: input, shape index: {}]
  %s1 = inlined_call_operand.vmem [shape: f32[32,96], index: 1, kind: input, shape index: {}]
  %s2 = inlined_call_operand.vmem [shape: f32[1,96], index: 2, kind: input, shape index: {}]
  %s3 = inlined_call_operand.vmem [shape: f32[16,96], index: 3, kind: output, shape index: {}]
  %s4 = sld [smem:[#allocation0]]
  $region22: #{tener_forward.13} parent=0
    _
  %s6 = ssub.s32 1, %s4
  %s7 = scalar_select 0, %s6, %s4
  // Predicated region
  $region2: #{tener_forward.13} parent=0 // pred_check
    _
  $region3: #{tener_forward.13} parent=0 // pred_check_branch
    %9 = sbr.rel (0) target = $region5
  $region4: #{tener_forward.13} parent=0 // pred_region
    _
  $region5: #{tener_forward.13} parent=0 // pred_fallthru
    _
  // Predicated region
  $region6: #{tener_forward.13} parent=0 // pred_check
    _
  $region7: #{tener_forward.13} parent=0 // pred_check_branch
    %11 = sbr.rel (0) target = $region9
  $region8: #{tener_forward.13} parent=0 // pred_region
    _
  $region9: #{tener_forward.13} parent=0 // pred_fallthru
    _
  // Predicated region
  $region10: #{tener_forward.13} parent=0 // pred_check
    _
  $region11: #{tener_forward.13} parent=0 // pred_check_branch
    %13 = sbr.rel (0) target = $region13
  $region12: #{tener_forward.13} parent=0 // pred_region
    _
  $region13: #{tener_forward.13} parent=0 // pred_fallthru
    _
  %v15 = vld [vmem:[%s0] sm:$0xff]
  %v16 = vld [vmem:[%s0 + $0x8] sm:$0xff]
  %v17 = vld [vmem:[%s1] sm:$0xff]
  %v18 = vld [vmem:[%s1 + $0x8] sm:$0xff]
  %v19 = vld [vmem:[%s1 + $0x10] sm:$0xff]
  %v20 = vld [vmem:[%s1 + $0x18] sm:$0xff]
  %v21 = vpack.c.bf16 %v16, %v15
  %v22 = vpack.c.bf16 %v18, %v17
  %v23 = vpack.c.bf16 %v20, %v19
  %v24 = vld [vmem:[%s2] sm:$0x1]
  %v26 = vlaneseq
  %v27 = vshrl.u32 %v26, 7
  %v28 = vsub.s32 0, %v27
  %v29 = vrot.slane %v24, %v28
  %vm31 = vcmask 261120
  %v33 = vsel %vm31, %v21, 0
  %35 = vmatprep.subr.bf16.mxu0 0
  %36 = vmatpush1.bf16.msra.mxu0 0
  %37 = vmatprep.subr.bf16.mxu0 0
  %38 = vmatpush1.bf16.msra.mxu0 0
  %39 = vmatprep.subr.bf16.mxu0 0
  %40 = vmatpush1.bf16.msra.mxu0 0
  %41 = vmatprep.subr.bf16.mxu0 0
  %42 = vmatpush1.bf16.msra.mxu0 0
  %43 = vmatprep.subr.bf16.mxu0 0
  %44 = vmatpush1.bf16.msra.mxu0 0
  %45 = vmatprep.subr.bf16.mxu0 0
  %46 = vmatpush1.bf16.msra.mxu0 0
  %47 = vmatprep.subr.bf16.mxu0 0
  %48 = vmatpush1.bf16.msra.mxu0 %v23
  %49 = vmatprep.subr.bf16.mxu0 0
  %50 = vmatpush1.bf16.msra.mxu0 %v22
  %51 = vmatprep.subr.bf16.mxu0 0
  %52 = vmatpush2.bf16.msra.mxu0 0
  %53 = vmatprep.subr.bf16.mxu0 0
  %54 = vmatpush2.bf16.msra.mxu0 0
  %55 = vmatprep.subr.bf16.mxu0 0
  %56 = vmatpush2.bf16.msra.mxu0 0
  %57 = vmatprep.subr.bf16.mxu0 0
  %58 = vmatpush2.bf16.msra.mxu0 0
  %59 = vmatprep.subr.bf16.mxu0 0
  %60 = vmatpush2.bf16.msra.mxu0 0
  %61 = vmatprep.subr.bf16.mxu0 0
  %62 = vmatpush2.bf16.msra.mxu0 0
  %63 = vmatprep.subr.bf16.mxu0 0
  %64 = vmatpush2.bf16.msra.mxu0 0
  %65 = vmatprep.subr.bf16.mxu0 0
  %66 = vmatpush2.bf16.msra.mxu0 0
  %67 = vmatprep.mubr.bf16.mxu0 0
  %68 = vmatmul.mubr.bf16.gmra.mxu0 %v33
  %v69 = vpop.f32.mrf.mxu0
  %v70 = vadd.f32 %v29, %v69
  %v71 = vpop.f32.mrf.mxu0
  %v72 = vpop.f32.mrf.mxu0
  %v73 = vadd.f32 %v29, %v72
  %v74 = vpop.f32.mrf.mxu0
  %75 = vdwg.mxu0
  %vm76 = vcmask 785408
  %77 = vst.msk [vmem:[%s3] sm:$0xff] %vm76, %v70
  %78 = vst.msk [vmem:[%s3 + $0x8] sm:$0xff] %vm76, %v73
  // Predicated region
  $region14: #{tener_forward.13} parent=0 // pred_check
    _
  $region15: #{tener_forward.13} parent=0 // pred_check_branch
    %80 = sbr.rel (0) target = $region17
  $region16: #{tener_forward.13} parent=0 // pred_region
    _
  $region17: #{tener_forward.13} parent=0 // pred_fallthru
    _
  // Predicated region
  $region18: #{tener_forward.13} parent=0 // pred_check
    _
  $region19: #{tener_forward.13} parent=0 // pred_check_branch
    %82 = sbr.rel (0) target = $region21
  $region20: #{tener_forward.13} parent=0 // pred_region
    _
  $region21: #{tener_forward.13} parent=0 // pred_fallthru
    _

// kernel: tener_forward.12
$region0: #{tener_forward.12}
  #allocation0 [shape = 'u32[]', space=smem, size = 0x4, offset = 0x4, fixed_abs, tag = 'smem constant byte address 0x4 - core index']
  #allocation1 [shape = 'u32[144,128]{1,0:T(1,128)}', space=vmem, size = 0x12000, scoped, tag = 'internal scratch']
  %s0 = inlined_call_operand.vmem [shape: f32[16,32], index: 0, kind: input, shape index: {}]
  %s1 = inlined_call_operand.vmem [shape: f32[1,32], index: 1, kind: input, shape index: {}]
  %s2 = inlined_call_operand.vmem [shape: f32[1,32], index: 2, kind: input, shape index: {}]
  %s3 = inlined_call_operand.vmem [shape: f32[16,32], index: 3, kind: output, shape index: {}]
  %s4 = sld [smem:[#allocation0]]
  $region22: #{tener_forward.12} parent=0
    _
  %s6 = ssub.s32 1, %s4
  %s7 = scalar_select 0, %s6, %s4
  // Predicated region
  $region2: #{tener_forward.12} parent=0 // pred_check
    _
  $region3: #{tener_forward.12} parent=0 // pred_check_branch
    %9 = sbr.rel (0) target = $region5
  $region4: #{tener_forward.12} parent=0 // pred_region
    _
  $region5: #{tener_forward.12} parent=0 // pred_fallthru
    _
  // Predicated region
  $region6: #{tener_forward.12} parent=0 // pred_check
    _
  $region7: #{tener_forward.12} parent=0 // pred_check_branch
    %11 = sbr.rel (0) target = $region9
  $region8: #{tener_forward.12} parent=0 // pred_region
    _
  $region9: #{tener_forward.12} parent=0 // pred_fallthru
    _
  // Predicated region
  $region10: #{tener_forward.12} parent=0 // pred_check
    _
  $region11: #{tener_forward.12} parent=0 // pred_check_branch
    %13 = sbr.rel (0) target = $region13
  $region12: #{tener_forward.12} parent=0 // pred_region
    _
  $region13: #{tener_forward.12} parent=0 // pred_fallthru
    _
  %v14 = vld [vmem:[%s0] sm:$0xff]
  %v15 = vld [vmem:[%s0 + $0x8] sm:$0xff]
  %v16 = vld [vmem:[%s1] sm:$0x1]
  %v17 = vld [vmem:[%s2] sm:$0x1]
  %vm18 = vcmask 261120
  %v19 = vsel %vm18, %v14, 0.0
  %20 = vadd.xlane.f32.xlu0 %v19
  %v21 = vpop.xlane.xlu0 %20
  %v22 = vsel %vm18, %v15, 0.0
  %23 = vadd.xlane.f32.xlu0 %v22
  %v24 = vpop.xlane.xlu0 %23
  %v25 = vrcp.pop 32.0
  %v26 = vmul.f32 %v21, %v25
  %v27 = vmul.f32 %v24, %v25
  %v28 = vsub.f32 %v14, %v26
  %v29 = vsub.f32 %v15, %v27
  %v30 = vmul.f32 %v28, %v28
  %v31 = vmul.f32 %v29, %v29
  %v32 = vsel %vm18, %v30, 0.0
  %33 = vadd.xlane.f32.xlu0 %v32
  %v34 = vpop.xlane.xlu0 %33
  %v35 = vsel %vm18, %v31, 0.0
  %36 = vadd.xlane.f32.xlu0 %v35
  %v37 = vpop.xlane.xlu0 %36
  %v38 = vmul.f32 %v34, %v25
  %v39 = vmul.f32 %v37, %v25
  %v40 = vadd.f32 %v38, 1e-05
  %v41 = vadd.f32 %v39, 1e-05
  %v42 = vrsqrt.pop %v40
  %v43 = vrsqrt.pop %v41
  %v44 = vmul.f32 %v28, %v42
  %v45 = vmul.f32 %v29, %v43
  %v47 = vlaneseq
  %v48 = vshrl.u32 %v47, 7
  %v49 = vsub.s32 0, %v48
  %v50 = vrot.slane %v16, %v49
  %v52 = vmul.f32 %v44, %v50
  %v53 = vmul.f32 %v45, %v50
  %v55 = vlaneseq
  %v56 = vshrl.u32 %v55, 7
  %v57 = vsub.s32 0, %v56
  %v58 = vrot.slane %v17, %v57
  %v60 = vadd.f32 %v52, %v58
  %v61 = vadd.f32 %v53, %v58
  %62 = vst.msk [vmem:[%s3] sm:$0xff] %vm18, %v60
  %63 = vst.msk [vmem:[%s3 + $0x8] sm:$0xff] %vm18, %v61
  // Predicated region
  $region14: #{tener_forward.12} parent=0 // pred_check
    _
  $region15: #{tener_forward.12} parent=0 // pred_check_branch
    %65 = sbr.rel (0) target = $region17
  $region16: #{tener_forward.12} parent=0 // pred_region
    _
  $region17: #{tener_forward.12} parent=0 // pred_fallthru
    _
  // Predicated region
  $region18: #{tener_forward.12} parent=0 // pred_check
    _
  $region19: #{tener_forward.12} parent=0 // pred_check_branch
    %67 = sbr.rel (0) target = $region21
  $region20: #{tener_forward.12} parent=0 // pred_region
    _
  $region21: #{tener_forward.12} parent=0 // pred_fallthru
    _

// kernel: tener_forward.17
$region0: #{tener_forward.17}
  #allocation0 [shape = 'u32[]', space=smem, size = 0x4, offset = 0x4, fixed_abs, tag = 'smem constant byte address 0x4 - core index']
  #allocation1 [shape = 'u32[144,128]{1,0:T(1,128)}', space=vmem, size = 0x12000, scoped, tag = 'internal scratch']
  %s0 = inlined_call_operand.vmem [shape: f32[16,32], index: 0, kind: input, shape index: {}]
  %s1 = inlined_call_operand.vmem [shape: f32[32,64], index: 1, kind: input, shape index: {}]
  %s2 = inlined_call_operand.vmem [shape: f32[16,64], index: 2, kind: output, shape index: {}]
  %s3 = sld [smem:[#allocation0]]
  $region18: #{tener_forward.17} parent=0
    _
  %s5 = ssub.s32 1, %s3
  %s6 = scalar_select 0, %s5, %s3
  // Predicated region
  $region2: #{tener_forward.17} parent=0 // pred_check
    _
  $region3: #{tener_forward.17} parent=0 // pred_check_branch
    %8 = sbr.rel (0) target = $region5
  $region4: #{tener_forward.17} parent=0 // pred_region
    _
  $region5: #{tener_forward.17} parent=0 // pred_fallthru
    _
  // Predicated region
  $region6: #{tener_forward.17} parent=0 // pred_check
    _
  $region7: #{tener_forward.17} parent=0 // pred_check_branch
    %10 = sbr.rel (0) target = $region9
  $region8: #{tener_forward.17} parent=0 // pred_region
    _
  $region9: #{tener_forward.17} parent=0 // pred_fallthru
    _
  %v12 = vld [vmem:[%s0] sm:$0xff]
  %v13 = vld [vmem:[%s0 + $0x8] sm:$0xff]
  %v14 = vld [vmem:[%s1] sm:$0xff]
  %v15 = vld [vmem:[%s1 + $0x8] sm:$0xff]
  %v16 = vld [vmem:[%s1 + $0x10] sm:$0xff]
  %v17 = vld [vmem:[%s1 + $0x18] sm:$0xff]
  %v18 = vpack.c.bf16 %v13, %v12
  %v19 = vpack.c.bf16 %v15, %v14
  %v20 = vpack.c.bf16 %v17, %v16
  %vm21 = vcmask 261120
  %v23 = vsel %vm21, %v18, 0
  %25 = vmatprep.subr.bf16.mxu0 0
  %26 = vmatpush1.bf16.msra.mxu0 0
  %27 = vmatprep.subr.bf16.mxu0 0
  %28 = vmatpush1.bf16.msra.mxu0 0
  %29 = vmatprep.subr.bf16.mxu0 0
  %30 = vmatpush1.bf16.msra.mxu0 0
  %31 = vmatprep.subr.bf16.mxu0 0
  %32 = vmatpush1.bf16.msra.mxu0 0
  %33 = vmatprep.subr.bf16.mxu0 0
  %34 = vmatpush1.bf16.msra.mxu0 0
  %35 = vmatprep.subr.bf16.mxu0 0
  %36 = vmatpush1.bf16.msra.mxu0 0
  %37 = vmatprep.subr.bf16.mxu0 0
  %38 = vmatpush1.bf16.msra.mxu0 %v20
  %39 = vmatprep.subr.bf16.mxu0 0
  %40 = vmatpush1.bf16.msra.mxu0 %v19
  %41 = vmatprep.subr.bf16.mxu0 0
  %42 = vmatpush2.bf16.msra.mxu0 0
  %43 = vmatprep.subr.bf16.mxu0 0
  %44 = vmatpush2.bf16.msra.mxu0 0
  %45 = vmatprep.subr.bf16.mxu0 0
  %46 = vmatpush2.bf16.msra.mxu0 0
  %47 = vmatprep.subr.bf16.mxu0 0
  %48 = vmatpush2.bf16.msra.mxu0 0
  %49 = vmatprep.subr.bf16.mxu0 0
  %50 = vmatpush2.bf16.msra.mxu0 0
  %51 = vmatprep.subr.bf16.mxu0 0
  %52 = vmatpush2.bf16.msra.mxu0 0
  %53 = vmatprep.subr.bf16.mxu0 0
  %54 = vmatpush2.bf16.msra.mxu0 0
  %55 = vmatprep.subr.bf16.mxu0 0
  %56 = vmatpush2.bf16.msra.mxu0 0
  %57 = vmatprep.mubr.bf16.mxu0 0
  %58 = vmatmul.mubr.bf16.gmra.mxu0 %v23
  %v59 = vpop.f32.mrf.mxu0
  %v60 = vadd.f32 0.0, %v59
  %v61 = vpop.f32.mrf.mxu0
  %v62 = vpop.f32.mrf.mxu0
  %v63 = vadd.f32 0.0, %v62
  %v64 = vpop.f32.mrf.mxu0
  %65 = vdwg.mxu0
  %vm66 = vcmask 523264
  %67 = vst.msk [vmem:[%s2] sm:$0xff] %vm66, %v60
  %68 = vst.msk [vmem:[%s2 + $0x8] sm:$0xff] %vm66, %v63
  // Predicated region
  $region10: #{tener_forward.17} parent=0 // pred_check
    _
  $region11: #{tener_forward.17} parent=0 // pred_check_branch
    %70 = sbr.rel (0) target = $region13
  $region12: #{tener_forward.17} parent=0 // pred_region
    _
  $region13: #{tener_forward.17} parent=0 // pred_fallthru
    _
  // Predicated region
  $region14: #{tener_forward.17} parent=0 // pred_check
    _
  $region15: #{tener_forward.17} parent=0 // pred_check_branch
    %72 = sbr.rel (0) target = $region17
  $region16: #{tener_forward.17} parent=0 // pred_region
    _
  $region17: #{tener_forward.17} parent=0 // pred_fallthru
    _

// kernel: tener_forward.16
$region0: #{tener_forward.16}
  #allocation0 [shape = 'u32[]', space=smem, size = 0x4, offset = 0x4, fixed_abs, tag = 'smem constant byte address 0x4 - core index']
  #allocation1 [shape = 'u32[144,128]{1,0:T(1,128)}', space=vmem, size = 0x12000, scoped, tag = 'internal scratch']
  %s0 = inlined_call_operand.vmem [shape: f32[16,32], index: 0, kind: input, shape index: {}]
  %s1 = inlined_call_operand.vmem [shape: f32[32,32], index: 1, kind: input, shape index: {}]
  %s2 = inlined_call_operand.vmem [shape: f32[1,32], index: 2, kind: input, shape index: {}]
  %s3 = inlined_call_operand.vmem [shape: f32[16,32], index: 3, kind: output, shape index: {}]
  %s4 = sld [smem:[#allocation0]]
  $region22: #{tener_forward.16} parent=0
    _
  %s6 = ssub.s32 1, %s4
  %s7 = scalar_select 0, %s6, %s4
  // Predicated region
  $region2: #{tener_forward.16} parent=0 // pred_check
    _
  $region3: #{tener_forward.16} parent=0 // pred_check_branch
    %9 = sbr.rel (0) target = $region5
  $region4: #{tener_forward.16} parent=0 // pred_region
    _
  $region5: #{tener_forward.16} parent=0 // pred_fallthru
    _
  // Predicated region
  $region6: #{tener_forward.16} parent=0 // pred_check
    _
  $region7: #{tener_forward.16} parent=0 // pred_check_branch
    %11 = sbr.rel (0) target = $region9
  $region8: #{tener_forward.16} parent=0 // pred_region
    _
  $region9: #{tener_forward.16} parent=0 // pred_fallthru
    _
  // Predicated region
  $region10: #{tener_forward.16} parent=0 // pred_check
    _
  $region11: #{tener_forward.16} parent=0 // pred_check_branch
    %13 = sbr.rel (0) target = $region13
  $region12: #{tener_forward.16} parent=0 // pred_region
    _
  $region13: #{tener_forward.16} parent=0 // pred_fallthru
    _
  %v15 = vld [vmem:[%s0] sm:$0xff]
  %v16 = vld [vmem:[%s0 + $0x8] sm:$0xff]
  %v17 = vld [vmem:[%s1] sm:$0xff]
  %v18 = vld [vmem:[%s1 + $0x8] sm:$0xff]
  %v19 = vld [vmem:[%s1 + $0x10] sm:$0xff]
  %v20 = vld [vmem:[%s1 + $0x18] sm:$0xff]
  %v21 = vpack.c.bf16 %v16, %v15
  %v22 = vpack.c.bf16 %v18, %v17
  %v23 = vpack.c.bf16 %v20, %v19
  %v24 = vld [vmem:[%s2] sm:$0x1]
  %v26 = vlaneseq
  %v27 = vshrl.u32 %v26, 7
  %v28 = vsub.s32 0, %v27
  %v29 = vrot.slane %v24, %v28
  %vm31 = vcmask 261120
  %v33 = vsel %vm31, %v21, 0
  %35 = vmatprep.subr.bf16.mxu0 0
  %36 = vmatpush1.bf16.msra.mxu0 0
  %37 = vmatprep.subr.bf16.mxu0 0
  %38 = vmatpush1.bf16.msra.mxu0 0
  %39 = vmatprep.subr.bf16.mxu0 0
  %40 = vmatpush1.bf16.msra.mxu0 0
  %41 = vmatprep.subr.bf16.mxu0 0
  %42 = vmatpush1.bf16.msra.mxu0 0
  %43 = vmatprep.subr.bf16.mxu0 0
  %44 = vmatpush1.bf16.msra.mxu0 0
  %45 = vmatprep.subr.bf16.mxu0 0
  %46 = vmatpush1.bf16.msra.mxu0 0
  %47 = vmatprep.subr.bf16.mxu0 0
  %48 = vmatpush1.bf16.msra.mxu0 %v23
  %49 = vmatprep.subr.bf16.mxu0 0
  %50 = vmatpush1.bf16.msra.mxu0 %v22
  %51 = vmatprep.subr.bf16.mxu0 0
  %52 = vmatpush2.bf16.msra.mxu0 0
  %53 = vmatprep.subr.bf16.mxu0 0
  %54 = vmatpush2.bf16.msra.mxu0 0
  %55 = vmatprep.subr.bf16.mxu0 0
  %56 = vmatpush2.bf16.msra.mxu0 0
  %57 = vmatprep.subr.bf16.mxu0 0
  %58 = vmatpush2.bf16.msra.mxu0 0
  %59 = vmatprep.subr.bf16.mxu0 0
  %60 = vmatpush2.bf16.msra.mxu0 0
  %61 = vmatprep.subr.bf16.mxu0 0
  %62 = vmatpush2.bf16.msra.mxu0 0
  %63 = vmatprep.subr.bf16.mxu0 0
  %64 = vmatpush2.bf16.msra.mxu0 0
  %65 = vmatprep.subr.bf16.mxu0 0
  %66 = vmatpush2.bf16.msra.mxu0 0
  %67 = vmatprep.mubr.bf16.mxu0 0
  %68 = vmatmul.mubr.bf16.gmra.mxu0 %v33
  %v69 = vpop.f32.mrf.mxu0
  %v70 = vadd.f32 %v29, %v69
  %v71 = vpop.f32.mrf.mxu0
  %v72 = vpop.f32.mrf.mxu0
  %v73 = vadd.f32 %v29, %v72
  %v74 = vpop.f32.mrf.mxu0
  %75 = vdwg.mxu0
  %76 = vst.msk [vmem:[%s3] sm:$0xff] %vm31, %v70
  %77 = vst.msk [vmem:[%s3 + $0x8] sm:$0xff] %vm31, %v73
  // Predicated region
  $region14: #{tener_forward.16} parent=0 // pred_check
    _
  $region15: #{tener_forward.16} parent=0 // pred_check_branch
    %79 = sbr.rel (0) target = $region17
  $region16: #{tener_forward.16} parent=0 // pred_region
    _
  $region17: #{tener_forward.16} parent=0 // pred_fallthru
    _
  // Predicated region
  $region18: #{tener_forward.16} parent=0 // pred_check
    _
  $region19: #{tener_forward.16} parent=0 // pred_check_branch
    %81 = sbr.rel (0) target = $region21
  $region20: #{tener_forward.16} parent=0 // pred_region
    _
  $region21: #{tener_forward.16} parent=0 // pred_fallthru
    _

// kernel: tener_forward.14
$region0: #{tener_forward.14}
  #allocation0 [shape = 'u32[]', space=smem, size = 0x4, offset = 0x4, fixed_abs, tag = 'smem constant byte address 0x4 - core index']
  #allocation1 [shape = 'u32[144,128]{1,0:T(1,128)}', space=vmem, size = 0x12000, scoped, tag = 'internal scratch']
  %s0 = inlined_call_operand.vmem [shape: f32[8,8,8], index: 0, kind: input, shape index: {}]
  %s1 = inlined_call_operand.vmem [shape: f32[8,8,8], index: 1, kind: input, shape index: {}]
  %s2 = inlined_call_operand.vmem [shape: f32[8,8,8], index: 2, kind: input, shape index: {}]
  %s3 = inlined_call_operand.vmem [shape: f32[8,1,8], index: 3, kind: input, shape index: {}]
  %s4 = inlined_call_operand.vmem [shape: f32[8,8,8], index: 4, kind: output, shape index: {}]
  %s5 = sld [smem:[#allocation0]]
  $region26: #{tener_forward.14} parent=0
    _
  %s7 = ssub.s32 1, %s5
  %s8 = scalar_select 0, %s7, %s5
  // Predicated region
  $region2: #{tener_forward.14} parent=0 // pred_check
    _
  $region3: #{tener_forward.14} parent=0 // pred_check_branch
    %10 = sbr.rel (0) target = $region5
  $region4: #{tener_forward.14} parent=0 // pred_region
    _
  $region5: #{tener_forward.14} parent=0 // pred_fallthru
    _
  // Predicated region
  $region6: #{tener_forward.14} parent=0 // pred_check
    _
  $region7: #{tener_forward.14} parent=0 // pred_check_branch
    %12 = sbr.rel (0) target = $region9
  $region8: #{tener_forward.14} parent=0 // pred_region
    _
  $region9: #{tener_forward.14} parent=0 // pred_fallthru
    _
  // Predicated region
  $region10: #{tener_forward.14} parent=0 // pred_check
    _
  $region11: #{tener_forward.14} parent=0 // pred_check_branch
    %14 = sbr.rel (0) target = $region13
  $region12: #{tener_forward.14} parent=0 // pred_region
    _
  $region13: #{tener_forward.14} parent=0 // pred_fallthru
    _
  // Predicated region
  $region14: #{tener_forward.14} parent=0 // pred_check
    _
  $region15: #{tener_forward.14} parent=0 // pred_check_branch
    %16 = sbr.rel (0) target = $region17
  $region16: #{tener_forward.14} parent=0 // pred_region
    _
  $region17: #{tener_forward.14} parent=0 // pred_fallthru
    _
  %v18 = vld [vmem:[%s0] sm:$0xff]
  %v19 = vld [vmem:[%s0 + $0x8] sm:$0xff]
  %v20 = vld [vmem:[%s0 + $0x10] sm:$0xff]
  %v21 = vld [vmem:[%s0 + $0x18] sm:$0xff]
  %v22 = vld [vmem:[%s0 + $0x20] sm:$0xff]
  %v23 = vld [vmem:[%s0 + $0x28] sm:$0xff]
  %v24 = vld [vmem:[%s0 + $0x30] sm:$0xff]
  %v25 = vld [vmem:[%s0 + $0x38] sm:$0xff]
  %v26 = vmul.f32 %v18, 0.35355338
  %v27 = vmul.f32 %v19, 0.35355338
  %v28 = vmul.f32 %v20, 0.35355338
  %v29 = vmul.f32 %v21, 0.35355338
  %v30 = vmul.f32 %v22, 0.35355338
  %v31 = vmul.f32 %v23, 0.35355338
  %v32 = vmul.f32 %v24, 0.35355338
  %v33 = vmul.f32 %v25, 0.35355338
  %v34 = vpack.c.bf16 %v26, %v26
  %v35 = vpack.c.bf16 %v27, %v27
  %v36 = vpack.c.bf16 %v28, %v28
  %v37 = vpack.c.bf16 %v29, %v29
  %v38 = vpack.c.bf16 %v30, %v30
  %v39 = vpack.c.bf16 %v31, %v31
  %v40 = vpack.c.bf16 %v32, %v32
  %v41 = vpack.c.bf16 %v33, %v33
  %v42 = vld [vmem:[%s1] sm:$0xff]
  %v43 = vld [vmem:[%s1 + $0x8] sm:$0xff]
  %v44 = vld [vmem:[%s1 + $0x10] sm:$0xff]
  %v45 = vld [vmem:[%s1 + $0x18] sm:$0xff]
  %v46 = vld [vmem:[%s1 + $0x20] sm:$0xff]
  %v47 = vld [vmem:[%s1 + $0x28] sm:$0xff]
  %v48 = vld [vmem:[%s1 + $0x30] sm:$0xff]
  %v49 = vld [vmem:[%s1 + $0x38] sm:$0xff]
  %v50 = vpack.c.bf16 %v42, %v42
  %v51 = vpack.c.bf16 %v43, %v43
  %v52 = vpack.c.bf16 %v44, %v44
  %v53 = vpack.c.bf16 %v45, %v45
  %v54 = vpack.c.bf16 %v46, %v46
  %v55 = vpack.c.bf16 %v47, %v47
  %v56 = vpack.c.bf16 %v48, %v48
  %v57 = vpack.c.bf16 %v49, %v49
  %vm58 = vcmask 64512
  %v60 = vsel %vm58, %v34, 0
  %v63 = vsel %vm58, %v50, 0
  %65 = vmatprep.subr.bf16.mxu0 0
  %66 = vmatpush1.bf16.xpose.msra.mxu0 0
  %67 = vmatprep.subr.bf16.mxu0 0
  %68 = vmatpush1.bf16.xpose.msra.mxu0 0
  %69 = vmatprep.subr.bf16.mxu0 0
  %70 = vmatpush1.bf16.xpose.msra.mxu0 0
  %71 = vmatprep.subr.bf16.mxu0 0
  %72 = vmatpush1.bf16.xpose.msra.mxu0 0
  %73 = vmatprep.subr.bf16.mxu0 0
  %74 = vmatpush1.bf16.xpose.msra.mxu0 0
  %75 = vmatprep.subr.bf16.mxu0 0
  %76 = vmatpush1.bf16.xpose.msra.mxu0 0
  %77 = vmatprep.subr.bf16.mxu0 0
  %78 = vmatpush1.bf16.xpose.msra.mxu0 0
  %79 = vmatprep.subr.bf16.mxu0 0
  %80 = vmatpush1.bf16.xpose.msra.mxu0 %v63
  %81 = vmatprep.subr.bf16.mxu0 0
  %82 = vmatpush2.bf16.xpose.msra.mxu0 0
  %83 = vmatprep.subr.bf16.mxu0 0
  %84 = vmatpush2.bf16.xpose.msra.mxu0 0
  %85 = vmatprep.subr.bf16.mxu0 0
  %86 = vmatpush2.bf16.xpose.msra.mxu0 0
  %87 = vmatprep.subr.bf16.mxu0 0
  %88 = vmatpush2.bf16.xpose.msra.mxu0 0
  %89 = vmatprep.subr.bf16.mxu0 0
  %90 = vmatpush2.bf16.xpose.msra.mxu0 0
  %91 = vmatprep.subr.bf16.mxu0 0
  %92 = vmatpush2.bf16.xpose.msra.mxu0 0
  %93 = vmatprep.subr.bf16.mxu0 0
  %94 = vmatpush2.bf16.xpose.msra.mxu0 0
  %95 = vmatprep.subr.bf16.mxu0 0
  %96 = vmatpush2.bf16.xpose.msra.mxu0 0
  %97 = vmatprep.mubr.bf16.mxu0 0
  %98 = vmatmul.mubr.bf16.gmra.mxu0 %v60
  %v99 = vpop.f32.mrf.mxu0
  %v100 = vadd.f32 0.0, %v99
  %v101 = vpop.f32.mrf.mxu0
  %v102 = vpop.f32.mrf.mxu0
  %v103 = vpop.f32.mrf.mxu0
  %104 = vdwg.mxu0
  %v106 = vsel %vm58, %v35, 0
  %v109 = vsel %vm58, %v51, 0
  %111 = vmatprep.subr.bf16.mxu0 0
  %112 = vmatpush1.bf16.xpose.msra.mxu0 0
  %113 = vmatprep.subr.bf16.mxu0 0
  %114 = vmatpush1.bf16.xpose.msra.mxu0 0
  %115 = vmatprep.subr.bf16.mxu0 0
  %116 = vmatpush1.bf16.xpose.msra.mxu0 0
  %117 = vmatprep.subr.bf16.mxu0 0
  %118 = vmatpush1.bf16.xpose.msra.mxu0 0
  %119 = vmatprep.subr.bf16.mxu0 0
  %120 = vmatpush1.bf16.xpose.msra.mxu0 0
  %121 = vmatprep.subr.bf16.mxu0 0
  %122 = vmatpush1.bf16.xpose.msra.mxu0 0
  %123 = vmatprep.subr.bf16.mxu0 0
  %124 = vmatpush1.bf16.xpose.msra.mxu0 0
  %125 = vmatprep.subr.bf16.mxu0 0
  %126 = vmatpush1.bf16.xpose.msra.mxu0 %v109
  %127 = vmatprep.subr.bf16.mxu0 0
  %128 = vmatpush2.bf16.xpose.msra.mxu0 0
  %129 = vmatprep.subr.bf16.mxu0 0
  %130 = vmatpush2.bf16.xpose.msra.mxu0 0
  %131 = vmatprep.subr.bf16.mxu0 0
  %132 = vmatpush2.bf16.xpose.msra.mxu0 0
  %133 = vmatprep.subr.bf16.mxu0 0
  %134 = vmatpush2.bf16.xpose.msra.mxu0 0
  %135 = vmatprep.subr.bf16.mxu0 0
  %136 = vmatpush2.bf16.xpose.msra.mxu0 0
  %137 = vmatprep.subr.bf16.mxu0 0
  %138 = vmatpush2.bf16.xpose.msra.mxu0 0
  %139 = vmatprep.subr.bf16.mxu0 0
  %140 = vmatpush2.bf16.xpose.msra.mxu0 0
  %141 = vmatprep.subr.bf16.mxu0 0
  %142 = vmatpush2.bf16.xpose.msra.mxu0 0
  %143 = vmatprep.mubr.bf16.mxu0 0
  %144 = vmatmul.mubr.bf16.gmra.mxu0 %v106
  %v145 = vpop.f32.mrf.mxu0
  %v146 = vadd.f32 0.0, %v145
  %v147 = vpop.f32.mrf.mxu0
  %v148 = vpop.f32.mrf.mxu0
  %v149 = vpop.f32.mrf.mxu0
  %150 = vdwg.mxu0
  %v152 = vsel %vm58, %v36, 0
  %v155 = vsel %vm58, %v52, 0
  %157 = vmatprep.subr.bf16.mxu0 0
  %158 = vmatpush1.bf16.xpose.msra.mxu0 0
  %159 = vmatprep.subr.bf16.mxu0 0
  %160 = vmatpush1.bf16.xpose.msra.mxu0 0
  %161 = vmatprep.subr.bf16.mxu0 0
  %162 = vmatpush1.bf16.xpose.msra.mxu0 0
  %163 = vmatprep.subr.bf16.mxu0 0
  %164 = vmatpush1.bf16.xpose.msra.mxu0 0
  %165 = vmatprep.subr.bf16.mxu0 0
  %166 = vmatpush1.bf16.xpose.msra.mxu0 0
  %167 = vmatprep.subr.bf16.mxu0 0
  %168 = vmatpush1.bf16.xpose.msra.mxu0 0
  %169 = vmatprep.subr.bf16.mxu0 0
  %170 = vmatpush1.bf16.xpose.msra.mxu0 0
  %171 = vmatprep.subr.bf16.mxu0 0
  %172 = vmatpush1.bf16.xpose.msra.mxu0 %v155
  %173 = vmatprep.subr.bf16.mxu0 0
  %174 = vmatpush2.bf16.xpose.msra.mxu0 0
  %175 = vmatprep.subr.bf16.mxu0 0
  %176 = vmatpush2.bf16.xpose.msra.mxu0 0
  %177 = vmatprep.subr.bf16.mxu0 0
  %178 = vmatpush2.bf16.xpose.msra.mxu0 0
  %179 = vmatprep.subr.bf16.mxu0 0
  %180 = vmatpush2.bf16.xpose.msra.mxu0 0
  %181 = vmatprep.subr.bf16.mxu0 0
  %182 = vmatpush2.bf16.xpose.msra.mxu0 0
  %183 = vmatprep.subr.bf16.mxu0 0
  %184 = vmatpush2.bf16.xpose.msra.mxu0 0
  %185 = vmatprep.subr.bf16.mxu0 0
  %186 = vmatpush2.bf16.xpose.msra.mxu0 0
  %187 = vmatprep.subr.bf16.mxu0 0
  %188 = vmatpush2.bf16.xpose.msra.mxu0 0
  %189 = vmatprep.mubr.bf16.mxu0 0
  %190 = vmatmul.mubr.bf16.gmra.mxu0 %v152
  %v191 = vpop.f32.mrf.mxu0
  %v192 = vadd.f32 0.0, %v191
  %v193 = vpop.f32.mrf.mxu0
  %v194 = vpop.f32.mrf.mxu0
  %v195 = vpop.f32.mrf.mxu0
  %196 = vdwg.mxu0
  %v198 = vsel %vm58, %v37, 0
  %v201 = vsel %vm58, %v53, 0
  %203 = vmatprep.subr.bf16.mxu0 0
  %204 = vmatpush1.bf16.xpose.msra.mxu0 0
  %205 = vmatprep.subr.bf16.mxu0 0
  %206 = vmatpush1.bf16.xpose.msra.mxu0 0
  %207 = vmatprep.subr.bf16.mxu0 0
  %208 = vmatpush1.bf16.xpose.msra.mxu0 0
  %209 = vmatprep.subr.bf16.mxu0 0
  %210 = vmatpush1.bf16.xpose.msra.mxu0 0
  %211 = vmatprep.subr.bf16.mxu0 0
  %212 = vmatpush1.bf16.xpose.msra.mxu0 0
  %213 = vmatprep.subr.bf16.mxu0 0
  %214 = vmatpush1.bf16.xpose.msra.mxu0 0
  %215 = vmatprep.subr.bf16.mxu0 0
  %216 = vmatpush1.bf16.xpose.msra.mxu0 0
  %217 = vmatprep.subr.bf16.mxu0 0
  %218 = vmatpush1.bf16.xpose.msra.mxu0 %v201
  %219 = vmatprep.subr.bf16.mxu0 0
  %220 = vmatpush2.bf16.xpose.msra.mxu0 0
  %221 = vmatprep.subr.bf16.mxu0 0
  %222 = vmatpush2.bf16.xpose.msra.mxu0 0
  %223 = vmatprep.subr.bf16.mxu0 0
  %224 = vmatpush2.bf16.xpose.msra.mxu0 0
  %225 = vmatprep.subr.bf16.mxu0 0
  %226 = vmatpush2.bf16.xpose.msra.mxu0 0
  %227 = vmatprep.subr.bf16.mxu0 0
  %228 = vmatpush2.bf16.xpose.msra.mxu0 0
  %229 = vmatprep.subr.bf16.mxu0 0
  %230 = vmatpush2.bf16.xpose.msra.mxu0 0
  %231 = vmatprep.subr.bf16.mxu0 0
  %232 = vmatpush2.bf16.xpose.msra.mxu0 0
  %233 = vmatprep.subr.bf16.mxu0 0
  %234 = vmatpush2.bf16.xpose.msra.mxu0 0
  %235 = vmatprep.mubr.bf16.mxu0 0
  %236 = vmatmul.mubr.bf16.gmra.mxu0 %v198
  %v237 = vpop.f32.mrf.mxu0
  %v238 = vadd.f32 0.0, %v237
  %v239 = vpop.f32.mrf.mxu0
  %v240 = vpop.f32.mrf.mxu0
  %v241 = vpop.f32.mrf.mxu0
  %242 = vdwg.mxu0
  %v244 = vsel %vm58, %v38, 0
  %v247 = vsel %vm58, %v54, 0
  %249 = vmatprep.subr.bf16.mxu0 0
  %250 = vmatpush1.bf16.xpose.msra.mxu0 0
  %251 = vmatprep.subr.bf16.mxu0 0
  %252 = vmatpush1.bf16.xpose.msra.mxu0 0
  %253 = vmatprep.subr.bf16.mxu0 0
  %254 = vmatpush1.bf16.xpose.msra.mxu0 0
  %255 = vmatprep.subr.bf16.mxu0 0
  %256 = vmatpush1.bf16.xpose.msra.mxu0 0
  %257 = vmatprep.subr.bf16.mxu0 0
  %258 = vmatpush1.bf16.xpose.msra.mxu0 0
  %259 = vmatprep.subr.bf16.mxu0 0
  %260 = vmatpush1.bf16.xpose.msra.mxu0 0
  %261 = vmatprep.subr.bf16.mxu0 0
  %262 = vmatpush1.bf16.xpose.msra.mxu0 0
  %263 = vmatprep.subr.bf16.mxu0 0
  %264 = vmatpush1.bf16.xpose.msra.mxu0 %v247
  %265 = vmatprep.subr.bf16.mxu0 0
  %266 = vmatpush2.bf16.xpose.msra.mxu0 0
  %267 = vmatprep.subr.bf16.mxu0 0
  %268 = vmatpush2.bf16.xpose.msra.mxu0 0
  %269 = vmatprep.subr.bf16.mxu0 0
  %270 = vmatpush2.bf16.xpose.msra.mxu0 0
  %271 = vmatprep.subr.bf16.mxu0 0
  %272 = vmatpush2.bf16.xpose.msra.mxu0 0
  %273 = vmatprep.subr.bf16.mxu0 0
  %274 = vmatpush2.bf16.xpose.msra.mxu0 0
  %275 = vmatprep.subr.bf16.mxu0 0
  %276 = vmatpush2.bf16.xpose.msra.mxu0 0
  %277 = vmatprep.subr.bf16.mxu0 0
  %278 = vmatpush2.bf16.xpose.msra.mxu0 0
  %279 = vmatprep.subr.bf16.mxu0 0
  %280 = vmatpush2.bf16.xpose.msra.mxu0 0
  %281 = vmatprep.mubr.bf16.mxu0 0
  %282 = vmatmul.mubr.bf16.gmra.mxu0 %v244
  %v283 = vpop.f32.mrf.mxu0
  %v284 = vadd.f32 0.0, %v283
  %v285 = vpop.f32.mrf.mxu0
  %v286 = vpop.f32.mrf.mxu0
  %v287 = vpop.f32.mrf.mxu0
  %288 = vdwg.mxu0
  %v290 = vsel %vm58, %v39, 0
  %v293 = vsel %vm58, %v55, 0
  %295 = vmatprep.subr.bf16.mxu0 0
  %296 = vmatpush1.bf16.xpose.msra.mxu0 0
  %297 = vmatprep.subr.bf16.mxu0 0
  %298 = vmatpush1.bf16.xpose.msra.mxu0 0
  %299 = vmatprep.subr.bf16.mxu0 0
  %300 = vmatpush1.bf16.xpose.msra.mxu0 0
  %301 = vmatprep.subr.bf16.mxu0 0
  %302 = vmatpush1.bf16.xpose.msra.mxu0 0
  %303 = vmatprep.subr.bf16.mxu0 0
  %304 = vmatpush1.bf16.xpose.msra.mxu0 0
  %305 = vmatprep.subr.bf16.mxu0 0
  %306 = vmatpush1.bf16.xpose.msra.mxu0 0
  %307 = vmatprep.subr.bf16.mxu0 0
  %308 = vmatpush1.bf16.xpose.msra.mxu0 0
  %309 = vmatprep.subr.bf16.mxu0 0
  %310 = vmatpush1.bf16.xpose.msra.mxu0 %v293
  %311 = vmatprep.subr.bf16.mxu0 0
  %312 = vmatpush2.bf16.xpose.msra.mxu0 0
  %313 = vmatprep.subr.bf16.mxu0 0
  %314 = vmatpush2.bf16.xpose.msra.mxu0 0
  %315 = vmatprep.subr.bf16.mxu0 0
  %316 = vmatpush2.bf16.xpose.msra.mxu0 0
  %317 = vmatprep.subr.bf16.mxu0 0
  %318 = vmatpush2.bf16.xpose.msra.mxu0 0
  %319 = vmatprep.subr.bf16.mxu0 0
  %320 = vmatpush2.bf16.xpose.msra.mxu0 0
  %321 = vmatprep.subr.bf16.mxu0 0
  %322 = vmatpush2.bf16.xpose.msra.mxu0 0
  %323 = vmatprep.subr.bf16.mxu0 0
  %324 = vmatpush2.bf16.xpose.msra.mxu0 0
  %325 = vmatprep.subr.bf16.mxu0 0
  %326 = vmatpush2.bf16.xpose.msra.mxu0 0
  %327 = vmatprep.mubr.bf16.mxu0 0
  %328 = vmatmul.mubr.bf16.gmra.mxu0 %v290
  %v329 = vpop.f32.mrf.mxu0
  %v330 = vadd.f32 0.0, %v329
  %v331 = vpop.f32.mrf.mxu0
  %v332 = vpop.f32.mrf.mxu0
  %v333 = vpop.f32.mrf.mxu0
  %334 = vdwg.mxu0
  %v336 = vsel %vm58, %v40, 0
  %v339 = vsel %vm58, %v56, 0
  %341 = vmatprep.subr.bf16.mxu0 0
  %342 = vmatpush1.bf16.xpose.msra.mxu0 0
  %343 = vmatprep.subr.bf16.mxu0 0
  %344 = vmatpush1.bf16.xpose.msra.mxu0 0
  %345 = vmatprep.subr.bf16.mxu0 0
  %346 = vmatpush1.bf16.xpose.msra.mxu0 0
  %347 = vmatprep.subr.bf16.mxu0 0
  %348 = vmatpush1.bf16.xpose.msra.mxu0 0
  %349 = vmatprep.subr.bf16.mxu0 0
  %350 = vmatpush1.bf16.xpose.msra.mxu0 0
  %351 = vmatprep.subr.bf16.mxu0 0
  %352 = vmatpush1.bf16.xpose.msra.mxu0 0
  %353 = vmatprep.subr.bf16.mxu0 0
  %354 = vmatpush1.bf16.xpose.msra.mxu0 0
  %355 = vmatprep.subr.bf16.mxu0 0
  %356 = vmatpush1.bf16.xpose.msra.mxu0 %v339
  %357 = vmatprep.subr.bf16.mxu0 0
  %358 = vmatpush2.bf16.xpose.msra.mxu0 0
  %359 = vmatprep.subr.bf16.mxu0 0
  %360 = vmatpush2.bf16.xpose.msra.mxu0 0
  %361 = vmatprep.subr.bf16.mxu0 0
  %362 = vmatpush2.bf16.xpose.msra.mxu0 0
  %363 = vmatprep.subr.bf16.mxu0 0
  %364 = vmatpush2.bf16.xpose.msra.mxu0 0
  %365 = vmatprep.subr.bf16.mxu0 0
  %366 = vmatpush2.bf16.xpose.msra.mxu0 0
  %367 = vmatprep.subr.bf16.mxu0 0
  %368 = vmatpush2.bf16.xpose.msra.mxu0 0
  %369 = vmatprep.subr.bf16.mxu0 0
  %370 = vmatpush2.bf16.xpose.msra.mxu0 0
  %371 = vmatprep.subr.bf16.mxu0 0
  %372 = vmatpush2.bf16.xpose.msra.mxu0 0
  %373 = vmatprep.mubr.bf16.mxu0 0
  %374 = vmatmul.mubr.bf16.gmra.mxu0 %v336
  %v375 = vpop.f32.mrf.mxu0
  %v376 = vadd.f32 0.0, %v375
  %v377 = vpop.f32.mrf.mxu0
  %v378 = vpop.f32.mrf.mxu0
  %v379 = vpop.f32.mrf.mxu0
  %380 = vdwg.mxu0
  %v382 = vsel %vm58, %v41, 0
  %v385 = vsel %vm58, %v57, 0
  %387 = vmatprep.subr.bf16.mxu0 0
  %388 = vmatpush1.bf16.xpose.msra.mxu0 0
  %389 = vmatprep.subr.bf16.mxu0 0
  %390 = vmatpush1.bf16.xpose.msra.mxu0 0
  %391 = vmatprep.subr.bf16.mxu0 0
  %392 = vmatpush1.bf16.xpose.msra.mxu0 0
  %393 = vmatprep.subr.bf16.mxu0 0
  %394 = vmatpush1.bf16.xpose.msra.mxu0 0
  %395 = vmatprep.subr.bf16.mxu0 0
  %396 = vmatpush1.bf16.xpose.msra.mxu0 0
  %397 = vmatprep.subr.bf16.mxu0 0
  %398 = vmatpush1.bf16.xpose.msra.mxu0 0
  %399 = vmatprep.subr.bf16.mxu0 0
  %400 = vmatpush1.bf16.xpose.msra.mxu0 0
  %401 = vmatprep.subr.bf16.mxu0 0
  %402 = vmatpush1.bf16.xpose.msra.mxu0 %v385
  %403 = vmatprep.subr.bf16.mxu0 0
  %404 = vmatpush2.bf16.xpose.msra.mxu0 0
  %405 = vmatprep.subr.bf16.mxu0 0
  %406 = vmatpush2.bf16.xpose.msra.mxu0 0
  %407 = vmatprep.subr.bf16.mxu0 0
  %408 = vmatpush2.bf16.xpose.msra.mxu0 0
  %409 = vmatprep.subr.bf16.mxu0 0
  %410 = vmatpush2.bf16.xpose.msra.mxu0 0
  %411 = vmatprep.subr.bf16.mxu0 0
  %412 = vmatpush2.bf16.xpose.msra.mxu0 0
  %413 = vmatprep.subr.bf16.mxu0 0
  %414 = vmatpush2.bf16.xpose.msra.mxu0 0
  %415 = vmatprep.subr.bf16.mxu0 0
  %416 = vmatpush2.bf16.xpose.msra.mxu0 0
  %417 = vmatprep.subr.bf16.mxu0 0
  %418 = vmatpush2.bf16.xpose.msra.mxu0 0
  %419 = vmatprep.mubr.bf16.mxu0 0
  %420 = vmatmul.mubr.bf16.gmra.mxu0 %v382
  %v421 = vpop.f32.mrf.mxu0
  %v422 = vadd.f32 0.0, %v421
  %v423 = vpop.f32.mrf.mxu0
  %v424 = vpop.f32.mrf.mxu0
  %v425 = vpop.f32.mrf.mxu0
  %426 = vdwg.mxu0
  %v427 = vld [vmem:[%s3] sm:$0x1]
  %v428 = vld [vmem:[%s3 + $0x1] sm:$0x1]
  %v429 = vld [vmem:[%s3 + $0x2] sm:$0x1]
  %v430 = vld [vmem:[%s3 + $0x3] sm:$0x1]
  %v431 = vld [vmem:[%s3 + $0x4] sm:$0x1]
  %v432 = vld [vmem:[%s3 + $0x5] sm:$0x1]
  %v433 = vld [vmem:[%s3 + $0x6] sm:$0x1]
  %v434 = vld [vmem:[%s3 + $0x7] sm:$0x1]
  %vm435 = vcmp.gt.f32.partialorder %v427, 0.5
  %vm436 = vcmp.gt.f32.partialorder %v428, 0.5
  %vm437 = vcmp.gt.f32.partialorder %v429, 0.5
  %vm438 = vcmp.gt.f32.partialorder %v430, 0.5
  %vm439 = vcmp.gt.f32.partialorder %v431, 0.5
  %vm440 = vcmp.gt.f32.partialorder %v432, 0.5
  %vm441 = vcmp.gt.f32.partialorder %v433, 0.5
  %vm442 = vcmp.gt.f32.partialorder %v434, 0.5
  %v443 = vsel %vm435, 1, 0
  %v444 = vsel %vm436, 1, 0
  %v445 = vsel %vm437, 1, 0
  %v446 = vsel %vm438, 1, 0
  %v447 = vsel %vm439, 1, 0
  %v448 = vsel %vm440, 1, 0
  %v449 = vsel %vm441, 1, 0
  %v450 = vsel %vm442, 1, 0
  %v451 = vlaneseq
  %v452 = vshrl.u32 %v451, 7
  %v453 = vsub.s32 0, %v452
  %v454 = vrot.slane %v443, %v453
  %v455 = vlaneseq
  %v456 = vshrl.u32 %v455, 7
  %v457 = vsub.s32 0, %v456
  %v458 = vrot.slane %v444, %v457
  %v459 = vlaneseq
  %v460 = vshrl.u32 %v459, 7
  %v461 = vsub.s32 0, %v460
  %v462 = vrot.slane %v445, %v461
  %v463 = vlaneseq
  %v464 = vshrl.u32 %v463, 7
  %v465 = vsub.s32 0, %v464
  %v466 = vrot.slane %v446, %v465
  %v467 = vlaneseq
  %v468 = vshrl.u32 %v467, 7
  %v469 = vsub.s32 0, %v468
  %v470 = vrot.slane %v447, %v469
  %v471 = vlaneseq
  %v472 = vshrl.u32 %v471, 7
  %v473 = vsub.s32 0, %v472
  %v474 = vrot.slane %v448, %v473
  %v475 = vlaneseq
  %v476 = vshrl.u32 %v475, 7
  %v477 = vsub.s32 0, %v476
  %v478 = vrot.slane %v449, %v477
  %v479 = vlaneseq
  %v480 = vshrl.u32 %v479, 7
  %v481 = vsub.s32 0, %v480
  %v482 = vrot.slane %v450, %v481
  %vm483 = vcmp.eq.s32.totalorder %v454, 1
  %vm484 = vcmp.eq.s32.totalorder %v458, 1
  %vm485 = vcmp.eq.s32.totalorder %v462, 1
  %vm486 = vcmp.eq.s32.totalorder %v466, 1
  %vm487 = vcmp.eq.s32.totalorder %v470, 1
  %vm488 = vcmp.eq.s32.totalorder %v474, 1
  %vm489 = vcmp.eq.s32.totalorder %v478, 1
  %vm490 = vcmp.eq.s32.totalorder %v482, 1
  %v491 = vsel %vm483, %v100, -1e+30
  %v492 = vsel %vm484, %v146, -1e+30
  %v493 = vsel %vm485, %v192, -1e+30
  %v494 = vsel %vm486, %v238, -1e+30
  %v495 = vsel %vm487, %v284, -1e+30
  %v496 = vsel %vm488, %v330, -1e+30
  %v497 = vsel %vm489, %v376, -1e+30
  %v498 = vsel %vm490, %v422, -1e+30
  %v499 = vsel %vm58, %v491, -inf
  %500 = vmax.xlane.f32.xlu0 %v499
  %v501 = vpop.xlane.xlu0 %500
  %v502 = vsel %vm58, %v492, -inf
  %503 = vmax.xlane.f32.xlu0 %v502
  %v504 = vpop.xlane.xlu0 %503
  %v505 = vsel %vm58, %v493, -inf
  %506 = vmax.xlane.f32.xlu0 %v505
  %v507 = vpop.xlane.xlu0 %506
  %v508 = vsel %vm58, %v494, -inf
  %509 = vmax.xlane.f32.xlu0 %v508
  %v510 = vpop.xlane.xlu0 %509
  %v511 = vsel %vm58, %v495, -inf
  %512 = vmax.xlane.f32.xlu0 %v511
  %v513 = vpop.xlane.xlu0 %512
  %v514 = vsel %vm58, %v496, -inf
  %515 = vmax.xlane.f32.xlu0 %v514
  %v516 = vpop.xlane.xlu0 %515
  %v517 = vsel %vm58, %v497, -inf
  %518 = vmax.xlane.f32.xlu0 %v517
  %v519 = vpop.xlane.xlu0 %518
  %v520 = vsel %vm58, %v498, -inf
  %521 = vmax.xlane.f32.xlu0 %v520
  %v522 = vpop.xlane.xlu0 %521
  %v523 = vsub.f32 %v491, %v501
  %v524 = vsub.f32 %v492, %v504
  %v525 = vsub.f32 %v493, %v507
  %v526 = vsub.f32 %v494, %v510
  %v527 = vsub.f32 %v495, %v513
  %v528 = vsub.f32 %v496, %v516
  %v529 = vsub.f32 %v497, %v519
  %v530 = vsub.f32 %v498, %v522
  %v531 = vmul.f32 %v523, 1.442695
  %v532 = vpow.pop %v531
  %v533 = vmul.f32 %v524, 1.442695
  %v534 = vpow.pop %v533
  %v535 = vmul.f32 %v525, 1.442695
  %v536 = vpow.pop %v535
  %v537 = vmul.f32 %v526, 1.442695
  %v538 = vpow.pop %v537
  %v539 = vmul.f32 %v527, 1.442695
  %v540 = vpow.pop %v539
  %v541 = vmul.f32 %v528, 1.442695
  %v542 = vpow.pop %v541
  %v543 = vmul.f32 %v529, 1.442695
  %v544 = vpow.pop %v543
  %v545 = vmul.f32 %v530, 1.442695
  %v546 = vpow.pop %v545
  %v547 = vsel %vm58, %v532, 0.0
  %548 = vadd.xlane.f32.xlu0 %v547
  %v549 = vpop.xlane.xlu0 %548
  %v550 = vsel %vm58, %v534, 0.0
  %551 = vadd.xlane.f32.xlu0 %v550
  %v552 = vpop.xlane.xlu0 %551
  %v553 = vsel %vm58, %v536, 0.0
  %554 = vadd.xlane.f32.xlu0 %v553
  %v555 = vpop.xlane.xlu0 %554
  %v556 = vsel %vm58, %v538, 0.0
  %557 = vadd.xlane.f32.xlu0 %v556
  %v558 = vpop.xlane.xlu0 %557
  %v559 = vsel %vm58, %v540, 0.0
  %560 = vadd.xlane.f32.xlu0 %v559
  %v561 = vpop.xlane.xlu0 %560
  %v562 = vsel %vm58, %v542, 0.0
  %563 = vadd.xlane.f32.xlu0 %v562
  %v564 = vpop.xlane.xlu0 %563
  %v565 = vsel %vm58, %v544, 0.0
  %566 = vadd.xlane.f32.xlu0 %v565
  %v567 = vpop.xlane.xlu0 %566
  %v568 = vsel %vm58, %v546, 0.0
  %569 = vadd.xlane.f32.xlu0 %v568
  %v570 = vpop.xlane.xlu0 %569
  %v571 = vrcp.pop %v549
  %v572 = vrcp.pop %v552
  %v573 = vrcp.pop %v555
  %v574 = vrcp.pop %v558
  %v575 = vrcp.pop %v561
  %v576 = vrcp.pop %v564
  %v577 = vrcp.pop %v567
  %v578 = vrcp.pop %v570
  %v579 = vmul.f32 %v532, %v571
  %v580 = vmul.f32 %v534, %v572
  %v581 = vmul.f32 %v536, %v573
  %v582 = vmul.f32 %v538, %v574
  %v583 = vmul.f32 %v540, %v575
  %v584 = vmul.f32 %v542, %v576
  %v585 = vmul.f32 %v544, %v577
  %v586 = vmul.f32 %v546, %v578
  %v587 = vpack.c.bf16 %v579, %v579
  %v588 = vpack.c.bf16 %v580, %v580
  %v589 = vpack.c.bf16 %v581, %v581
  %v590 = vpack.c.bf16 %v582, %v582
  %v591 = vpack.c.bf16 %v583, %v583
  %v592 = vpack.c.bf16 %v584, %v584
  %v593 = vpack.c.bf16 %v585, %v585
  %v594 = vpack.c.bf16 %v586, %v586
  %v595 = vld [vmem:[%s2] sm:$0xff]
  %v596 = vld [vmem:[%s2 + $0x8] sm:$0xff]
  %v597 = vld [vmem:[%s2 + $0x10] sm:$0xff]
  %v598 = vld [vmem:[%s2 + $0x18] sm:$0xff]
  %v599 = vld [vmem:[%s2 + $0x20] sm:$0xff]
  %v600 = vld [vmem:[%s2 + $0x28] sm:$0xff]
  %v601 = vld [vmem:[%s2 + $0x30] sm:$0xff]
  %v602 = vld [vmem:[%s2 + $0x38] sm:$0xff]
  %v603 = vpack.c.bf16 %v595, %v595
  %v604 = vpack.c.bf16 %v596, %v596
  %v605 = vpack.c.bf16 %v597, %v597
  %v606 = vpack.c.bf16 %v598, %v598
  %v607 = vpack.c.bf16 %v599, %v599
  %v608 = vpack.c.bf16 %v600, %v600
  %v609 = vpack.c.bf16 %v601, %v601
  %v610 = vpack.c.bf16 %v602, %v602
  %v612 = vsel %vm58, %v587, 0
  %vm614 = vcmask 1043456
  %v616 = vsel %vm614, %v603, 0
  %618 = vmatprep.subr.bf16.mxu0 0
  %619 = vmatpush1.bf16.msra.mxu0 0
  %620 = vmatprep.subr.bf16.mxu0 0
  %621 = vmatpush1.bf16.msra.mxu0 0
  %622 = vmatprep.subr.bf16.mxu0 0
  %623 = vmatpush1.bf16.msra.mxu0 0
  %624 = vmatprep.subr.bf16.mxu0 0
  %625 = vmatpush1.bf16.msra.mxu0 0
  %626 = vmatprep.subr.bf16.mxu0 0
  %627 = vmatpush1.bf16.msra.mxu0 0
  %628 = vmatprep.subr.bf16.mxu0 0
  %629 = vmatpush1.bf16.msra.mxu0 0
  %630 = vmatprep.subr.bf16.mxu0 0
  %631 = vmatpush1.bf16.msra.mxu0 0
  %632 = vmatprep.subr.bf16.mxu0 0
  %633 = vmatpush1.bf16.msra.mxu0 %v616
  %634 = vmatprep.subr.bf16.mxu0 0
  %635 = vmatpush2.bf16.msra.mxu0 0
  %636 = vmatprep.subr.bf16.mxu0 0
  %637 = vmatpush2.bf16.msra.mxu0 0
  %638 = vmatprep.subr.bf16.mxu0 0
  %639 = vmatpush2.bf16.msra.mxu0 0
  %640 = vmatprep.subr.bf16.mxu0 0
  %641 = vmatpush2.bf16.msra.mxu0 0
  %642 = vmatprep.subr.bf16.mxu0 0
  %643 = vmatpush2.bf16.msra.mxu0 0
  %644 = vmatprep.subr.bf16.mxu0 0
  %645 = vmatpush2.bf16.msra.mxu0 0
  %646 = vmatprep.subr.bf16.mxu0 0
  %647 = vmatpush2.bf16.msra.mxu0 0
  %648 = vmatprep.subr.bf16.mxu0 0
  %649 = vmatpush2.bf16.msra.mxu0 0
  %650 = vmatprep.mubr.bf16.mxu0 0
  %651 = vmatmul.mubr.bf16.gmra.mxu0 %v612
  %v652 = vpop.f32.mrf.mxu0
  %v653 = vadd.f32 0.0, %v652
  %v654 = vpop.f32.mrf.mxu0
  %v655 = vpop.f32.mrf.mxu0
  %v656 = vpop.f32.mrf.mxu0
  %657 = vdwg.mxu0
  %v659 = vsel %vm58, %v588, 0
  %v662 = vsel %vm614, %v604, 0
  %664 = vmatprep.subr.bf16.mxu0 0
  %665 = vmatpush1.bf16.msra.mxu0 0
  %666 = vmatprep.subr.bf16.mxu0 0
  %667 = vmatpush1.bf16.msra.mxu0 0
  %668 = vmatprep.subr.bf16.mxu0 0
  %669 = vmatpush1.bf16.msra.mxu0 0
  %670 = vmatprep.subr.bf16.mxu0 0
  %671 = vmatpush1.bf16.msra.mxu0 0
  %672 = vmatprep.subr.bf16.mxu0 0
  %673 = vmatpush1.bf16.msra.mxu0 0
  %674 = vmatprep.subr.bf16.mxu0 0
  %675 = vmatpush1.bf16.msra.mxu0 0
  %676 = vmatprep.subr.bf16.mxu0 0
  %677 = vmatpush1.bf16.msra.mxu0 0
  %678 = vmatprep.subr.bf16.mxu0 0
  %679 = vmatpush1.bf16.msra.mxu0 %v662
  %680 = vmatprep.subr.bf16.mxu0 0
  %681 = vmatpush2.bf16.msra.mxu0 0
  %682 = vmatprep.subr.bf16.mxu0 0
  %683 = vmatpush2.bf16.msra.mxu0 0
  %684 = vmatprep.subr.bf16.mxu0 0
  %685 = vmatpush2.bf16.msra.mxu0 0
  %686 = vmatprep.subr.bf16.mxu0 0
  %687 = vmatpush2.bf16.msra.mxu0 0
  %688 = vmatprep.subr.bf16.mxu0 0
  %689 = vmatpush2.bf16.msra.mxu0 0
  %690 = vmatprep.subr.bf16.mxu0 0
  %691 = vmatpush2.bf16.msra.mxu0 0
  %692 = vmatprep.subr.bf16.mxu0 0
  %693 = vmatpush2.bf16.msra.mxu0 0
  %694 = vmatprep.subr.bf16.mxu0 0
  %695 = vmatpush2.bf16.msra.mxu0 0
  %696 = vmatprep.mubr.bf16.mxu0 0
  %697 = vmatmul.mubr.bf16.gmra.mxu0 %v659
  %v698 = vpop.f32.mrf.mxu0
  %v699 = vadd.f32 0.0, %v698
  %v700 = vpop.f32.mrf.mxu0
  %v701 = vpop.f32.mrf.mxu0
  %v702 = vpop.f32.mrf.mxu0
  %703 = vdwg.mxu0
  %v705 = vsel %vm58, %v589, 0
  %v708 = vsel %vm614, %v605, 0
  %710 = vmatprep.subr.bf16.mxu0 0
  %711 = vmatpush1.bf16.msra.mxu0 0
  %712 = vmatprep.subr.bf16.mxu0 0
  %713 = vmatpush1.bf16.msra.mxu0 0
  %714 = vmatprep.subr.bf16.mxu0 0
  %715 = vmatpush1.bf16.msra.mxu0 0
  %716 = vmatprep.subr.bf16.mxu0 0
  %717 = vmatpush1.bf16.msra.mxu0 0
  %718 = vmatprep.subr.bf16.mxu0 0
  %719 = vmatpush1.bf16.msra.mxu0 0
  %720 = vmatprep.subr.bf16.mxu0 0
  %721 = vmatpush1.bf16.msra.mxu0 0
  %722 = vmatprep.subr.bf16.mxu0 0
  %723 = vmatpush1.bf16.msra.mxu0 0
  %724 = vmatprep.subr.bf16.mxu0 0
  %725 = vmatpush1.bf16.msra.mxu0 %v708
  %726 = vmatprep.subr.bf16.mxu0 0
  %727 = vmatpush2.bf16.msra.mxu0 0
  %728 = vmatprep.subr.bf16.mxu0 0
  %729 = vmatpush2.bf16.msra.mxu0 0
  %730 = vmatprep.subr.bf16.mxu0 0
  %731 = vmatpush2.bf16.msra.mxu0 0
  %732 = vmatprep.subr.bf16.mxu0 0
  %733 = vmatpush2.bf16.msra.mxu0 0
  %734 = vmatprep.subr.bf16.mxu0 0
  %735 = vmatpush2.bf16.msra.mxu0 0
  %736 = vmatprep.subr.bf16.mxu0 0
  %737 = vmatpush2.bf16.msra.mxu0 0
  %738 = vmatprep.subr.bf16.mxu0 0
  %739 = vmatpush2.bf16.msra.mxu0 0
  %740 = vmatprep.subr.bf16.mxu0 0
  %741 = vmatpush2.bf16.msra.mxu0 0
  %742 = vmatprep.mubr.bf16.mxu0 0
  %743 = vmatmul.mubr.bf16.gmra.mxu0 %v705
  %v744 = vpop.f32.mrf.mxu0
  %v745 = vadd.f32 0.0, %v744
  %v746 = vpop.f32.mrf.mxu0
  %v747 = vpop.f32.mrf.mxu0
  %v748 = vpop.f32.mrf.mxu0
  %749 = vdwg.mxu0
  %v751 = vsel %vm58, %v590, 0
  %v754 = vsel %vm614, %v606, 0
  %756 = vmatprep.subr.bf16.mxu0 0
  %757 = vmatpush1.bf16.msra.mxu0 0
  %758 = vmatprep.subr.bf16.mxu0 0
  %759 = vmatpush1.bf16.msra.mxu0 0
  %760 = vmatprep.subr.bf16.mxu0 0
  %761 = vmatpush1.bf16.msra.mxu0 0
  %762 = vmatprep.subr.bf16.mxu0 0
  %763 = vmatpush1.bf16.msra.mxu0 0
  %764 = vmatprep.subr.bf16.mxu0 0
  %765 = vmatpush1.bf16.msra.mxu0 0
  %766 = vmatprep.subr.bf16.mxu0 0
  %767 = vmatpush1.bf16.msra.mxu0 0
  %768 = vmatprep.subr.bf16.mxu0 0
  %769 = vmatpush1.bf16.msra.mxu0 0
  %770 = vmatprep.subr.bf16.mxu0 0
  %771 = vmatpush1.bf16.msra.mxu0 %v754
  %772 = vmatprep.subr.bf16.mxu0 0
  %773 = vmatpush2.bf16.msra.mxu0 0
  %774 = vmatprep.subr.bf16.mxu0 0
  %775 = vmatpush2.bf16.msra.mxu0 0
  %776 = vmatprep.subr.bf16.mxu0 0
  %777 = vmatpush2.bf16.msra.mxu0 0
  %778 = vmatprep.subr.bf16.mxu0 0
  %779 = vmatpush2.bf16.msra.mxu0 0
  %780 = vmatprep.subr.bf16.mxu0 0
  %781 = vmatpush2.bf16.msra.mxu0 0
  %782 = vmatprep.subr.bf16.mxu0 0
  %783 = vmatpush2.bf16.msra.mxu0 0
  %784 = vmatprep.subr.bf16.mxu0 0
  %785 = vmatpush2.bf16.msra.mxu0 0
  %786 = vmatprep.subr.bf16.mxu0 0
  %787 = vmatpush2.bf16.msra.mxu0 0
  %788 = vmatprep.mubr.bf16.mxu0 0
  %789 = vmatmul.mubr.bf16.gmra.mxu0 %v751
  %v790 = vpop.f32.mrf.mxu0
  %v791 = vadd.f32 0.0, %v790
  %v792 = vpop.f32.mrf.mxu0
  %v793 = vpop.f32.mrf.mxu0
  %v794 = vpop.f32.mrf.mxu0
  %795 = vdwg.mxu0
  %v797 = vsel %vm58, %v591, 0
  %v800 = vsel %vm614, %v607, 0
  %802 = vmatprep.subr.bf16.mxu0 0
  %803 = vmatpush1.bf16.msra.mxu0 0
  %804 = vmatprep.subr.bf16.mxu0 0
  %805 = vmatpush1.bf16.msra.mxu0 0
  %806 = vmatprep.subr.bf16.mxu0 0
  %807 = vmatpush1.bf16.msra.mxu0 0
  %808 = vmatprep.subr.bf16.mxu0 0
  %809 = vmatpush1.bf16.msra.mxu0 0
  %810 = vmatprep.subr.bf16.mxu0 0
  %811 = vmatpush1.bf16.msra.mxu0 0
  %812 = vmatprep.subr.bf16.mxu0 0
  %813 = vmatpush1.bf16.msra.mxu0 0
  %814 = vmatprep.subr.bf16.mxu0 0
  %815 = vmatpush1.bf16.msra.mxu0 0
  %816 = vmatprep.subr.bf16.mxu0 0
  %817 = vmatpush1.bf16.msra.mxu0 %v800
  %818 = vmatprep.subr.bf16.mxu0 0
  %819 = vmatpush2.bf16.msra.mxu0 0
  %820 = vmatprep.subr.bf16.mxu0 0
  %821 = vmatpush2.bf16.msra.mxu0 0
  %822 = vmatprep.subr.bf16.mxu0 0
  %823 = vmatpush2.bf16.msra.mxu0 0
  %824 = vmatprep.subr.bf16.mxu0 0
  %825 = vmatpush2.bf16.msra.mxu0 0
  %826 = vmatprep.subr.bf16.mxu0 0
  %827 = vmatpush2.bf16.msra.mxu0 0
  %828 = vmatprep.subr.bf16.mxu0 0
  %829 = vmatpush2.bf16.msra.mxu0 0
  %830 = vmatprep.subr.bf16.mxu0 0
  %831 = vmatpush2.bf16.msra.mxu0 0
  %832 = vmatprep.subr.bf16.mxu0 0
  %833 = vmatpush2.bf16.msra.mxu0 0
  %834 = vmatprep.mubr.bf16.mxu0 0
  %835 = vmatmul.mubr.bf16.gmra.mxu0 %v797
  %v836 = vpop.f32.mrf.mxu0
  %v837 = vadd.f32 0.0, %v836
  %v838 = vpop.f32.mrf.mxu0
  %v839 = vpop.f32.mrf.mxu0
  %v840 = vpop.f32.mrf.mxu0
  %841 = vdwg.mxu0
  %v843 = vsel %vm58, %v592, 0
  %v846 = vsel %vm614, %v608, 0
  %848 = vmatprep.subr.bf16.mxu0 0
  %849 = vmatpush1.bf16.msra.mxu0 0
  %850 = vmatprep.subr.bf16.mxu0 0
  %851 = vmatpush1.bf16.msra.mxu0 0
  %852 = vmatprep.subr.bf16.mxu0 0
  %853 = vmatpush1.bf16.msra.mxu0 0
  %854 = vmatprep.subr.bf16.mxu0 0
  %855 = vmatpush1.bf16.msra.mxu0 0
  %856 = vmatprep.subr.bf16.mxu0 0
  %857 = vmatpush1.bf16.msra.mxu0 0
  %858 = vmatprep.subr.bf16.mxu0 0
  %859 = vmatpush1.bf16.msra.mxu0 0
  %860 = vmatprep.subr.bf16.mxu0 0
  %861 = vmatpush1.bf16.msra.mxu0 0
  %862 = vmatprep.subr.bf16.mxu0 0
  %863 = vmatpush1.bf16.msra.mxu0 %v846
  %864 = vmatprep.subr.bf16.mxu0 0
  %865 = vmatpush2.bf16.msra.mxu0 0
  %866 = vmatprep.subr.bf16.mxu0 0
  %867 = vmatpush2.bf16.msra.mxu0 0
  %868 = vmatprep.subr.bf16.mxu0 0
  %869 = vmatpush2.bf16.msra.mxu0 0
  %870 = vmatprep.subr.bf16.mxu0 0
  %871 = vmatpush2.bf16.msra.mxu0 0
  %872 = vmatprep.subr.bf16.mxu0 0
  %873 = vmatpush2.bf16.msra.mxu0 0
  %874 = vmatprep.subr.bf16.mxu0 0
  %875 = vmatpush2.bf16.msra.mxu0 0
  %876 = vmatprep.subr.bf16.mxu0 0
  %877 = vmatpush2.bf16.msra.mxu0 0
  %878 = vmatprep.subr.bf16.mxu0 0
  %879 = vmatpush2.bf16.msra.mxu0 0
  %880 = vmatprep.mubr.bf16.mxu0 0
  %881 = vmatmul.mubr.bf16.gmra.mxu0 %v843
  %v882 = vpop.f32.mrf.mxu0
  %v883 = vadd.f32 0.0, %v882
  %v884 = vpop.f32.mrf.mxu0
  %v885 = vpop.f32.mrf.mxu0
  %v886 = vpop.f32.mrf.mxu0
  %887 = vdwg.mxu0
  %v889 = vsel %vm58, %v593, 0
  %v892 = vsel %vm614, %v609, 0
  %894 = vmatprep.subr.bf16.mxu0 0
  %895 = vmatpush1.bf16.msra.mxu0 0
  %896 = vmatprep.subr.bf16.mxu0 0
  %897 = vmatpush1.bf16.msra.mxu0 0
  %898 = vmatprep.subr.bf16.mxu0 0
  %899 = vmatpush1.bf16.msra.mxu0 0
  %900 = vmatprep.subr.bf16.mxu0 0
  %901 = vmatpush1.bf16.msra.mxu0 0
  %902 = vmatprep.subr.bf16.mxu0 0
  %903 = vmatpush1.bf16.msra.mxu0 0
  %904 = vmatprep.subr.bf16.mxu0 0
  %905 = vmatpush1.bf16.msra.mxu0 0
  %906 = vmatprep.subr.bf16.mxu0 0
  %907 = vmatpush1.bf16.msra.mxu0 0
  %908 = vmatprep.subr.bf16.mxu0 0
  %909 = vmatpush1.bf16.msra.mxu0 %v892
  %910 = vmatprep.subr.bf16.mxu0 0
  %911 = vmatpush2.bf16.msra.mxu0 0
  %912 = vmatprep.subr.bf16.mxu0 0
  %913 = vmatpush2.bf16.msra.mxu0 0
  %914 = vmatprep.subr.bf16.mxu0 0
  %915 = vmatpush2.bf16.msra.mxu0 0
  %916 = vmatprep.subr.bf16.mxu0 0
  %917 = vmatpush2.bf16.msra.mxu0 0
  %918 = vmatprep.subr.bf16.mxu0 0
  %919 = vmatpush2.bf16.msra.mxu0 0
  %920 = vmatprep.subr.bf16.mxu0 0
  %921 = vmatpush2.bf16.msra.mxu0 0
  %922 = vmatprep.subr.bf16.mxu0 0
  %923 = vmatpush2.bf16.msra.mxu0 0
  %924 = vmatprep.subr.bf16.mxu0 0
  %925 = vmatpush2.bf16.msra.mxu0 0
  %926 = vmatprep.mubr.bf16.mxu0 0
  %927 = vmatmul.mubr.bf16.gmra.mxu0 %v889
  %v928 = vpop.f32.mrf.mxu0
  %v929 = vadd.f32 0.0, %v928
  %v930 = vpop.f32.mrf.mxu0
  %v931 = vpop.f32.mrf.mxu0
  %v932 = vpop.f32.mrf.mxu0
  %933 = vdwg.mxu0
  %v935 = vsel %vm58, %v594, 0
  %v938 = vsel %vm614, %v610, 0
  %940 = vmatprep.subr.bf16.mxu0 0
  %941 = vmatpush1.bf16.msra.mxu0 0
  %942 = vmatprep.subr.bf16.mxu0 0
  %943 = vmatpush1.bf16.msra.mxu0 0
  %944 = vmatprep.subr.bf16.mxu0 0
  %945 = vmatpush1.bf16.msra.mxu0 0
  %946 = vmatprep.subr.bf16.mxu0 0
  %947 = vmatpush1.bf16.msra.mxu0 0
  %948 = vmatprep.subr.bf16.mxu0 0
  %949 = vmatpush1.bf16.msra.mxu0 0
  %950 = vmatprep.subr.bf16.mxu0 0
  %951 = vmatpush1.bf16.msra.mxu0 0
  %952 = vmatprep.subr.bf16.mxu0 0
  %953 = vmatpush1.bf16.msra.mxu0 0
  %954 = vmatprep.subr.bf16.mxu0 0
  %955 = vmatpush1.bf16.msra.mxu0 %v938
  %956 = vmatprep.subr.bf16.mxu0 0
  %957 = vmatpush2.bf16.msra.mxu0 0
  %958 = vmatprep.subr.bf16.mxu0 0
  %959 = vmatpush2.bf16.msra.mxu0 0
  %960 = vmatprep.subr.bf16.mxu0 0
  %961 = vmatpush2.bf16.msra.mxu0 0
  %962 = vmatprep.subr.bf16.mxu0 0
  %963 = vmatpush2.bf16.msra.mxu0 0
  %964 = vmatprep.subr.bf16.mxu0 0
  %965 = vmatpush2.bf16.msra.mxu0 0
  %966 = vmatprep.subr.bf16.mxu0 0
  %967 = vmatpush2.bf16.msra.mxu0 0
  %968 = vmatprep.subr.bf16.mxu0 0
  %969 = vmatpush2.bf16.msra.mxu0 0
  %970 = vmatprep.subr.bf16.mxu0 0
  %971 = vmatpush2.bf16.msra.mxu0 0
  %972 = vmatprep.mubr.bf16.mxu0 0
  %973 = vmatmul.mubr.bf16.gmra.mxu0 %v935
  %v974 = vpop.f32.mrf.mxu0
  %v975 = vadd.f32 0.0, %v974
  %v976 = vpop.f32.mrf.mxu0
  %v977 = vpop.f32.mrf.mxu0
  %v978 = vpop.f32.mrf.mxu0
  %979 = vdwg.mxu0
  %980 = vst.msk [vmem:[%s4] sm:$0xff] %vm58, %v653
  %981 = vst.msk [vmem:[%s4 + $0x8] sm:$0xff] %vm58, %v699
  %982 = vst.msk [vmem:[%s4 + $0x10] sm:$0xff] %vm58, %v745
  %983 = vst.msk [vmem:[%s4 + $0x18] sm:$0xff] %vm58, %v791
  %984 = vst.msk [vmem:[%s4 + $0x20] sm:$0xff] %vm58, %v837
  %985 = vst.msk [vmem:[%s4 + $0x28] sm:$0xff] %vm58, %v883
  %986 = vst.msk [vmem:[%s4 + $0x30] sm:$0xff] %vm58, %v929
  %987 = vst.msk [vmem:[%s4 + $0x38] sm:$0xff] %vm58, %v975
  // Predicated region
  $region18: #{tener_forward.14} parent=0 // pred_check
    _
  $region19: #{tener_forward.14} parent=0 // pred_check_branch
    %989 = sbr.rel (0) target = $region21
  $region20: #{tener_forward.14} parent=0 // pred_region
    _
  $region21: #{tener_forward.14} parent=0 // pred_fallthru
    _
  // Predicated region
  $region22: #{tener_forward.14} parent=0 // pred_check
    _
  $region23: #{tener_forward.14} parent=0 // pred_check_branch
    %991 = sbr.rel (0) target = $region25
  $region24: #{tener_forward.14} parent=0 // pred_region
    _
  $region25: #{tener_forward.14} parent=0 // pred_fallthru
    _

// kernel: tener_forward.15
$region0: #{tener_forward.15}
  #allocation0 [shape = 'u32[]', space=smem, size = 0x4, offset = 0x4, fixed_abs, tag = 'smem constant byte address 0x4 - core index']
  #allocation1 [shape = 'u32[144,128]{1,0:T(1,128)}', space=vmem, size = 0x12000, scoped, tag = 'internal scratch']
  %s0 = inlined_call_operand.vmem [shape: f32[16,32], index: 0, kind: input, shape index: {}]
  %s1 = inlined_call_operand.vmem [shape: f32[16,32], index: 1, kind: input, shape index: {}]
  %s2 = inlined_call_operand.vmem [shape: f32[32,32], index: 2, kind: input, shape index: {}]
  %s3 = inlined_call_operand.vmem [shape: f32[1,32], index: 3, kind: input, shape index: {}]
  %s4 = inlined_call_operand.vmem [shape: f32[1,32], index: 4, kind: input, shape index: {}]
  %s5 = inlined_call_operand.vmem [shape: f32[1,32], index: 5, kind: input, shape index: {}]
  %s6 = inlined_call_operand.vmem [shape: f32[32,64], index: 6, kind: input, shape index: {}]
  %s7 = inlined_call_operand.vmem [shape: f32[1,64], index: 7, kind: input, shape index: {}]
  %s8 = inlined_call_operand.vmem [shape: f32[64,32], index: 8, kind: input, shape index: {}]
  %s9 = inlined_call_operand.vmem [shape: f32[1,32], index: 9, kind: input, shape index: {}]
  %s10 = inlined_call_operand.vmem [shape: f32[1,32], index: 10, kind: input, shape index: {}]
  %s11 = inlined_call_operand.vmem [shape: f32[1,32], index: 11, kind: input, shape index: {}]
  %s12 = inlined_call_operand.vmem [shape: f32[16,32], index: 12, kind: output, shape index: {}]
  %s13 = sld [smem:[#allocation0]]
  $region58: #{tener_forward.15} parent=0
    _
  %s15 = ssub.s32 1, %s13
  %s16 = scalar_select 0, %s15, %s13
  // Predicated region
  $region2: #{tener_forward.15} parent=0 // pred_check
    _
  $region3: #{tener_forward.15} parent=0 // pred_check_branch
    %18 = sbr.rel (0) target = $region5
  $region4: #{tener_forward.15} parent=0 // pred_region
    _
  $region5: #{tener_forward.15} parent=0 // pred_fallthru
    _
  // Predicated region
  $region6: #{tener_forward.15} parent=0 // pred_check
    _
  $region7: #{tener_forward.15} parent=0 // pred_check_branch
    %20 = sbr.rel (0) target = $region9
  $region8: #{tener_forward.15} parent=0 // pred_region
    _
  $region9: #{tener_forward.15} parent=0 // pred_fallthru
    _
  // Predicated region
  $region10: #{tener_forward.15} parent=0 // pred_check
    _
  $region11: #{tener_forward.15} parent=0 // pred_check_branch
    %22 = sbr.rel (0) target = $region13
  $region12: #{tener_forward.15} parent=0 // pred_region
    _
  $region13: #{tener_forward.15} parent=0 // pred_fallthru
    _
  // Predicated region
  $region14: #{tener_forward.15} parent=0 // pred_check
    _
  $region15: #{tener_forward.15} parent=0 // pred_check_branch
    %24 = sbr.rel (0) target = $region17
  $region16: #{tener_forward.15} parent=0 // pred_region
    _
  $region17: #{tener_forward.15} parent=0 // pred_fallthru
    _
  // Predicated region
  $region18: #{tener_forward.15} parent=0 // pred_check
    _
  $region19: #{tener_forward.15} parent=0 // pred_check_branch
    %26 = sbr.rel (0) target = $region21
  $region20: #{tener_forward.15} parent=0 // pred_region
    _
  $region21: #{tener_forward.15} parent=0 // pred_fallthru
    _
  // Predicated region
  $region22: #{tener_forward.15} parent=0 // pred_check
    _
  $region23: #{tener_forward.15} parent=0 // pred_check_branch
    %28 = sbr.rel (0) target = $region25
  $region24: #{tener_forward.15} parent=0 // pred_region
    _
  $region25: #{tener_forward.15} parent=0 // pred_fallthru
    _
  // Predicated region
  $region26: #{tener_forward.15} parent=0 // pred_check
    _
  $region27: #{tener_forward.15} parent=0 // pred_check_branch
    %30 = sbr.rel (0) target = $region29
  $region28: #{tener_forward.15} parent=0 // pred_region
    _
  $region29: #{tener_forward.15} parent=0 // pred_fallthru
    _
  // Predicated region
  $region30: #{tener_forward.15} parent=0 // pred_check
    _
  $region31: #{tener_forward.15} parent=0 // pred_check_branch
    %32 = sbr.rel (0) target = $region33
  $region32: #{tener_forward.15} parent=0 // pred_region
    _
  $region33: #{tener_forward.15} parent=0 // pred_fallthru
    _
  // Predicated region
  $region34: #{tener_forward.15} parent=0 // pred_check
    _
  $region35: #{tener_forward.15} parent=0 // pred_check_branch
    %34 = sbr.rel (0) target = $region37
  $region36: #{tener_forward.15} parent=0 // pred_region
    _
  $region37: #{tener_forward.15} parent=0 // pred_fallthru
    _
  // Predicated region
  $region38: #{tener_forward.15} parent=0 // pred_check
    _
  $region39: #{tener_forward.15} parent=0 // pred_check_branch
    %36 = sbr.rel (0) target = $region41
  $region40: #{tener_forward.15} parent=0 // pred_region
    _
  $region41: #{tener_forward.15} parent=0 // pred_fallthru
    _
  // Predicated region
  $region42: #{tener_forward.15} parent=0 // pred_check
    _
  $region43: #{tener_forward.15} parent=0 // pred_check_branch
    %38 = sbr.rel (0) target = $region45
  $region44: #{tener_forward.15} parent=0 // pred_region
    _
  $region45: #{tener_forward.15} parent=0 // pred_fallthru
    _
  // Predicated region
  $region46: #{tener_forward.15} parent=0 // pred_check
    _
  $region47: #{tener_forward.15} parent=0 // pred_check_branch
    %40 = sbr.rel (0) target = $region49
  $region48: #{tener_forward.15} parent=0 // pred_region
    _
  $region49: #{tener_forward.15} parent=0 // pred_fallthru
    _
  %v42 = vld [vmem:[%s1] sm:$0xff]
  %v43 = vld [vmem:[%s1 + $0x8] sm:$0xff]
  %v44 = vld [vmem:[%s2] sm:$0xff]
  %v45 = vld [vmem:[%s2 + $0x8] sm:$0xff]
  %v46 = vld [vmem:[%s2 + $0x10] sm:$0xff]
  %v47 = vld [vmem:[%s2 + $0x18] sm:$0xff]
  %v48 = vpack.c.bf16 %v43, %v42
  %v49 = vpack.c.bf16 %v45, %v44
  %v50 = vpack.c.bf16 %v47, %v46
  %v51 = vld [vmem:[%s3] sm:$0x1]
  %v53 = vlaneseq
  %v54 = vshrl.u32 %v53, 7
  %v55 = vsub.s32 0, %v54
  %v56 = vrot.slane %v51, %v55
  %vm58 = vcmask 261120
  %v60 = vsel %vm58, %v48, 0
  %62 = vmatprep.subr.bf16.mxu0 0
  %63 = vmatpush1.bf16.msra.mxu0 0
  %64 = vmatprep.subr.bf16.mxu0 0
  %65 = vmatpush1.bf16.msra.mxu0 0
  %66 = vmatprep.subr.bf16.mxu0 0
  %67 = vmatpush1.bf16.msra.mxu0 0
  %68 = vmatprep.subr.bf16.mxu0 0
  %69 = vmatpush1.bf16.msra.mxu0 0
  %70 = vmatprep.subr.bf16.mxu0 0
  %71 = vmatpush1.bf16.msra.mxu0 0
  %72 = vmatprep.subr.bf16.mxu0 0
  %73 = vmatpush1.bf16.msra.mxu0 0
  %74 = vmatprep.subr.bf16.mxu0 0
  %75 = vmatpush1.bf16.msra.mxu0 %v50
  %76 = vmatprep.subr.bf16.mxu0 0
  %77 = vmatpush1.bf16.msra.mxu0 %v49
  %78 = vmatprep.subr.bf16.mxu0 0
  %79 = vmatpush2.bf16.msra.mxu0 0
  %80 = vmatprep.subr.bf16.mxu0 0
  %81 = vmatpush2.bf16.msra.mxu0 0
  %82 = vmatprep.subr.bf16.mxu0 0
  %83 = vmatpush2.bf16.msra.mxu0 0
  %84 = vmatprep.subr.bf16.mxu0 0
  %85 = vmatpush2.bf16.msra.mxu0 0
  %86 = vmatprep.subr.bf16.mxu0 0
  %87 = vmatpush2.bf16.msra.mxu0 0
  %88 = vmatprep.subr.bf16.mxu0 0
  %89 = vmatpush2.bf16.msra.mxu0 0
  %90 = vmatprep.subr.bf16.mxu0 0
  %91 = vmatpush2.bf16.msra.mxu0 0
  %92 = vmatprep.subr.bf16.mxu0 0
  %93 = vmatpush2.bf16.msra.mxu0 0
  %94 = vmatprep.mubr.bf16.mxu0 0
  %95 = vmatmul.mubr.bf16.gmra.mxu0 %v60
  %v96 = vpop.f32.mrf.mxu0
  %v97 = vadd.f32 %v56, %v96
  %v98 = vpop.f32.mrf.mxu0
  %v99 = vpop.f32.mrf.mxu0
  %v100 = vadd.f32 %v56, %v99
  %v101 = vpop.f32.mrf.mxu0
  %102 = vdwg.mxu0
  %v103 = vld [vmem:[%s0] sm:$0xff]
  %v104 = vld [vmem:[%s0 + $0x8] sm:$0xff]
  %v105 = vadd.f32 %v103, %v97
  %v106 = vadd.f32 %v104, %v100
  %v107 = vld [vmem:[%s4] sm:$0x1]
  %v108 = vld [vmem:[%s5] sm:$0x1]
  %v109 = vsel %vm58, %v105, 0.0
  %110 = vadd.xlane.f32.xlu0 %v109
  %v111 = vpop.xlane.xlu0 %110
  %v112 = vsel %vm58, %v106, 0.0
  %113 = vadd.xlane.f32.xlu0 %v112
  %v114 = vpop.xlane.xlu0 %113
  %v115 = vrcp.pop 32.0
  %v116 = vmul.f32 %v111, %v115
  %v117 = vmul.f32 %v114, %v115
  %v118 = vsub.f32 %v105, %v116
  %v119 = vsub.f32 %v106, %v117
  %v120 = vmul.f32 %v118, %v118
  %v121 = vmul.f32 %v119, %v119
  %v122 = vsel %vm58, %v120, 0.0
  %123 = vadd.xlane.f32.xlu0 %v122
  %v124 = vpop.xlane.xlu0 %123
  %v125 = vsel %vm58, %v121, 0.0
  %126 = vadd.xlane.f32.xlu0 %v125
  %v127 = vpop.xlane.xlu0 %126
  %v128 = vmul.f32 %v124, %v115
  %v129 = vmul.f32 %v127, %v115
  %v130 = vadd.f32 %v128, 1e-05
  %v131 = vadd.f32 %v129, 1e-05
  %v132 = vrsqrt.pop %v130
  %v133 = vrsqrt.pop %v131
  %v134 = vmul.f32 %v118, %v132
  %v135 = vmul.f32 %v119, %v133
  %v137 = vlaneseq
  %v138 = vshrl.u32 %v137, 7
  %v139 = vsub.s32 0, %v138
  %v140 = vrot.slane %v107, %v139
  %v142 = vmul.f32 %v134, %v140
  %v143 = vmul.f32 %v135, %v140
  %v145 = vlaneseq
  %v146 = vshrl.u32 %v145, 7
  %v147 = vsub.s32 0, %v146
  %v148 = vrot.slane %v108, %v147
  %v150 = vadd.f32 %v142, %v148
  %v151 = vadd.f32 %v143, %v148
  %v152 = vld [vmem:[%s6] sm:$0xff]
  %v153 = vld [vmem:[%s6 + $0x8] sm:$0xff]
  %v154 = vld [vmem:[%s6 + $0x10] sm:$0xff]
  %v155 = vld [vmem:[%s6 + $0x18] sm:$0xff]
  %v156 = vpack.c.bf16 %v151, %v150
  %v157 = vpack.c.bf16 %v153, %v152
  %v158 = vpack.c.bf16 %v155, %v154
  %v159 = vld [vmem:[%s7] sm:$0x1]
  %v161 = vlaneseq
  %v162 = vshrl.u32 %v161, 7
  %v163 = vsub.s32 0, %v162
  %v164 = vrot.slane %v159, %v163
  %v167 = vsel %vm58, %v156, 0
  %169 = vmatprep.subr.bf16.mxu0 0
  %170 = vmatpush1.bf16.msra.mxu0 0
  %171 = vmatprep.subr.bf16.mxu0 0
  %172 = vmatpush1.bf16.msra.mxu0 0
  %173 = vmatprep.subr.bf16.mxu0 0
  %174 = vmatpush1.bf16.msra.mxu0 0
  %175 = vmatprep.subr.bf16.mxu0 0
  %176 = vmatpush1.bf16.msra.mxu0 0
  %177 = vmatprep.subr.bf16.mxu0 0
  %178 = vmatpush1.bf16.msra.mxu0 0
  %179 = vmatprep.subr.bf16.mxu0 0
  %180 = vmatpush1.bf16.msra.mxu0 0
  %181 = vmatprep.subr.bf16.mxu0 0
  %182 = vmatpush1.bf16.msra.mxu0 %v158
  %183 = vmatprep.subr.bf16.mxu0 0
  %184 = vmatpush1.bf16.msra.mxu0 %v157
  %185 = vmatprep.subr.bf16.mxu0 0
  %186 = vmatpush2.bf16.msra.mxu0 0
  %187 = vmatprep.subr.bf16.mxu0 0
  %188 = vmatpush2.bf16.msra.mxu0 0
  %189 = vmatprep.subr.bf16.mxu0 0
  %190 = vmatpush2.bf16.msra.mxu0 0
  %191 = vmatprep.subr.bf16.mxu0 0
  %192 = vmatpush2.bf16.msra.mxu0 0
  %193 = vmatprep.subr.bf16.mxu0 0
  %194 = vmatpush2.bf16.msra.mxu0 0
  %195 = vmatprep.subr.bf16.mxu0 0
  %196 = vmatpush2.bf16.msra.mxu0 0
  %197 = vmatprep.subr.bf16.mxu0 0
  %198 = vmatpush2.bf16.msra.mxu0 0
  %199 = vmatprep.subr.bf16.mxu0 0
  %200 = vmatpush2.bf16.msra.mxu0 0
  %201 = vmatprep.mubr.bf16.mxu0 0
  %202 = vmatmul.mubr.bf16.gmra.mxu0 %v167
  %v203 = vpop.f32.mrf.mxu0
  %v204 = vadd.f32 %v164, %v203
  %v205 = vpop.f32.mrf.mxu0
  %v206 = vpop.f32.mrf.mxu0
  %v207 = vadd.f32 %v164, %v206
  %v208 = vpop.f32.mrf.mxu0
  %209 = vdwg.mxu0
  %v210 = vmul.f32 %v204, 0.5
  %v211 = vmul.f32 %v207, 0.5
  %v212 = vmul.f32 %v204, 0.044715
  %v213 = vmul.f32 %v207, 0.044715
  %v214 = vmul.f32 %v212, %v204
  %v215 = vmul.f32 %v213, %v207
  %v216 = vmul.f32 %v214, %v204
  %v217 = vmul.f32 %v215, %v207
  %v218 = vadd.f32 %v204, %v216
  %v219 = vadd.f32 %v207, %v217
  %v220 = vmul.f32 %v218, 0.7978846
  %v221 = vmul.f32 %v219, 0.7978846
  %v222 = vtanh.pop %v220
  %v223 = vtanh.pop %v221
  %v224 = vadd.f32 %v222, 1.0
  %v225 = vadd.f32 %v223, 1.0
  %v226 = vmul.f32 %v210, %v224
  %v227 = vmul.f32 %v211, %v225
  %v228 = vld [vmem:[%s8] sm:$0xff]
  %v229 = vld [vmem:[%s8 + $0x8] sm:$0xff]
  %v230 = vld [vmem:[%s8 + $0x10] sm:$0xff]
  %v231 = vld [vmem:[%s8 + $0x18] sm:$0xff]
  %v232 = vld [vmem:[%s8 + $0x20] sm:$0xff]
  %v233 = vld [vmem:[%s8 + $0x28] sm:$0xff]
  %v234 = vld [vmem:[%s8 + $0x30] sm:$0xff]
  %v235 = vld [vmem:[%s8 + $0x38] sm:$0xff]
  %v236 = vpack.c.bf16 %v227, %v226
  %v237 = vpack.c.bf16 %v229, %v228
  %v238 = vpack.c.bf16 %v231, %v230
  %v239 = vpack.c.bf16 %v233, %v232
  %v240 = vpack.c.bf16 %v235, %v234
  %vm241 = vcmask 523264
  %v243 = vsel %vm241, %v236, 0
  %245 = vmatprep.subr.bf16.mxu0 0
  %246 = vmatpush1.bf16.msra.mxu0 0
  %247 = vmatprep.subr.bf16.mxu0 0
  %248 = vmatpush1.bf16.msra.mxu0 0
  %249 = vmatprep.subr.bf16.mxu0 0
  %250 = vmatpush1.bf16.msra.mxu0 0
  %251 = vmatprep.subr.bf16.mxu0 0
  %252 = vmatpush1.bf16.msra.mxu0 0
  %253 = vmatprep.subr.bf16.mxu0 0
  %254 = vmatpush1.bf16.msra.mxu0 %v240
  %255 = vmatprep.subr.bf16.mxu0 0
  %256 = vmatpush1.bf16.msra.mxu0 %v239
  %257 = vmatprep.subr.bf16.mxu0 0
  %258 = vmatpush1.bf16.msra.mxu0 %v238
  %259 = vmatprep.subr.bf16.mxu0 0
  %260 = vmatpush1.bf16.msra.mxu0 %v237
  %261 = vmatprep.subr.bf16.mxu0 0
  %262 = vmatpush2.bf16.msra.mxu0 0
  %263 = vmatprep.subr.bf16.mxu0 0
  %264 = vmatpush2.bf16.msra.mxu0 0
  %265 = vmatprep.subr.bf16.mxu0 0
  %266 = vmatpush2.bf16.msra.mxu0 0
  %267 = vmatprep.subr.bf16.mxu0 0
  %268 = vmatpush2.bf16.msra.mxu0 0
  %269 = vmatprep.subr.bf16.mxu0 0
  %270 = vmatpush2.bf16.msra.mxu0 0
  %271 = vmatprep.subr.bf16.mxu0 0
  %272 = vmatpush2.bf16.msra.mxu0 0
  %273 = vmatprep.subr.bf16.mxu0 0
  %274 = vmatpush2.bf16.msra.mxu0 0
  %275 = vmatprep.subr.bf16.mxu0 0
  %276 = vmatpush2.bf16.msra.mxu0 0
  %277 = vmatprep.mubr.bf16.mxu0 0
  %278 = vmatmul.mubr.bf16.gmra.mxu0 %v243
  %v279 = vpop.f32.mrf.mxu0
  %v280 = vadd.f32 0.0, %v279
  %v281 = vpop.f32.mrf.mxu0
  %v282 = vpop.f32.mrf.mxu0
  %v283 = vadd.f32 0.0, %v282
  %v284 = vpop.f32.mrf.mxu0
  %285 = vdwg.mxu0
  %v286 = vadd.f32 %v150, %v280
  %v287 = vadd.f32 %v151, %v283
  %v288 = vld [vmem:[%s9] sm:$0x1]
  %v290 = vlaneseq
  %v291 = vshrl.u32 %v290, 7
  %v292 = vsub.s32 0, %v291
  %v293 = vrot.slane %v288, %v292
  %v295 = vadd.f32 %v286, %v293
  %v296 = vadd.f32 %v287, %v293
  %v297 = vld [vmem:[%s10] sm:$0x1]
  %v298 = vld [vmem:[%s11] sm:$0x1]
  %v299 = vsel %vm58, %v295, 0.0
  %300 = vadd.xlane.f32.xlu0 %v299
  %v301 = vpop.xlane.xlu0 %300
  %v302 = vsel %vm58, %v296, 0.0
  %303 = vadd.xlane.f32.xlu0 %v302
  %v304 = vpop.xlane.xlu0 %303
  %v305 = vmul.f32 %v301, %v115
  %v306 = vmul.f32 %v304, %v115
  %v307 = vsub.f32 %v295, %v305
  %v308 = vsub.f32 %v296, %v306
  %v309 = vmul.f32 %v307, %v307
  %v310 = vmul.f32 %v308, %v308
  %v311 = vsel %vm58, %v309, 0.0
  %312 = vadd.xlane.f32.xlu0 %v311
  %v313 = vpop.xlane.xlu0 %312
  %v314 = vsel %vm58, %v310, 0.0
  %315 = vadd.xlane.f32.xlu0 %v314
  %v316 = vpop.xlane.xlu0 %315
  %v317 = vmul.f32 %v313, %v115
  %v318 = vmul.f32 %v316, %v115
  %v319 = vadd.f32 %v317, 1e-05
  %v320 = vadd.f32 %v318, 1e-05
  %v321 = vrsqrt.pop %v319
  %v322 = vrsqrt.pop %v320
  %v323 = vmul.f32 %v307, %v321
  %v324 = vmul.f32 %v308, %v322
  %v326 = vlaneseq
  %v327 = vshrl.u32 %v326, 7
  %v328 = vsub.s32 0, %v327
  %v329 = vrot.slane %v297, %v328
  %v331 = vmul.f32 %v323, %v329
  %v332 = vmul.f32 %v324, %v329
  %v334 = vlaneseq
  %v335 = vshrl.u32 %v334, 7
  %v336 = vsub.s32 0, %v335
  %v337 = vrot.slane %v298, %v336
  %v339 = vadd.f32 %v331, %v337
  %v340 = vadd.f32 %v332, %v337
  %341 = vst.msk [vmem:[%s12] sm:$0xff] %vm58, %v339
  %342 = vst.msk [vmem:[%s12 + $0x8] sm:$0xff] %vm58, %v340
  // Predicated region
  $region50: #{tener_forward.15} parent=0 // pred_check
    _
  $region51: #{tener_forward.15} parent=0 // pred_check_branch
    %344 = sbr.rel (0) target = $region53
  $region52: #{tener_forward.15} parent=0 // pred_region
    _
  $region53: #{tener_forward.15} parent=0 // pred_fallthru
    _
  // Predicated region
  $region54: #{tener_forward.15} parent=0 // pred_check
    _
  $region55: #{tener_forward.15} parent=0 // pred_check_branch
    %346 = sbr.rel (0) target = $region57
  $region56: #{tener_forward.15} parent=0 // pred_region
    _
  $region57: #{tener_forward.15} parent=0 // pred_fallthru
    _

// kernel: tener_forward.19
$region0: #{tener_forward.19}
  #allocation0 [shape = 'u32[]', space=smem, size = 0x4, offset = 0x4, fixed_abs, tag = 'smem constant byte address 0x4 - core index']
  #allocation1 [shape = 'u32[144,128]{1,0:T(1,128)}', space=vmem, size = 0x12000, scoped, tag = 'internal scratch']
  %s0 = inlined_call_operand.vmem [shape: f32[16,32], index: 0, kind: input, shape index: {}]
  %s1 = inlined_call_operand.vmem [shape: f32[16,32], index: 1, kind: input, shape index: {}]
  %s2 = inlined_call_operand.vmem [shape: f32[1,32], index: 2, kind: input, shape index: {}]
  %s3 = inlined_call_operand.vmem [shape: f32[1,32], index: 3, kind: input, shape index: {}]
  %s4 = inlined_call_operand.vmem [shape: f32[32,64], index: 4, kind: input, shape index: {}]
  %s5 = inlined_call_operand.vmem [shape: f32[1,64], index: 5, kind: input, shape index: {}]
  %s6 = inlined_call_operand.vmem [shape: f32[64,32], index: 6, kind: input, shape index: {}]
  %s7 = inlined_call_operand.vmem [shape: f32[1,32], index: 7, kind: input, shape index: {}]
  %s8 = inlined_call_operand.vmem [shape: f32[1,32], index: 8, kind: input, shape index: {}]
  %s9 = inlined_call_operand.vmem [shape: f32[1,32], index: 9, kind: input, shape index: {}]
  %s10 = inlined_call_operand.vmem [shape: f32[16,32], index: 10, kind: output, shape index: {}]
  %s11 = sld [smem:[#allocation0]]
  $region50: #{tener_forward.19} parent=0
    _
  %s13 = ssub.s32 1, %s11
  %s14 = scalar_select 0, %s13, %s11
  // Predicated region
  $region2: #{tener_forward.19} parent=0 // pred_check
    _
  $region3: #{tener_forward.19} parent=0 // pred_check_branch
    %16 = sbr.rel (0) target = $region5
  $region4: #{tener_forward.19} parent=0 // pred_region
    _
  $region5: #{tener_forward.19} parent=0 // pred_fallthru
    _
  // Predicated region
  $region6: #{tener_forward.19} parent=0 // pred_check
    _
  $region7: #{tener_forward.19} parent=0 // pred_check_branch
    %18 = sbr.rel (0) target = $region9
  $region8: #{tener_forward.19} parent=0 // pred_region
    _
  $region9: #{tener_forward.19} parent=0 // pred_fallthru
    _
  // Predicated region
  $region10: #{tener_forward.19} parent=0 // pred_check
    _
  $region11: #{tener_forward.19} parent=0 // pred_check_branch
    %20 = sbr.rel (0) target = $region13
  $region12: #{tener_forward.19} parent=0 // pred_region
    _
  $region13: #{tener_forward.19} parent=0 // pred_fallthru
    _
  // Predicated region
  $region14: #{tener_forward.19} parent=0 // pred_check
    _
  $region15: #{tener_forward.19} parent=0 // pred_check_branch
    %22 = sbr.rel (0) target = $region17
  $region16: #{tener_forward.19} parent=0 // pred_region
    _
  $region17: #{tener_forward.19} parent=0 // pred_fallthru
    _
  // Predicated region
  $region18: #{tener_forward.19} parent=0 // pred_check
    _
  $region19: #{tener_forward.19} parent=0 // pred_check_branch
    %24 = sbr.rel (0) target = $region21
  $region20: #{tener_forward.19} parent=0 // pred_region
    _
  $region21: #{tener_forward.19} parent=0 // pred_fallthru
    _
  // Predicated region
  $region22: #{tener_forward.19} parent=0 // pred_check
    _
  $region23: #{tener_forward.19} parent=0 // pred_check_branch
    %26 = sbr.rel (0) target = $region25
  $region24: #{tener_forward.19} parent=0 // pred_region
    _
  $region25: #{tener_forward.19} parent=0 // pred_fallthru
    _
  // Predicated region
  $region26: #{tener_forward.19} parent=0 // pred_check
    _
  $region27: #{tener_forward.19} parent=0 // pred_check_branch
    %28 = sbr.rel (0) target = $region29
  $region28: #{tener_forward.19} parent=0 // pred_region
    _
  $region29: #{tener_forward.19} parent=0 // pred_fallthru
    _
  // Predicated region
  $region30: #{tener_forward.19} parent=0 // pred_check
    _
  $region31: #{tener_forward.19} parent=0 // pred_check_branch
    %30 = sbr.rel (0) target = $region33
  $region32: #{tener_forward.19} parent=0 // pred_region
    _
  $region33: #{tener_forward.19} parent=0 // pred_fallthru
    _
  // Predicated region
  $region34: #{tener_forward.19} parent=0 // pred_check
    _
  $region35: #{tener_forward.19} parent=0 // pred_check_branch
    %32 = sbr.rel (0) target = $region37
  $region36: #{tener_forward.19} parent=0 // pred_region
    _
  $region37: #{tener_forward.19} parent=0 // pred_fallthru
    _
  // Predicated region
  $region38: #{tener_forward.19} parent=0 // pred_check
    _
  $region39: #{tener_forward.19} parent=0 // pred_check_branch
    %34 = sbr.rel (0) target = $region41
  $region40: #{tener_forward.19} parent=0 // pred_region
    _
  $region41: #{tener_forward.19} parent=0 // pred_fallthru
    _
  %v36 = vld [vmem:[%s1] sm:$0xff]
  %v37 = vld [vmem:[%s1 + $0x8] sm:$0xff]
  %v38 = vld [vmem:[%s0] sm:$0xff]
  %v39 = vld [vmem:[%s0 + $0x8] sm:$0xff]
  %v40 = vadd.f32 %v38, %v36
  %v41 = vadd.f32 %v39, %v37
  %v42 = vld [vmem:[%s2] sm:$0x1]
  %v43 = vld [vmem:[%s3] sm:$0x1]
  %vm44 = vcmask 261120
  %v45 = vsel %vm44, %v40, 0.0
  %46 = vadd.xlane.f32.xlu0 %v45
  %v47 = vpop.xlane.xlu0 %46
  %v48 = vsel %vm44, %v41, 0.0
  %49 = vadd.xlane.f32.xlu0 %v48
  %v50 = vpop.xlane.xlu0 %49
  %v51 = vrcp.pop 32.0
  %v52 = vmul.f32 %v47, %v51
  %v53 = vmul.f32 %v50, %v51
  %v54 = vsub.f32 %v40, %v52
  %v55 = vsub.f32 %v41, %v53
  %v56 = vmul.f32 %v54, %v54
  %v57 = vmul.f32 %v55, %v55
  %v58 = vsel %vm44, %v56, 0.0
  %59 = vadd.xlane.f32.xlu0 %v58
  %v60 = vpop.xlane.xlu0 %59
  %v61 = vsel %vm44, %v57, 0.0
  %62 = vadd.xlane.f32.xlu0 %v61
  %v63 = vpop.xlane.xlu0 %62
  %v64 = vmul.f32 %v60, %v51
  %v65 = vmul.f32 %v63, %v51
  %v66 = vadd.f32 %v64, 1e-05
  %v67 = vadd.f32 %v65, 1e-05
  %v68 = vrsqrt.pop %v66
  %v69 = vrsqrt.pop %v67
  %v70 = vmul.f32 %v54, %v68
  %v71 = vmul.f32 %v55, %v69
  %v73 = vlaneseq
  %v74 = vshrl.u32 %v73, 7
  %v75 = vsub.s32 0, %v74
  %v76 = vrot.slane %v42, %v75
  %v78 = vmul.f32 %v70, %v76
  %v79 = vmul.f32 %v71, %v76
  %v81 = vlaneseq
  %v82 = vshrl.u32 %v81, 7
  %v83 = vsub.s32 0, %v82
  %v84 = vrot.slane %v43, %v83
  %v86 = vadd.f32 %v78, %v84
  %v87 = vadd.f32 %v79, %v84
  %v88 = vld [vmem:[%s4] sm:$0xff]
  %v89 = vld [vmem:[%s4 + $0x8] sm:$0xff]
  %v90 = vld [vmem:[%s4 + $0x10] sm:$0xff]
  %v91 = vld [vmem:[%s4 + $0x18] sm:$0xff]
  %v92 = vpack.c.bf16 %v87, %v86
  %v93 = vpack.c.bf16 %v89, %v88
  %v94 = vpack.c.bf16 %v91, %v90
  %v95 = vld [vmem:[%s5] sm:$0x1]
  %v97 = vlaneseq
  %v98 = vshrl.u32 %v97, 7
  %v99 = vsub.s32 0, %v98
  %v100 = vrot.slane %v95, %v99
  %v103 = vsel %vm44, %v92, 0
  %105 = vmatprep.subr.bf16.mxu0 0
  %106 = vmatpush1.bf16.msra.mxu0 0
  %107 = vmatprep.subr.bf16.mxu0 0
  %108 = vmatpush1.bf16.msra.mxu0 0
  %109 = vmatprep.subr.bf16.mxu0 0
  %110 = vmatpush1.bf16.msra.mxu0 0
  %111 = vmatprep.subr.bf16.mxu0 0
  %112 = vmatpush1.bf16.msra.mxu0 0
  %113 = vmatprep.subr.bf16.mxu0 0
  %114 = vmatpush1.bf16.msra.mxu0 0
  %115 = vmatprep.subr.bf16.mxu0 0
  %116 = vmatpush1.bf16.msra.mxu0 0
  %117 = vmatprep.subr.bf16.mxu0 0
  %118 = vmatpush1.bf16.msra.mxu0 %v94
  %119 = vmatprep.subr.bf16.mxu0 0
  %120 = vmatpush1.bf16.msra.mxu0 %v93
  %121 = vmatprep.subr.bf16.mxu0 0
  %122 = vmatpush2.bf16.msra.mxu0 0
  %123 = vmatprep.subr.bf16.mxu0 0
  %124 = vmatpush2.bf16.msra.mxu0 0
  %125 = vmatprep.subr.bf16.mxu0 0
  %126 = vmatpush2.bf16.msra.mxu0 0
  %127 = vmatprep.subr.bf16.mxu0 0
  %128 = vmatpush2.bf16.msra.mxu0 0
  %129 = vmatprep.subr.bf16.mxu0 0
  %130 = vmatpush2.bf16.msra.mxu0 0
  %131 = vmatprep.subr.bf16.mxu0 0
  %132 = vmatpush2.bf16.msra.mxu0 0
  %133 = vmatprep.subr.bf16.mxu0 0
  %134 = vmatpush2.bf16.msra.mxu0 0
  %135 = vmatprep.subr.bf16.mxu0 0
  %136 = vmatpush2.bf16.msra.mxu0 0
  %137 = vmatprep.mubr.bf16.mxu0 0
  %138 = vmatmul.mubr.bf16.gmra.mxu0 %v103
  %v139 = vpop.f32.mrf.mxu0
  %v140 = vadd.f32 %v100, %v139
  %v141 = vpop.f32.mrf.mxu0
  %v142 = vpop.f32.mrf.mxu0
  %v143 = vadd.f32 %v100, %v142
  %v144 = vpop.f32.mrf.mxu0
  %145 = vdwg.mxu0
  %vm146 = vcmp.ge.f32.partialorder %v140, 0.0
  %vm147 = vcmp.ge.f32.partialorder %v143, 0.0
  %v148 = vmul.f32 %v140, 0.01
  %v149 = vmul.f32 %v143, 0.01
  %v150 = vsel %vm146, %v140, %v148
  %v151 = vsel %vm147, %v143, %v149
  %v152 = vld [vmem:[%s6] sm:$0xff]
  %v153 = vld [vmem:[%s6 + $0x8] sm:$0xff]
  %v154 = vld [vmem:[%s6 + $0x10] sm:$0xff]
  %v155 = vld [vmem:[%s6 + $0x18] sm:$0xff]
  %v156 = vld [vmem:[%s6 + $0x20] sm:$0xff]
  %v157 = vld [vmem:[%s6 + $0x28] sm:$0xff]
  %v158 = vld [vmem:[%s6 + $0x30] sm:$0xff]
  %v159 = vld [vmem:[%s6 + $0x38] sm:$0xff]
  %v160 = vpack.c.bf16 %v151, %v150
  %v161 = vpack.c.bf16 %v153, %v152
  %v162 = vpack.c.bf16 %v155, %v154
  %v163 = vpack.c.bf16 %v157, %v156
  %v164 = vpack.c.bf16 %v159, %v158
  %vm165 = vcmask 523264
  %v167 = vsel %vm165, %v160, 0
  %169 = vmatprep.subr.bf16.mxu0 0
  %170 = vmatpush1.bf16.msra.mxu0 0
  %171 = vmatprep.subr.bf16.mxu0 0
  %172 = vmatpush1.bf16.msra.mxu0 0
  %173 = vmatprep.subr.bf16.mxu0 0
  %174 = vmatpush1.bf16.msra.mxu0 0
  %175 = vmatprep.subr.bf16.mxu0 0
  %176 = vmatpush1.bf16.msra.mxu0 0
  %177 = vmatprep.subr.bf16.mxu0 0
  %178 = vmatpush1.bf16.msra.mxu0 %v164
  %179 = vmatprep.subr.bf16.mxu0 0
  %180 = vmatpush1.bf16.msra.mxu0 %v163
  %181 = vmatprep.subr.bf16.mxu0 0
  %182 = vmatpush1.bf16.msra.mxu0 %v162
  %183 = vmatprep.subr.bf16.mxu0 0
  %184 = vmatpush1.bf16.msra.mxu0 %v161
  %185 = vmatprep.subr.bf16.mxu0 0
  %186 = vmatpush2.bf16.msra.mxu0 0
  %187 = vmatprep.subr.bf16.mxu0 0
  %188 = vmatpush2.bf16.msra.mxu0 0
  %189 = vmatprep.subr.bf16.mxu0 0
  %190 = vmatpush2.bf16.msra.mxu0 0
  %191 = vmatprep.subr.bf16.mxu0 0
  %192 = vmatpush2.bf16.msra.mxu0 0
  %193 = vmatprep.subr.bf16.mxu0 0
  %194 = vmatpush2.bf16.msra.mxu0 0
  %195 = vmatprep.subr.bf16.mxu0 0
  %196 = vmatpush2.bf16.msra.mxu0 0
  %197 = vmatprep.subr.bf16.mxu0 0
  %198 = vmatpush2.bf16.msra.mxu0 0
  %199 = vmatprep.subr.bf16.mxu0 0
  %200 = vmatpush2.bf16.msra.mxu0 0
  %201 = vmatprep.mubr.bf16.mxu0 0
  %202 = vmatmul.mubr.bf16.gmra.mxu0 %v167
  %v203 = vpop.f32.mrf.mxu0
  %v204 = vadd.f32 0.0, %v203
  %v205 = vpop.f32.mrf.mxu0
  %v206 = vpop.f32.mrf.mxu0
  %v207 = vadd.f32 0.0, %v206
  %v208 = vpop.f32.mrf.mxu0
  %209 = vdwg.mxu0
  %v210 = vadd.f32 %v86, %v204
  %v211 = vadd.f32 %v87, %v207
  %v212 = vld [vmem:[%s7] sm:$0x1]
  %v214 = vlaneseq
  %v215 = vshrl.u32 %v214, 7
  %v216 = vsub.s32 0, %v215
  %v217 = vrot.slane %v212, %v216
  %v219 = vadd.f32 %v210, %v217
  %v220 = vadd.f32 %v211, %v217
  %v221 = vld [vmem:[%s8] sm:$0x1]
  %v222 = vld [vmem:[%s9] sm:$0x1]
  %v223 = vsel %vm44, %v219, 0.0
  %224 = vadd.xlane.f32.xlu0 %v223
  %v225 = vpop.xlane.xlu0 %224
  %v226 = vsel %vm44, %v220, 0.0
  %227 = vadd.xlane.f32.xlu0 %v226
  %v228 = vpop.xlane.xlu0 %227
  %v229 = vmul.f32 %v225, %v51
  %v230 = vmul.f32 %v228, %v51
  %v231 = vsub.f32 %v219, %v229
  %v232 = vsub.f32 %v220, %v230
  %v233 = vmul.f32 %v231, %v231
  %v234 = vmul.f32 %v232, %v232
  %v235 = vsel %vm44, %v233, 0.0
  %236 = vadd.xlane.f32.xlu0 %v235
  %v237 = vpop.xlane.xlu0 %236
  %v238 = vsel %vm44, %v234, 0.0
  %239 = vadd.xlane.f32.xlu0 %v238
  %v240 = vpop.xlane.xlu0 %239
  %v241 = vmul.f32 %v237, %v51
  %v242 = vmul.f32 %v240, %v51
  %v243 = vadd.f32 %v241, 1e-05
  %v244 = vadd.f32 %v242, 1e-05
  %v245 = vrsqrt.pop %v243
  %v246 = vrsqrt.pop %v244
  %v247 = vmul.f32 %v231, %v245
  %v248 = vmul.f32 %v232, %v246
  %v250 = vlaneseq
  %v251 = vshrl.u32 %v250, 7
  %v252 = vsub.s32 0, %v251
  %v253 = vrot.slane %v221, %v252
  %v255 = vmul.f32 %v247, %v253
  %v256 = vmul.f32 %v248, %v253
  %v258 = vlaneseq
  %v259 = vshrl.u32 %v258, 7
  %v260 = vsub.s32 0, %v259
  %v261 = vrot.slane %v222, %v260
  %v263 = vadd.f32 %v255, %v261
  %v264 = vadd.f32 %v256, %v261
  %265 = vst.msk [vmem:[%s10] sm:$0xff] %vm44, %v263
  %266 = vst.msk [vmem:[%s10 + $0x8] sm:$0xff] %vm44, %v264
  // Predicated region
  $region42: #{tener_forward.19} parent=0 // pred_check
    _
  $region43: #{tener_forward.19} parent=0 // pred_check_branch
    %268 = sbr.rel (0) target = $region45
  $region44: #{tener_forward.19} parent=0 // pred_region
    _
  $region45: #{tener_forward.19} parent=0 // pred_fallthru
    _
  // Predicated region
  $region46: #{tener_forward.19} parent=0 // pred_check
    _
  $region47: #{tener_forward.19} parent=0 // pred_check_branch
    %270 = sbr.rel (0) target = $region49
  $region48: #{tener_forward.19} parent=0 // pred_region
    _
  $region49: #{tener_forward.19} parent=0 // pred_fallthru
    _

// kernel: tener_forward.18
$region0: #{tener_forward.18}
  #allocation0 [shape = 'u32[]', space=smem, size = 0x4, offset = 0x4, fixed_abs, tag = 'smem constant byte address 0x4 - core index']
  #allocation1 [shape = 'u32[144,128]{1,0:T(1,128)}', space=vmem, size = 0x12000, scoped, tag = 'internal scratch']
  %s0 = inlined_call_operand.vmem [shape: f32[8,8,8], index: 0, kind: input, shape index: {}]
  %s1 = inlined_call_operand.vmem [shape: f32[8,8,8], index: 1, kind: input, shape index: {}]
  %s2 = inlined_call_operand.vmem [shape: f32[8,8,8], index: 2, kind: input, shape index: {}]
  %s3 = inlined_call_operand.vmem [shape: f32[8,8,8], index: 3, kind: input, shape index: {}]
  %s4 = inlined_call_operand.vmem [shape: f32[8,1,8], index: 4, kind: input, shape index: {}]
  %s5 = inlined_call_operand.vmem [shape: f32[8,8,8], index: 5, kind: output, shape index: {}]
  %s6 = sld [smem:[#allocation0]]
  $region30: #{tener_forward.18} parent=0
    _
  %s8 = ssub.s32 1, %s6
  %s9 = scalar_select 0, %s8, %s6
  // Predicated region
  $region2: #{tener_forward.18} parent=0 // pred_check
    _
  $region3: #{tener_forward.18} parent=0 // pred_check_branch
    %11 = sbr.rel (0) target = $region5
  $region4: #{tener_forward.18} parent=0 // pred_region
    _
  $region5: #{tener_forward.18} parent=0 // pred_fallthru
    _
  // Predicated region
  $region6: #{tener_forward.18} parent=0 // pred_check
    _
  $region7: #{tener_forward.18} parent=0 // pred_check_branch
    %13 = sbr.rel (0) target = $region9
  $region8: #{tener_forward.18} parent=0 // pred_region
    _
  $region9: #{tener_forward.18} parent=0 // pred_fallthru
    _
  // Predicated region
  $region10: #{tener_forward.18} parent=0 // pred_check
    _
  $region11: #{tener_forward.18} parent=0 // pred_check_branch
    %15 = sbr.rel (0) target = $region13
  $region12: #{tener_forward.18} parent=0 // pred_region
    _
  $region13: #{tener_forward.18} parent=0 // pred_fallthru
    _
  // Predicated region
  $region14: #{tener_forward.18} parent=0 // pred_check
    _
  $region15: #{tener_forward.18} parent=0 // pred_check_branch
    %17 = sbr.rel (0) target = $region17
  $region16: #{tener_forward.18} parent=0 // pred_region
    _
  $region17: #{tener_forward.18} parent=0 // pred_fallthru
    _
  // Predicated region
  $region18: #{tener_forward.18} parent=0 // pred_check
    _
  $region19: #{tener_forward.18} parent=0 // pred_check_branch
    %19 = sbr.rel (0) target = $region21
  $region20: #{tener_forward.18} parent=0 // pred_region
    _
  $region21: #{tener_forward.18} parent=0 // pred_fallthru
    _
  %v21 = vld [vmem:[%s0] sm:$0xff]
  %v22 = vld [vmem:[%s0 + $0x8] sm:$0xff]
  %v23 = vld [vmem:[%s0 + $0x10] sm:$0xff]
  %v24 = vld [vmem:[%s0 + $0x18] sm:$0xff]
  %v25 = vld [vmem:[%s0 + $0x20] sm:$0xff]
  %v26 = vld [vmem:[%s0 + $0x28] sm:$0xff]
  %v27 = vld [vmem:[%s0 + $0x30] sm:$0xff]
  %v28 = vld [vmem:[%s0 + $0x38] sm:$0xff]
  %v29 = vpack.c.bf16 %v21, %v21
  %v30 = vpack.c.bf16 %v22, %v22
  %v31 = vpack.c.bf16 %v23, %v23
  %v32 = vpack.c.bf16 %v24, %v24
  %v33 = vpack.c.bf16 %v25, %v25
  %v34 = vpack.c.bf16 %v26, %v26
  %v35 = vpack.c.bf16 %v27, %v27
  %v36 = vpack.c.bf16 %v28, %v28
  %v37 = vld [vmem:[%s1] sm:$0xff]
  %v38 = vld [vmem:[%s1 + $0x8] sm:$0xff]
  %v39 = vld [vmem:[%s1 + $0x10] sm:$0xff]
  %v40 = vld [vmem:[%s1 + $0x18] sm:$0xff]
  %v41 = vld [vmem:[%s1 + $0x20] sm:$0xff]
  %v42 = vld [vmem:[%s1 + $0x28] sm:$0xff]
  %v43 = vld [vmem:[%s1 + $0x30] sm:$0xff]
  %v44 = vld [vmem:[%s1 + $0x38] sm:$0xff]
  %v45 = vpack.c.bf16 %v37, %v37
  %v46 = vpack.c.bf16 %v38, %v38
  %v47 = vpack.c.bf16 %v39, %v39
  %v48 = vpack.c.bf16 %v40, %v40
  %v49 = vpack.c.bf16 %v41, %v41
  %v50 = vpack.c.bf16 %v42, %v42
  %v51 = vpack.c.bf16 %v43, %v43
  %v52 = vpack.c.bf16 %v44, %v44
  %v53 = vld [vmem:[%s3] sm:$0xff]
  %v54 = vld [vmem:[%s3 + $0x8] sm:$0xff]
  %v55 = vld [vmem:[%s3 + $0x10] sm:$0xff]
  %v56 = vld [vmem:[%s3 + $0x18] sm:$0xff]
  %v57 = vld [vmem:[%s3 + $0x20] sm:$0xff]
  %v58 = vld [vmem:[%s3 + $0x28] sm:$0xff]
  %v59 = vld [vmem:[%s3 + $0x30] sm:$0xff]
  %v60 = vld [vmem:[%s3 + $0x38] sm:$0xff]
  %vm61 = vcmask 64512
  %v63 = vsel %vm61, %v29, 0
  %v66 = vsel %vm61, %v45, 0
  %68 = vmatprep.subr.bf16.mxu0 0
  %69 = vmatpush1.bf16.xpose.msra.mxu0 0
  %70 = vmatprep.subr.bf16.mxu0 0
  %71 = vmatpush1.bf16.xpose.msra.mxu0 0
  %72 = vmatprep.subr.bf16.mxu0 0
  %73 = vmatpush1.bf16.xpose.msra.mxu0 0
  %74 = vmatprep.subr.bf16.mxu0 0
  %75 = vmatpush1.bf16.xpose.msra.mxu0 0
  %76 = vmatprep.subr.bf16.mxu0 0
  %77 = vmatpush1.bf16.xpose.msra.mxu0 0
  %78 = vmatprep.subr.bf16.mxu0 0
  %79 = vmatpush1.bf16.xpose.msra.mxu0 0
  %80 = vmatprep.subr.bf16.mxu0 0
  %81 = vmatpush1.bf16.xpose.msra.mxu0 0
  %82 = vmatprep.subr.bf16.mxu0 0
  %83 = vmatpush1.bf16.xpose.msra.mxu0 %v66
  %84 = vmatprep.subr.bf16.mxu0 0
  %85 = vmatpush2.bf16.xpose.msra.mxu0 0
  %86 = vmatprep.subr.bf16.mxu0 0
  %87 = vmatpush2.bf16.xpose.msra.mxu0 0
  %88 = vmatprep.subr.bf16.mxu0 0
  %89 = vmatpush2.bf16.xpose.msra.mxu0 0
  %90 = vmatprep.subr.bf16.mxu0 0
  %91 = vmatpush2.bf16.xpose.msra.mxu0 0
  %92 = vmatprep.subr.bf16.mxu0 0
  %93 = vmatpush2.bf16.xpose.msra.mxu0 0
  %94 = vmatprep.subr.bf16.mxu0 0
  %95 = vmatpush2.bf16.xpose.msra.mxu0 0
  %96 = vmatprep.subr.bf16.mxu0 0
  %97 = vmatpush2.bf16.xpose.msra.mxu0 0
  %98 = vmatprep.subr.bf16.mxu0 0
  %99 = vmatpush2.bf16.xpose.msra.mxu0 0
  %100 = vmatprep.mubr.bf16.mxu0 0
  %101 = vmatmul.mubr.bf16.gmra.mxu0 %v63
  %v102 = vpop.f32.mrf.mxu0
  %v103 = vadd.f32 %v53, %v102
  %v104 = vpop.f32.mrf.mxu0
  %v105 = vpop.f32.mrf.mxu0
  %v106 = vpop.f32.mrf.mxu0
  %107 = vdwg.mxu0
  %v109 = vsel %vm61, %v30, 0
  %v112 = vsel %vm61, %v46, 0
  %114 = vmatprep.subr.bf16.mxu0 0
  %115 = vmatpush1.bf16.xpose.msra.mxu0 0
  %116 = vmatprep.subr.bf16.mxu0 0
  %117 = vmatpush1.bf16.xpose.msra.mxu0 0
  %118 = vmatprep.subr.bf16.mxu0 0
  %119 = vmatpush1.bf16.xpose.msra.mxu0 0
  %120 = vmatprep.subr.bf16.mxu0 0
  %121 = vmatpush1.bf16.xpose.msra.mxu0 0
  %122 = vmatprep.subr.bf16.mxu0 0
  %123 = vmatpush1.bf16.xpose.msra.mxu0 0
  %124 = vmatprep.subr.bf16.mxu0 0
  %125 = vmatpush1.bf16.xpose.msra.mxu0 0
  %126 = vmatprep.subr.bf16.mxu0 0
  %127 = vmatpush1.bf16.xpose.msra.mxu0 0
  %128 = vmatprep.subr.bf16.mxu0 0
  %129 = vmatpush1.bf16.xpose.msra.mxu0 %v112
  %130 = vmatprep.subr.bf16.mxu0 0
  %131 = vmatpush2.bf16.xpose.msra.mxu0 0
  %132 = vmatprep.subr.bf16.mxu0 0
  %133 = vmatpush2.bf16.xpose.msra.mxu0 0
  %134 = vmatprep.subr.bf16.mxu0 0
  %135 = vmatpush2.bf16.xpose.msra.mxu0 0
  %136 = vmatprep.subr.bf16.mxu0 0
  %137 = vmatpush2.bf16.xpose.msra.mxu0 0
  %138 = vmatprep.subr.bf16.mxu0 0
  %139 = vmatpush2.bf16.xpose.msra.mxu0 0
  %140 = vmatprep.subr.bf16.mxu0 0
  %141 = vmatpush2.bf16.xpose.msra.mxu0 0
  %142 = vmatprep.subr.bf16.mxu0 0
  %143 = vmatpush2.bf16.xpose.msra.mxu0 0
  %144 = vmatprep.subr.bf16.mxu0 0
  %145 = vmatpush2.bf16.xpose.msra.mxu0 0
  %146 = vmatprep.mubr.bf16.mxu0 0
  %147 = vmatmul.mubr.bf16.gmra.mxu0 %v109
  %v148 = vpop.f32.mrf.mxu0
  %v149 = vadd.f32 %v54, %v148
  %v150 = vpop.f32.mrf.mxu0
  %v151 = vpop.f32.mrf.mxu0
  %v152 = vpop.f32.mrf.mxu0
  %153 = vdwg.mxu0
  %v155 = vsel %vm61, %v31, 0
  %v158 = vsel %vm61, %v47, 0
  %160 = vmatprep.subr.bf16.mxu0 0
  %161 = vmatpush1.bf16.xpose.msra.mxu0 0
  %162 = vmatprep.subr.bf16.mxu0 0
  %163 = vmatpush1.bf16.xpose.msra.mxu0 0
  %164 = vmatprep.subr.bf16.mxu0 0
  %165 = vmatpush1.bf16.xpose.msra.mxu0 0
  %166 = vmatprep.subr.bf16.mxu0 0
  %167 = vmatpush1.bf16.xpose.msra.mxu0 0
  %168 = vmatprep.subr.bf16.mxu0 0
  %169 = vmatpush1.bf16.xpose.msra.mxu0 0
  %170 = vmatprep.subr.bf16.mxu0 0
  %171 = vmatpush1.bf16.xpose.msra.mxu0 0
  %172 = vmatprep.subr.bf16.mxu0 0
  %173 = vmatpush1.bf16.xpose.msra.mxu0 0
  %174 = vmatprep.subr.bf16.mxu0 0
  %175 = vmatpush1.bf16.xpose.msra.mxu0 %v158
  %176 = vmatprep.subr.bf16.mxu0 0
  %177 = vmatpush2.bf16.xpose.msra.mxu0 0
  %178 = vmatprep.subr.bf16.mxu0 0
  %179 = vmatpush2.bf16.xpose.msra.mxu0 0
  %180 = vmatprep.subr.bf16.mxu0 0
  %181 = vmatpush2.bf16.xpose.msra.mxu0 0
  %182 = vmatprep.subr.bf16.mxu0 0
  %183 = vmatpush2.bf16.xpose.msra.mxu0 0
  %184 = vmatprep.subr.bf16.mxu0 0
  %185 = vmatpush2.bf16.xpose.msra.mxu0 0
  %186 = vmatprep.subr.bf16.mxu0 0
  %187 = vmatpush2.bf16.xpose.msra.mxu0 0
  %188 = vmatprep.subr.bf16.mxu0 0
  %189 = vmatpush2.bf16.xpose.msra.mxu0 0
  %190 = vmatprep.subr.bf16.mxu0 0
  %191 = vmatpush2.bf16.xpose.msra.mxu0 0
  %192 = vmatprep.mubr.bf16.mxu0 0
  %193 = vmatmul.mubr.bf16.gmra.mxu0 %v155
  %v194 = vpop.f32.mrf.mxu0
  %v195 = vadd.f32 %v55, %v194
  %v196 = vpop.f32.mrf.mxu0
  %v197 = vpop.f32.mrf.mxu0
  %v198 = vpop.f32.mrf.mxu0
  %199 = vdwg.mxu0
  %v201 = vsel %vm61, %v32, 0
  %v204 = vsel %vm61, %v48, 0
  %206 = vmatprep.subr.bf16.mxu0 0
  %207 = vmatpush1.bf16.xpose.msra.mxu0 0
  %208 = vmatprep.subr.bf16.mxu0 0
  %209 = vmatpush1.bf16.xpose.msra.mxu0 0
  %210 = vmatprep.subr.bf16.mxu0 0
  %211 = vmatpush1.bf16.xpose.msra.mxu0 0
  %212 = vmatprep.subr.bf16.mxu0 0
  %213 = vmatpush1.bf16.xpose.msra.mxu0 0
  %214 = vmatprep.subr.bf16.mxu0 0
  %215 = vmatpush1.bf16.xpose.msra.mxu0 0
  %216 = vmatprep.subr.bf16.mxu0 0
  %217 = vmatpush1.bf16.xpose.msra.mxu0 0
  %218 = vmatprep.subr.bf16.mxu0 0
  %219 = vmatpush1.bf16.xpose.msra.mxu0 0
  %220 = vmatprep.subr.bf16.mxu0 0
  %221 = vmatpush1.bf16.xpose.msra.mxu0 %v204
  %222 = vmatprep.subr.bf16.mxu0 0
  %223 = vmatpush2.bf16.xpose.msra.mxu0 0
  %224 = vmatprep.subr.bf16.mxu0 0
  %225 = vmatpush2.bf16.xpose.msra.mxu0 0
  %226 = vmatprep.subr.bf16.mxu0 0
  %227 = vmatpush2.bf16.xpose.msra.mxu0 0
  %228 = vmatprep.subr.bf16.mxu0 0
  %229 = vmatpush2.bf16.xpose.msra.mxu0 0
  %230 = vmatprep.subr.bf16.mxu0 0
  %231 = vmatpush2.bf16.xpose.msra.mxu0 0
  %232 = vmatprep.subr.bf16.mxu0 0
  %233 = vmatpush2.bf16.xpose.msra.mxu0 0
  %234 = vmatprep.subr.bf16.mxu0 0
  %235 = vmatpush2.bf16.xpose.msra.mxu0 0
  %236 = vmatprep.subr.bf16.mxu0 0
  %237 = vmatpush2.bf16.xpose.msra.mxu0 0
  %238 = vmatprep.mubr.bf16.mxu0 0
  %239 = vmatmul.mubr.bf16.gmra.mxu0 %v201
  %v240 = vpop.f32.mrf.mxu0
  %v241 = vadd.f32 %v56, %v240
  %v242 = vpop.f32.mrf.mxu0
  %v243 = vpop.f32.mrf.mxu0
  %v244 = vpop.f32.mrf.mxu0
  %245 = vdwg.mxu0
  %v247 = vsel %vm61, %v33, 0
  %v250 = vsel %vm61, %v49, 0
  %252 = vmatprep.subr.bf16.mxu0 0
  %253 = vmatpush1.bf16.xpose.msra.mxu0 0
  %254 = vmatprep.subr.bf16.mxu0 0
  %255 = vmatpush1.bf16.xpose.msra.mxu0 0
  %256 = vmatprep.subr.bf16.mxu0 0
  %257 = vmatpush1.bf16.xpose.msra.mxu0 0
  %258 = vmatprep.subr.bf16.mxu0 0
  %259 = vmatpush1.bf16.xpose.msra.mxu0 0
  %260 = vmatprep.subr.bf16.mxu0 0
  %261 = vmatpush1.bf16.xpose.msra.mxu0 0
  %262 = vmatprep.subr.bf16.mxu0 0
  %263 = vmatpush1.bf16.xpose.msra.mxu0 0
  %264 = vmatprep.subr.bf16.mxu0 0
  %265 = vmatpush1.bf16.xpose.msra.mxu0 0
  %266 = vmatprep.subr.bf16.mxu0 0
  %267 = vmatpush1.bf16.xpose.msra.mxu0 %v250
  %268 = vmatprep.subr.bf16.mxu0 0
  %269 = vmatpush2.bf16.xpose.msra.mxu0 0
  %270 = vmatprep.subr.bf16.mxu0 0
  %271 = vmatpush2.bf16.xpose.msra.mxu0 0
  %272 = vmatprep.subr.bf16.mxu0 0
  %273 = vmatpush2.bf16.xpose.msra.mxu0 0
  %274 = vmatprep.subr.bf16.mxu0 0
  %275 = vmatpush2.bf16.xpose.msra.mxu0 0
  %276 = vmatprep.subr.bf16.mxu0 0
  %277 = vmatpush2.bf16.xpose.msra.mxu0 0
  %278 = vmatprep.subr.bf16.mxu0 0
  %279 = vmatpush2.bf16.xpose.msra.mxu0 0
  %280 = vmatprep.subr.bf16.mxu0 0
  %281 = vmatpush2.bf16.xpose.msra.mxu0 0
  %282 = vmatprep.subr.bf16.mxu0 0
  %283 = vmatpush2.bf16.xpose.msra.mxu0 0
  %284 = vmatprep.mubr.bf16.mxu0 0
  %285 = vmatmul.mubr.bf16.gmra.mxu0 %v247
  %v286 = vpop.f32.mrf.mxu0
  %v287 = vadd.f32 %v57, %v286
  %v288 = vpop.f32.mrf.mxu0
  %v289 = vpop.f32.mrf.mxu0
  %v290 = vpop.f32.mrf.mxu0
  %291 = vdwg.mxu0
  %v293 = vsel %vm61, %v34, 0
  %v296 = vsel %vm61, %v50, 0
  %298 = vmatprep.subr.bf16.mxu0 0
  %299 = vmatpush1.bf16.xpose.msra.mxu0 0
  %300 = vmatprep.subr.bf16.mxu0 0
  %301 = vmatpush1.bf16.xpose.msra.mxu0 0
  %302 = vmatprep.subr.bf16.mxu0 0
  %303 = vmatpush1.bf16.xpose.msra.mxu0 0
  %304 = vmatprep.subr.bf16.mxu0 0
  %305 = vmatpush1.bf16.xpose.msra.mxu0 0
  %306 = vmatprep.subr.bf16.mxu0 0
  %307 = vmatpush1.bf16.xpose.msra.mxu0 0
  %308 = vmatprep.subr.bf16.mxu0 0
  %309 = vmatpush1.bf16.xpose.msra.mxu0 0
  %310 = vmatprep.subr.bf16.mxu0 0
  %311 = vmatpush1.bf16.xpose.msra.mxu0 0
  %312 = vmatprep.subr.bf16.mxu0 0
  %313 = vmatpush1.bf16.xpose.msra.mxu0 %v296
  %314 = vmatprep.subr.bf16.mxu0 0
  %315 = vmatpush2.bf16.xpose.msra.mxu0 0
  %316 = vmatprep.subr.bf16.mxu0 0
  %317 = vmatpush2.bf16.xpose.msra.mxu0 0
  %318 = vmatprep.subr.bf16.mxu0 0
  %319 = vmatpush2.bf16.xpose.msra.mxu0 0
  %320 = vmatprep.subr.bf16.mxu0 0
  %321 = vmatpush2.bf16.xpose.msra.mxu0 0
  %322 = vmatprep.subr.bf16.mxu0 0
  %323 = vmatpush2.bf16.xpose.msra.mxu0 0
  %324 = vmatprep.subr.bf16.mxu0 0
  %325 = vmatpush2.bf16.xpose.msra.mxu0 0
  %326 = vmatprep.subr.bf16.mxu0 0
  %327 = vmatpush2.bf16.xpose.msra.mxu0 0
  %328 = vmatprep.subr.bf16.mxu0 0
  %329 = vmatpush2.bf16.xpose.msra.mxu0 0
  %330 = vmatprep.mubr.bf16.mxu0 0
  %331 = vmatmul.mubr.bf16.gmra.mxu0 %v293
  %v332 = vpop.f32.mrf.mxu0
  %v333 = vadd.f32 %v58, %v332
  %v334 = vpop.f32.mrf.mxu0
  %v335 = vpop.f32.mrf.mxu0
  %v336 = vpop.f32.mrf.mxu0
  %337 = vdwg.mxu0
  %v339 = vsel %vm61, %v35, 0
  %v342 = vsel %vm61, %v51, 0
  %344 = vmatprep.subr.bf16.mxu0 0
  %345 = vmatpush1.bf16.xpose.msra.mxu0 0
  %346 = vmatprep.subr.bf16.mxu0 0
  %347 = vmatpush1.bf16.xpose.msra.mxu0 0
  %348 = vmatprep.subr.bf16.mxu0 0
  %349 = vmatpush1.bf16.xpose.msra.mxu0 0
  %350 = vmatprep.subr.bf16.mxu0 0
  %351 = vmatpush1.bf16.xpose.msra.mxu0 0
  %352 = vmatprep.subr.bf16.mxu0 0
  %353 = vmatpush1.bf16.xpose.msra.mxu0 0
  %354 = vmatprep.subr.bf16.mxu0 0
  %355 = vmatpush1.bf16.xpose.msra.mxu0 0
  %356 = vmatprep.subr.bf16.mxu0 0
  %357 = vmatpush1.bf16.xpose.msra.mxu0 0
  %358 = vmatprep.subr.bf16.mxu0 0
  %359 = vmatpush1.bf16.xpose.msra.mxu0 %v342
  %360 = vmatprep.subr.bf16.mxu0 0
  %361 = vmatpush2.bf16.xpose.msra.mxu0 0
  %362 = vmatprep.subr.bf16.mxu0 0
  %363 = vmatpush2.bf16.xpose.msra.mxu0 0
  %364 = vmatprep.subr.bf16.mxu0 0
  %365 = vmatpush2.bf16.xpose.msra.mxu0 0
  %366 = vmatprep.subr.bf16.mxu0 0
  %367 = vmatpush2.bf16.xpose.msra.mxu0 0
  %368 = vmatprep.subr.bf16.mxu0 0
  %369 = vmatpush2.bf16.xpose.msra.mxu0 0
  %370 = vmatprep.subr.bf16.mxu0 0
  %371 = vmatpush2.bf16.xpose.msra.mxu0 0
  %372 = vmatprep.subr.bf16.mxu0 0
  %373 = vmatpush2.bf16.xpose.msra.mxu0 0
  %374 = vmatprep.subr.bf16.mxu0 0
  %375 = vmatpush2.bf16.xpose.msra.mxu0 0
  %376 = vmatprep.mubr.bf16.mxu0 0
  %377 = vmatmul.mubr.bf16.gmra.mxu0 %v339
  %v378 = vpop.f32.mrf.mxu0
  %v379 = vadd.f32 %v59, %v378
  %v380 = vpop.f32.mrf.mxu0
  %v381 = vpop.f32.mrf.mxu0
  %v382 = vpop.f32.mrf.mxu0
  %383 = vdwg.mxu0
  %v385 = vsel %vm61, %v36, 0
  %v388 = vsel %vm61, %v52, 0
  %390 = vmatprep.subr.bf16.mxu0 0
  %391 = vmatpush1.bf16.xpose.msra.mxu0 0
  %392 = vmatprep.subr.bf16.mxu0 0
  %393 = vmatpush1.bf16.xpose.msra.mxu0 0
  %394 = vmatprep.subr.bf16.mxu0 0
  %395 = vmatpush1.bf16.xpose.msra.mxu0 0
  %396 = vmatprep.subr.bf16.mxu0 0
  %397 = vmatpush1.bf16.xpose.msra.mxu0 0
  %398 = vmatprep.subr.bf16.mxu0 0
  %399 = vmatpush1.bf16.xpose.msra.mxu0 0
  %400 = vmatprep.subr.bf16.mxu0 0
  %401 = vmatpush1.bf16.xpose.msra.mxu0 0
  %402 = vmatprep.subr.bf16.mxu0 0
  %403 = vmatpush1.bf16.xpose.msra.mxu0 0
  %404 = vmatprep.subr.bf16.mxu0 0
  %405 = vmatpush1.bf16.xpose.msra.mxu0 %v388
  %406 = vmatprep.subr.bf16.mxu0 0
  %407 = vmatpush2.bf16.xpose.msra.mxu0 0
  %408 = vmatprep.subr.bf16.mxu0 0
  %409 = vmatpush2.bf16.xpose.msra.mxu0 0
  %410 = vmatprep.subr.bf16.mxu0 0
  %411 = vmatpush2.bf16.xpose.msra.mxu0 0
  %412 = vmatprep.subr.bf16.mxu0 0
  %413 = vmatpush2.bf16.xpose.msra.mxu0 0
  %414 = vmatprep.subr.bf16.mxu0 0
  %415 = vmatpush2.bf16.xpose.msra.mxu0 0
  %416 = vmatprep.subr.bf16.mxu0 0
  %417 = vmatpush2.bf16.xpose.msra.mxu0 0
  %418 = vmatprep.subr.bf16.mxu0 0
  %419 = vmatpush2.bf16.xpose.msra.mxu0 0
  %420 = vmatprep.subr.bf16.mxu0 0
  %421 = vmatpush2.bf16.xpose.msra.mxu0 0
  %422 = vmatprep.mubr.bf16.mxu0 0
  %423 = vmatmul.mubr.bf16.gmra.mxu0 %v385
  %v424 = vpop.f32.mrf.mxu0
  %v425 = vadd.f32 %v60, %v424
  %v426 = vpop.f32.mrf.mxu0
  %v427 = vpop.f32.mrf.mxu0
  %v428 = vpop.f32.mrf.mxu0
  %429 = vdwg.mxu0
  %v430 = vld [vmem:[%s4] sm:$0x1]
  %v431 = vld [vmem:[%s4 + $0x1] sm:$0x1]
  %v432 = vld [vmem:[%s4 + $0x2] sm:$0x1]
  %v433 = vld [vmem:[%s4 + $0x3] sm:$0x1]
  %v434 = vld [vmem:[%s4 + $0x4] sm:$0x1]
  %v435 = vld [vmem:[%s4 + $0x5] sm:$0x1]
  %v436 = vld [vmem:[%s4 + $0x6] sm:$0x1]
  %v437 = vld [vmem:[%s4 + $0x7] sm:$0x1]
  %vm438 = vcmp.gt.f32.partialorder %v430, 0.5
  %vm439 = vcmp.gt.f32.partialorder %v431, 0.5
  %vm440 = vcmp.gt.f32.partialorder %v432, 0.5
  %vm441 = vcmp.gt.f32.partialorder %v433, 0.5
  %vm442 = vcmp.gt.f32.partialorder %v434, 0.5
  %vm443 = vcmp.gt.f32.partialorder %v435, 0.5
  %vm444 = vcmp.gt.f32.partialorder %v436, 0.5
  %vm445 = vcmp.gt.f32.partialorder %v437, 0.5
  %v446 = vsel %vm438, 1, 0
  %v447 = vsel %vm439, 1, 0
  %v448 = vsel %vm440, 1, 0
  %v449 = vsel %vm441, 1, 0
  %v450 = vsel %vm442, 1, 0
  %v451 = vsel %vm443, 1, 0
  %v452 = vsel %vm444, 1, 0
  %v453 = vsel %vm445, 1, 0
  %v454 = vlaneseq
  %v455 = vshrl.u32 %v454, 7
  %v456 = vsub.s32 0, %v455
  %v457 = vrot.slane %v446, %v456
  %v458 = vlaneseq
  %v459 = vshrl.u32 %v458, 7
  %v460 = vsub.s32 0, %v459
  %v461 = vrot.slane %v447, %v460
  %v462 = vlaneseq
  %v463 = vshrl.u32 %v462, 7
  %v464 = vsub.s32 0, %v463
  %v465 = vrot.slane %v448, %v464
  %v466 = vlaneseq
  %v467 = vshrl.u32 %v466, 7
  %v468 = vsub.s32 0, %v467
  %v469 = vrot.slane %v449, %v468
  %v470 = vlaneseq
  %v471 = vshrl.u32 %v470, 7
  %v472 = vsub.s32 0, %v471
  %v473 = vrot.slane %v450, %v472
  %v474 = vlaneseq
  %v475 = vshrl.u32 %v474, 7
  %v476 = vsub.s32 0, %v475
  %v477 = vrot.slane %v451, %v476
  %v478 = vlaneseq
  %v479 = vshrl.u32 %v478, 7
  %v480 = vsub.s32 0, %v479
  %v481 = vrot.slane %v452, %v480
  %v482 = vlaneseq
  %v483 = vshrl.u32 %v482, 7
  %v484 = vsub.s32 0, %v483
  %v485 = vrot.slane %v453, %v484
  %vm486 = vcmp.eq.s32.totalorder %v457, 1
  %vm487 = vcmp.eq.s32.totalorder %v461, 1
  %vm488 = vcmp.eq.s32.totalorder %v465, 1
  %vm489 = vcmp.eq.s32.totalorder %v469, 1
  %vm490 = vcmp.eq.s32.totalorder %v473, 1
  %vm491 = vcmp.eq.s32.totalorder %v477, 1
  %vm492 = vcmp.eq.s32.totalorder %v481, 1
  %vm493 = vcmp.eq.s32.totalorder %v485, 1
  %v494 = vsel %vm486, %v103, -1e+30
  %v495 = vsel %vm487, %v149, -1e+30
  %v496 = vsel %vm488, %v195, -1e+30
  %v497 = vsel %vm489, %v241, -1e+30
  %v498 = vsel %vm490, %v287, -1e+30
  %v499 = vsel %vm491, %v333, -1e+30
  %v500 = vsel %vm492, %v379, -1e+30
  %v501 = vsel %vm493, %v425, -1e+30
  %v502 = vsel %vm61, %v494, -inf
  %503 = vmax.xlane.f32.xlu0 %v502
  %v504 = vpop.xlane.xlu0 %503
  %v505 = vsel %vm61, %v495, -inf
  %506 = vmax.xlane.f32.xlu0 %v505
  %v507 = vpop.xlane.xlu0 %506
  %v508 = vsel %vm61, %v496, -inf
  %509 = vmax.xlane.f32.xlu0 %v508
  %v510 = vpop.xlane.xlu0 %509
  %v511 = vsel %vm61, %v497, -inf
  %512 = vmax.xlane.f32.xlu0 %v511
  %v513 = vpop.xlane.xlu0 %512
  %v514 = vsel %vm61, %v498, -inf
  %515 = vmax.xlane.f32.xlu0 %v514
  %v516 = vpop.xlane.xlu0 %515
  %v517 = vsel %vm61, %v499, -inf
  %518 = vmax.xlane.f32.xlu0 %v517
  %v519 = vpop.xlane.xlu0 %518
  %v520 = vsel %vm61, %v500, -inf
  %521 = vmax.xlane.f32.xlu0 %v520
  %v522 = vpop.xlane.xlu0 %521
  %v523 = vsel %vm61, %v501, -inf
  %524 = vmax.xlane.f32.xlu0 %v523
  %v525 = vpop.xlane.xlu0 %524
  %v526 = vsub.f32 %v494, %v504
  %v527 = vsub.f32 %v495, %v507
  %v528 = vsub.f32 %v496, %v510
  %v529 = vsub.f32 %v497, %v513
  %v530 = vsub.f32 %v498, %v516
  %v531 = vsub.f32 %v499, %v519
  %v532 = vsub.f32 %v500, %v522
  %v533 = vsub.f32 %v501, %v525
  %v534 = vmul.f32 %v526, 1.442695
  %v535 = vpow.pop %v534
  %v536 = vmul.f32 %v527, 1.442695
  %v537 = vpow.pop %v536
  %v538 = vmul.f32 %v528, 1.442695
  %v539 = vpow.pop %v538
  %v540 = vmul.f32 %v529, 1.442695
  %v541 = vpow.pop %v540
  %v542 = vmul.f32 %v530, 1.442695
  %v543 = vpow.pop %v542
  %v544 = vmul.f32 %v531, 1.442695
  %v545 = vpow.pop %v544
  %v546 = vmul.f32 %v532, 1.442695
  %v547 = vpow.pop %v546
  %v548 = vmul.f32 %v533, 1.442695
  %v549 = vpow.pop %v548
  %v550 = vsel %vm61, %v535, 0.0
  %551 = vadd.xlane.f32.xlu0 %v550
  %v552 = vpop.xlane.xlu0 %551
  %v553 = vsel %vm61, %v537, 0.0
  %554 = vadd.xlane.f32.xlu0 %v553
  %v555 = vpop.xlane.xlu0 %554
  %v556 = vsel %vm61, %v539, 0.0
  %557 = vadd.xlane.f32.xlu0 %v556
  %v558 = vpop.xlane.xlu0 %557
  %v559 = vsel %vm61, %v541, 0.0
  %560 = vadd.xlane.f32.xlu0 %v559
  %v561 = vpop.xlane.xlu0 %560
  %v562 = vsel %vm61, %v543, 0.0
  %563 = vadd.xlane.f32.xlu0 %v562
  %v564 = vpop.xlane.xlu0 %563
  %v565 = vsel %vm61, %v545, 0.0
  %566 = vadd.xlane.f32.xlu0 %v565
  %v567 = vpop.xlane.xlu0 %566
  %v568 = vsel %vm61, %v547, 0.0
  %569 = vadd.xlane.f32.xlu0 %v568
  %v570 = vpop.xlane.xlu0 %569
  %v571 = vsel %vm61, %v549, 0.0
  %572 = vadd.xlane.f32.xlu0 %v571
  %v573 = vpop.xlane.xlu0 %572
  %v574 = vrcp.pop %v552
  %v575 = vrcp.pop %v555
  %v576 = vrcp.pop %v558
  %v577 = vrcp.pop %v561
  %v578 = vrcp.pop %v564
  %v579 = vrcp.pop %v567
  %v580 = vrcp.pop %v570
  %v581 = vrcp.pop %v573
  %v582 = vmul.f32 %v535, %v574
  %v583 = vmul.f32 %v537, %v575
  %v584 = vmul.f32 %v539, %v576
  %v585 = vmul.f32 %v541, %v577
  %v586 = vmul.f32 %v543, %v578
  %v587 = vmul.f32 %v545, %v579
  %v588 = vmul.f32 %v547, %v580
  %v589 = vmul.f32 %v549, %v581
  %v590 = vpack.c.bf16 %v582, %v582
  %v591 = vpack.c.bf16 %v583, %v583
  %v592 = vpack.c.bf16 %v584, %v584
  %v593 = vpack.c.bf16 %v585, %v585
  %v594 = vpack.c.bf16 %v586, %v586
  %v595 = vpack.c.bf16 %v587, %v587
  %v596 = vpack.c.bf16 %v588, %v588
  %v597 = vpack.c.bf16 %v589, %v589
  %v598 = vld [vmem:[%s2] sm:$0xff]
  %v599 = vld [vmem:[%s2 + $0x8] sm:$0xff]
  %v600 = vld [vmem:[%s2 + $0x10] sm:$0xff]
  %v601 = vld [vmem:[%s2 + $0x18] sm:$0xff]
  %v602 = vld [vmem:[%s2 + $0x20] sm:$0xff]
  %v603 = vld [vmem:[%s2 + $0x28] sm:$0xff]
  %v604 = vld [vmem:[%s2 + $0x30] sm:$0xff]
  %v605 = vld [vmem:[%s2 + $0x38] sm:$0xff]
  %v606 = vpack.c.bf16 %v598, %v598
  %v607 = vpack.c.bf16 %v599, %v599
  %v608 = vpack.c.bf16 %v600, %v600
  %v609 = vpack.c.bf16 %v601, %v601
  %v610 = vpack.c.bf16 %v602, %v602
  %v611 = vpack.c.bf16 %v603, %v603
  %v612 = vpack.c.bf16 %v604, %v604
  %v613 = vpack.c.bf16 %v605, %v605
  %v615 = vsel %vm61, %v590, 0
  %vm617 = vcmask 1043456
  %v619 = vsel %vm617, %v606, 0
  %621 = vmatprep.subr.bf16.mxu0 0
  %622 = vmatpush1.bf16.msra.mxu0 0
  %623 = vmatprep.subr.bf16.mxu0 0
  %624 = vmatpush1.bf16.msra.mxu0 0
  %625 = vmatprep.subr.bf16.mxu0 0
  %626 = vmatpush1.bf16.msra.mxu0 0
  %627 = vmatprep.subr.bf16.mxu0 0
  %628 = vmatpush1.bf16.msra.mxu0 0
  %629 = vmatprep.subr.bf16.mxu0 0
  %630 = vmatpush1.bf16.msra.mxu0 0
  %631 = vmatprep.subr.bf16.mxu0 0
  %632 = vmatpush1.bf16.msra.mxu0 0
  %633 = vmatprep.subr.bf16.mxu0 0
  %634 = vmatpush1.bf16.msra.mxu0 0
  %635 = vmatprep.subr.bf16.mxu0 0
  %636 = vmatpush1.bf16.msra.mxu0 %v619
  %637 = vmatprep.subr.bf16.mxu0 0
  %638 = vmatpush2.bf16.msra.mxu0 0
  %639 = vmatprep.subr.bf16.mxu0 0
  %640 = vmatpush2.bf16.msra.mxu0 0
  %641 = vmatprep.subr.bf16.mxu0 0
  %642 = vmatpush2.bf16.msra.mxu0 0
  %643 = vmatprep.subr.bf16.mxu0 0
  %644 = vmatpush2.bf16.msra.mxu0 0
  %645 = vmatprep.subr.bf16.mxu0 0
  %646 = vmatpush2.bf16.msra.mxu0 0
  %647 = vmatprep.subr.bf16.mxu0 0
  %648 = vmatpush2.bf16.msra.mxu0 0
  %649 = vmatprep.subr.bf16.mxu0 0
  %650 = vmatpush2.bf16.msra.mxu0 0
  %651 = vmatprep.subr.bf16.mxu0 0
  %652 = vmatpush2.bf16.msra.mxu0 0
  %653 = vmatprep.mubr.bf16.mxu0 0
  %654 = vmatmul.mubr.bf16.gmra.mxu0 %v615
  %v655 = vpop.f32.mrf.mxu0
  %v656 = vadd.f32 0.0, %v655
  %v657 = vpop.f32.mrf.mxu0
  %v658 = vpop.f32.mrf.mxu0
  %v659 = vpop.f32.mrf.mxu0
  %660 = vdwg.mxu0
  %v662 = vsel %vm61, %v591, 0
  %v665 = vsel %vm617, %v607, 0
  %667 = vmatprep.subr.bf16.mxu0 0
  %668 = vmatpush1.bf16.msra.mxu0 0
  %669 = vmatprep.subr.bf16.mxu0 0
  %670 = vmatpush1.bf16.msra.mxu0 0
  %671 = vmatprep.subr.bf16.mxu0 0
  %672 = vmatpush1.bf16.msra.mxu0 0
  %673 = vmatprep.subr.bf16.mxu0 0
  %674 = vmatpush1.bf16.msra.mxu0 0
  %675 = vmatprep.subr.bf16.mxu0 0
  %676 = vmatpush1.bf16.msra.mxu0 0
  %677 = vmatprep.subr.bf16.mxu0 0
  %678 = vmatpush1.bf16.msra.mxu0 0
  %679 = vmatprep.subr.bf16.mxu0 0
  %680 = vmatpush1.bf16.msra.mxu0 0
  %681 = vmatprep.subr.bf16.mxu0 0
  %682 = vmatpush1.bf16.msra.mxu0 %v665
  %683 = vmatprep.subr.bf16.mxu0 0
  %684 = vmatpush2.bf16.msra.mxu0 0
  %685 = vmatprep.subr.bf16.mxu0 0
  %686 = vmatpush2.bf16.msra.mxu0 0
  %687 = vmatprep.subr.bf16.mxu0 0
  %688 = vmatpush2.bf16.msra.mxu0 0
  %689 = vmatprep.subr.bf16.mxu0 0
  %690 = vmatpush2.bf16.msra.mxu0 0
  %691 = vmatprep.subr.bf16.mxu0 0
  %692 = vmatpush2.bf16.msra.mxu0 0
  %693 = vmatprep.subr.bf16.mxu0 0
  %694 = vmatpush2.bf16.msra.mxu0 0
  %695 = vmatprep.subr.bf16.mxu0 0
  %696 = vmatpush2.bf16.msra.mxu0 0
  %697 = vmatprep.subr.bf16.mxu0 0
  %698 = vmatpush2.bf16.msra.mxu0 0
  %699 = vmatprep.mubr.bf16.mxu0 0
  %700 = vmatmul.mubr.bf16.gmra.mxu0 %v662
  %v701 = vpop.f32.mrf.mxu0
  %v702 = vadd.f32 0.0, %v701
  %v703 = vpop.f32.mrf.mxu0
  %v704 = vpop.f32.mrf.mxu0
  %v705 = vpop.f32.mrf.mxu0
  %706 = vdwg.mxu0
  %v708 = vsel %vm61, %v592, 0
  %v711 = vsel %vm617, %v608, 0
  %713 = vmatprep.subr.bf16.mxu0 0
  %714 = vmatpush1.bf16.msra.mxu0 0
  %715 = vmatprep.subr.bf16.mxu0 0
  %716 = vmatpush1.bf16.msra.mxu0 0
  %717 = vmatprep.subr.bf16.mxu0 0
  %718 = vmatpush1.bf16.msra.mxu0 0
  %719 = vmatprep.subr.bf16.mxu0 0
  %720 = vmatpush1.bf16.msra.mxu0 0
  %721 = vmatprep.subr.bf16.mxu0 0
  %722 = vmatpush1.bf16.msra.mxu0 0
  %723 = vmatprep.subr.bf16.mxu0 0
  %724 = vmatpush1.bf16.msra.mxu0 0
  %725 = vmatprep.subr.bf16.mxu0 0
  %726 = vmatpush1.bf16.msra.mxu0 0
  %727 = vmatprep.subr.bf16.mxu0 0
  %728 = vmatpush1.bf16.msra.mxu0 %v711
  %729 = vmatprep.subr.bf16.mxu0 0
  %730 = vmatpush2.bf16.msra.mxu0 0
  %731 = vmatprep.subr.bf16.mxu0 0
  %732 = vmatpush2.bf16.msra.mxu0 0
  %733 = vmatprep.subr.bf16.mxu0 0
  %734 = vmatpush2.bf16.msra.mxu0 0
  %735 = vmatprep.subr.bf16.mxu0 0
  %736 = vmatpush2.bf16.msra.mxu0 0
  %737 = vmatprep.subr.bf16.mxu0 0
  %738 = vmatpush2.bf16.msra.mxu0 0
  %739 = vmatprep.subr.bf16.mxu0 0
  %740 = vmatpush2.bf16.msra.mxu0 0
  %741 = vmatprep.subr.bf16.mxu0 0
  %742 = vmatpush2.bf16.msra.mxu0 0
  %743 = vmatprep.subr.bf16.mxu0 0
  %744 = vmatpush2.bf16.msra.mxu0 0
  %745 = vmatprep.mubr.bf16.mxu0 0
  %746 = vmatmul.mubr.bf16.gmra.mxu0 %v708
  %v747 = vpop.f32.mrf.mxu0
  %v748 = vadd.f32 0.0, %v747
  %v749 = vpop.f32.mrf.mxu0
  %v750 = vpop.f32.mrf.mxu0
  %v751 = vpop.f32.mrf.mxu0
  %752 = vdwg.mxu0
  %v754 = vsel %vm61, %v593, 0
  %v757 = vsel %vm617, %v609, 0
  %759 = vmatprep.subr.bf16.mxu0 0
  %760 = vmatpush1.bf16.msra.mxu0 0
  %761 = vmatprep.subr.bf16.mxu0 0
  %762 = vmatpush1.bf16.msra.mxu0 0
  %763 = vmatprep.subr.bf16.mxu0 0
  %764 = vmatpush1.bf16.msra.mxu0 0
  %765 = vmatprep.subr.bf16.mxu0 0
  %766 = vmatpush1.bf16.msra.mxu0 0
  %767 = vmatprep.subr.bf16.mxu0 0
  %768 = vmatpush1.bf16.msra.mxu0 0
  %769 = vmatprep.subr.bf16.mxu0 0
  %770 = vmatpush1.bf16.msra.mxu0 0
  %771 = vmatprep.subr.bf16.mxu0 0
  %772 = vmatpush1.bf16.msra.mxu0 0
  %773 = vmatprep.subr.bf16.mxu0 0
  %774 = vmatpush1.bf16.msra.mxu0 %v757
  %775 = vmatprep.subr.bf16.mxu0 0
  %776 = vmatpush2.bf16.msra.mxu0 0
  %777 = vmatprep.subr.bf16.mxu0 0
  %778 = vmatpush2.bf16.msra.mxu0 0
  %779 = vmatprep.subr.bf16.mxu0 0
  %780 = vmatpush2.bf16.msra.mxu0 0
  %781 = vmatprep.subr.bf16.mxu0 0
  %782 = vmatpush2.bf16.msra.mxu0 0
  %783 = vmatprep.subr.bf16.mxu0 0
  %784 = vmatpush2.bf16.msra.mxu0 0
  %785 = vmatprep.subr.bf16.mxu0 0
  %786 = vmatpush2.bf16.msra.mxu0 0
  %787 = vmatprep.subr.bf16.mxu0 0
  %788 = vmatpush2.bf16.msra.mxu0 0
  %789 = vmatprep.subr.bf16.mxu0 0
  %790 = vmatpush2.bf16.msra.mxu0 0
  %791 = vmatprep.mubr.bf16.mxu0 0
  %792 = vmatmul.mubr.bf16.gmra.mxu0 %v754
  %v793 = vpop.f32.mrf.mxu0
  %v794 = vadd.f32 0.0, %v793
  %v795 = vpop.f32.mrf.mxu0
  %v796 = vpop.f32.mrf.mxu0
  %v797 = vpop.f32.mrf.mxu0
  %798 = vdwg.mxu0
  %v800 = vsel %vm61, %v594, 0
  %v803 = vsel %vm617, %v610, 0
  %805 = vmatprep.subr.bf16.mxu0 0
  %806 = vmatpush1.bf16.msra.mxu0 0
  %807 = vmatprep.subr.bf16.mxu0 0
  %808 = vmatpush1.bf16.msra.mxu0 0
  %809 = vmatprep.subr.bf16.mxu0 0
  %810 = vmatpush1.bf16.msra.mxu0 0
  %811 = vmatprep.subr.bf16.mxu0 0
  %812 = vmatpush1.bf16.msra.mxu0 0
  %813 = vmatprep.subr.bf16.mxu0 0
  %814 = vmatpush1.bf16.msra.mxu0 0
  %815 = vmatprep.subr.bf16.mxu0 0
  %816 = vmatpush1.bf16.msra.mxu0 0
  %817 = vmatprep.subr.bf16.mxu0 0
  %818 = vmatpush1.bf16.msra.mxu0 0
  %819 = vmatprep.subr.bf16.mxu0 0
  %820 = vmatpush1.bf16.msra.mxu0 %v803
  %821 = vmatprep.subr.bf16.mxu0 0
  %822 = vmatpush2.bf16.msra.mxu0 0
  %823 = vmatprep.subr.bf16.mxu0 0
  %824 = vmatpush2.bf16.msra.mxu0 0
  %825 = vmatprep.subr.bf16.mxu0 0
  %826 = vmatpush2.bf16.msra.mxu0 0
  %827 = vmatprep.subr.bf16.mxu0 0
  %828 = vmatpush2.bf16.msra.mxu0 0
  %829 = vmatprep.subr.bf16.mxu0 0
  %830 = vmatpush2.bf16.msra.mxu0 0
  %831 = vmatprep.subr.bf16.mxu0 0
  %832 = vmatpush2.bf16.msra.mxu0 0
  %833 = vmatprep.subr.bf16.mxu0 0
  %834 = vmatpush2.bf16.msra.mxu0 0
  %835 = vmatprep.subr.bf16.mxu0 0
  %836 = vmatpush2.bf16.msra.mxu0 0
  %837 = vmatprep.mubr.bf16.mxu0 0
  %838 = vmatmul.mubr.bf16.gmra.mxu0 %v800
  %v839 = vpop.f32.mrf.mxu0
  %v840 = vadd.f32 0.0, %v839
  %v841 = vpop.f32.mrf.mxu0
  %v842 = vpop.f32.mrf.mxu0
  %v843 = vpop.f32.mrf.mxu0
  %844 = vdwg.mxu0
  %v846 = vsel %vm61, %v595, 0
  %v849 = vsel %vm617, %v611, 0
  %851 = vmatprep.subr.bf16.mxu0 0
  %852 = vmatpush1.bf16.msra.mxu0 0
  %853 = vmatprep.subr.bf16.mxu0 0
  %854 = vmatpush1.bf16.msra.mxu0 0
  %855 = vmatprep.subr.bf16.mxu0 0
  %856 = vmatpush1.bf16.msra.mxu0 0
  %857 = vmatprep.subr.bf16.mxu0 0
  %858 = vmatpush1.bf16.msra.mxu0 0
  %859 = vmatprep.subr.bf16.mxu0 0
  %860 = vmatpush1.bf16.msra.mxu0 0
  %861 = vmatprep.subr.bf16.mxu0 0
  %862 = vmatpush1.bf16.msra.mxu0 0
  %863 = vmatprep.subr.bf16.mxu0 0
  %864 = vmatpush1.bf16.msra.mxu0 0
  %865 = vmatprep.subr.bf16.mxu0 0
  %866 = vmatpush1.bf16.msra.mxu0 %v849
  %867 = vmatprep.subr.bf16.mxu0 0
  %868 = vmatpush2.bf16.msra.mxu0 0
  %869 = vmatprep.subr.bf16.mxu0 0
  %870 = vmatpush2.bf16.msra.mxu0 0
  %871 = vmatprep.subr.bf16.mxu0 0
  %872 = vmatpush2.bf16.msra.mxu0 0
  %873 = vmatprep.subr.bf16.mxu0 0
  %874 = vmatpush2.bf16.msra.mxu0 0
  %875 = vmatprep.subr.bf16.mxu0 0
  %876 = vmatpush2.bf16.msra.mxu0 0
  %877 = vmatprep.subr.bf16.mxu0 0
  %878 = vmatpush2.bf16.msra.mxu0 0
  %879 = vmatprep.subr.bf16.mxu0 0
  %880 = vmatpush2.bf16.msra.mxu0 0
  %881 = vmatprep.subr.bf16.mxu0 0
  %882 = vmatpush2.bf16.msra.mxu0 0
  %883 = vmatprep.mubr.bf16.mxu0 0
  %884 = vmatmul.mubr.bf16.gmra.mxu0 %v846
  %v885 = vpop.f32.mrf.mxu0
  %v886 = vadd.f32 0.0, %v885
  %v887 = vpop.f32.mrf.mxu0
  %v888 = vpop.f32.mrf.mxu0
  %v889 = vpop.f32.mrf.mxu0
  %890 = vdwg.mxu0
  %v892 = vsel %vm61, %v596, 0
  %v895 = vsel %vm617, %v612, 0
  %897 = vmatprep.subr.bf16.mxu0 0
  %898 = vmatpush1.bf16.msra.mxu0 0
  %899 = vmatprep.subr.bf16.mxu0 0
  %900 = vmatpush1.bf16.msra.mxu0 0
  %901 = vmatprep.subr.bf16.mxu0 0
  %902 = vmatpush1.bf16.msra.mxu0 0
  %903 = vmatprep.subr.bf16.mxu0 0
  %904 = vmatpush1.bf16.msra.mxu0 0
  %905 = vmatprep.subr.bf16.mxu0 0
  %906 = vmatpush1.bf16.msra.mxu0 0
  %907 = vmatprep.subr.bf16.mxu0 0
  %908 = vmatpush1.bf16.msra.mxu0 0
  %909 = vmatprep.subr.bf16.mxu0 0
  %910 = vmatpush1.bf16.msra.mxu0 0
  %911 = vmatprep.subr.bf16.mxu0 0
  %912 = vmatpush1.bf16.msra.mxu0 %v895
  %913 = vmatprep.subr.bf16.mxu0 0
  %914 = vmatpush2.bf16.msra.mxu0 0
  %915 = vmatprep.subr.bf16.mxu0 0
  %916 = vmatpush2.bf16.msra.mxu0 0
  %917 = vmatprep.subr.bf16.mxu0 0
  %918 = vmatpush2.bf16.msra.mxu0 0
  %919 = vmatprep.subr.bf16.mxu0 0
  %920 = vmatpush2.bf16.msra.mxu0 0
  %921 = vmatprep.subr.bf16.mxu0 0
  %922 = vmatpush2.bf16.msra.mxu0 0
  %923 = vmatprep.subr.bf16.mxu0 0
  %924 = vmatpush2.bf16.msra.mxu0 0
  %925 = vmatprep.subr.bf16.mxu0 0
  %926 = vmatpush2.bf16.msra.mxu0 0
  %927 = vmatprep.subr.bf16.mxu0 0
  %928 = vmatpush2.bf16.msra.mxu0 0
  %929 = vmatprep.mubr.bf16.mxu0 0
  %930 = vmatmul.mubr.bf16.gmra.mxu0 %v892
  %v931 = vpop.f32.mrf.mxu0
  %v932 = vadd.f32 0.0, %v931
  %v933 = vpop.f32.mrf.mxu0
  %v934 = vpop.f32.mrf.mxu0
  %v935 = vpop.f32.mrf.mxu0
  %936 = vdwg.mxu0
  %v938 = vsel %vm61, %v597, 0
  %v941 = vsel %vm617, %v613, 0
  %943 = vmatprep.subr.bf16.mxu0 0
  %944 = vmatpush1.bf16.msra.mxu0 0
  %945 = vmatprep.subr.bf16.mxu0 0
  %946 = vmatpush1.bf16.msra.mxu0 0
  %947 = vmatprep.subr.bf16.mxu0 0
  %948 = vmatpush1.bf16.msra.mxu0 0
  %949 = vmatprep.subr.bf16.mxu0 0
  %950 = vmatpush1.bf16.msra.mxu0 0
  %951 = vmatprep.subr.bf16.mxu0 0
  %952 = vmatpush1.bf16.msra.mxu0 0
  %953 = vmatprep.subr.bf16.mxu0 0
  %954 = vmatpush1.bf16.msra.mxu0 0
  %955 = vmatprep.subr.bf16.mxu0 0
  %956 = vmatpush1.bf16.msra.mxu0 0
  %957 = vmatprep.subr.bf16.mxu0 0
  %958 = vmatpush1.bf16.msra.mxu0 %v941
  %959 = vmatprep.subr.bf16.mxu0 0
  %960 = vmatpush2.bf16.msra.mxu0 0
  %961 = vmatprep.subr.bf16.mxu0 0
  %962 = vmatpush2.bf16.msra.mxu0 0
  %963 = vmatprep.subr.bf16.mxu0 0
  %964 = vmatpush2.bf16.msra.mxu0 0
  %965 = vmatprep.subr.bf16.mxu0 0
  %966 = vmatpush2.bf16.msra.mxu0 0
  %967 = vmatprep.subr.bf16.mxu0 0
  %968 = vmatpush2.bf16.msra.mxu0 0
  %969 = vmatprep.subr.bf16.mxu0 0
  %970 = vmatpush2.bf16.msra.mxu0 0
  %971 = vmatprep.subr.bf16.mxu0 0
  %972 = vmatpush2.bf16.msra.mxu0 0
  %973 = vmatprep.subr.bf16.mxu0 0
  %974 = vmatpush2.bf16.msra.mxu0 0
  %975 = vmatprep.mubr.bf16.mxu0 0
  %976 = vmatmul.mubr.bf16.gmra.mxu0 %v938
  %v977 = vpop.f32.mrf.mxu0
  %v978 = vadd.f32 0.0, %v977
  %v979 = vpop.f32.mrf.mxu0
  %v980 = vpop.f32.mrf.mxu0
  %v981 = vpop.f32.mrf.mxu0
  %982 = vdwg.mxu0
  %983 = vst.msk [vmem:[%s5] sm:$0xff] %vm61, %v656
  %984 = vst.msk [vmem:[%s5 + $0x8] sm:$0xff] %vm61, %v702
  %985 = vst.msk [vmem:[%s5 + $0x10] sm:$0xff] %vm61, %v748
  %986 = vst.msk [vmem:[%s5 + $0x18] sm:$0xff] %vm61, %v794
  %987 = vst.msk [vmem:[%s5 + $0x20] sm:$0xff] %vm61, %v840
  %988 = vst.msk [vmem:[%s5 + $0x28] sm:$0xff] %vm61, %v886
  %989 = vst.msk [vmem:[%s5 + $0x30] sm:$0xff] %vm61, %v932
  %990 = vst.msk [vmem:[%s5 + $0x38] sm:$0xff] %vm61, %v978
  // Predicated region
  $region22: #{tener_forward.18} parent=0 // pred_check
    _
  $region23: #{tener_forward.18} parent=0 // pred_check_branch
    %992 = sbr.rel (0) target = $region25
  $region24: #{tener_forward.18} parent=0 // pred_region
    _
  $region25: #{tener_forward.18} parent=0 // pred_fallthru
    _
  // Predicated region
  $region26: #{tener_forward.18} parent=0 // pred_check
    _
  $region27: #{tener_forward.18} parent=0 // pred_check_branch
    %994 = sbr.rel (0) target = $region29
  $region28: #{tener_forward.18} parent=0 // pred_region
    _
  $region29: #{tener_forward.18} parent=0 // pred_fallthru
    _

// kernel: tener_forward.23
$region0: #{tener_forward.23}
  #allocation0 [shape = 'u32[]', space=smem, size = 0x4, offset = 0x4, fixed_abs, tag = 'smem constant byte address 0x4 - core index']
  #allocation1 [shape = 'u32[144,128]{1,0:T(1,128)}', space=vmem, size = 0x12000, scoped, tag = 'internal scratch']
  %s0 = inlined_call_operand.vmem [shape: f32[16,32], index: 0, kind: input, shape index: {}]
  %s1 = inlined_call_operand.vmem [shape: f32[32,8], index: 1, kind: input, shape index: {}]
  %s2 = inlined_call_operand.vmem [shape: f32[1,8], index: 2, kind: input, shape index: {}]
  %s3 = inlined_call_operand.vmem [shape: f32[16,1], index: 3, kind: input, shape index: {}]
  %s4 = inlined_call_operand.vmem [shape: f32[8,8], index: 4, kind: input, shape index: {}]
  %s5 = inlined_call_operand.vmem [shape: f32[1,8], index: 5, kind: input, shape index: {}]
  %s6 = inlined_call_operand.vmem [shape: f32[1,8], index: 6, kind: input, shape index: {}]
  %s7 = inlined_call_operand.vmem [shape: f32[16,8], index: 7, kind: output, shape index: {0}]
  %s8 = inlined_call_operand.vmem [shape: f32[2,1], index: 8, kind: output, shape index: {1}]
  %9 = xla_tuple %s7, %s8
  %s10 = sld [smem:[#allocation0]]
  $region46: #{tener_forward.23} parent=0
    _
  %s12 = ssub.s32 1, %s10
  %s13 = scalar_select 0, %s12, %s10
  // Predicated region
  $region2: #{tener_forward.23} parent=0 // pred_check
    _
  $region3: #{tener_forward.23} parent=0 // pred_check_branch
    %15 = sbr.rel (0) target = $region5
  $region4: #{tener_forward.23} parent=0 // pred_region
    _
  $region5: #{tener_forward.23} parent=0 // pred_fallthru
    _
  // Predicated region
  $region6: #{tener_forward.23} parent=0 // pred_check
    _
  $region7: #{tener_forward.23} parent=0 // pred_check_branch
    %17 = sbr.rel (0) target = $region9
  $region8: #{tener_forward.23} parent=0 // pred_region
    _
  $region9: #{tener_forward.23} parent=0 // pred_fallthru
    _
  // Predicated region
  $region10: #{tener_forward.23} parent=0 // pred_check
    _
  $region11: #{tener_forward.23} parent=0 // pred_check_branch
    %19 = sbr.rel (0) target = $region13
  $region12: #{tener_forward.23} parent=0 // pred_region
    _
  $region13: #{tener_forward.23} parent=0 // pred_fallthru
    _
  // Predicated region
  $region14: #{tener_forward.23} parent=0 // pred_check
    _
  $region15: #{tener_forward.23} parent=0 // pred_check_branch
    %21 = sbr.rel (0) target = $region17
  $region16: #{tener_forward.23} parent=0 // pred_region
    _
  $region17: #{tener_forward.23} parent=0 // pred_fallthru
    _
  // Predicated region
  $region18: #{tener_forward.23} parent=0 // pred_check
    _
  $region19: #{tener_forward.23} parent=0 // pred_check_branch
    %23 = sbr.rel (0) target = $region21
  $region20: #{tener_forward.23} parent=0 // pred_region
    _
  $region21: #{tener_forward.23} parent=0 // pred_fallthru
    _
  // Predicated region
  $region22: #{tener_forward.23} parent=0 // pred_check
    _
  $region23: #{tener_forward.23} parent=0 // pred_check_branch
    %25 = sbr.rel (0) target = $region25
  $region24: #{tener_forward.23} parent=0 // pred_region
    _
  $region25: #{tener_forward.23} parent=0 // pred_fallthru
    _
  // Predicated region
  $region26: #{tener_forward.23} parent=0 // pred_check
    _
  $region27: #{tener_forward.23} parent=0 // pred_check_branch
    %27 = sbr.rel (0) target = $region29
  $region28: #{tener_forward.23} parent=0 // pred_region
    _
  $region29: #{tener_forward.23} parent=0 // pred_fallthru
    _
  %v28 = vld [vmem:[%s0] sm:$0xff]
  %v29 = vld [vmem:[%s0 + $0x8] sm:$0xff]
  %v30 = vld [vmem:[%s1] sm:$0xff]
  %v31 = vld [vmem:[%s1 + $0x8] sm:$0xff]
  %v32 = vld [vmem:[%s1 + $0x10] sm:$0xff]
  %v33 = vld [vmem:[%s1 + $0x18] sm:$0xff]
  %v34 = vld [vmem:[%s2] sm:$0x1]
  %v36 = vlaneseq
  %v37 = vshrl.u32 %v36, 7
  %v38 = vsub.s32 0, %v37
  %v39 = vrot.slane %v34, %v38
  %vm41 = vcmask 261120
  %v43 = vsel %vm41, %v28, 0
  %v46 = vsel %vm41, %v29, 0
  %48 = vmatprep.subr.mxu0 0.0
  %49 = vmatpush1.msra.mxu0 0.0
  %50 = vmatprep.subr.mxu0 0.0
  %51 = vmatpush1.msra.mxu0 0.0
  %52 = vmatprep.subr.mxu0 0.0
  %53 = vmatpush1.msra.mxu0 0.0
  %54 = vmatprep.subr.mxu0 0.0
  %55 = vmatpush1.msra.mxu0 0.0
  %56 = vmatprep.subr.mxu0 0.0
  %57 = vmatpush1.msra.mxu0 0.0
  %58 = vmatprep.subr.mxu0 0.0
  %59 = vmatpush1.msra.mxu0 0.0
  %60 = vmatprep.subr.mxu0 0.0
  %61 = vmatpush1.msra.mxu0 0.0
  %62 = vmatprep.subr.mxu0 0.0
  %63 = vmatpush1.msra.mxu0 0.0
  %64 = vmatprep.subr.mxu0 0.0
  %65 = vmatpush1.msra.mxu0 0.0
  %66 = vmatprep.subr.mxu0 0.0
  %67 = vmatpush1.msra.mxu0 0.0
  %68 = vmatprep.subr.mxu0 0.0
  %69 = vmatpush1.msra.mxu0 0.0
  %70 = vmatprep.subr.mxu0 0.0
  %71 = vmatpush1.msra.mxu0 0.0
  %72 = vmatprep.subr.mxu0 0.0
  %73 = vmatpush1.msra.mxu0 %v33
  %74 = vmatprep.subr.mxu0 0.0
  %75 = vmatpush1.msra.mxu0 %v32
  %76 = vmatprep.subr.mxu0 0.0
  %77 = vmatpush1.msra.mxu0 %v31
  %78 = vmatprep.subr.mxu0 0.0
  %79 = vmatpush1.msra.mxu0 %v30
  %80 = vmatprep.subr.mxu0 0.0
  %81 = vmatpush2.msra.mxu0 0.0
  %82 = vmatprep.subr.mxu0 0.0
  %83 = vmatpush2.msra.mxu0 0.0
  %84 = vmatprep.subr.mxu0 0.0
  %85 = vmatpush2.msra.mxu0 0.0
  %86 = vmatprep.subr.mxu0 0.0
  %87 = vmatpush2.msra.mxu0 0.0
  %88 = vmatprep.subr.mxu0 0.0
  %89 = vmatpush2.msra.mxu0 0.0
  %90 = vmatprep.subr.mxu0 0.0
  %91 = vmatpush2.msra.mxu0 0.0
  %92 = vmatprep.subr.mxu0 0.0
  %93 = vmatpush2.msra.mxu0 0.0
  %94 = vmatprep.subr.mxu0 0.0
  %95 = vmatpush2.msra.mxu0 0.0
  %96 = vmatprep.subr.mxu0 0.0
  %97 = vmatpush2.msra.mxu0 0.0
  %98 = vmatprep.subr.mxu0 0.0
  %99 = vmatpush2.msra.mxu0 0.0
  %100 = vmatprep.subr.mxu0 0.0
  %101 = vmatpush2.msra.mxu0 0.0
  %102 = vmatprep.subr.mxu0 0.0
  %103 = vmatpush2.msra.mxu0 0.0
  %104 = vmatprep.subr.mxu0 0.0
  %105 = vmatpush2.msra.mxu0 0.0
  %106 = vmatprep.subr.mxu0 0.0
  %107 = vmatpush2.msra.mxu0 0.0
  %108 = vmatprep.subr.mxu0 0.0
  %109 = vmatpush2.msra.mxu0 0.0
  %110 = vmatprep.subr.mxu0 0.0
  %111 = vmatpush2.msra.mxu0 0.0
  %112 = vmatprep.mubr.f32.mxu0 0.0
  %113 = vmatmul.mubr.f32.gmra.mxu0 %v43
  %v114 = vpop.f32.mrf.mxu0
  %v115 = vadd.f32 %v39, %v114
  %v116 = vpop.f32.mrf.mxu0
  %117 = vmatprep.mubr.f32.mxu0 0.0
  %118 = vmatmul.mubr.f32.gmra.mxu0 %v46
  %v119 = vpop.f32.mrf.mxu0
  %v120 = vadd.f32 %v39, %v119
  %v121 = vpop.f32.mrf.mxu0
  %122 = vdwg.mxu0
  %vm123 = vcmask 64512
  %v124 = vsel %vm123, %v115, -inf
  %125 = vmax.xlane.f32.xlu0 %v124
  %v126 = vpop.xlane.xlu0 %125
  %v127 = vsel %vm123, %v120, -inf
  %128 = vmax.xlane.f32.xlu0 %v127
  %v129 = vpop.xlane.xlu0 %128
  %v130 = vsub.f32 %v115, %v126
  %v131 = vsub.f32 %v120, %v129
  %v132 = vmul.f32 %v130, 1.442695
  %v133 = vpow.pop %v132
  %v134 = vmul.f32 %v131, 1.442695
  %v135 = vpow.pop %v134
  %v136 = vsel %vm123, %v133, 0.0
  %137 = vadd.xlane.f32.xlu0 %v136
  %v138 = vpop.xlane.xlu0 %137
  %v139 = vsel %vm123, %v135, 0.0
  %140 = vadd.xlane.f32.xlu0 %v139
  %v141 = vpop.xlane.xlu0 %140
  %v142 = vlog2.pop %v138
  %v143 = vmul.f32 %v142, 0.6931472
  %v144 = vlog2.pop %v141
  %v145 = vmul.f32 %v144, 0.6931472
  %v146 = vsub.f32 %v130, %v143
  %v147 = vsub.f32 %v131, %v145
  %148 = vst.msk [vmem:[%s7] sm:$0xff] %vm123, %v146
  %149 = vst.msk [vmem:[%s7 + $0x8] sm:$0xff] %vm123, %v147
  %v150 = vld [vmem:[%s4] sm:$0xff]
  %v151 = vld [vmem:[%s5] sm:$0x1]
  %v153 = vlaneseq
  %v154 = vshrl.u32 %v153, 7
  %v155 = vsub.s32 0, %v154
  %v156 = vrot.slane %v151, %v155
  %v158 = vadd.f32 %v146, %v156
  %v161 = vunpack.c.l.s4 1966171168
  %v162 = vunpack.c.0.s8 %v161
  %v163 = vlaneseq
  %v164 = vshrl.u32 %v163, 7
  %v165 = vsub.s32 %v162, %v164
  %v166 = vrot.slane %v158, %v165
  %v167 = vcombine.high %v166, %v166
  %v169 = vunpack.c.l.s4 1966171168
  %v170 = vunpack.c.0.s8 %v169
  %v171 = vlaneseq
  %v172 = vshrl.u32 %v171, 7
  %v173 = vsub.s32 %v170, %v172
  %v174 = vrot.slane %v166, %v173
  %v176 = vunpack.c.l.s4 1966171168
  %v177 = vunpack.c.0.s8 %v176
  %v178 = vlaneseq
  %v179 = vshrl.u32 %v178, 7
  %v180 = vsub.s32 %v177, %v179
  %v181 = vrot.slane %v167, %v180
  %v182 = vlaneseq
  %v183 = vshrl.u32 %v182, 7
  %v184 = vsub.s32 2, %v183
  %v185 = vrot.slane %v146, %v184
  %187 = vbcast.lane.b32.xlu0 %v185, 256
  %v188 = vpop.permute.xlu0 %187
  %v189 = vlaneseq
  %v190 = vshrl.u32 %v189, 7
  %v191 = vsub.s32 3, %v190
  %v192 = vrot.slane %v146, %v191
  %194 = vbcast.lane.b32.xlu0 %v192, 256
  %v195 = vpop.permute.xlu0 %194
  %v196 = vlaneseq
  %v197 = vshrl.u32 %v196, 7
  %v198 = vsub.s32 0, %v197
  %v199 = vrot.slane %v174, %v198
  %v200 = vlaneseq
  %v201 = vshrl.u32 %v200, 7
  %v202 = vsub.s32 0, %v201
  %v203 = vrot.slane %v181, %v202
  %v206 = vadd.f32 %v199, %v188
  %v207 = vadd.f32 %v203, %v195
  %v208 = vadd.f32 %v206, %v150
  %v209 = vadd.f32 %v207, %v150
  %v210 = vsel %vm123, %v208, -inf
  %211 = vmax.xlane.f32.xlu0 %v210
  %v212 = vpop.xlane.xlu0 %211
  %v213 = vsel %vm123, %v209, -inf
  %214 = vmax.xlane.f32.xlu0 %v213
  %v215 = vpop.xlane.xlu0 %214
  %v216 = vsub.f32 %v208, %v212
  %v217 = vsub.f32 %v209, %v215
  %v218 = vmul.f32 %v216, 1.442695
  %v219 = vpow.pop %v218
  %v220 = vmul.f32 %v217, 1.442695
  %v221 = vpow.pop %v220
  %v222 = vsel %vm123, %v219, 0.0
  %223 = vadd.xlane.f32.xlu0 %v222
  %v224 = vpop.xlane.xlu0 %223
  %v225 = vsel %vm123, %v221, 0.0
  %226 = vadd.xlane.f32.xlu0 %v225
  %v227 = vpop.xlane.xlu0 %226
  %v228 = vlog2.pop %v224
  %v229 = vmul.f32 %v228, 0.6931472
  %v230 = vlog2.pop %v227
  %v231 = vmul.f32 %v230, 0.6931472
  %v232 = vadd.f32 %v229, %v212
  %v233 = vadd.f32 %v231, %v215
  %v234 = vld [vmem:[%s3 + $0x2] sm:$0x3]
  %236 = vset.pattern.permute.xlu0 0
  %237 = vperm.xlu0 %236, %v234
  %v238 = vpop.permute.xlu0 %237
  %v239 = vlaneseq
  %v240 = vshrl.u32 %v239, 7
  %v241 = vsub.s32 0, %v240
  %v242 = vrot.slane %v238, %v241
  %v243 = vlaneseq
  %v244 = vshrl.u32 %v243, 7
  %v245 = vsub.s32 1, %v244
  %v246 = vrot.slane %v238, %v245
  %v249 = vmul.f32 %v232, %v242
  %v250 = vmul.f32 %v233, %v246
  %v251 = vsub.f32 1.0, %v234
  %253 = vset.pattern.permute.xlu0 0
  %254 = vperm.xlu0 %253, %v251
  %v255 = vpop.permute.xlu0 %254
  %v257 = vmul.f32 %v158, %v255
  %v259 = vlaneseq
  %v260 = vshrl.u32 %v259, 7
  %v261 = vsub.s32 0, %v260
  %v262 = vrot.slane %v257, %v261
  %264 = vbcast.lane.b32.xlu0 %v262, 256
  %v265 = vpop.permute.xlu0 %264
  %v266 = vlaneseq
  %v267 = vshrl.u32 %v266, 7
  %v268 = vsub.s32 1, %v267
  %v269 = vrot.slane %v257, %v268
  %271 = vbcast.lane.b32.xlu0 %v269, 256
  %v272 = vpop.permute.xlu0 %271
  %v275 = vadd.f32 %v249, %v265
  %v276 = vadd.f32 %v250, %v272
  %v277 = vlaneseq
  %v278 = vshrl.u32 %v277, 7
  %v279 = vsub.s32 4, %v278
  %v280 = vrot.slane %v146, %v279
  %282 = vbcast.lane.b32.xlu0 %v280, 256
  %v283 = vpop.permute.xlu0 %282
  %v284 = vlaneseq
  %v285 = vshrl.u32 %v284, 7
  %v286 = vsub.s32 5, %v285
  %v287 = vrot.slane %v146, %v286
  %289 = vbcast.lane.b32.xlu0 %v287, 256
  %v290 = vpop.permute.xlu0 %289
  %v293 = vlaneseq
  %v294 = vshrl.u32 %v293, 7
  %v295 = vsub.s32 0, %v294
  %v296 = vrot.slane %v283, %v295
  %v297 = vlaneseq
  %v298 = vshrl.u32 %v297, 7
  %v299 = vsub.s32 1, %v298
  %v300 = vrot.slane %v283, %v299
  %v301 = vlaneseq
  %v302 = vshrl.u32 %v301, 7
  %v303 = vsub.s32 2, %v302
  %v304 = vrot.slane %v283, %v303
  %v305 = vlaneseq
  %v306 = vshrl.u32 %v305, 7
  %v307 = vsub.s32 3, %v306
  %v308 = vrot.slane %v283, %v307
  %v309 = vlaneseq
  %v310 = vshrl.u32 %v309, 7
  %v311 = vsub.s32 4, %v310
  %v312 = vrot.slane %v283, %v311
  %v313 = vlaneseq
  %v314 = vshrl.u32 %v313, 7
  %v315 = vsub.s32 5, %v314
  %v316 = vrot.slane %v283, %v315
  %v317 = vlaneseq
  %v318 = vshrl.u32 %v317, 7
  %v319 = vsub.s32 6, %v318
  %v320 = vrot.slane %v283, %v319
  %v321 = vlaneseq
  %v322 = vshrl.u32 %v321, 7
  %v323 = vsub.s32 7, %v322
  %v324 = vrot.slane %v283, %v323
  %v325 = vlaneseq
  %v326 = vshrl.u32 %v325, 7
  %v327 = vsub.s32 0, %v326
  %v328 = vrot.slane %v290, %v327
  %v329 = vlaneseq
  %v330 = vshrl.u32 %v329, 7
  %v331 = vsub.s32 1, %v330
  %v332 = vrot.slane %v290, %v331
  %v333 = vlaneseq
  %v334 = vshrl.u32 %v333, 7
  %v335 = vsub.s32 2, %v334
  %v336 = vrot.slane %v290, %v335
  %v337 = vlaneseq
  %v338 = vshrl.u32 %v337, 7
  %v339 = vsub.s32 3, %v338
  %v340 = vrot.slane %v290, %v339
  %v341 = vlaneseq
  %v342 = vshrl.u32 %v341, 7
  %v343 = vsub.s32 4, %v342
  %v344 = vrot.slane %v290, %v343
  %v345 = vlaneseq
  %v346 = vshrl.u32 %v345, 7
  %v347 = vsub.s32 5, %v346
  %v348 = vrot.slane %v290, %v347
  %v349 = vlaneseq
  %v350 = vshrl.u32 %v349, 7
  %v351 = vsub.s32 6, %v350
  %v352 = vrot.slane %v290, %v351
  %v353 = vlaneseq
  %v354 = vshrl.u32 %v353, 7
  %v355 = vsub.s32 7, %v354
  %v356 = vrot.slane %v290, %v355
  %v373 = vadd.f32 %v275, %v296
  %v374 = vadd.f32 %v275, %v300
  %v375 = vadd.f32 %v275, %v304
  %v376 = vadd.f32 %v275, %v308
  %v377 = vadd.f32 %v275, %v312
  %v378 = vadd.f32 %v275, %v316
  %v379 = vadd.f32 %v275, %v320
  %v380 = vadd.f32 %v275, %v324
  %v381 = vadd.f32 %v276, %v328
  %v382 = vadd.f32 %v276, %v332
  %v383 = vadd.f32 %v276, %v336
  %v384 = vadd.f32 %v276, %v340
  %v385 = vadd.f32 %v276, %v344
  %v386 = vadd.f32 %v276, %v348
  %v387 = vadd.f32 %v276, %v352
  %v388 = vadd.f32 %v276, %v356
  %v390 = vlaneseq
  %v391 = vshrl.u32 %v390, 7
  %v392 = vsub.s32 0, %v391
  %v393 = vrot.slane %v150, %v392
  %395 = vbcast.lane.b32.xlu0 %v393, 256
  %v396 = vpop.permute.xlu0 %395
  %v397 = vlaneseq
  %v398 = vshrl.u32 %v397, 7
  %v399 = vsub.s32 1, %v398
  %v400 = vrot.slane %v150, %v399
  %402 = vbcast.lane.b32.xlu0 %v400, 256
  %v403 = vpop.permute.xlu0 %402
  %v404 = vlaneseq
  %v405 = vshrl.u32 %v404, 7
  %v406 = vsub.s32 2, %v405
  %v407 = vrot.slane %v150, %v406
  %409 = vbcast.lane.b32.xlu0 %v407, 256
  %v410 = vpop.permute.xlu0 %409
  %v411 = vlaneseq
  %v412 = vshrl.u32 %v411, 7
  %v413 = vsub.s32 3, %v412
  %v414 = vrot.slane %v150, %v413
  %416 = vbcast.lane.b32.xlu0 %v414, 256
  %v417 = vpop.permute.xlu0 %416
  %v418 = vlaneseq
  %v419 = vshrl.u32 %v418, 7
  %v420 = vsub.s32 4, %v419
  %v421 = vrot.slane %v150, %v420
  %423 = vbcast.lane.b32.xlu0 %v421, 256
  %v424 = vpop.permute.xlu0 %423
  %v425 = vlaneseq
  %v426 = vshrl.u32 %v425, 7
  %v427 = vsub.s32 5, %v426
  %v428 = vrot.slane %v150, %v427
  %430 = vbcast.lane.b32.xlu0 %v428, 256
  %v431 = vpop.permute.xlu0 %430
  %v432 = vlaneseq
  %v433 = vshrl.u32 %v432, 7
  %v434 = vsub.s32 6, %v433
  %v435 = vrot.slane %v150, %v434
  %437 = vbcast.lane.b32.xlu0 %v435, 256
  %v438 = vpop.permute.xlu0 %437
  %v439 = vlaneseq
  %v440 = vshrl.u32 %v439, 7
  %v441 = vsub.s32 7, %v440
  %v442 = vrot.slane %v150, %v441
  %444 = vbcast.lane.b32.xlu0 %v442, 256
  %v445 = vpop.permute.xlu0 %444
  %v454 = vadd.f32 %v373, %v396
  %v455 = vadd.f32 %v374, %v403
  %v456 = vadd.f32 %v375, %v410
  %v457 = vadd.f32 %v376, %v417
  %v458 = vadd.f32 %v377, %v424
  %v459 = vadd.f32 %v378, %v431
  %v460 = vadd.f32 %v379, %v438
  %v461 = vadd.f32 %v380, %v445
  %v462 = vadd.f32 %v381, %v396
  %v463 = vadd.f32 %v382, %v403
  %v464 = vadd.f32 %v383, %v410
  %v465 = vadd.f32 %v384, %v417
  %v466 = vadd.f32 %v385, %v424
  %v467 = vadd.f32 %v386, %v431
  %v468 = vadd.f32 %v387, %v438
  %v469 = vadd.f32 %v388, %v445
  %486 = vset.pattern.permute.xlu0 0
  %487 = vperm.xlu0 %486, %v454
  %v488 = vpop.permute.xlu0 %487
  %489 = vset.pattern.permute.xlu0 0
  %490 = vperm.xlu0 %489, %v455
  %v491 = vpop.permute.xlu0 %490
  %492 = vset.pattern.permute.xlu0 0
  %493 = vperm.xlu0 %492, %v456
  %v494 = vpop.permute.xlu0 %493
  %495 = vset.pattern.permute.xlu0 0
  %496 = vperm.xlu0 %495, %v457
  %v497 = vpop.permute.xlu0 %496
  %498 = vset.pattern.permute.xlu0 0
  %499 = vperm.xlu0 %498, %v458
  %v500 = vpop.permute.xlu0 %499
  %501 = vset.pattern.permute.xlu0 0
  %502 = vperm.xlu0 %501, %v459
  %v503 = vpop.permute.xlu0 %502
  %504 = vset.pattern.permute.xlu0 0
  %505 = vperm.xlu0 %504, %v460
  %v506 = vpop.permute.xlu0 %505
  %507 = vset.pattern.permute.xlu0 0
  %508 = vperm.xlu0 %507, %v461
  %v509 = vpop.permute.xlu0 %508
  %510 = vset.pattern.permute.xlu0 0
  %511 = vperm.xlu0 %510, %v462
  %v512 = vpop.permute.xlu0 %511
  %513 = vset.pattern.permute.xlu0 0
  %514 = vperm.xlu0 %513, %v463
  %v515 = vpop.permute.xlu0 %514
  %516 = vset.pattern.permute.xlu0 0
  %517 = vperm.xlu0 %516, %v464
  %v518 = vpop.permute.xlu0 %517
  %519 = vset.pattern.permute.xlu0 0
  %520 = vperm.xlu0 %519, %v465
  %v521 = vpop.permute.xlu0 %520
  %522 = vset.pattern.permute.xlu0 0
  %523 = vperm.xlu0 %522, %v466
  %v524 = vpop.permute.xlu0 %523
  %525 = vset.pattern.permute.xlu0 0
  %526 = vperm.xlu0 %525, %v467
  %v527 = vpop.permute.xlu0 %526
  %528 = vset.pattern.permute.xlu0 0
  %529 = vperm.xlu0 %528, %v468
  %v530 = vpop.permute.xlu0 %529
  %531 = vset.pattern.permute.xlu0 0
  %532 = vperm.xlu0 %531, %v469
  %v533 = vpop.permute.xlu0 %532
  %v534 = vlaneseq
  %v535 = vand.u32 %v534, 127
  %v536 = vlaneseq
  %v537 = vshrl.u32 %v536, 7
  %v538 = vsub.s32 %v535, %v537
  %v539 = vrot.slane %v488, %v538
  %v540 = vlaneseq
  %v541 = vshrl.u32 %v540, 7
  %v542 = vsub.s32 %v535, %v541
  %v543 = vrot.slane %v491, %v542
  %v544 = vlaneseq
  %v545 = vshrl.u32 %v544, 7
  %v546 = vsub.s32 %v535, %v545
  %v547 = vrot.slane %v494, %v546
  %v548 = vlaneseq
  %v549 = vshrl.u32 %v548, 7
  %v550 = vsub.s32 %v535, %v549
  %v551 = vrot.slane %v497, %v550
  %v552 = vlaneseq
  %v553 = vshrl.u32 %v552, 7
  %v554 = vsub.s32 %v535, %v553
  %v555 = vrot.slane %v500, %v554
  %v556 = vlaneseq
  %v557 = vshrl.u32 %v556, 7
  %v558 = vsub.s32 %v535, %v557
  %v559 = vrot.slane %v503, %v558
  %v560 = vlaneseq
  %v561 = vshrl.u32 %v560, 7
  %v562 = vsub.s32 %v535, %v561
  %v563 = vrot.slane %v506, %v562
  %v564 = vlaneseq
  %v565 = vshrl.u32 %v564, 7
  %v566 = vsub.s32 %v535, %v565
  %v567 = vrot.slane %v509, %v566
  %v568 = vlaneseq
  %v569 = vshrl.u32 %v568, 7
  %v570 = vsub.s32 %v535, %v569
  %v571 = vrot.slane %v512, %v570
  %v572 = vlaneseq
  %v573 = vshrl.u32 %v572, 7
  %v574 = vsub.s32 %v535, %v573
  %v575 = vrot.slane %v515, %v574
  %v576 = vlaneseq
  %v577 = vshrl.u32 %v576, 7
  %v578 = vsub.s32 %v535, %v577
  %v579 = vrot.slane %v518, %v578
  %v580 = vlaneseq
  %v581 = vshrl.u32 %v580, 7
  %v582 = vsub.s32 %v535, %v581
  %v583 = vrot.slane %v521, %v582
  %v584 = vlaneseq
  %v585 = vshrl.u32 %v584, 7
  %v586 = vsub.s32 %v535, %v585
  %v587 = vrot.slane %v524, %v586
  %v588 = vlaneseq
  %v589 = vshrl.u32 %v588, 7
  %v590 = vsub.s32 %v535, %v589
  %v591 = vrot.slane %v527, %v590
  %v592 = vlaneseq
  %v593 = vshrl.u32 %v592, 7
  %v594 = vsub.s32 %v535, %v593
  %v595 = vrot.slane %v530, %v594
  %v596 = vlaneseq
  %v597 = vshrl.u32 %v596, 7
  %v598 = vsub.s32 %v535, %v597
  %v599 = vrot.slane %v533, %v598
  %vm600 = vcmask 1041409
  %v601 = vsel %vm600, %v543, %v539
  %vm602 = vcmask 1042434
  %v603 = vsel %vm602, %v547, %v601
  %vm604 = vcmask 1043459
  %v605 = vsel %vm604, %v551, %v603
  %vm606 = vcmask 1044484
  %v607 = vsel %vm606, %v555, %v605
  %vm608 = vcmask 1045509
  %v609 = vsel %vm608, %v559, %v607
  %vm610 = vcmask 1046534
  %v611 = vsel %vm610, %v563, %v609
  %vm612 = vcmask 1047559
  %v613 = vsel %vm612, %v567, %v611
  %v614 = vsel %vm600, %v575, %v571
  %v615 = vsel %vm602, %v579, %v614
  %v616 = vsel %vm604, %v583, %v615
  %v617 = vsel %vm606, %v587, %v616
  %v618 = vsel %vm608, %v591, %v617
  %v619 = vsel %vm610, %v595, %v618
  %v620 = vsel %vm612, %v599, %v619
  %v623 = vsel %vm123, %v613, -inf
  %624 = vmax.xlane.f32.xlu0 %v623
  %v625 = vpop.xlane.xlu0 %624
  %v626 = vsel %vm123, %v620, -inf
  %627 = vmax.xlane.f32.xlu0 %v626
  %v628 = vpop.xlane.xlu0 %627
  %v631 = vlaneseq
  %v632 = vshrl.u32 %v631, 7
  %v633 = vsub.s32 0, %v632
  %v634 = vrot.slane %v625, %v633
  %v635 = vlaneseq
  %v636 = vshrl.u32 %v635, 7
  %v637 = vsub.s32 1, %v636
  %v638 = vrot.slane %v625, %v637
  %v639 = vlaneseq
  %v640 = vshrl.u32 %v639, 7
  %v641 = vsub.s32 2, %v640
  %v642 = vrot.slane %v625, %v641
  %v643 = vlaneseq
  %v644 = vshrl.u32 %v643, 7
  %v645 = vsub.s32 3, %v644
  %v646 = vrot.slane %v625, %v645
  %v647 = vlaneseq
  %v648 = vshrl.u32 %v647, 7
  %v649 = vsub.s32 4, %v648
  %v650 = vrot.slane %v625, %v649
  %v651 = vlaneseq
  %v652 = vshrl.u32 %v651, 7
  %v653 = vsub.s32 5, %v652
  %v654 = vrot.slane %v625, %v653
  %v655 = vlaneseq
  %v656 = vshrl.u32 %v655, 7
  %v657 = vsub.s32 6, %v656
  %v658 = vrot.slane %v625, %v657
  %v659 = vlaneseq
  %v660 = vshrl.u32 %v659, 7
  %v661 = vsub.s32 7, %v660
  %v662 = vrot.slane %v625, %v661
  %v663 = vlaneseq
  %v664 = vshrl.u32 %v663, 7
  %v665 = vsub.s32 0, %v664
  %v666 = vrot.slane %v628, %v665
  %v667 = vlaneseq
  %v668 = vshrl.u32 %v667, 7
  %v669 = vsub.s32 1, %v668
  %v670 = vrot.slane %v628, %v669
  %v671 = vlaneseq
  %v672 = vshrl.u32 %v671, 7
  %v673 = vsub.s32 2, %v672
  %v674 = vrot.slane %v628, %v673
  %v675 = vlaneseq
  %v676 = vshrl.u32 %v675, 7
  %v677 = vsub.s32 3, %v676
  %v678 = vrot.slane %v628, %v677
  %v679 = vlaneseq
  %v680 = vshrl.u32 %v679, 7
  %v681 = vsub.s32 4, %v680
  %v682 = vrot.slane %v628, %v681
  %v683 = vlaneseq
  %v684 = vshrl.u32 %v683, 7
  %v685 = vsub.s32 5, %v684
  %v686 = vrot.slane %v628, %v685
  %v687 = vlaneseq
  %v688 = vshrl.u32 %v687, 7
  %v689 = vsub.s32 6, %v688
  %v690 = vrot.slane %v628, %v689
  %v691 = vlaneseq
  %v692 = vshrl.u32 %v691, 7
  %v693 = vsub.s32 7, %v692
  %v694 = vrot.slane %v628, %v693
  %v711 = vsub.f32 %v454, %v634
  %v712 = vsub.f32 %v455, %v638
  %v713 = vsub.f32 %v456, %v642
  %v714 = vsub.f32 %v457, %v646
  %v715 = vsub.f32 %v458, %v650
  %v716 = vsub.f32 %v459, %v654
  %v717 = vsub.f32 %v460, %v658
  %v718 = vsub.f32 %v461, %v662
  %v719 = vsub.f32 %v462, %v666
  %v720 = vsub.f32 %v463, %v670
  %v721 = vsub.f32 %v464, %v674
  %v722 = vsub.f32 %v465, %v678
  %v723 = vsub.f32 %v466, %v682
  %v724 = vsub.f32 %v467, %v686
  %v725 = vsub.f32 %v468, %v690
  %v726 = vsub.f32 %v469, %v694
  %v727 = vmul.f32 %v711, 1.442695
  %v728 = vpow.pop %v727
  %v729 = vmul.f32 %v712, 1.442695
  %v730 = vpow.pop %v729
  %v731 = vmul.f32 %v713, 1.442695
  %v732 = vpow.pop %v731
  %v733 = vmul.f32 %v714, 1.442695
  %v734 = vpow.pop %v733
  %v735 = vmul.f32 %v715, 1.442695
  %v736 = vpow.pop %v735
  %v737 = vmul.f32 %v716, 1.442695
  %v738 = vpow.pop %v737
  %v739 = vmul.f32 %v717, 1.442695
  %v740 = vpow.pop %v739
  %v741 = vmul.f32 %v718, 1.442695
  %v742 = vpow.pop %v741
  %v743 = vmul.f32 %v719, 1.442695
  %v744 = vpow.pop %v743
  %v745 = vmul.f32 %v720, 1.442695
  %v746 = vpow.pop %v745
  %v747 = vmul.f32 %v721, 1.442695
  %v748 = vpow.pop %v747
  %v749 = vmul.f32 %v722, 1.442695
  %v750 = vpow.pop %v749
  %v751 = vmul.f32 %v723, 1.442695
  %v752 = vpow.pop %v751
  %v753 = vmul.f32 %v724, 1.442695
  %v754 = vpow.pop %v753
  %v755 = vmul.f32 %v725, 1.442695
  %v756 = vpow.pop %v755
  %v757 = vmul.f32 %v726, 1.442695
  %v758 = vpow.pop %v757
  %775 = vset.pattern.permute.xlu0 0
  %776 = vperm.xlu0 %775, %v728
  %v777 = vpop.permute.xlu0 %776
  %778 = vset.pattern.permute.xlu0 0
  %779 = vperm.xlu0 %778, %v730
  %v780 = vpop.permute.xlu0 %779
  %781 = vset.pattern.permute.xlu0 0
  %782 = vperm.xlu0 %781, %v732
  %v783 = vpop.permute.xlu0 %782
  %784 = vset.pattern.permute.xlu0 0
  %785 = vperm.xlu0 %784, %v734
  %v786 = vpop.permute.xlu0 %785
  %787 = vset.pattern.permute.xlu0 0
  %788 = vperm.xlu0 %787, %v736
  %v789 = vpop.permute.xlu0 %788
  %790 = vset.pattern.permute.xlu0 0
  %791 = vperm.xlu0 %790, %v738
  %v792 = vpop.permute.xlu0 %791
  %793 = vset.pattern.permute.xlu0 0
  %794 = vperm.xlu0 %793, %v740
  %v795 = vpop.permute.xlu0 %794
  %796 = vset.pattern.permute.xlu0 0
  %797 = vperm.xlu0 %796, %v742
  %v798 = vpop.permute.xlu0 %797
  %799 = vset.pattern.permute.xlu0 0
  %800 = vperm.xlu0 %799, %v744
  %v801 = vpop.permute.xlu0 %800
  %802 = vset.pattern.permute.xlu0 0
  %803 = vperm.xlu0 %802, %v746
  %v804 = vpop.permute.xlu0 %803
  %805 = vset.pattern.permute.xlu0 0
  %806 = vperm.xlu0 %805, %v748
  %v807 = vpop.permute.xlu0 %806
  %808 = vset.pattern.permute.xlu0 0
  %809 = vperm.xlu0 %808, %v750
  %v810 = vpop.permute.xlu0 %809
  %811 = vset.pattern.permute.xlu0 0
  %812 = vperm.xlu0 %811, %v752
  %v813 = vpop.permute.xlu0 %812
  %814 = vset.pattern.permute.xlu0 0
  %815 = vperm.xlu0 %814, %v754
  %v816 = vpop.permute.xlu0 %815
  %817 = vset.pattern.permute.xlu0 0
  %818 = vperm.xlu0 %817, %v756
  %v819 = vpop.permute.xlu0 %818
  %820 = vset.pattern.permute.xlu0 0
  %821 = vperm.xlu0 %820, %v758
  %v822 = vpop.permute.xlu0 %821
  %v823 = vlaneseq
  %v824 = vshrl.u32 %v823, 7
  %v825 = vsub.s32 %v535, %v824
  %v826 = vrot.slane %v777, %v825
  %v827 = vlaneseq
  %v828 = vshrl.u32 %v827, 7
  %v829 = vsub.s32 %v535, %v828
  %v830 = vrot.slane %v780, %v829
  %v831 = vlaneseq
  %v832 = vshrl.u32 %v831, 7
  %v833 = vsub.s32 %v535, %v832
  %v834 = vrot.slane %v783, %v833
  %v835 = vlaneseq
  %v836 = vshrl.u32 %v835, 7
  %v837 = vsub.s32 %v535, %v836
  %v838 = vrot.slane %v786, %v837
  %v839 = vlaneseq
  %v840 = vshrl.u32 %v839, 7
  %v841 = vsub.s32 %v535, %v840
  %v842 = vrot.slane %v789, %v841
  %v843 = vlaneseq
  %v844 = vshrl.u32 %v843, 7
  %v845 = vsub.s32 %v535, %v844
  %v846 = vrot.slane %v792, %v845
  %v847 = vlaneseq
  %v848 = vshrl.u32 %v847, 7
  %v849 = vsub.s32 %v535, %v848
  %v850 = vrot.slane %v795, %v849
  %v851 = vlaneseq
  %v852 = vshrl.u32 %v851, 7
  %v853 = vsub.s32 %v535, %v852
  %v854 = vrot.slane %v798, %v853
  %v855 = vlaneseq
  %v856 = vshrl.u32 %v855, 7
  %v857 = vsub.s32 %v535, %v856
  %v858 = vrot.slane %v801, %v857
  %v859 = vlaneseq
  %v860 = vshrl.u32 %v859, 7
  %v861 = vsub.s32 %v535, %v860
  %v862 = vrot.slane %v804, %v861
  %v863 = vlaneseq
  %v864 = vshrl.u32 %v863, 7
  %v865 = vsub.s32 %v535, %v864
  %v866 = vrot.slane %v807, %v865
  %v867 = vlaneseq
  %v868 = vshrl.u32 %v867, 7
  %v869 = vsub.s32 %v535, %v868
  %v870 = vrot.slane %v810, %v869
  %v871 = vlaneseq
  %v872 = vshrl.u32 %v871, 7
  %v873 = vsub.s32 %v535, %v872
  %v874 = vrot.slane %v813, %v873
  %v875 = vlaneseq
  %v876 = vshrl.u32 %v875, 7
  %v877 = vsub.s32 %v535, %v876
  %v878 = vrot.slane %v816, %v877
  %v879 = vlaneseq
  %v880 = vshrl.u32 %v879, 7
  %v881 = vsub.s32 %v535, %v880
  %v882 = vrot.slane %v819, %v881
  %v883 = vlaneseq
  %v884 = vshrl.u32 %v883, 7
  %v885 = vsub.s32 %v535, %v884
  %v886 = vrot.slane %v822, %v885
  %v887 = vsel %vm600, %v830, %v826
  %v888 = vsel %vm602, %v834, %v887
  %v889 = vsel %vm604, %v838, %v888
  %v890 = vsel %vm606, %v842, %v889
  %v891 = vsel %vm608, %v846, %v890
  %v892 = vsel %vm610, %v850, %v891
  %v893 = vsel %vm612, %v854, %v892
  %v894 = vsel %vm600, %v862, %v858
  %v895 = vsel %vm602, %v866, %v894
  %v896 = vsel %vm604, %v870, %v895
  %v897 = vsel %vm606, %v874, %v896
  %v898 = vsel %vm608, %v878, %v897
  %v899 = vsel %vm610, %v882, %v898
  %v900 = vsel %vm612, %v886, %v899
  %v903 = vsel %vm123, %v893, 0.0
  %904 = vadd.xlane.f32.xlu0 %v903
  %v905 = vpop.xlane.xlu0 %904
  %v906 = vsel %vm123, %v900, 0.0
  %907 = vadd.xlane.f32.xlu0 %v906
  %v908 = vpop.xlane.xlu0 %907
  %v909 = vlog2.pop %v905
  %v910 = vmul.f32 %v909, 0.6931472
  %v911 = vlog2.pop %v908
  %v912 = vmul.f32 %v911, 0.6931472
  %v913 = vadd.f32 %v910, %v625
  %v914 = vadd.f32 %v912, %v628
  %v915 = vld [vmem:[%s3 + $0x4] sm:$0x3]
  %917 = vset.pattern.permute.xlu0 0
  %918 = vperm.xlu0 %917, %v915
  %v919 = vpop.permute.xlu0 %918
  %v920 = vlaneseq
  %v921 = vshrl.u32 %v920, 7
  %v922 = vsub.s32 0, %v921
  %v923 = vrot.slane %v919, %v922
  %v924 = vlaneseq
  %v925 = vshrl.u32 %v924, 7
  %v926 = vsub.s32 1, %v925
  %v927 = vrot.slane %v919, %v926
  %v930 = vmul.f32 %v913, %v923
  %v931 = vmul.f32 %v914, %v927
  %v932 = vsub.f32 1.0, %v915
  %934 = vset.pattern.permute.xlu0 0
  %935 = vperm.xlu0 %934, %v932
  %v936 = vpop.permute.xlu0 %935
  %v937 = vlaneseq
  %v938 = vshrl.u32 %v937, 7
  %v939 = vsub.s32 0, %v938
  %v940 = vrot.slane %v936, %v939
  %v941 = vlaneseq
  %v942 = vshrl.u32 %v941, 7
  %v943 = vsub.s32 1, %v942
  %v944 = vrot.slane %v936, %v943
  %v947 = vmul.f32 %v275, %v940
  %v948 = vmul.f32 %v276, %v944
  %v949 = vadd.f32 %v930, %v947
  %v950 = vadd.f32 %v931, %v948
  %v951 = vlaneseq
  %v952 = vshrl.u32 %v951, 7
  %v953 = vsub.s32 6, %v952
  %v954 = vrot.slane %v146, %v953
  %956 = vbcast.lane.b32.xlu0 %v954, 256
  %v957 = vpop.permute.xlu0 %956
  %v958 = vlaneseq
  %v959 = vshrl.u32 %v958, 7
  %v960 = vsub.s32 7, %v959
  %v961 = vrot.slane %v146, %v960
  %963 = vbcast.lane.b32.xlu0 %v961, 256
  %v964 = vpop.permute.xlu0 %963
  %v967 = vlaneseq
  %v968 = vshrl.u32 %v967, 7
  %v969 = vsub.s32 0, %v968
  %v970 = vrot.slane %v957, %v969
  %v971 = vlaneseq
  %v972 = vshrl.u32 %v971, 7
  %v973 = vsub.s32 1, %v972
  %v974 = vrot.slane %v957, %v973
  %v975 = vlaneseq
  %v976 = vshrl.u32 %v975, 7
  %v977 = vsub.s32 2, %v976
  %v978 = vrot.slane %v957, %v977
  %v979 = vlaneseq
  %v980 = vshrl.u32 %v979, 7
  %v981 = vsub.s32 3, %v980
  %v982 = vrot.slane %v957, %v981
  %v983 = vlaneseq
  %v984 = vshrl.u32 %v983, 7
  %v985 = vsub.s32 4, %v984
  %v986 = vrot.slane %v957, %v985
  %v987 = vlaneseq
  %v988 = vshrl.u32 %v987, 7
  %v989 = vsub.s32 5, %v988
  %v990 = vrot.slane %v957, %v989
  %v991 = vlaneseq
  %v992 = vshrl.u32 %v991, 7
  %v993 = vsub.s32 6, %v992
  %v994 = vrot.slane %v957, %v993
  %v995 = vlaneseq
  %v996 = vshrl.u32 %v995, 7
  %v997 = vsub.s32 7, %v996
  %v998 = vrot.slane %v957, %v997
  %v999 = vlaneseq
  %v1000 = vshrl.u32 %v999, 7
  %v1001 = vsub.s32 0, %v1000
  %v1002 = vrot.slane %v964, %v1001
  %v1003 = vlaneseq
  %v1004 = vshrl.u32 %v1003, 7
  %v1005 = vsub.s32 1, %v1004
  %v1006 = vrot.slane %v964, %v1005
  %v1007 = vlaneseq
  %v1008 = vshrl.u32 %v1007, 7
  %v1009 = vsub.s32 2, %v1008
  %v1010 = vrot.slane %v964, %v1009
  %v1011 = vlaneseq
  %v1012 = vshrl.u32 %v1011, 7
  %v1013 = vsub.s32 3, %v1012
  %v1014 = vrot.slane %v964, %v1013
  %v1015 = vlaneseq
  %v1016 = vshrl.u32 %v1015, 7
  %v1017 = vsub.s32 4, %v1016
  %v1018 = vrot.slane %v964, %v1017
  %v1019 = vlaneseq
  %v1020 = vshrl.u32 %v1019, 7
  %v1021 = vsub.s32 5, %v1020
  %v1022 = vrot.slane %v964, %v1021
  %v1023 = vlaneseq
  %v1024 = vshrl.u32 %v1023, 7
  %v1025 = vsub.s32 6, %v1024
  %v1026 = vrot.slane %v964, %v1025
  %v1027 = vlaneseq
  %v1028 = vshrl.u32 %v1027, 7
  %v1029 = vsub.s32 7, %v1028
  %v1030 = vrot.slane %v964, %v1029
  %v1047 = vadd.f32 %v949, %v970
  %v1048 = vadd.f32 %v949, %v974
  %v1049 = vadd.f32 %v949, %v978
  %v1050 = vadd.f32 %v949, %v982
  %v1051 = vadd.f32 %v949, %v986
  %v1052 = vadd.f32 %v949, %v990
  %v1053 = vadd.f32 %v949, %v994
  %v1054 = vadd.f32 %v949, %v998
  %v1055 = vadd.f32 %v950, %v1002
  %v1056 = vadd.f32 %v950, %v1006
  %v1057 = vadd.f32 %v950, %v1010
  %v1058 = vadd.f32 %v950, %v1014
  %v1059 = vadd.f32 %v950, %v1018
  %v1060 = vadd.f32 %v950, %v1022
  %v1061 = vadd.f32 %v950, %v1026
  %v1062 = vadd.f32 %v950, %v1030
  %v1063 = vadd.f32 %v1047, %v396
  %v1064 = vadd.f32 %v1048, %v403
  %v1065 = vadd.f32 %v1049, %v410
  %v1066 = vadd.f32 %v1050, %v417
  %v1067 = vadd.f32 %v1051, %v424
  %v1068 = vadd.f32 %v1052, %v431
  %v1069 = vadd.f32 %v1053, %v438
  %v1070 = vadd.f32 %v1054, %v445
  %v1071 = vadd.f32 %v1055, %v396
  %v1072 = vadd.f32 %v1056, %v403
  %v1073 = vadd.f32 %v1057, %v410
  %v1074 = vadd.f32 %v1058, %v417
  %v1075 = vadd.f32 %v1059, %v424
  %v1076 = vadd.f32 %v1060, %v431
  %v1077 = vadd.f32 %v1061, %v438
  %v1078 = vadd.f32 %v1062, %v445
  %1095 = vset.pattern.permute.xlu0 0
  %1096 = vperm.xlu0 %1095, %v1063
  %v1097 = vpop.permute.xlu0 %1096
  %1098 = vset.pattern.permute.xlu0 0
  %1099 = vperm.xlu0 %1098, %v1064
  %v1100 = vpop.permute.xlu0 %1099
  %1101 = vset.pattern.permute.xlu0 0
  %1102 = vperm.xlu0 %1101, %v1065
  %v1103 = vpop.permute.xlu0 %1102
  %1104 = vset.pattern.permute.xlu0 0
  %1105 = vperm.xlu0 %1104, %v1066
  %v1106 = vpop.permute.xlu0 %1105
  %1107 = vset.pattern.permute.xlu0 0
  %1108 = vperm.xlu0 %1107, %v1067
  %v1109 = vpop.permute.xlu0 %1108
  %1110 = vset.pattern.permute.xlu0 0
  %1111 = vperm.xlu0 %1110, %v1068
  %v1112 = vpop.permute.xlu0 %1111
  %1113 = vset.pattern.permute.xlu0 0
  %1114 = vperm.xlu0 %1113, %v1069
  %v1115 = vpop.permute.xlu0 %1114
  %1116 = vset.pattern.permute.xlu0 0
  %1117 = vperm.xlu0 %1116, %v1070
  %v1118 = vpop.permute.xlu0 %1117
  %1119 = vset.pattern.permute.xlu0 0
  %1120 = vperm.xlu0 %1119, %v1071
  %v1121 = vpop.permute.xlu0 %1120
  %1122 = vset.pattern.permute.xlu0 0
  %1123 = vperm.xlu0 %1122, %v1072
  %v1124 = vpop.permute.xlu0 %1123
  %1125 = vset.pattern.permute.xlu0 0
  %1126 = vperm.xlu0 %1125, %v1073
  %v1127 = vpop.permute.xlu0 %1126
  %1128 = vset.pattern.permute.xlu0 0
  %1129 = vperm.xlu0 %1128, %v1074
  %v1130 = vpop.permute.xlu0 %1129
  %1131 = vset.pattern.permute.xlu0 0
  %1132 = vperm.xlu0 %1131, %v1075
  %v1133 = vpop.permute.xlu0 %1132
  %1134 = vset.pattern.permute.xlu0 0
  %1135 = vperm.xlu0 %1134, %v1076
  %v1136 = vpop.permute.xlu0 %1135
  %1137 = vset.pattern.permute.xlu0 0
  %1138 = vperm.xlu0 %1137, %v1077
  %v1139 = vpop.permute.xlu0 %1138
  %1140 = vset.pattern.permute.xlu0 0
  %1141 = vperm.xlu0 %1140, %v1078
  %v1142 = vpop.permute.xlu0 %1141
  %v1143 = vlaneseq
  %v1144 = vshrl.u32 %v1143, 7
  %v1145 = vsub.s32 %v535, %v1144
  %v1146 = vrot.slane %v1097, %v1145
  %v1147 = vlaneseq
  %v1148 = vshrl.u32 %v1147, 7
  %v1149 = vsub.s32 %v535, %v1148
  %v1150 = vrot.slane %v1100, %v1149
  %v1151 = vlaneseq
  %v1152 = vshrl.u32 %v1151, 7
  %v1153 = vsub.s32 %v535, %v1152
  %v1154 = vrot.slane %v1103, %v1153
  %v1155 = vlaneseq
  %v1156 = vshrl.u32 %v1155, 7
  %v1157 = vsub.s32 %v535, %v1156
  %v1158 = vrot.slane %v1106, %v1157
  %v1159 = vlaneseq
  %v1160 = vshrl.u32 %v1159, 7
  %v1161 = vsub.s32 %v535, %v1160
  %v1162 = vrot.slane %v1109, %v1161
  %v1163 = vlaneseq
  %v1164 = vshrl.u32 %v1163, 7
  %v1165 = vsub.s32 %v535, %v1164
  %v1166 = vrot.slane %v1112, %v1165
  %v1167 = vlaneseq
  %v1168 = vshrl.u32 %v1167, 7
  %v1169 = vsub.s32 %v535, %v1168
  %v1170 = vrot.slane %v1115, %v1169
  %v1171 = vlaneseq
  %v1172 = vshrl.u32 %v1171, 7
  %v1173 = vsub.s32 %v535, %v1172
  %v1174 = vrot.slane %v1118, %v1173
  %v1175 = vlaneseq
  %v1176 = vshrl.u32 %v1175, 7
  %v1177 = vsub.s32 %v535, %v1176
  %v1178 = vrot.slane %v1121, %v1177
  %v1179 = vlaneseq
  %v1180 = vshrl.u32 %v1179, 7
  %v1181 = vsub.s32 %v535, %v1180
  %v1182 = vrot.slane %v1124, %v1181
  %v1183 = vlaneseq
  %v1184 = vshrl.u32 %v1183, 7
  %v1185 = vsub.s32 %v535, %v1184
  %v1186 = vrot.slane %v1127, %v1185
  %v1187 = vlaneseq
  %v1188 = vshrl.u32 %v1187, 7
  %v1189 = vsub.s32 %v535, %v1188
  %v1190 = vrot.slane %v1130, %v1189
  %v1191 = vlaneseq
  %v1192 = vshrl.u32 %v1191, 7
  %v1193 = vsub.s32 %v535, %v1192
  %v1194 = vrot.slane %v1133, %v1193
  %v1195 = vlaneseq
  %v1196 = vshrl.u32 %v1195, 7
  %v1197 = vsub.s32 %v535, %v1196
  %v1198 = vrot.slane %v1136, %v1197
  %v1199 = vlaneseq
  %v1200 = vshrl.u32 %v1199, 7
  %v1201 = vsub.s32 %v535, %v1200
  %v1202 = vrot.slane %v1139, %v1201
  %v1203 = vlaneseq
  %v1204 = vshrl.u32 %v1203, 7
  %v1205 = vsub.s32 %v535, %v1204
  %v1206 = vrot.slane %v1142, %v1205
  %v1207 = vsel %vm600, %v1150, %v1146
  %v1208 = vsel %vm602, %v1154, %v1207
  %v1209 = vsel %vm604, %v1158, %v1208
  %v1210 = vsel %vm606, %v1162, %v1209
  %v1211 = vsel %vm608, %v1166, %v1210
  %v1212 = vsel %vm610, %v1170, %v1211
  %v1213 = vsel %vm612, %v1174, %v1212
  %v1214 = vsel %vm600, %v1182, %v1178
  %v1215 = vsel %vm602, %v1186, %v1214
  %v1216 = vsel %vm604, %v1190, %v1215
  %v1217 = vsel %vm606, %v1194, %v1216
  %v1218 = vsel %vm608, %v1198, %v1217
  %v1219 = vsel %vm610, %v1202, %v1218
  %v1220 = vsel %vm612, %v1206, %v1219
  %v1223 = vsel %vm123, %v1213, -inf
  %1224 = vmax.xlane.f32.xlu0 %v1223
  %v1225 = vpop.xlane.xlu0 %1224
  %v1226 = vsel %vm123, %v1220, -inf
  %1227 = vmax.xlane.f32.xlu0 %v1226
  %v1228 = vpop.xlane.xlu0 %1227
  %v1231 = vlaneseq
  %v1232 = vshrl.u32 %v1231, 7
  %v1233 = vsub.s32 0, %v1232
  %v1234 = vrot.slane %v1225, %v1233
  %v1235 = vlaneseq
  %v1236 = vshrl.u32 %v1235, 7
  %v1237 = vsub.s32 1, %v1236
  %v1238 = vrot.slane %v1225, %v1237
  %v1239 = vlaneseq
  %v1240 = vshrl.u32 %v1239, 7
  %v1241 = vsub.s32 2, %v1240
  %v1242 = vrot.slane %v1225, %v1241
  %v1243 = vlaneseq
  %v1244 = vshrl.u32 %v1243, 7
  %v1245 = vsub.s32 3, %v1244
  %v1246 = vrot.slane %v1225, %v1245
  %v1247 = vlaneseq
  %v1248 = vshrl.u32 %v1247, 7
  %v1249 = vsub.s32 4, %v1248
  %v1250 = vrot.slane %v1225, %v1249
  %v1251 = vlaneseq
  %v1252 = vshrl.u32 %v1251, 7
  %v1253 = vsub.s32 5, %v1252
  %v1254 = vrot.slane %v1225, %v1253
  %v1255 = vlaneseq
  %v1256 = vshrl.u32 %v1255, 7
  %v1257 = vsub.s32 6, %v1256
  %v1258 = vrot.slane %v1225, %v1257
  %v1259 = vlaneseq
  %v1260 = vshrl.u32 %v1259, 7
  %v1261 = vsub.s32 7, %v1260
  %v1262 = vrot.slane %v1225, %v1261
  %v1263 = vlaneseq
  %v1264 = vshrl.u32 %v1263, 7
  %v1265 = vsub.s32 0, %v1264
  %v1266 = vrot.slane %v1228, %v1265
  %v1267 = vlaneseq
  %v1268 = vshrl.u32 %v1267, 7
  %v1269 = vsub.s32 1, %v1268
  %v1270 = vrot.slane %v1228, %v1269
  %v1271 = vlaneseq
  %v1272 = vshrl.u32 %v1271, 7
  %v1273 = vsub.s32 2, %v1272
  %v1274 = vrot.slane %v1228, %v1273
  %v1275 = vlaneseq
  %v1276 = vshrl.u32 %v1275, 7
  %v1277 = vsub.s32 3, %v1276
  %v1278 = vrot.slane %v1228, %v1277
  %v1279 = vlaneseq
  %v1280 = vshrl.u32 %v1279, 7
  %v1281 = vsub.s32 4, %v1280
  %v1282 = vrot.slane %v1228, %v1281
  %v1283 = vlaneseq
  %v1284 = vshrl.u32 %v1283, 7
  %v1285 = vsub.s32 5, %v1284
  %v1286 = vrot.slane %v1228, %v1285
  %v1287 = vlaneseq
  %v1288 = vshrl.u32 %v1287, 7
  %v1289 = vsub.s32 6, %v1288
  %v1290 = vrot.slane %v1228, %v1289
  %v1291 = vlaneseq
  %v1292 = vshrl.u32 %v1291, 7
  %v1293 = vsub.s32 7, %v1292
  %v1294 = vrot.slane %v1228, %v1293
  %v1311 = vsub.f32 %v1063, %v1234
  %v1312 = vsub.f32 %v1064, %v1238
  %v1313 = vsub.f32 %v1065, %v1242
  %v1314 = vsub.f32 %v1066, %v1246
  %v1315 = vsub.f32 %v1067, %v1250
  %v1316 = vsub.f32 %v1068, %v1254
  %v1317 = vsub.f32 %v1069, %v1258
  %v1318 = vsub.f32 %v1070, %v1262
  %v1319 = vsub.f32 %v1071, %v1266
  %v1320 = vsub.f32 %v1072, %v1270
  %v1321 = vsub.f32 %v1073, %v1274
  %v1322 = vsub.f32 %v1074, %v1278
  %v1323 = vsub.f32 %v1075, %v1282
  %v1324 = vsub.f32 %v1076, %v1286
  %v1325 = vsub.f32 %v1077, %v1290
  %v1326 = vsub.f32 %v1078, %v1294
  %v1327 = vmul.f32 %v1311, 1.442695
  %v1328 = vpow.pop %v1327
  %v1329 = vmul.f32 %v1312, 1.442695
  %v1330 = vpow.pop %v1329
  %v1331 = vmul.f32 %v1313, 1.442695
  %v1332 = vpow.pop %v1331
  %v1333 = vmul.f32 %v1314, 1.442695
  %v1334 = vpow.pop %v1333
  %v1335 = vmul.f32 %v1315, 1.442695
  %v1336 = vpow.pop %v1335
  %v1337 = vmul.f32 %v1316, 1.442695
  %v1338 = vpow.pop %v1337
  %v1339 = vmul.f32 %v1317, 1.442695
  %v1340 = vpow.pop %v1339
  %v1341 = vmul.f32 %v1318, 1.442695
  %v1342 = vpow.pop %v1341
  %v1343 = vmul.f32 %v1319, 1.442695
  %v1344 = vpow.pop %v1343
  %v1345 = vmul.f32 %v1320, 1.442695
  %v1346 = vpow.pop %v1345
  %v1347 = vmul.f32 %v1321, 1.442695
  %v1348 = vpow.pop %v1347
  %v1349 = vmul.f32 %v1322, 1.442695
  %v1350 = vpow.pop %v1349
  %v1351 = vmul.f32 %v1323, 1.442695
  %v1352 = vpow.pop %v1351
  %v1353 = vmul.f32 %v1324, 1.442695
  %v1354 = vpow.pop %v1353
  %v1355 = vmul.f32 %v1325, 1.442695
  %v1356 = vpow.pop %v1355
  %v1357 = vmul.f32 %v1326, 1.442695
  %v1358 = vpow.pop %v1357
  %1375 = vset.pattern.permute.xlu0 0
  %1376 = vperm.xlu0 %1375, %v1328
  %v1377 = vpop.permute.xlu0 %1376
  %1378 = vset.pattern.permute.xlu0 0
  %1379 = vperm.xlu0 %1378, %v1330
  %v1380 = vpop.permute.xlu0 %1379
  %1381 = vset.pattern.permute.xlu0 0
  %1382 = vperm.xlu0 %1381, %v1332
  %v1383 = vpop.permute.xlu0 %1382
  %1384 = vset.pattern.permute.xlu0 0
  %1385 = vperm.xlu0 %1384, %v1334
  %v1386 = vpop.permute.xlu0 %1385
  %1387 = vset.pattern.permute.xlu0 0
  %1388 = vperm.xlu0 %1387, %v1336
  %v1389 = vpop.permute.xlu0 %1388
  %1390 = vset.pattern.permute.xlu0 0
  %1391 = vperm.xlu0 %1390, %v1338
  %v1392 = vpop.permute.xlu0 %1391
  %1393 = vset.pattern.permute.xlu0 0
  %1394 = vperm.xlu0 %1393, %v1340
  %v1395 = vpop.permute.xlu0 %1394
  %1396 = vset.pattern.permute.xlu0 0
  %1397 = vperm.xlu0 %1396, %v1342
  %v1398 = vpop.permute.xlu0 %1397
  %1399 = vset.pattern.permute.xlu0 0
  %1400 = vperm.xlu0 %1399, %v1344
  %v1401 = vpop.permute.xlu0 %1400
  %1402 = vset.pattern.permute.xlu0 0
  %1403 = vperm.xlu0 %1402, %v1346
  %v1404 = vpop.permute.xlu0 %1403
  %1405 = vset.pattern.permute.xlu0 0
  %1406 = vperm.xlu0 %1405, %v1348
  %v1407 = vpop.permute.xlu0 %1406
  %1408 = vset.pattern.permute.xlu0 0
  %1409 = vperm.xlu0 %1408, %v1350
  %v1410 = vpop.permute.xlu0 %1409
  %1411 = vset.pattern.permute.xlu0 0
  %1412 = vperm.xlu0 %1411, %v1352
  %v1413 = vpop.permute.xlu0 %1412
  %1414 = vset.pattern.permute.xlu0 0
  %1415 = vperm.xlu0 %1414, %v1354
  %v1416 = vpop.permute.xlu0 %1415
  %1417 = vset.pattern.permute.xlu0 0
  %1418 = vperm.xlu0 %1417, %v1356
  %v1419 = vpop.permute.xlu0 %1418
  %1420 = vset.pattern.permute.xlu0 0
  %1421 = vperm.xlu0 %1420, %v1358
  %v1422 = vpop.permute.xlu0 %1421
  %v1423 = vlaneseq
  %v1424 = vshrl.u32 %v1423, 7
  %v1425 = vsub.s32 %v535, %v1424
  %v1426 = vrot.slane %v1377, %v1425
  %v1427 = vlaneseq
  %v1428 = vshrl.u32 %v1427, 7
  %v1429 = vsub.s32 %v535, %v1428
  %v1430 = vrot.slane %v1380, %v1429
  %v1431 = vlaneseq
  %v1432 = vshrl.u32 %v1431, 7
  %v1433 = vsub.s32 %v535, %v1432
  %v1434 = vrot.slane %v1383, %v1433
  %v1435 = vlaneseq
  %v1436 = vshrl.u32 %v1435, 7
  %v1437 = vsub.s32 %v535, %v1436
  %v1438 = vrot.slane %v1386, %v1437
  %v1439 = vlaneseq
  %v1440 = vshrl.u32 %v1439, 7
  %v1441 = vsub.s32 %v535, %v1440
  %v1442 = vrot.slane %v1389, %v1441
  %v1443 = vlaneseq
  %v1444 = vshrl.u32 %v1443, 7
  %v1445 = vsub.s32 %v535, %v1444
  %v1446 = vrot.slane %v1392, %v1445
  %v1447 = vlaneseq
  %v1448 = vshrl.u32 %v1447, 7
  %v1449 = vsub.s32 %v535, %v1448
  %v1450 = vrot.slane %v1395, %v1449
  %v1451 = vlaneseq
  %v1452 = vshrl.u32 %v1451, 7
  %v1453 = vsub.s32 %v535, %v1452
  %v1454 = vrot.slane %v1398, %v1453
  %v1455 = vlaneseq
  %v1456 = vshrl.u32 %v1455, 7
  %v1457 = vsub.s32 %v535, %v1456
  %v1458 = vrot.slane %v1401, %v1457
  %v1459 = vlaneseq
  %v1460 = vshrl.u32 %v1459, 7
  %v1461 = vsub.s32 %v535, %v1460
  %v1462 = vrot.slane %v1404, %v1461
  %v1463 = vlaneseq
  %v1464 = vshrl.u32 %v1463, 7
  %v1465 = vsub.s32 %v535, %v1464
  %v1466 = vrot.slane %v1407, %v1465
  %v1467 = vlaneseq
  %v1468 = vshrl.u32 %v1467, 7
  %v1469 = vsub.s32 %v535, %v1468
  %v1470 = vrot.slane %v1410, %v1469
  %v1471 = vlaneseq
  %v1472 = vshrl.u32 %v1471, 7
  %v1473 = vsub.s32 %v535, %v1472
  %v1474 = vrot.slane %v1413, %v1473
  %v1475 = vlaneseq
  %v1476 = vshrl.u32 %v1475, 7
  %v1477 = vsub.s32 %v535, %v1476
  %v1478 = vrot.slane %v1416, %v1477
  %v1479 = vlaneseq
  %v1480 = vshrl.u32 %v1479, 7
  %v1481 = vsub.s32 %v535, %v1480
  %v1482 = vrot.slane %v1419, %v1481
  %v1483 = vlaneseq
  %v1484 = vshrl.u32 %v1483, 7
  %v1485 = vsub.s32 %v535, %v1484
  %v1486 = vrot.slane %v1422, %v1485
  %v1487 = vsel %vm600, %v1430, %v1426
  %v1488 = vsel %vm602, %v1434, %v1487
  %v1489 = vsel %vm604, %v1438, %v1488
  %v1490 = vsel %vm606, %v1442, %v1489
  %v1491 = vsel %vm608, %v1446, %v1490
  %v1492 = vsel %vm610, %v1450, %v1491
  %v1493 = vsel %vm612, %v1454, %v1492
  %v1494 = vsel %vm600, %v1462, %v1458
  %v1495 = vsel %vm602, %v1466, %v1494
  %v1496 = vsel %vm604, %v1470, %v1495
  %v1497 = vsel %vm606, %v1474, %v1496
  %v1498 = vsel %vm608, %v1478, %v1497
  %v1499 = vsel %vm610, %v1482, %v1498
  %v1500 = vsel %vm612, %v1486, %v1499
  %v1503 = vsel %vm123, %v1493, 0.0
  %1504 = vadd.xlane.f32.xlu0 %v1503
  %v1505 = vpop.xlane.xlu0 %1504
  %v1506 = vsel %vm123, %v1500, 0.0
  %1507 = vadd.xlane.f32.xlu0 %v1506
  %v1508 = vpop.xlane.xlu0 %1507
  %v1509 = vlog2.pop %v1505
  %v1510 = vmul.f32 %v1509, 0.6931472
  %v1511 = vlog2.pop %v1508
  %v1512 = vmul.f32 %v1511, 0.6931472
  %v1513 = vadd.f32 %v1510, %v1225
  %v1514 = vadd.f32 %v1512, %v1228
  %v1515 = vld [vmem:[%s3 + $0x6] sm:$0x3]
  %1517 = vset.pattern.permute.xlu0 0
  %1518 = vperm.xlu0 %1517, %v1515
  %v1519 = vpop.permute.xlu0 %1518
  %v1520 = vlaneseq
  %v1521 = vshrl.u32 %v1520, 7
  %v1522 = vsub.s32 0, %v1521
  %v1523 = vrot.slane %v1519, %v1522
  %v1524 = vlaneseq
  %v1525 = vshrl.u32 %v1524, 7
  %v1526 = vsub.s32 1, %v1525
  %v1527 = vrot.slane %v1519, %v1526
  %v1530 = vmul.f32 %v1513, %v1523
  %v1531 = vmul.f32 %v1514, %v1527
  %v1532 = vsub.f32 1.0, %v1515
  %1534 = vset.pattern.permute.xlu0 0
  %1535 = vperm.xlu0 %1534, %v1532
  %v1536 = vpop.permute.xlu0 %1535
  %v1537 = vlaneseq
  %v1538 = vshrl.u32 %v1537, 7
  %v1539 = vsub.s32 0, %v1538
  %v1540 = vrot.slane %v1536, %v1539
  %v1541 = vlaneseq
  %v1542 = vshrl.u32 %v1541, 7
  %v1543 = vsub.s32 1, %v1542
  %v1544 = vrot.slane %v1536, %v1543
  %v1547 = vmul.f32 %v949, %v1540
  %v1548 = vmul.f32 %v950, %v1544
  %v1549 = vadd.f32 %v1530, %v1547
  %v1550 = vadd.f32 %v1531, %v1548
  %v1551 = vlaneseq
  %v1552 = vshrl.u32 %v1551, 7
  %v1553 = vsub.s32 0, %v1552
  %v1554 = vrot.slane %v147, %v1553
  %1556 = vbcast.lane.b32.xlu0 %v1554, 256
  %v1557 = vpop.permute.xlu0 %1556
  %v1558 = vlaneseq
  %v1559 = vshrl.u32 %v1558, 7
  %v1560 = vsub.s32 1, %v1559
  %v1561 = vrot.slane %v147, %v1560
  %1563 = vbcast.lane.b32.xlu0 %v1561, 256
  %v1564 = vpop.permute.xlu0 %1563
  %v1567 = vlaneseq
  %v1568 = vshrl.u32 %v1567, 7
  %v1569 = vsub.s32 0, %v1568
  %v1570 = vrot.slane %v1557, %v1569
  %v1571 = vlaneseq
  %v1572 = vshrl.u32 %v1571, 7
  %v1573 = vsub.s32 1, %v1572
  %v1574 = vrot.slane %v1557, %v1573
  %v1575 = vlaneseq
  %v1576 = vshrl.u32 %v1575, 7
  %v1577 = vsub.s32 2, %v1576
  %v1578 = vrot.slane %v1557, %v1577
  %v1579 = vlaneseq
  %v1580 = vshrl.u32 %v1579, 7
  %v1581 = vsub.s32 3, %v1580
  %v1582 = vrot.slane %v1557, %v1581
  %v1583 = vlaneseq
  %v1584 = vshrl.u32 %v1583, 7
  %v1585 = vsub.s32 4, %v1584
  %v1586 = vrot.slane %v1557, %v1585
  %v1587 = vlaneseq
  %v1588 = vshrl.u32 %v1587, 7
  %v1589 = vsub.s32 5, %v1588
  %v1590 = vrot.slane %v1557, %v1589
  %v1591 = vlaneseq
  %v1592 = vshrl.u32 %v1591, 7
  %v1593 = vsub.s32 6, %v1592
  %v1594 = vrot.slane %v1557, %v1593
  %v1595 = vlaneseq
  %v1596 = vshrl.u32 %v1595, 7
  %v1597 = vsub.s32 7, %v1596
  %v1598 = vrot.slane %v1557, %v1597
  %v1599 = vlaneseq
  %v1600 = vshrl.u32 %v1599, 7
  %v1601 = vsub.s32 0, %v1600
  %v1602 = vrot.slane %v1564, %v1601
  %v1603 = vlaneseq
  %v1604 = vshrl.u32 %v1603, 7
  %v1605 = vsub.s32 1, %v1604
  %v1606 = vrot.slane %v1564, %v1605
  %v1607 = vlaneseq
  %v1608 = vshrl.u32 %v1607, 7
  %v1609 = vsub.s32 2, %v1608
  %v1610 = vrot.slane %v1564, %v1609
  %v1611 = vlaneseq
  %v1612 = vshrl.u32 %v1611, 7
  %v1613 = vsub.s32 3, %v1612
  %v1614 = vrot.slane %v1564, %v1613
  %v1615 = vlaneseq
  %v1616 = vshrl.u32 %v1615, 7
  %v1617 = vsub.s32 4, %v1616
  %v1618 = vrot.slane %v1564, %v1617
  %v1619 = vlaneseq
  %v1620 = vshrl.u32 %v1619, 7
  %v1621 = vsub.s32 5, %v1620
  %v1622 = vrot.slane %v1564, %v1621
  %v1623 = vlaneseq
  %v1624 = vshrl.u32 %v1623, 7
  %v1625 = vsub.s32 6, %v1624
  %v1626 = vrot.slane %v1564, %v1625
  %v1627 = vlaneseq
  %v1628 = vshrl.u32 %v1627, 7
  %v1629 = vsub.s32 7, %v1628
  %v1630 = vrot.slane %v1564, %v1629
  %v1647 = vadd.f32 %v1549, %v1570
  %v1648 = vadd.f32 %v1549, %v1574
  %v1649 = vadd.f32 %v1549, %v1578
  %v1650 = vadd.f32 %v1549, %v1582
  %v1651 = vadd.f32 %v1549, %v1586
  %v1652 = vadd.f32 %v1549, %v1590
  %v1653 = vadd.f32 %v1549, %v1594
  %v1654 = vadd.f32 %v1549, %v1598
  %v1655 = vadd.f32 %v1550, %v1602
  %v1656 = vadd.f32 %v1550, %v1606
  %v1657 = vadd.f32 %v1550, %v1610
  %v1658 = vadd.f32 %v1550, %v1614
  %v1659 = vadd.f32 %v1550, %v1618
  %v1660 = vadd.f32 %v1550, %v1622
  %v1661 = vadd.f32 %v1550, %v1626
  %v1662 = vadd.f32 %v1550, %v1630
  %v1663 = vadd.f32 %v1647, %v396
  %v1664 = vadd.f32 %v1648, %v403
  %v1665 = vadd.f32 %v1649, %v410
  %v1666 = vadd.f32 %v1650, %v417
  %v1667 = vadd.f32 %v1651, %v424
  %v1668 = vadd.f32 %v1652, %v431
  %v1669 = vadd.f32 %v1653, %v438
  %v1670 = vadd.f32 %v1654, %v445
  %v1671 = vadd.f32 %v1655, %v396
  %v1672 = vadd.f32 %v1656, %v403
  %v1673 = vadd.f32 %v1657, %v410
  %v1674 = vadd.f32 %v1658, %v417
  %v1675 = vadd.f32 %v1659, %v424
  %v1676 = vadd.f32 %v1660, %v431
  %v1677 = vadd.f32 %v1661, %v438
  %v1678 = vadd.f32 %v1662, %v445
  %1695 = vset.pattern.permute.xlu0 0
  %1696 = vperm.xlu0 %1695, %v1663
  %v1697 = vpop.permute.xlu0 %1696
  %1698 = vset.pattern.permute.xlu0 0
  %1699 = vperm.xlu0 %1698, %v1664
  %v1700 = vpop.permute.xlu0 %1699
  %1701 = vset.pattern.permute.xlu0 0
  %1702 = vperm.xlu0 %1701, %v1665
  %v1703 = vpop.permute.xlu0 %1702
  %1704 = vset.pattern.permute.xlu0 0
  %1705 = vperm.xlu0 %1704, %v1666
  %v1706 = vpop.permute.xlu0 %1705
  %1707 = vset.pattern.permute.xlu0 0
  %1708 = vperm.xlu0 %1707, %v1667
  %v1709 = vpop.permute.xlu0 %1708
  %1710 = vset.pattern.permute.xlu0 0
  %1711 = vperm.xlu0 %1710, %v1668
  %v1712 = vpop.permute.xlu0 %1711
  %1713 = vset.pattern.permute.xlu0 0
  %1714 = vperm.xlu0 %1713, %v1669
  %v1715 = vpop.permute.xlu0 %1714
  %1716 = vset.pattern.permute.xlu0 0
  %1717 = vperm.xlu0 %1716, %v1670
  %v1718 = vpop.permute.xlu0 %1717
  %1719 = vset.pattern.permute.xlu0 0
  %1720 = vperm.xlu0 %1719, %v1671
  %v1721 = vpop.permute.xlu0 %1720
  %1722 = vset.pattern.permute.xlu0 0
  %1723 = vperm.xlu0 %1722, %v1672
  %v1724 = vpop.permute.xlu0 %1723
  %1725 = vset.pattern.permute.xlu0 0
  %1726 = vperm.xlu0 %1725, %v1673
  %v1727 = vpop.permute.xlu0 %1726
  %1728 = vset.pattern.permute.xlu0 0
  %1729 = vperm.xlu0 %1728, %v1674
  %v1730 = vpop.permute.xlu0 %1729
  %1731 = vset.pattern.permute.xlu0 0
  %1732 = vperm.xlu0 %1731, %v1675
  %v1733 = vpop.permute.xlu0 %1732
  %1734 = vset.pattern.permute.xlu0 0
  %1735 = vperm.xlu0 %1734, %v1676
  %v1736 = vpop.permute.xlu0 %1735
  %1737 = vset.pattern.permute.xlu0 0
  %1738 = vperm.xlu0 %1737, %v1677
  %v1739 = vpop.permute.xlu0 %1738
  %1740 = vset.pattern.permute.xlu0 0
  %1741 = vperm.xlu0 %1740, %v1678
  %v1742 = vpop.permute.xlu0 %1741
  %v1743 = vlaneseq
  %v1744 = vshrl.u32 %v1743, 7
  %v1745 = vsub.s32 %v535, %v1744
  %v1746 = vrot.slane %v1697, %v1745
  %v1747 = vlaneseq
  %v1748 = vshrl.u32 %v1747, 7
  %v1749 = vsub.s32 %v535, %v1748
  %v1750 = vrot.slane %v1700, %v1749
  %v1751 = vlaneseq
  %v1752 = vshrl.u32 %v1751, 7
  %v1753 = vsub.s32 %v535, %v1752
  %v1754 = vrot.slane %v1703, %v1753
  %v1755 = vlaneseq
  %v1756 = vshrl.u32 %v1755, 7
  %v1757 = vsub.s32 %v535, %v1756
  %v1758 = vrot.slane %v1706, %v1757
  %v1759 = vlaneseq
  %v1760 = vshrl.u32 %v1759, 7
  %v1761 = vsub.s32 %v535, %v1760
  %v1762 = vrot.slane %v1709, %v1761
  %v1763 = vlaneseq
  %v1764 = vshrl.u32 %v1763, 7
  %v1765 = vsub.s32 %v535, %v1764
  %v1766 = vrot.slane %v1712, %v1765
  %v1767 = vlaneseq
  %v1768 = vshrl.u32 %v1767, 7
  %v1769 = vsub.s32 %v535, %v1768
  %v1770 = vrot.slane %v1715, %v1769
  %v1771 = vlaneseq
  %v1772 = vshrl.u32 %v1771, 7
  %v1773 = vsub.s32 %v535, %v1772
  %v1774 = vrot.slane %v1718, %v1773
  %v1775 = vlaneseq
  %v1776 = vshrl.u32 %v1775, 7
  %v1777 = vsub.s32 %v535, %v1776
  %v1778 = vrot.slane %v1721, %v1777
  %v1779 = vlaneseq
  %v1780 = vshrl.u32 %v1779, 7
  %v1781 = vsub.s32 %v535, %v1780
  %v1782 = vrot.slane %v1724, %v1781
  %v1783 = vlaneseq
  %v1784 = vshrl.u32 %v1783, 7
  %v1785 = vsub.s32 %v535, %v1784
  %v1786 = vrot.slane %v1727, %v1785
  %v1787 = vlaneseq
  %v1788 = vshrl.u32 %v1787, 7
  %v1789 = vsub.s32 %v535, %v1788
  %v1790 = vrot.slane %v1730, %v1789
  %v1791 = vlaneseq
  %v1792 = vshrl.u32 %v1791, 7
  %v1793 = vsub.s32 %v535, %v1792
  %v1794 = vrot.slane %v1733, %v1793
  %v1795 = vlaneseq
  %v1796 = vshrl.u32 %v1795, 7
  %v1797 = vsub.s32 %v535, %v1796
  %v1798 = vrot.slane %v1736, %v1797
  %v1799 = vlaneseq
  %v1800 = vshrl.u32 %v1799, 7
  %v1801 = vsub.s32 %v535, %v1800
  %v1802 = vrot.slane %v1739, %v1801
  %v1803 = vlaneseq
  %v1804 = vshrl.u32 %v1803, 7
  %v1805 = vsub.s32 %v535, %v1804
  %v1806 = vrot.slane %v1742, %v1805
  %v1807 = vsel %vm600, %v1750, %v1746
  %v1808 = vsel %vm602, %v1754, %v1807
  %v1809 = vsel %vm604, %v1758, %v1808
  %v1810 = vsel %vm606, %v1762, %v1809
  %v1811 = vsel %vm608, %v1766, %v1810
  %v1812 = vsel %vm610, %v1770, %v1811
  %v1813 = vsel %vm612, %v1774, %v1812
  %v1814 = vsel %vm600, %v1782, %v1778
  %v1815 = vsel %vm602, %v1786, %v1814
  %v1816 = vsel %vm604, %v1790, %v1815
  %v1817 = vsel %vm606, %v1794, %v1816
  %v1818 = vsel %vm608, %v1798, %v1817
  %v1819 = vsel %vm610, %v1802, %v1818
  %v1820 = vsel %vm612, %v1806, %v1819
  %v1823 = vsel %vm123, %v1813, -inf
  %1824 = vmax.xlane.f32.xlu0 %v1823
  %v1825 = vpop.xlane.xlu0 %1824
  %v1826 = vsel %vm123, %v1820, -inf
  %1827 = vmax.xlane.f32.xlu0 %v1826
  %v1828 = vpop.xlane.xlu0 %1827
  %v1831 = vlaneseq
  %v1832 = vshrl.u32 %v1831, 7
  %v1833 = vsub.s32 0, %v1832
  %v1834 = vrot.slane %v1825, %v1833
  %v1835 = vlaneseq
  %v1836 = vshrl.u32 %v1835, 7
  %v1837 = vsub.s32 1, %v1836
  %v1838 = vrot.slane %v1825, %v1837
  %v1839 = vlaneseq
  %v1840 = vshrl.u32 %v1839, 7
  %v1841 = vsub.s32 2, %v1840
  %v1842 = vrot.slane %v1825, %v1841
  %v1843 = vlaneseq
  %v1844 = vshrl.u32 %v1843, 7
  %v1845 = vsub.s32 3, %v1844
  %v1846 = vrot.slane %v1825, %v1845
  %v1847 = vlaneseq
  %v1848 = vshrl.u32 %v1847, 7
  %v1849 = vsub.s32 4, %v1848
  %v1850 = vrot.slane %v1825, %v1849
  %v1851 = vlaneseq
  %v1852 = vshrl.u32 %v1851, 7
  %v1853 = vsub.s32 5, %v1852
  %v1854 = vrot.slane %v1825, %v1853
  %v1855 = vlaneseq
  %v1856 = vshrl.u32 %v1855, 7
  %v1857 = vsub.s32 6, %v1856
  %v1858 = vrot.slane %v1825, %v1857
  %v1859 = vlaneseq
  %v1860 = vshrl.u32 %v1859, 7
  %v1861 = vsub.s32 7, %v1860
  %v1862 = vrot.slane %v1825, %v1861
  %v1863 = vlaneseq
  %v1864 = vshrl.u32 %v1863, 7
  %v1865 = vsub.s32 0, %v1864
  %v1866 = vrot.slane %v1828, %v1865
  %v1867 = vlaneseq
  %v1868 = vshrl.u32 %v1867, 7
  %v1869 = vsub.s32 1, %v1868
  %v1870 = vrot.slane %v1828, %v1869
  %v1871 = vlaneseq
  %v1872 = vshrl.u32 %v1871, 7
  %v1873 = vsub.s32 2, %v1872
  %v1874 = vrot.slane %v1828, %v1873
  %v1875 = vlaneseq
  %v1876 = vshrl.u32 %v1875, 7
  %v1877 = vsub.s32 3, %v1876
  %v1878 = vrot.slane %v1828, %v1877
  %v1879 = vlaneseq
  %v1880 = vshrl.u32 %v1879, 7
  %v1881 = vsub.s32 4, %v1880
  %v1882 = vrot.slane %v1828, %v1881
  %v1883 = vlaneseq
  %v1884 = vshrl.u32 %v1883, 7
  %v1885 = vsub.s32 5, %v1884
  %v1886 = vrot.slane %v1828, %v1885
  %v1887 = vlaneseq
  %v1888 = vshrl.u32 %v1887, 7
  %v1889 = vsub.s32 6, %v1888
  %v1890 = vrot.slane %v1828, %v1889
  %v1891 = vlaneseq
  %v1892 = vshrl.u32 %v1891, 7
  %v1893 = vsub.s32 7, %v1892
  %v1894 = vrot.slane %v1828, %v1893
  %v1911 = vsub.f32 %v1663, %v1834
  %v1912 = vsub.f32 %v1664, %v1838
  %v1913 = vsub.f32 %v1665, %v1842
  %v1914 = vsub.f32 %v1666, %v1846
  %v1915 = vsub.f32 %v1667, %v1850
  %v1916 = vsub.f32 %v1668, %v1854
  %v1917 = vsub.f32 %v1669, %v1858
  %v1918 = vsub.f32 %v1670, %v1862
  %v1919 = vsub.f32 %v1671, %v1866
  %v1920 = vsub.f32 %v1672, %v1870
  %v1921 = vsub.f32 %v1673, %v1874
  %v1922 = vsub.f32 %v1674, %v1878
  %v1923 = vsub.f32 %v1675, %v1882
  %v1924 = vsub.f32 %v1676, %v1886
  %v1925 = vsub.f32 %v1677, %v1890
  %v1926 = vsub.f32 %v1678, %v1894
  %v1927 = vmul.f32 %v1911, 1.442695
  %v1928 = vpow.pop %v1927
  %v1929 = vmul.f32 %v1912, 1.442695
  %v1930 = vpow.pop %v1929
  %v1931 = vmul.f32 %v1913, 1.442695
  %v1932 = vpow.pop %v1931
  %v1933 = vmul.f32 %v1914, 1.442695
  %v1934 = vpow.pop %v1933
  %v1935 = vmul.f32 %v1915, 1.442695
  %v1936 = vpow.pop %v1935
  %v1937 = vmul.f32 %v1916, 1.442695
  %v1938 = vpow.pop %v1937
  %v1939 = vmul.f32 %v1917, 1.442695
  %v1940 = vpow.pop %v1939
  %v1941 = vmul.f32 %v1918, 1.442695
  %v1942 = vpow.pop %v1941
  %v1943 = vmul.f32 %v1919, 1.442695
  %v1944 = vpow.pop %v1943
  %v1945 = vmul.f32 %v1920, 1.442695
  %v1946 = vpow.pop %v1945
  %v1947 = vmul.f32 %v1921, 1.442695
  %v1948 = vpow.pop %v1947
  %v1949 = vmul.f32 %v1922, 1.442695
  %v1950 = vpow.pop %v1949
  %v1951 = vmul.f32 %v1923, 1.442695
  %v1952 = vpow.pop %v1951
  %v1953 = vmul.f32 %v1924, 1.442695
  %v1954 = vpow.pop %v1953
  %v1955 = vmul.f32 %v1925, 1.442695
  %v1956 = vpow.pop %v1955
  %v1957 = vmul.f32 %v1926, 1.442695
  %v1958 = vpow.pop %v1957
  %1975 = vset.pattern.permute.xlu0 0
  %1976 = vperm.xlu0 %1975, %v1928
  %v1977 = vpop.permute.xlu0 %1976
  %1978 = vset.pattern.permute.xlu0 0
  %1979 = vperm.xlu0 %1978, %v1930
  %v1980 = vpop.permute.xlu0 %1979
  %1981 = vset.pattern.permute.xlu0 0
  %1982 = vperm.xlu0 %1981, %v1932
  %v1983 = vpop.permute.xlu0 %1982
  %1984 = vset.pattern.permute.xlu0 0
  %1985 = vperm.xlu0 %1984, %v1934
  %v1986 = vpop.permute.xlu0 %1985
  %1987 = vset.pattern.permute.xlu0 0
  %1988 = vperm.xlu0 %1987, %v1936
  %v1989 = vpop.permute.xlu0 %1988
  %1990 = vset.pattern.permute.xlu0 0
  %1991 = vperm.xlu0 %1990, %v1938
  %v1992 = vpop.permute.xlu0 %1991
  %1993 = vset.pattern.permute.xlu0 0
  %1994 = vperm.xlu0 %1993, %v1940
  %v1995 = vpop.permute.xlu0 %1994
  %1996 = vset.pattern.permute.xlu0 0
  %1997 = vperm.xlu0 %1996, %v1942
  %v1998 = vpop.permute.xlu0 %1997
  %1999 = vset.pattern.permute.xlu0 0
  %2000 = vperm.xlu0 %1999, %v1944
  %v2001 = vpop.permute.xlu0 %2000
  %2002 = vset.pattern.permute.xlu0 0
  %2003 = vperm.xlu0 %2002, %v1946
  %v2004 = vpop.permute.xlu0 %2003
  %2005 = vset.pattern.permute.xlu0 0
  %2006 = vperm.xlu0 %2005, %v1948
  %v2007 = vpop.permute.xlu0 %2006
  %2008 = vset.pattern.permute.xlu0 0
  %2009 = vperm.xlu0 %2008, %v1950
  %v2010 = vpop.permute.xlu0 %2009
  %2011 = vset.pattern.permute.xlu0 0
  %2012 = vperm.xlu0 %2011, %v1952
  %v2013 = vpop.permute.xlu0 %2012
  %2014 = vset.pattern.permute.xlu0 0
  %2015 = vperm.xlu0 %2014, %v1954
  %v2016 = vpop.permute.xlu0 %2015
  %2017 = vset.pattern.permute.xlu0 0
  %2018 = vperm.xlu0 %2017, %v1956
  %v2019 = vpop.permute.xlu0 %2018
  %2020 = vset.pattern.permute.xlu0 0
  %2021 = vperm.xlu0 %2020, %v1958
  %v2022 = vpop.permute.xlu0 %2021
  %v2023 = vlaneseq
  %v2024 = vshrl.u32 %v2023, 7
  %v2025 = vsub.s32 %v535, %v2024
  %v2026 = vrot.slane %v1977, %v2025
  %v2027 = vlaneseq
  %v2028 = vshrl.u32 %v2027, 7
  %v2029 = vsub.s32 %v535, %v2028
  %v2030 = vrot.slane %v1980, %v2029
  %v2031 = vlaneseq
  %v2032 = vshrl.u32 %v2031, 7
  %v2033 = vsub.s32 %v535, %v2032
  %v2034 = vrot.slane %v1983, %v2033
  %v2035 = vlaneseq
  %v2036 = vshrl.u32 %v2035, 7
  %v2037 = vsub.s32 %v535, %v2036
  %v2038 = vrot.slane %v1986, %v2037
  %v2039 = vlaneseq
  %v2040 = vshrl.u32 %v2039, 7
  %v2041 = vsub.s32 %v535, %v2040
  %v2042 = vrot.slane %v1989, %v2041
  %v2043 = vlaneseq
  %v2044 = vshrl.u32 %v2043, 7
  %v2045 = vsub.s32 %v535, %v2044
  %v2046 = vrot.slane %v1992, %v2045
  %v2047 = vlaneseq
  %v2048 = vshrl.u32 %v2047, 7
  %v2049 = vsub.s32 %v535, %v2048
  %v2050 = vrot.slane %v1995, %v2049
  %v2051 = vlaneseq
  %v2052 = vshrl.u32 %v2051, 7
  %v2053 = vsub.s32 %v535, %v2052
  %v2054 = vrot.slane %v1998, %v2053
  %v2055 = vlaneseq
  %v2056 = vshrl.u32 %v2055, 7
  %v2057 = vsub.s32 %v535, %v2056
  %v2058 = vrot.slane %v2001, %v2057
  %v2059 = vlaneseq
  %v2060 = vshrl.u32 %v2059, 7
  %v2061 = vsub.s32 %v535, %v2060
  %v2062 = vrot.slane %v2004, %v2061
  %v2063 = vlaneseq
  %v2064 = vshrl.u32 %v2063, 7
  %v2065 = vsub.s32 %v535, %v2064
  %v2066 = vrot.slane %v2007, %v2065
  %v2067 = vlaneseq
  %v2068 = vshrl.u32 %v2067, 7
  %v2069 = vsub.s32 %v535, %v2068
  %v2070 = vrot.slane %v2010, %v2069
  %v2071 = vlaneseq
  %v2072 = vshrl.u32 %v2071, 7
  %v2073 = vsub.s32 %v535, %v2072
  %v2074 = vrot.slane %v2013, %v2073
  %v2075 = vlaneseq
  %v2076 = vshrl.u32 %v2075, 7
  %v2077 = vsub.s32 %v535, %v2076
  %v2078 = vrot.slane %v2016, %v2077
  %v2079 = vlaneseq
  %v2080 = vshrl.u32 %v2079, 7
  %v2081 = vsub.s32 %v535, %v2080
  %v2082 = vrot.slane %v2019, %v2081
  %v2083 = vlaneseq
  %v2084 = vshrl.u32 %v2083, 7
  %v2085 = vsub.s32 %v535, %v2084
  %v2086 = vrot.slane %v2022, %v2085
  %v2087 = vsel %vm600, %v2030, %v2026
  %v2088 = vsel %vm602, %v2034, %v2087
  %v2089 = vsel %vm604, %v2038, %v2088
  %v2090 = vsel %vm606, %v2042, %v2089
  %v2091 = vsel %vm608, %v2046, %v2090
  %v2092 = vsel %vm610, %v2050, %v2091
  %v2093 = vsel %vm612, %v2054, %v2092
  %v2094 = vsel %vm600, %v2062, %v2058
  %v2095 = vsel %vm602, %v2066, %v2094
  %v2096 = vsel %vm604, %v2070, %v2095
  %v2097 = vsel %vm606, %v2074, %v2096
  %v2098 = vsel %vm608, %v2078, %v2097
  %v2099 = vsel %vm610, %v2082, %v2098
  %v2100 = vsel %vm612, %v2086, %v2099
  %v2103 = vsel %vm123, %v2093, 0.0
  %2104 = vadd.xlane.f32.xlu0 %v2103
  %v2105 = vpop.xlane.xlu0 %2104
  %v2106 = vsel %vm123, %v2100, 0.0
  %2107 = vadd.xlane.f32.xlu0 %v2106
  %v2108 = vpop.xlane.xlu0 %2107
  %v2109 = vlog2.pop %v2105
  %v2110 = vmul.f32 %v2109, 0.6931472
  %v2111 = vlog2.pop %v2108
  %v2112 = vmul.f32 %v2111, 0.6931472
  %v2113 = vadd.f32 %v2110, %v1825
  %v2114 = vadd.f32 %v2112, %v1828
  %v2115 = vld [vmem:[%s3 + $0x8] sm:$0x3]
  %2117 = vset.pattern.permute.xlu0 0
  %2118 = vperm.xlu0 %2117, %v2115
  %v2119 = vpop.permute.xlu0 %2118
  %v2120 = vlaneseq
  %v2121 = vshrl.u32 %v2120, 7
  %v2122 = vsub.s32 0, %v2121
  %v2123 = vrot.slane %v2119, %v2122
  %v2124 = vlaneseq
  %v2125 = vshrl.u32 %v2124, 7
  %v2126 = vsub.s32 1, %v2125
  %v2127 = vrot.slane %v2119, %v2126
  %v2130 = vmul.f32 %v2113, %v2123
  %v2131 = vmul.f32 %v2114, %v2127
  %v2132 = vsub.f32 1.0, %v2115
  %2134 = vset.pattern.permute.xlu0 0
  %2135 = vperm.xlu0 %2134, %v2132
  %v2136 = vpop.permute.xlu0 %2135
  %v2137 = vlaneseq
  %v2138 = vshrl.u32 %v2137, 7
  %v2139 = vsub.s32 0, %v2138
  %v2140 = vrot.slane %v2136, %v2139
  %v2141 = vlaneseq
  %v2142 = vshrl.u32 %v2141, 7
  %v2143 = vsub.s32 1, %v2142
  %v2144 = vrot.slane %v2136, %v2143
  %v2147 = vmul.f32 %v1549, %v2140
  %v2148 = vmul.f32 %v1550, %v2144
  %v2149 = vadd.f32 %v2130, %v2147
  %v2150 = vadd.f32 %v2131, %v2148
  %v2151 = vlaneseq
  %v2152 = vshrl.u32 %v2151, 7
  %v2153 = vsub.s32 2, %v2152
  %v2154 = vrot.slane %v147, %v2153
  %2156 = vbcast.lane.b32.xlu0 %v2154, 256
  %v2157 = vpop.permute.xlu0 %2156
  %v2158 = vlaneseq
  %v2159 = vshrl.u32 %v2158, 7
  %v2160 = vsub.s32 3, %v2159
  %v2161 = vrot.slane %v147, %v2160
  %2163 = vbcast.lane.b32.xlu0 %v2161, 256
  %v2164 = vpop.permute.xlu0 %2163
  %v2167 = vlaneseq
  %v2168 = vshrl.u32 %v2167, 7
  %v2169 = vsub.s32 0, %v2168
  %v2170 = vrot.slane %v2157, %v2169
  %v2171 = vlaneseq
  %v2172 = vshrl.u32 %v2171, 7
  %v2173 = vsub.s32 1, %v2172
  %v2174 = vrot.slane %v2157, %v2173
  %v2175 = vlaneseq
  %v2176 = vshrl.u32 %v2175, 7
  %v2177 = vsub.s32 2, %v2176
  %v2178 = vrot.slane %v2157, %v2177
  %v2179 = vlaneseq
  %v2180 = vshrl.u32 %v2179, 7
  %v2181 = vsub.s32 3, %v2180
  %v2182 = vrot.slane %v2157, %v2181
  %v2183 = vlaneseq
  %v2184 = vshrl.u32 %v2183, 7
  %v2185 = vsub.s32 4, %v2184
  %v2186 = vrot.slane %v2157, %v2185
  %v2187 = vlaneseq
  %v2188 = vshrl.u32 %v2187, 7
  %v2189 = vsub.s32 5, %v2188
  %v2190 = vrot.slane %v2157, %v2189
  %v2191 = vlaneseq
  %v2192 = vshrl.u32 %v2191, 7
  %v2193 = vsub.s32 6, %v2192
  %v2194 = vrot.slane %v2157, %v2193
  %v2195 = vlaneseq
  %v2196 = vshrl.u32 %v2195, 7
  %v2197 = vsub.s32 7, %v2196
  %v2198 = vrot.slane %v2157, %v2197
  %v2199 = vlaneseq
  %v2200 = vshrl.u32 %v2199, 7
  %v2201 = vsub.s32 0, %v2200
  %v2202 = vrot.slane %v2164, %v2201
  %v2203 = vlaneseq
  %v2204 = vshrl.u32 %v2203, 7
  %v2205 = vsub.s32 1, %v2204
  %v2206 = vrot.slane %v2164, %v2205
  %v2207 = vlaneseq
  %v2208 = vshrl.u32 %v2207, 7
  %v2209 = vsub.s32 2, %v2208
  %v2210 = vrot.slane %v2164, %v2209
  %v2211 = vlaneseq
  %v2212 = vshrl.u32 %v2211, 7
  %v2213 = vsub.s32 3, %v2212
  %v2214 = vrot.slane %v2164, %v2213
  %v2215 = vlaneseq
  %v2216 = vshrl.u32 %v2215, 7
  %v2217 = vsub.s32 4, %v2216
  %v2218 = vrot.slane %v2164, %v2217
  %v2219 = vlaneseq
  %v2220 = vshrl.u32 %v2219, 7
  %v2221 = vsub.s32 5, %v2220
  %v2222 = vrot.slane %v2164, %v2221
  %v2223 = vlaneseq
  %v2224 = vshrl.u32 %v2223, 7
  %v2225 = vsub.s32 6, %v2224
  %v2226 = vrot.slane %v2164, %v2225
  %v2227 = vlaneseq
  %v2228 = vshrl.u32 %v2227, 7
  %v2229 = vsub.s32 7, %v2228
  %v2230 = vrot.slane %v2164, %v2229
  %v2247 = vadd.f32 %v2149, %v2170
  %v2248 = vadd.f32 %v2149, %v2174
  %v2249 = vadd.f32 %v2149, %v2178
  %v2250 = vadd.f32 %v2149, %v2182
  %v2251 = vadd.f32 %v2149, %v2186
  %v2252 = vadd.f32 %v2149, %v2190
  %v2253 = vadd.f32 %v2149, %v2194
  %v2254 = vadd.f32 %v2149, %v2198
  %v2255 = vadd.f32 %v2150, %v2202
  %v2256 = vadd.f32 %v2150, %v2206
  %v2257 = vadd.f32 %v2150, %v2210
  %v2258 = vadd.f32 %v2150, %v2214
  %v2259 = vadd.f32 %v2150, %v2218
  %v2260 = vadd.f32 %v2150, %v2222
  %v2261 = vadd.f32 %v2150, %v2226
  %v2262 = vadd.f32 %v2150, %v2230
  %v2263 = vadd.f32 %v2247, %v396
  %v2264 = vadd.f32 %v2248, %v403
  %v2265 = vadd.f32 %v2249, %v410
  %v2266 = vadd.f32 %v2250, %v417
  %v2267 = vadd.f32 %v2251, %v424
  %v2268 = vadd.f32 %v2252, %v431
  %v2269 = vadd.f32 %v2253, %v438
  %v2270 = vadd.f32 %v2254, %v445
  %v2271 = vadd.f32 %v2255, %v396
  %v2272 = vadd.f32 %v2256, %v403
  %v2273 = vadd.f32 %v2257, %v410
  %v2274 = vadd.f32 %v2258, %v417
  %v2275 = vadd.f32 %v2259, %v424
  %v2276 = vadd.f32 %v2260, %v431
  %v2277 = vadd.f32 %v2261, %v438
  %v2278 = vadd.f32 %v2262, %v445
  %2295 = vset.pattern.permute.xlu0 0
  %2296 = vperm.xlu0 %2295, %v2263
  %v2297 = vpop.permute.xlu0 %2296
  %2298 = vset.pattern.permute.xlu0 0
  %2299 = vperm.xlu0 %2298, %v2264
  %v2300 = vpop.permute.xlu0 %2299
  %2301 = vset.pattern.permute.xlu0 0
  %2302 = vperm.xlu0 %2301, %v2265
  %v2303 = vpop.permute.xlu0 %2302
  %2304 = vset.pattern.permute.xlu0 0
  %2305 = vperm.xlu0 %2304, %v2266
  %v2306 = vpop.permute.xlu0 %2305
  %2307 = vset.pattern.permute.xlu0 0
  %2308 = vperm.xlu0 %2307, %v2267
  %v2309 = vpop.permute.xlu0 %2308
  %2310 = vset.pattern.permute.xlu0 0
  %2311 = vperm.xlu0 %2310, %v2268
  %v2312 = vpop.permute.xlu0 %2311
  %2313 = vset.pattern.permute.xlu0 0
  %2314 = vperm.xlu0 %2313, %v2269
  %v2315 = vpop.permute.xlu0 %2314
  %2316 = vset.pattern.permute.xlu0 0
  %2317 = vperm.xlu0 %2316, %v2270
  %v2318 = vpop.permute.xlu0 %2317
  %2319 = vset.pattern.permute.xlu0 0
  %2320 = vperm.xlu0 %2319, %v2271
  %v2321 = vpop.permute.xlu0 %2320
  %2322 = vset.pattern.permute.xlu0 0
  %2323 = vperm.xlu0 %2322, %v2272
  %v2324 = vpop.permute.xlu0 %2323
  %2325 = vset.pattern.permute.xlu0 0
  %2326 = vperm.xlu0 %2325, %v2273
  %v2327 = vpop.permute.xlu0 %2326
  %2328 = vset.pattern.permute.xlu0 0
  %2329 = vperm.xlu0 %2328, %v2274
  %v2330 = vpop.permute.xlu0 %2329
  %2331 = vset.pattern.permute.xlu0 0
  %2332 = vperm.xlu0 %2331, %v2275
  %v2333 = vpop.permute.xlu0 %2332
  %2334 = vset.pattern.permute.xlu0 0
  %2335 = vperm.xlu0 %2334, %v2276
  %v2336 = vpop.permute.xlu0 %2335
  %2337 = vset.pattern.permute.xlu0 0
  %2338 = vperm.xlu0 %2337, %v2277
  %v2339 = vpop.permute.xlu0 %2338
  %2340 = vset.pattern.permute.xlu0 0
  %2341 = vperm.xlu0 %2340, %v2278
  %v2342 = vpop.permute.xlu0 %2341
  %v2343 = vlaneseq
  %v2344 = vshrl.u32 %v2343, 7
  %v2345 = vsub.s32 %v535, %v2344
  %v2346 = vrot.slane %v2297, %v2345
  %v2347 = vlaneseq
  %v2348 = vshrl.u32 %v2347, 7
  %v2349 = vsub.s32 %v535, %v2348
  %v2350 = vrot.slane %v2300, %v2349
  %v2351 = vlaneseq
  %v2352 = vshrl.u32 %v2351, 7
  %v2353 = vsub.s32 %v535, %v2352
  %v2354 = vrot.slane %v2303, %v2353
  %v2355 = vlaneseq
  %v2356 = vshrl.u32 %v2355, 7
  %v2357 = vsub.s32 %v535, %v2356
  %v2358 = vrot.slane %v2306, %v2357
  %v2359 = vlaneseq
  %v2360 = vshrl.u32 %v2359, 7
  %v2361 = vsub.s32 %v535, %v2360
  %v2362 = vrot.slane %v2309, %v2361
  %v2363 = vlaneseq
  %v2364 = vshrl.u32 %v2363, 7
  %v2365 = vsub.s32 %v535, %v2364
  %v2366 = vrot.slane %v2312, %v2365
  %v2367 = vlaneseq
  %v2368 = vshrl.u32 %v2367, 7
  %v2369 = vsub.s32 %v535, %v2368
  %v2370 = vrot.slane %v2315, %v2369
  %v2371 = vlaneseq
  %v2372 = vshrl.u32 %v2371, 7
  %v2373 = vsub.s32 %v535, %v2372
  %v2374 = vrot.slane %v2318, %v2373
  %v2375 = vlaneseq
  %v2376 = vshrl.u32 %v2375, 7
  %v2377 = vsub.s32 %v535, %v2376
  %v2378 = vrot.slane %v2321, %v2377
  %v2379 = vlaneseq
  %v2380 = vshrl.u32 %v2379, 7
  %v2381 = vsub.s32 %v535, %v2380
  %v2382 = vrot.slane %v2324, %v2381
  %v2383 = vlaneseq
  %v2384 = vshrl.u32 %v2383, 7
  %v2385 = vsub.s32 %v535, %v2384
  %v2386 = vrot.slane %v2327, %v2385
  %v2387 = vlaneseq
  %v2388 = vshrl.u32 %v2387, 7
  %v2389 = vsub.s32 %v535, %v2388
  %v2390 = vrot.slane %v2330, %v2389
  %v2391 = vlaneseq
  %v2392 = vshrl.u32 %v2391, 7
  %v2393 = vsub.s32 %v535, %v2392
  %v2394 = vrot.slane %v2333, %v2393
  %v2395 = vlaneseq
  %v2396 = vshrl.u32 %v2395, 7
  %v2397 = vsub.s32 %v535, %v2396
  %v2398 = vrot.slane %v2336, %v2397
  %v2399 = vlaneseq
  %v2400 = vshrl.u32 %v2399, 7
  %v2401 = vsub.s32 %v535, %v2400
  %v2402 = vrot.slane %v2339, %v2401
  %v2403 = vlaneseq
  %v2404 = vshrl.u32 %v2403, 7
  %v2405 = vsub.s32 %v535, %v2404
  %v2406 = vrot.slane %v2342, %v2405
  %v2407 = vsel %vm600, %v2350, %v2346
  %v2408 = vsel %vm602, %v2354, %v2407
  %v2409 = vsel %vm604, %v2358, %v2408
  %v2410 = vsel %vm606, %v2362, %v2409
  %v2411 = vsel %vm608, %v2366, %v2410
  %v2412 = vsel %vm610, %v2370, %v2411
  %v2413 = vsel %vm612, %v2374, %v2412
  %v2414 = vsel %vm600, %v2382, %v2378
  %v2415 = vsel %vm602, %v2386, %v2414
  %v2416 = vsel %vm604, %v2390, %v2415
  %v2417 = vsel %vm606, %v2394, %v2416
  %v2418 = vsel %vm608, %v2398, %v2417
  %v2419 = vsel %vm610, %v2402, %v2418
  %v2420 = vsel %vm612, %v2406, %v2419
  %v2423 = vsel %vm123, %v2413, -inf
  %2424 = vmax.xlane.f32.xlu0 %v2423
  %v2425 = vpop.xlane.xlu0 %2424
  %v2426 = vsel %vm123, %v2420, -inf
  %2427 = vmax.xlane.f32.xlu0 %v2426
  %v2428 = vpop.xlane.xlu0 %2427
  %v2431 = vlaneseq
  %v2432 = vshrl.u32 %v2431, 7
  %v2433 = vsub.s32 0, %v2432
  %v2434 = vrot.slane %v2425, %v2433
  %v2435 = vlaneseq
  %v2436 = vshrl.u32 %v2435, 7
  %v2437 = vsub.s32 1, %v2436
  %v2438 = vrot.slane %v2425, %v2437
  %v2439 = vlaneseq
  %v2440 = vshrl.u32 %v2439, 7
  %v2441 = vsub.s32 2, %v2440
  %v2442 = vrot.slane %v2425, %v2441
  %v2443 = vlaneseq
  %v2444 = vshrl.u32 %v2443, 7
  %v2445 = vsub.s32 3, %v2444
  %v2446 = vrot.slane %v2425, %v2445
  %v2447 = vlaneseq
  %v2448 = vshrl.u32 %v2447, 7
  %v2449 = vsub.s32 4, %v2448
  %v2450 = vrot.slane %v2425, %v2449
  %v2451 = vlaneseq
  %v2452 = vshrl.u32 %v2451, 7
  %v2453 = vsub.s32 5, %v2452
  %v2454 = vrot.slane %v2425, %v2453
  %v2455 = vlaneseq
  %v2456 = vshrl.u32 %v2455, 7
  %v2457 = vsub.s32 6, %v2456
  %v2458 = vrot.slane %v2425, %v2457
  %v2459 = vlaneseq
  %v2460 = vshrl.u32 %v2459, 7
  %v2461 = vsub.s32 7, %v2460
  %v2462 = vrot.slane %v2425, %v2461
  %v2463 = vlaneseq
  %v2464 = vshrl.u32 %v2463, 7
  %v2465 = vsub.s32 0, %v2464
  %v2466 = vrot.slane %v2428, %v2465
  %v2467 = vlaneseq
  %v2468 = vshrl.u32 %v2467, 7
  %v2469 = vsub.s32 1, %v2468
  %v2470 = vrot.slane %v2428, %v2469
  %v2471 = vlaneseq
  %v2472 = vshrl.u32 %v2471, 7
  %v2473 = vsub.s32 2, %v2472
  %v2474 = vrot.slane %v2428, %v2473
  %v2475 = vlaneseq
  %v2476 = vshrl.u32 %v2475, 7
  %v2477 = vsub.s32 3, %v2476
  %v2478 = vrot.slane %v2428, %v2477
  %v2479 = vlaneseq
  %v2480 = vshrl.u32 %v2479, 7
  %v2481 = vsub.s32 4, %v2480
  %v2482 = vrot.slane %v2428, %v2481
  %v2483 = vlaneseq
  %v2484 = vshrl.u32 %v2483, 7
  %v2485 = vsub.s32 5, %v2484
  %v2486 = vrot.slane %v2428, %v2485
  %v2487 = vlaneseq
  %v2488 = vshrl.u32 %v2487, 7
  %v2489 = vsub.s32 6, %v2488
  %v2490 = vrot.slane %v2428, %v2489
  %v2491 = vlaneseq
  %v2492 = vshrl.u32 %v2491, 7
  %v2493 = vsub.s32 7, %v2492
  %v2494 = vrot.slane %v2428, %v2493
  %v2511 = vsub.f32 %v2263, %v2434
  %v2512 = vsub.f32 %v2264, %v2438
  %v2513 = vsub.f32 %v2265, %v2442
  %v2514 = vsub.f32 %v2266, %v2446
  %v2515 = vsub.f32 %v2267, %v2450
  %v2516 = vsub.f32 %v2268, %v2454
  %v2517 = vsub.f32 %v2269, %v2458
  %v2518 = vsub.f32 %v2270, %v2462
  %v2519 = vsub.f32 %v2271, %v2466
  %v2520 = vsub.f32 %v2272, %v2470
  %v2521 = vsub.f32 %v2273, %v2474
  %v2522 = vsub.f32 %v2274, %v2478
  %v2523 = vsub.f32 %v2275, %v2482
  %v2524 = vsub.f32 %v2276, %v2486
  %v2525 = vsub.f32 %v2277, %v2490
  %v2526 = vsub.f32 %v2278, %v2494
  %v2527 = vmul.f32 %v2511, 1.442695
  %v2528 = vpow.pop %v2527
  %v2529 = vmul.f32 %v2512, 1.442695
  %v2530 = vpow.pop %v2529
  %v2531 = vmul.f32 %v2513, 1.442695
  %v2532 = vpow.pop %v2531
  %v2533 = vmul.f32 %v2514, 1.442695
  %v2534 = vpow.pop %v2533
  %v2535 = vmul.f32 %v2515, 1.442695
  %v2536 = vpow.pop %v2535
  %v2537 = vmul.f32 %v2516, 1.442695
  %v2538 = vpow.pop %v2537
  %v2539 = vmul.f32 %v2517, 1.442695
  %v2540 = vpow.pop %v2539
  %v2541 = vmul.f32 %v2518, 1.442695
  %v2542 = vpow.pop %v2541
  %v2543 = vmul.f32 %v2519, 1.442695
  %v2544 = vpow.pop %v2543
  %v2545 = vmul.f32 %v2520, 1.442695
  %v2546 = vpow.pop %v2545
  %v2547 = vmul.f32 %v2521, 1.442695
  %v2548 = vpow.pop %v2547
  %v2549 = vmul.f32 %v2522, 1.442695
  %v2550 = vpow.pop %v2549
  %v2551 = vmul.f32 %v2523, 1.442695
  %v2552 = vpow.pop %v2551
  %v2553 = vmul.f32 %v2524, 1.442695
  %v2554 = vpow.pop %v2553
  %v2555 = vmul.f32 %v2525, 1.442695
  %v2556 = vpow.pop %v2555
  %v2557 = vmul.f32 %v2526, 1.442695
  %v2558 = vpow.pop %v2557
  %2575 = vset.pattern.permute.xlu0 0
  %2576 = vperm.xlu0 %2575, %v2528
  %v2577 = vpop.permute.xlu0 %2576
  %2578 = vset.pattern.permute.xlu0 0
  %2579 = vperm.xlu0 %2578, %v2530
  %v2580 = vpop.permute.xlu0 %2579
  %2581 = vset.pattern.permute.xlu0 0
  %2582 = vperm.xlu0 %2581, %v2532
  %v2583 = vpop.permute.xlu0 %2582
  %2584 = vset.pattern.permute.xlu0 0
  %2585 = vperm.xlu0 %2584, %v2534
  %v2586 = vpop.permute.xlu0 %2585
  %2587 = vset.pattern.permute.xlu0 0
  %2588 = vperm.xlu0 %2587, %v2536
  %v2589 = vpop.permute.xlu0 %2588
  %2590 = vset.pattern.permute.xlu0 0
  %2591 = vperm.xlu0 %2590, %v2538
  %v2592 = vpop.permute.xlu0 %2591
  %2593 = vset.pattern.permute.xlu0 0
  %2594 = vperm.xlu0 %2593, %v2540
  %v2595 = vpop.permute.xlu0 %2594
  %2596 = vset.pattern.permute.xlu0 0
  %2597 = vperm.xlu0 %2596, %v2542
  %v2598 = vpop.permute.xlu0 %2597
  %2599 = vset.pattern.permute.xlu0 0
  %2600 = vperm.xlu0 %2599, %v2544
  %v2601 = vpop.permute.xlu0 %2600
  %2602 = vset.pattern.permute.xlu0 0
  %2603 = vperm.xlu0 %2602, %v2546
  %v2604 = vpop.permute.xlu0 %2603
  %2605 = vset.pattern.permute.xlu0 0
  %2606 = vperm.xlu0 %2605, %v2548
  %v2607 = vpop.permute.xlu0 %2606
  %2608 = vset.pattern.permute.xlu0 0
  %2609 = vperm.xlu0 %2608, %v2550
  %v2610 = vpop.permute.xlu0 %2609
  %2611 = vset.pattern.permute.xlu0 0
  %2612 = vperm.xlu0 %2611, %v2552
  %v2613 = vpop.permute.xlu0 %2612
  %2614 = vset.pattern.permute.xlu0 0
  %2615 = vperm.xlu0 %2614, %v2554
  %v2616 = vpop.permute.xlu0 %2615
  %2617 = vset.pattern.permute.xlu0 0
  %2618 = vperm.xlu0 %2617, %v2556
  %v2619 = vpop.permute.xlu0 %2618
  %2620 = vset.pattern.permute.xlu0 0
  %2621 = vperm.xlu0 %2620, %v2558
  %v2622 = vpop.permute.xlu0 %2621
  %v2623 = vlaneseq
  %v2624 = vshrl.u32 %v2623, 7
  %v2625 = vsub.s32 %v535, %v2624
  %v2626 = vrot.slane %v2577, %v2625
  %v2627 = vlaneseq
  %v2628 = vshrl.u32 %v2627, 7
  %v2629 = vsub.s32 %v535, %v2628
  %v2630 = vrot.slane %v2580, %v2629
  %v2631 = vlaneseq
  %v2632 = vshrl.u32 %v2631, 7
  %v2633 = vsub.s32 %v535, %v2632
  %v2634 = vrot.slane %v2583, %v2633
  %v2635 = vlaneseq
  %v2636 = vshrl.u32 %v2635, 7
  %v2637 = vsub.s32 %v535, %v2636
  %v2638 = vrot.slane %v2586, %v2637
  %v2639 = vlaneseq
  %v2640 = vshrl.u32 %v2639, 7
  %v2641 = vsub.s32 %v535, %v2640
  %v2642 = vrot.slane %v2589, %v2641
  %v2643 = vlaneseq
  %v2644 = vshrl.u32 %v2643, 7
  %v2645 = vsub.s32 %v535, %v2644
  %v2646 = vrot.slane %v2592, %v2645
  %v2647 = vlaneseq
  %v2648 = vshrl.u32 %v2647, 7
  %v2649 = vsub.s32 %v535, %v2648
  %v2650 = vrot.slane %v2595, %v2649
  %v2651 = vlaneseq
  %v2652 = vshrl.u32 %v2651, 7
  %v2653 = vsub.s32 %v535, %v2652
  %v2654 = vrot.slane %v2598, %v2653
  %v2655 = vlaneseq
  %v2656 = vshrl.u32 %v2655, 7
  %v2657 = vsub.s32 %v535, %v2656
  %v2658 = vrot.slane %v2601, %v2657
  %v2659 = vlaneseq
  %v2660 = vshrl.u32 %v2659, 7
  %v2661 = vsub.s32 %v535, %v2660
  %v2662 = vrot.slane %v2604, %v2661
  %v2663 = vlaneseq
  %v2664 = vshrl.u32 %v2663, 7
  %v2665 = vsub.s32 %v535, %v2664
  %v2666 = vrot.slane %v2607, %v2665
  %v2667 = vlaneseq
  %v2668 = vshrl.u32 %v2667, 7
  %v2669 = vsub.s32 %v535, %v2668
  %v2670 = vrot.slane %v2610, %v2669
  %v2671 = vlaneseq
  %v2672 = vshrl.u32 %v2671, 7
  %v2673 = vsub.s32 %v535, %v2672
  %v2674 = vrot.slane %v2613, %v2673
  %v2675 = vlaneseq
  %v2676 = vshrl.u32 %v2675, 7
  %v2677 = vsub.s32 %v535, %v2676
  %v2678 = vrot.slane %v2616, %v2677
  %v2679 = vlaneseq
  %v2680 = vshrl.u32 %v2679, 7
  %v2681 = vsub.s32 %v535, %v2680
  %v2682 = vrot.slane %v2619, %v2681
  %v2683 = vlaneseq
  %v2684 = vshrl.u32 %v2683, 7
  %v2685 = vsub.s32 %v535, %v2684
  %v2686 = vrot.slane %v2622, %v2685
  %v2687 = vsel %vm600, %v2630, %v2626
  %v2688 = vsel %vm602, %v2634, %v2687
  %v2689 = vsel %vm604, %v2638, %v2688
  %v2690 = vsel %vm606, %v2642, %v2689
  %v2691 = vsel %vm608, %v2646, %v2690
  %v2692 = vsel %vm610, %v2650, %v2691
  %v2693 = vsel %vm612, %v2654, %v2692
  %v2694 = vsel %vm600, %v2662, %v2658
  %v2695 = vsel %vm602, %v2666, %v2694
  %v2696 = vsel %vm604, %v2670, %v2695
  %v2697 = vsel %vm606, %v2674, %v2696
  %v2698 = vsel %vm608, %v2678, %v2697
  %v2699 = vsel %vm610, %v2682, %v2698
  %v2700 = vsel %vm612, %v2686, %v2699
  %v2703 = vsel %vm123, %v2693, 0.0
  %2704 = vadd.xlane.f32.xlu0 %v2703
  %v2705 = vpop.xlane.xlu0 %2704
  %v2706 = vsel %vm123, %v2700, 0.0
  %2707 = vadd.xlane.f32.xlu0 %v2706
  %v2708 = vpop.xlane.xlu0 %2707
  %v2709 = vlog2.pop %v2705
  %v2710 = vmul.f32 %v2709, 0.6931472
  %v2711 = vlog2.pop %v2708
  %v2712 = vmul.f32 %v2711, 0.6931472
  %v2713 = vadd.f32 %v2710, %v2425
  %v2714 = vadd.f32 %v2712, %v2428
  %v2715 = vld [vmem:[%s3 + $0xa] sm:$0x3]
  %2717 = vset.pattern.permute.xlu0 0
  %2718 = vperm.xlu0 %2717, %v2715
  %v2719 = vpop.permute.xlu0 %2718
  %v2720 = vlaneseq
  %v2721 = vshrl.u32 %v2720, 7
  %v2722 = vsub.s32 0, %v2721
  %v2723 = vrot.slane %v2719, %v2722
  %v2724 = vlaneseq
  %v2725 = vshrl.u32 %v2724, 7
  %v2726 = vsub.s32 1, %v2725
  %v2727 = vrot.slane %v2719, %v2726
  %v2730 = vmul.f32 %v2713, %v2723
  %v2731 = vmul.f32 %v2714, %v2727
  %v2732 = vsub.f32 1.0, %v2715
  %2734 = vset.pattern.permute.xlu0 0
  %2735 = vperm.xlu0 %2734, %v2732
  %v2736 = vpop.permute.xlu0 %2735
  %v2737 = vlaneseq
  %v2738 = vshrl.u32 %v2737, 7
  %v2739 = vsub.s32 0, %v2738
  %v2740 = vrot.slane %v2736, %v2739
  %v2741 = vlaneseq
  %v2742 = vshrl.u32 %v2741, 7
  %v2743 = vsub.s32 1, %v2742
  %v2744 = vrot.slane %v2736, %v2743
  %v2747 = vmul.f32 %v2149, %v2740
  %v2748 = vmul.f32 %v2150, %v2744
  %v2749 = vadd.f32 %v2730, %v2747
  %v2750 = vadd.f32 %v2731, %v2748
  %v2751 = vlaneseq
  %v2752 = vshrl.u32 %v2751, 7
  %v2753 = vsub.s32 4, %v2752
  %v2754 = vrot.slane %v147, %v2753
  %2756 = vbcast.lane.b32.xlu0 %v2754, 256
  %v2757 = vpop.permute.xlu0 %2756
  %v2758 = vlaneseq
  %v2759 = vshrl.u32 %v2758, 7
  %v2760 = vsub.s32 5, %v2759
  %v2761 = vrot.slane %v147, %v2760
  %2763 = vbcast.lane.b32.xlu0 %v2761, 256
  %v2764 = vpop.permute.xlu0 %2763
  %v2767 = vlaneseq
  %v2768 = vshrl.u32 %v2767, 7
  %v2769 = vsub.s32 0, %v2768
  %v2770 = vrot.slane %v2757, %v2769
  %v2771 = vlaneseq
  %v2772 = vshrl.u32 %v2771, 7
  %v2773 = vsub.s32 1, %v2772
  %v2774 = vrot.slane %v2757, %v2773
  %v2775 = vlaneseq
  %v2776 = vshrl.u32 %v2775, 7
  %v2777 = vsub.s32 2, %v2776
  %v2778 = vrot.slane %v2757, %v2777
  %v2779 = vlaneseq
  %v2780 = vshrl.u32 %v2779, 7
  %v2781 = vsub.s32 3, %v2780
  %v2782 = vrot.slane %v2757, %v2781
  %v2783 = vlaneseq
  %v2784 = vshrl.u32 %v2783, 7
  %v2785 = vsub.s32 4, %v2784
  %v2786 = vrot.slane %v2757, %v2785
  %v2787 = vlaneseq
  %v2788 = vshrl.u32 %v2787, 7
  %v2789 = vsub.s32 5, %v2788
  %v2790 = vrot.slane %v2757, %v2789
  %v2791 = vlaneseq
  %v2792 = vshrl.u32 %v2791, 7
  %v2793 = vsub.s32 6, %v2792
  %v2794 = vrot.slane %v2757, %v2793
  %v2795 = vlaneseq
  %v2796 = vshrl.u32 %v2795, 7
  %v2797 = vsub.s32 7, %v2796
  %v2798 = vrot.slane %v2757, %v2797
  %v2799 = vlaneseq
  %v2800 = vshrl.u32 %v2799, 7
  %v2801 = vsub.s32 0, %v2800
  %v2802 = vrot.slane %v2764, %v2801
  %v2803 = vlaneseq
  %v2804 = vshrl.u32 %v2803, 7
  %v2805 = vsub.s32 1, %v2804
  %v2806 = vrot.slane %v2764, %v2805
  %v2807 = vlaneseq
  %v2808 = vshrl.u32 %v2807, 7
  %v2809 = vsub.s32 2, %v2808
  %v2810 = vrot.slane %v2764, %v2809
  %v2811 = vlaneseq
  %v2812 = vshrl.u32 %v2811, 7
  %v2813 = vsub.s32 3, %v2812
  %v2814 = vrot.slane %v2764, %v2813
  %v2815 = vlaneseq
  %v2816 = vshrl.u32 %v2815, 7
  %v2817 = vsub.s32 4, %v2816
  %v2818 = vrot.slane %v2764, %v2817
  %v2819 = vlaneseq
  %v2820 = vshrl.u32 %v2819, 7
  %v2821 = vsub.s32 5, %v2820
  %v2822 = vrot.slane %v2764, %v2821
  %v2823 = vlaneseq
  %v2824 = vshrl.u32 %v2823, 7
  %v2825 = vsub.s32 6, %v2824
  %v2826 = vrot.slane %v2764, %v2825
  %v2827 = vlaneseq
  %v2828 = vshrl.u32 %v2827, 7
  %v2829 = vsub.s32 7, %v2828
  %v2830 = vrot.slane %v2764, %v2829
  %v2847 = vadd.f32 %v2749, %v2770
  %v2848 = vadd.f32 %v2749, %v2774
  %v2849 = vadd.f32 %v2749, %v2778
  %v2850 = vadd.f32 %v2749, %v2782
  %v2851 = vadd.f32 %v2749, %v2786
  %v2852 = vadd.f32 %v2749, %v2790
  %v2853 = vadd.f32 %v2749, %v2794
  %v2854 = vadd.f32 %v2749, %v2798
  %v2855 = vadd.f32 %v2750, %v2802
  %v2856 = vadd.f32 %v2750, %v2806
  %v2857 = vadd.f32 %v2750, %v2810
  %v2858 = vadd.f32 %v2750, %v2814
  %v2859 = vadd.f32 %v2750, %v2818
  %v2860 = vadd.f32 %v2750, %v2822
  %v2861 = vadd.f32 %v2750, %v2826
  %v2862 = vadd.f32 %v2750, %v2830
  %v2863 = vadd.f32 %v2847, %v396
  %v2864 = vadd.f32 %v2848, %v403
  %v2865 = vadd.f32 %v2849, %v410
  %v2866 = vadd.f32 %v2850, %v417
  %v2867 = vadd.f32 %v2851, %v424
  %v2868 = vadd.f32 %v2852, %v431
  %v2869 = vadd.f32 %v2853, %v438
  %v2870 = vadd.f32 %v2854, %v445
  %v2871 = vadd.f32 %v2855, %v396
  %v2872 = vadd.f32 %v2856, %v403
  %v2873 = vadd.f32 %v2857, %v410
  %v2874 = vadd.f32 %v2858, %v417
  %v2875 = vadd.f32 %v2859, %v424
  %v2876 = vadd.f32 %v2860, %v431
  %v2877 = vadd.f32 %v2861, %v438
  %v2878 = vadd.f32 %v2862, %v445
  %2895 = vset.pattern.permute.xlu0 0
  %2896 = vperm.xlu0 %2895, %v2863
  %v2897 = vpop.permute.xlu0 %2896
  %2898 = vset.pattern.permute.xlu0 0
  %2899 = vperm.xlu0 %2898, %v2864
  %v2900 = vpop.permute.xlu0 %2899
  %2901 = vset.pattern.permute.xlu0 0
  %2902 = vperm.xlu0 %2901, %v2865
  %v2903 = vpop.permute.xlu0 %2902
  %2904 = vset.pattern.permute.xlu0 0
  %2905 = vperm.xlu0 %2904, %v2866
  %v2906 = vpop.permute.xlu0 %2905
  %2907 = vset.pattern.permute.xlu0 0
  %2908 = vperm.xlu0 %2907, %v2867
  %v2909 = vpop.permute.xlu0 %2908
  %2910 = vset.pattern.permute.xlu0 0
  %2911 = vperm.xlu0 %2910, %v2868
  %v2912 = vpop.permute.xlu0 %2911
  %2913 = vset.pattern.permute.xlu0 0
  %2914 = vperm.xlu0 %2913, %v2869
  %v2915 = vpop.permute.xlu0 %2914
  %2916 = vset.pattern.permute.xlu0 0
  %2917 = vperm.xlu0 %2916, %v2870
  %v2918 = vpop.permute.xlu0 %2917
  %2919 = vset.pattern.permute.xlu0 0
  %2920 = vperm.xlu0 %2919, %v2871
  %v2921 = vpop.permute.xlu0 %2920
  %2922 = vset.pattern.permute.xlu0 0
  %2923 = vperm.xlu0 %2922, %v2872
  %v2924 = vpop.permute.xlu0 %2923
  %2925 = vset.pattern.permute.xlu0 0
  %2926 = vperm.xlu0 %2925, %v2873
  %v2927 = vpop.permute.xlu0 %2926
  %2928 = vset.pattern.permute.xlu0 0
  %2929 = vperm.xlu0 %2928, %v2874
  %v2930 = vpop.permute.xlu0 %2929
  %2931 = vset.pattern.permute.xlu0 0
  %2932 = vperm.xlu0 %2931, %v2875
  %v2933 = vpop.permute.xlu0 %2932
  %2934 = vset.pattern.permute.xlu0 0
  %2935 = vperm.xlu0 %2934, %v2876
  %v2936 = vpop.permute.xlu0 %2935
  %2937 = vset.pattern.permute.xlu0 0
  %2938 = vperm.xlu0 %2937, %v2877
  %v2939 = vpop.permute.xlu0 %2938
  %2940 = vset.pattern.permute.xlu0 0
  %2941 = vperm.xlu0 %2940, %v2878
  %v2942 = vpop.permute.xlu0 %2941
  %v2943 = vlaneseq
  %v2944 = vshrl.u32 %v2943, 7
  %v2945 = vsub.s32 %v535, %v2944
  %v2946 = vrot.slane %v2897, %v2945
  %v2947 = vlaneseq
  %v2948 = vshrl.u32 %v2947, 7
  %v2949 = vsub.s32 %v535, %v2948
  %v2950 = vrot.slane %v2900, %v2949
  %v2951 = vlaneseq
  %v2952 = vshrl.u32 %v2951, 7
  %v2953 = vsub.s32 %v535, %v2952
  %v2954 = vrot.slane %v2903, %v2953
  %v2955 = vlaneseq
  %v2956 = vshrl.u32 %v2955, 7
  %v2957 = vsub.s32 %v535, %v2956
  %v2958 = vrot.slane %v2906, %v2957
  %v2959 = vlaneseq
  %v2960 = vshrl.u32 %v2959, 7
  %v2961 = vsub.s32 %v535, %v2960
  %v2962 = vrot.slane %v2909, %v2961
  %v2963 = vlaneseq
  %v2964 = vshrl.u32 %v2963, 7
  %v2965 = vsub.s32 %v535, %v2964
  %v2966 = vrot.slane %v2912, %v2965
  %v2967 = vlaneseq
  %v2968 = vshrl.u32 %v2967, 7
  %v2969 = vsub.s32 %v535, %v2968
  %v2970 = vrot.slane %v2915, %v2969
  %v2971 = vlaneseq
  %v2972 = vshrl.u32 %v2971, 7
  %v2973 = vsub.s32 %v535, %v2972
  %v2974 = vrot.slane %v2918, %v2973
  %v2975 = vlaneseq
  %v2976 = vshrl.u32 %v2975, 7
  %v2977 = vsub.s32 %v535, %v2976
  %v2978 = vrot.slane %v2921, %v2977
  %v2979 = vlaneseq
  %v2980 = vshrl.u32 %v2979, 7
  %v2981 = vsub.s32 %v535, %v2980
  %v2982 = vrot.slane %v2924, %v2981
  %v2983 = vlaneseq
  %v2984 = vshrl.u32 %v2983, 7
  %v2985 = vsub.s32 %v535, %v2984
  %v2986 = vrot.slane %v2927, %v2985
  %v2987 = vlaneseq
  %v2988 = vshrl.u32 %v2987, 7
  %v2989 = vsub.s32 %v535, %v2988
  %v2990 = vrot.slane %v2930, %v2989
  %v2991 = vlaneseq
  %v2992 = vshrl.u32 %v2991, 7
  %v2993 = vsub.s32 %v535, %v2992
  %v2994 = vrot.slane %v2933, %v2993
  %v2995 = vlaneseq
  %v2996 = vshrl.u32 %v2995, 7
  %v2997 = vsub.s32 %v535, %v2996
  %v2998 = vrot.slane %v2936, %v2997
  %v2999 = vlaneseq
  %v3000 = vshrl.u32 %v2999, 7
  %v3001 = vsub.s32 %v535, %v3000
  %v3002 = vrot.slane %v2939, %v3001
  %v3003 = vlaneseq
  %v3004 = vshrl.u32 %v3003, 7
  %v3005 = vsub.s32 %v535, %v3004
  %v3006 = vrot.slane %v2942, %v3005
  %v3007 = vsel %vm600, %v2950, %v2946
  %v3008 = vsel %vm602, %v2954, %v3007
  %v3009 = vsel %vm604, %v2958, %v3008
  %v3010 = vsel %vm606, %v2962, %v3009
  %v3011 = vsel %vm608, %v2966, %v3010
  %v3012 = vsel %vm610, %v2970, %v3011
  %v3013 = vsel %vm612, %v2974, %v3012
  %v3014 = vsel %vm600, %v2982, %v2978
  %v3015 = vsel %vm602, %v2986, %v3014
  %v3016 = vsel %vm604, %v2990, %v3015
  %v3017 = vsel %vm606, %v2994, %v3016
  %v3018 = vsel %vm608, %v2998, %v3017
  %v3019 = vsel %vm610, %v3002, %v3018
  %v3020 = vsel %vm612, %v3006, %v3019
  %v3023 = vsel %vm123, %v3013, -inf
  %3024 = vmax.xlane.f32.xlu0 %v3023
  %v3025 = vpop.xlane.xlu0 %3024
  %v3026 = vsel %vm123, %v3020, -inf
  %3027 = vmax.xlane.f32.xlu0 %v3026
  %v3028 = vpop.xlane.xlu0 %3027
  %v3031 = vlaneseq
  %v3032 = vshrl.u32 %v3031, 7
  %v3033 = vsub.s32 0, %v3032
  %v3034 = vrot.slane %v3025, %v3033
  %v3035 = vlaneseq
  %v3036 = vshrl.u32 %v3035, 7
  %v3037 = vsub.s32 1, %v3036
  %v3038 = vrot.slane %v3025, %v3037
  %v3039 = vlaneseq
  %v3040 = vshrl.u32 %v3039, 7
  %v3041 = vsub.s32 2, %v3040
  %v3042 = vrot.slane %v3025, %v3041
  %v3043 = vlaneseq
  %v3044 = vshrl.u32 %v3043, 7
  %v3045 = vsub.s32 3, %v3044
  %v3046 = vrot.slane %v3025, %v3045
  %v3047 = vlaneseq
  %v3048 = vshrl.u32 %v3047, 7
  %v3049 = vsub.s32 4, %v3048
  %v3050 = vrot.slane %v3025, %v3049
  %v3051 = vlaneseq
  %v3052 = vshrl.u32 %v3051, 7
  %v3053 = vsub.s32 5, %v3052
  %v3054 = vrot.slane %v3025, %v3053
  %v3055 = vlaneseq
  %v3056 = vshrl.u32 %v3055, 7
  %v3057 = vsub.s32 6, %v3056
  %v3058 = vrot.slane %v3025, %v3057
  %v3059 = vlaneseq
  %v3060 = vshrl.u32 %v3059, 7
  %v3061 = vsub.s32 7, %v3060
  %v3062 = vrot.slane %v3025, %v3061
  %v3063 = vlaneseq
  %v3064 = vshrl.u32 %v3063, 7
  %v3065 = vsub.s32 0, %v3064
  %v3066 = vrot.slane %v3028, %v3065
  %v3067 = vlaneseq
  %v3068 = vshrl.u32 %v3067, 7
  %v3069 = vsub.s32 1, %v3068
  %v3070 = vrot.slane %v3028, %v3069
  %v3071 = vlaneseq
  %v3072 = vshrl.u32 %v3071, 7
  %v3073 = vsub.s32 2, %v3072
  %v3074 = vrot.slane %v3028, %v3073
  %v3075 = vlaneseq
  %v3076 = vshrl.u32 %v3075, 7
  %v3077 = vsub.s32 3, %v3076
  %v3078 = vrot.slane %v3028, %v3077
  %v3079 = vlaneseq
  %v3080 = vshrl.u32 %v3079, 7
  %v3081 = vsub.s32 4, %v3080
  %v3082 = vrot.slane %v3028, %v3081
  %v3083 = vlaneseq
  %v3084 = vshrl.u32 %v3083, 7
  %v3085 = vsub.s32 5, %v3084
  %v3086 = vrot.slane %v3028, %v3085
  %v3087 = vlaneseq
  %v3088 = vshrl.u32 %v3087, 7
  %v3089 = vsub.s32 6, %v3088
  %v3090 = vrot.slane %v3028, %v3089
  %v3091 = vlaneseq
  %v3092 = vshrl.u32 %v3091, 7
  %v3093 = vsub.s32 7, %v3092
  %v3094 = vrot.slane %v3028, %v3093
  %v3111 = vsub.f32 %v2863, %v3034
  %v3112 = vsub.f32 %v2864, %v3038
  %v3113 = vsub.f32 %v2865, %v3042
  %v3114 = vsub.f32 %v2866, %v3046
  %v3115 = vsub.f32 %v2867, %v3050
  %v3116 = vsub.f32 %v2868, %v3054
  %v3117 = vsub.f32 %v2869, %v3058
  %v3118 = vsub.f32 %v2870, %v3062
  %v3119 = vsub.f32 %v2871, %v3066
  %v3120 = vsub.f32 %v2872, %v3070
  %v3121 = vsub.f32 %v2873, %v3074
  %v3122 = vsub.f32 %v2874, %v3078
  %v3123 = vsub.f32 %v2875, %v3082
  %v3124 = vsub.f32 %v2876, %v3086
  %v3125 = vsub.f32 %v2877, %v3090
  %v3126 = vsub.f32 %v2878, %v3094
  %v3127 = vmul.f32 %v3111, 1.442695
  %v3128 = vpow.pop %v3127
  %v3129 = vmul.f32 %v3112, 1.442695
  %v3130 = vpow.pop %v3129
  %v3131 = vmul.f32 %v3113, 1.442695
  %v3132 = vpow.pop %v3131
  %v3133 = vmul.f32 %v3114, 1.442695
  %v3134 = vpow.pop %v3133
  %v3135 = vmul.f32 %v3115, 1.442695
  %v3136 = vpow.pop %v3135
  %v3137 = vmul.f32 %v3116, 1.442695
  %v3138 = vpow.pop %v3137
  %v3139 = vmul.f32 %v3117, 1.442695
  %v3140 = vpow.pop %v3139
  %v3141 = vmul.f32 %v3118, 1.442695
  %v3142 = vpow.pop %v3141
  %v3143 = vmul.f32 %v3119, 1.442695
  %v3144 = vpow.pop %v3143
  %v3145 = vmul.f32 %v3120, 1.442695
  %v3146 = vpow.pop %v3145
  %v3147 = vmul.f32 %v3121, 1.442695
  %v3148 = vpow.pop %v3147
  %v3149 = vmul.f32 %v3122, 1.442695
  %v3150 = vpow.pop %v3149
  %v3151 = vmul.f32 %v3123, 1.442695
  %v3152 = vpow.pop %v3151
  %v3153 = vmul.f32 %v3124, 1.442695
  %v3154 = vpow.pop %v3153
  %v3155 = vmul.f32 %v3125, 1.442695
  %v3156 = vpow.pop %v3155
  %v3157 = vmul.f32 %v3126, 1.442695
  %v3158 = vpow.pop %v3157
  %3175 = vset.pattern.permute.xlu0 0
  %3176 = vperm.xlu0 %3175, %v3128
  %v3177 = vpop.permute.xlu0 %3176
  %3178 = vset.pattern.permute.xlu0 0
  %3179 = vperm.xlu0 %3178, %v3130
  %v3180 = vpop.permute.xlu0 %3179
  %3181 = vset.pattern.permute.xlu0 0
  %3182 = vperm.xlu0 %3181, %v3132
  %v3183 = vpop.permute.xlu0 %3182
  %3184 = vset.pattern.permute.xlu0 0
  %3185 = vperm.xlu0 %3184, %v3134
  %v3186 = vpop.permute.xlu0 %3185
  %3187 = vset.pattern.permute.xlu0 0
  %3188 = vperm.xlu0 %3187, %v3136
  %v3189 = vpop.permute.xlu0 %3188
  %3190 = vset.pattern.permute.xlu0 0
  %3191 = vperm.xlu0 %3190, %v3138
  %v3192 = vpop.permute.xlu0 %3191
  %3193 = vset.pattern.permute.xlu0 0
  %3194 = vperm.xlu0 %3193, %v3140
  %v3195 = vpop.permute.xlu0 %3194
  %3196 = vset.pattern.permute.xlu0 0
  %3197 = vperm.xlu0 %3196, %v3142
  %v3198 = vpop.permute.xlu0 %3197
  %3199 = vset.pattern.permute.xlu0 0
  %3200 = vperm.xlu0 %3199, %v3144
  %v3201 = vpop.permute.xlu0 %3200
  %3202 = vset.pattern.permute.xlu0 0
  %3203 = vperm.xlu0 %3202, %v3146
  %v3204 = vpop.permute.xlu0 %3203
  %3205 = vset.pattern.permute.xlu0 0
  %3206 = vperm.xlu0 %3205, %v3148
  %v3207 = vpop.permute.xlu0 %3206
  %3208 = vset.pattern.permute.xlu0 0
  %3209 = vperm.xlu0 %3208, %v3150
  %v3210 = vpop.permute.xlu0 %3209
  %3211 = vset.pattern.permute.xlu0 0
  %3212 = vperm.xlu0 %3211, %v3152
  %v3213 = vpop.permute.xlu0 %3212
  %3214 = vset.pattern.permute.xlu0 0
  %3215 = vperm.xlu0 %3214, %v3154
  %v3216 = vpop.permute.xlu0 %3215
  %3217 = vset.pattern.permute.xlu0 0
  %3218 = vperm.xlu0 %3217, %v3156
  %v3219 = vpop.permute.xlu0 %3218
  %3220 = vset.pattern.permute.xlu0 0
  %3221 = vperm.xlu0 %3220, %v3158
  %v3222 = vpop.permute.xlu0 %3221
  %v3223 = vlaneseq
  %v3224 = vshrl.u32 %v3223, 7
  %v3225 = vsub.s32 %v535, %v3224
  %v3226 = vrot.slane %v3177, %v3225
  %v3227 = vlaneseq
  %v3228 = vshrl.u32 %v3227, 7
  %v3229 = vsub.s32 %v535, %v3228
  %v3230 = vrot.slane %v3180, %v3229
  %v3231 = vlaneseq
  %v3232 = vshrl.u32 %v3231, 7
  %v3233 = vsub.s32 %v535, %v3232
  %v3234 = vrot.slane %v3183, %v3233
  %v3235 = vlaneseq
  %v3236 = vshrl.u32 %v3235, 7
  %v3237 = vsub.s32 %v535, %v3236
  %v3238 = vrot.slane %v3186, %v3237
  %v3239 = vlaneseq
  %v3240 = vshrl.u32 %v3239, 7
  %v3241 = vsub.s32 %v535, %v3240
  %v3242 = vrot.slane %v3189, %v3241
  %v3243 = vlaneseq
  %v3244 = vshrl.u32 %v3243, 7
  %v3245 = vsub.s32 %v535, %v3244
  %v3246 = vrot.slane %v3192, %v3245
  %v3247 = vlaneseq
  %v3248 = vshrl.u32 %v3247, 7
  %v3249 = vsub.s32 %v535, %v3248
  %v3250 = vrot.slane %v3195, %v3249
  %v3251 = vlaneseq
  %v3252 = vshrl.u32 %v3251, 7
  %v3253 = vsub.s32 %v535, %v3252
  %v3254 = vrot.slane %v3198, %v3253
  %v3255 = vlaneseq
  %v3256 = vshrl.u32 %v3255, 7
  %v3257 = vsub.s32 %v535, %v3256
  %v3258 = vrot.slane %v3201, %v3257
  %v3259 = vlaneseq
  %v3260 = vshrl.u32 %v3259, 7
  %v3261 = vsub.s32 %v535, %v3260
  %v3262 = vrot.slane %v3204, %v3261
  %v3263 = vlaneseq
  %v3264 = vshrl.u32 %v3263, 7
  %v3265 = vsub.s32 %v535, %v3264
  %v3266 = vrot.slane %v3207, %v3265
  %v3267 = vlaneseq
  %v3268 = vshrl.u32 %v3267, 7
  %v3269 = vsub.s32 %v535, %v3268
  %v3270 = vrot.slane %v3210, %v3269
  %v3271 = vlaneseq
  %v3272 = vshrl.u32 %v3271, 7
  %v3273 = vsub.s32 %v535, %v3272
  %v3274 = vrot.slane %v3213, %v3273
  %v3275 = vlaneseq
  %v3276 = vshrl.u32 %v3275, 7
  %v3277 = vsub.s32 %v535, %v3276
  %v3278 = vrot.slane %v3216, %v3277
  %v3279 = vlaneseq
  %v3280 = vshrl.u32 %v3279, 7
  %v3281 = vsub.s32 %v535, %v3280
  %v3282 = vrot.slane %v3219, %v3281
  %v3283 = vlaneseq
  %v3284 = vshrl.u32 %v3283, 7
  %v3285 = vsub.s32 %v535, %v3284
  %v3286 = vrot.slane %v3222, %v3285
  %v3287 = vsel %vm600, %v3230, %v3226
  %v3288 = vsel %vm602, %v3234, %v3287
  %v3289 = vsel %vm604, %v3238, %v3288
  %v3290 = vsel %vm606, %v3242, %v3289
  %v3291 = vsel %vm608, %v3246, %v3290
  %v3292 = vsel %vm610, %v3250, %v3291
  %v3293 = vsel %vm612, %v3254, %v3292
  %v3294 = vsel %vm600, %v3262, %v3258
  %v3295 = vsel %vm602, %v3266, %v3294
  %v3296 = vsel %vm604, %v3270, %v3295
  %v3297 = vsel %vm606, %v3274, %v3296
  %v3298 = vsel %vm608, %v3278, %v3297
  %v3299 = vsel %vm610, %v3282, %v3298
  %v3300 = vsel %vm612, %v3286, %v3299
  %v3303 = vsel %vm123, %v3293, 0.0
  %3304 = vadd.xlane.f32.xlu0 %v3303
  %v3305 = vpop.xlane.xlu0 %3304
  %v3306 = vsel %vm123, %v3300, 0.0
  %3307 = vadd.xlane.f32.xlu0 %v3306
  %v3308 = vpop.xlane.xlu0 %3307
  %v3309 = vlog2.pop %v3305
  %v3310 = vmul.f32 %v3309, 0.6931472
  %v3311 = vlog2.pop %v3308
  %v3312 = vmul.f32 %v3311, 0.6931472
  %v3313 = vadd.f32 %v3310, %v3025
  %v3314 = vadd.f32 %v3312, %v3028
  %v3315 = vld [vmem:[%s3 + $0xc] sm:$0x3]
  %3317 = vset.pattern.permute.xlu0 0
  %3318 = vperm.xlu0 %3317, %v3315
  %v3319 = vpop.permute.xlu0 %3318
  %v3320 = vlaneseq
  %v3321 = vshrl.u32 %v3320, 7
  %v3322 = vsub.s32 0, %v3321
  %v3323 = vrot.slane %v3319, %v3322
  %v3324 = vlaneseq
  %v3325 = vshrl.u32 %v3324, 7
  %v3326 = vsub.s32 1, %v3325
  %v3327 = vrot.slane %v3319, %v3326
  %v3330 = vmul.f32 %v3313, %v3323
  %v3331 = vmul.f32 %v3314, %v3327
  %v3332 = vsub.f32 1.0, %v3315
  %3334 = vset.pattern.permute.xlu0 0
  %3335 = vperm.xlu0 %3334, %v3332
  %v3336 = vpop.permute.xlu0 %3335
  %v3337 = vlaneseq
  %v3338 = vshrl.u32 %v3337, 7
  %v3339 = vsub.s32 0, %v3338
  %v3340 = vrot.slane %v3336, %v3339
  %v3341 = vlaneseq
  %v3342 = vshrl.u32 %v3341, 7
  %v3343 = vsub.s32 1, %v3342
  %v3344 = vrot.slane %v3336, %v3343
  %v3347 = vmul.f32 %v2749, %v3340
  %v3348 = vmul.f32 %v2750, %v3344
  %v3349 = vadd.f32 %v3330, %v3347
  %v3350 = vadd.f32 %v3331, %v3348
  %v3351 = vlaneseq
  %v3352 = vshrl.u32 %v3351, 7
  %v3353 = vsub.s32 6, %v3352
  %v3354 = vrot.slane %v147, %v3353
  %3356 = vbcast.lane.b32.xlu0 %v3354, 256
  %v3357 = vpop.permute.xlu0 %3356
  %v3358 = vlaneseq
  %v3359 = vshrl.u32 %v3358, 7
  %v3360 = vsub.s32 7, %v3359
  %v3361 = vrot.slane %v147, %v3360
  %3363 = vbcast.lane.b32.xlu0 %v3361, 256
  %v3364 = vpop.permute.xlu0 %3363
  %v3367 = vlaneseq
  %v3368 = vshrl.u32 %v3367, 7
  %v3369 = vsub.s32 0, %v3368
  %v3370 = vrot.slane %v3357, %v3369
  %v3371 = vlaneseq
  %v3372 = vshrl.u32 %v3371, 7
  %v3373 = vsub.s32 1, %v3372
  %v3374 = vrot.slane %v3357, %v3373
  %v3375 = vlaneseq
  %v3376 = vshrl.u32 %v3375, 7
  %v3377 = vsub.s32 2, %v3376
  %v3378 = vrot.slane %v3357, %v3377
  %v3379 = vlaneseq
  %v3380 = vshrl.u32 %v3379, 7
  %v3381 = vsub.s32 3, %v3380
  %v3382 = vrot.slane %v3357, %v3381
  %v3383 = vlaneseq
  %v3384 = vshrl.u32 %v3383, 7
  %v3385 = vsub.s32 4, %v3384
  %v3386 = vrot.slane %v3357, %v3385
  %v3387 = vlaneseq
  %v3388 = vshrl.u32 %v3387, 7
  %v3389 = vsub.s32 5, %v3388
  %v3390 = vrot.slane %v3357, %v3389
  %v3391 = vlaneseq
  %v3392 = vshrl.u32 %v3391, 7
  %v3393 = vsub.s32 6, %v3392
  %v3394 = vrot.slane %v3357, %v3393
  %v3395 = vlaneseq
  %v3396 = vshrl.u32 %v3395, 7
  %v3397 = vsub.s32 7, %v3396
  %v3398 = vrot.slane %v3357, %v3397
  %v3399 = vlaneseq
  %v3400 = vshrl.u32 %v3399, 7
  %v3401 = vsub.s32 0, %v3400
  %v3402 = vrot.slane %v3364, %v3401
  %v3403 = vlaneseq
  %v3404 = vshrl.u32 %v3403, 7
  %v3405 = vsub.s32 1, %v3404
  %v3406 = vrot.slane %v3364, %v3405
  %v3407 = vlaneseq
  %v3408 = vshrl.u32 %v3407, 7
  %v3409 = vsub.s32 2, %v3408
  %v3410 = vrot.slane %v3364, %v3409
  %v3411 = vlaneseq
  %v3412 = vshrl.u32 %v3411, 7
  %v3413 = vsub.s32 3, %v3412
  %v3414 = vrot.slane %v3364, %v3413
  %v3415 = vlaneseq
  %v3416 = vshrl.u32 %v3415, 7
  %v3417 = vsub.s32 4, %v3416
  %v3418 = vrot.slane %v3364, %v3417
  %v3419 = vlaneseq
  %v3420 = vshrl.u32 %v3419, 7
  %v3421 = vsub.s32 5, %v3420
  %v3422 = vrot.slane %v3364, %v3421
  %v3423 = vlaneseq
  %v3424 = vshrl.u32 %v3423, 7
  %v3425 = vsub.s32 6, %v3424
  %v3426 = vrot.slane %v3364, %v3425
  %v3427 = vlaneseq
  %v3428 = vshrl.u32 %v3427, 7
  %v3429 = vsub.s32 7, %v3428
  %v3430 = vrot.slane %v3364, %v3429
  %v3447 = vadd.f32 %v3349, %v3370
  %v3448 = vadd.f32 %v3349, %v3374
  %v3449 = vadd.f32 %v3349, %v3378
  %v3450 = vadd.f32 %v3349, %v3382
  %v3451 = vadd.f32 %v3349, %v3386
  %v3452 = vadd.f32 %v3349, %v3390
  %v3453 = vadd.f32 %v3349, %v3394
  %v3454 = vadd.f32 %v3349, %v3398
  %v3455 = vadd.f32 %v3350, %v3402
  %v3456 = vadd.f32 %v3350, %v3406
  %v3457 = vadd.f32 %v3350, %v3410
  %v3458 = vadd.f32 %v3350, %v3414
  %v3459 = vadd.f32 %v3350, %v3418
  %v3460 = vadd.f32 %v3350, %v3422
  %v3461 = vadd.f32 %v3350, %v3426
  %v3462 = vadd.f32 %v3350, %v3430
  %v3463 = vadd.f32 %v3447, %v396
  %v3464 = vadd.f32 %v3448, %v403
  %v3465 = vadd.f32 %v3449, %v410
  %v3466 = vadd.f32 %v3450, %v417
  %v3467 = vadd.f32 %v3451, %v424
  %v3468 = vadd.f32 %v3452, %v431
  %v3469 = vadd.f32 %v3453, %v438
  %v3470 = vadd.f32 %v3454, %v445
  %v3471 = vadd.f32 %v3455, %v396
  %v3472 = vadd.f32 %v3456, %v403
  %v3473 = vadd.f32 %v3457, %v410
  %v3474 = vadd.f32 %v3458, %v417
  %v3475 = vadd.f32 %v3459, %v424
  %v3476 = vadd.f32 %v3460, %v431
  %v3477 = vadd.f32 %v3461, %v438
  %v3478 = vadd.f32 %v3462, %v445
  %3495 = vset.pattern.permute.xlu0 0
  %3496 = vperm.xlu0 %3495, %v3463
  %v3497 = vpop.permute.xlu0 %3496
  %3498 = vset.pattern.permute.xlu0 0
  %3499 = vperm.xlu0 %3498, %v3464
  %v3500 = vpop.permute.xlu0 %3499
  %3501 = vset.pattern.permute.xlu0 0
  %3502 = vperm.xlu0 %3501, %v3465
  %v3503 = vpop.permute.xlu0 %3502
  %3504 = vset.pattern.permute.xlu0 0
  %3505 = vperm.xlu0 %3504, %v3466
  %v3506 = vpop.permute.xlu0 %3505
  %3507 = vset.pattern.permute.xlu0 0
  %3508 = vperm.xlu0 %3507, %v3467
  %v3509 = vpop.permute.xlu0 %3508
  %3510 = vset.pattern.permute.xlu0 0
  %3511 = vperm.xlu0 %3510, %v3468
  %v3512 = vpop.permute.xlu0 %3511
  %3513 = vset.pattern.permute.xlu0 0
  %3514 = vperm.xlu0 %3513, %v3469
  %v3515 = vpop.permute.xlu0 %3514
  %3516 = vset.pattern.permute.xlu0 0
  %3517 = vperm.xlu0 %3516, %v3470
  %v3518 = vpop.permute.xlu0 %3517
  %3519 = vset.pattern.permute.xlu0 0
  %3520 = vperm.xlu0 %3519, %v3471
  %v3521 = vpop.permute.xlu0 %3520
  %3522 = vset.pattern.permute.xlu0 0
  %3523 = vperm.xlu0 %3522, %v3472
  %v3524 = vpop.permute.xlu0 %3523
  %3525 = vset.pattern.permute.xlu0 0
  %3526 = vperm.xlu0 %3525, %v3473
  %v3527 = vpop.permute.xlu0 %3526
  %3528 = vset.pattern.permute.xlu0 0
  %3529 = vperm.xlu0 %3528, %v3474
  %v3530 = vpop.permute.xlu0 %3529
  %3531 = vset.pattern.permute.xlu0 0
  %3532 = vperm.xlu0 %3531, %v3475
  %v3533 = vpop.permute.xlu0 %3532
  %3534 = vset.pattern.permute.xlu0 0
  %3535 = vperm.xlu0 %3534, %v3476
  %v3536 = vpop.permute.xlu0 %3535
  %3537 = vset.pattern.permute.xlu0 0
  %3538 = vperm.xlu0 %3537, %v3477
  %v3539 = vpop.permute.xlu0 %3538
  %3540 = vset.pattern.permute.xlu0 0
  %3541 = vperm.xlu0 %3540, %v3478
  %v3542 = vpop.permute.xlu0 %3541
  %v3543 = vlaneseq
  %v3544 = vshrl.u32 %v3543, 7
  %v3545 = vsub.s32 %v535, %v3544
  %v3546 = vrot.slane %v3497, %v3545
  %v3547 = vlaneseq
  %v3548 = vshrl.u32 %v3547, 7
  %v3549 = vsub.s32 %v535, %v3548
  %v3550 = vrot.slane %v3500, %v3549
  %v3551 = vlaneseq
  %v3552 = vshrl.u32 %v3551, 7
  %v3553 = vsub.s32 %v535, %v3552
  %v3554 = vrot.slane %v3503, %v3553
  %v3555 = vlaneseq
  %v3556 = vshrl.u32 %v3555, 7
  %v3557 = vsub.s32 %v535, %v3556
  %v3558 = vrot.slane %v3506, %v3557
  %v3559 = vlaneseq
  %v3560 = vshrl.u32 %v3559, 7
  %v3561 = vsub.s32 %v535, %v3560
  %v3562 = vrot.slane %v3509, %v3561
  %v3563 = vlaneseq
  %v3564 = vshrl.u32 %v3563, 7
  %v3565 = vsub.s32 %v535, %v3564
  %v3566 = vrot.slane %v3512, %v3565
  %v3567 = vlaneseq
  %v3568 = vshrl.u32 %v3567, 7
  %v3569 = vsub.s32 %v535, %v3568
  %v3570 = vrot.slane %v3515, %v3569
  %v3571 = vlaneseq
  %v3572 = vshrl.u32 %v3571, 7
  %v3573 = vsub.s32 %v535, %v3572
  %v3574 = vrot.slane %v3518, %v3573
  %v3575 = vlaneseq
  %v3576 = vshrl.u32 %v3575, 7
  %v3577 = vsub.s32 %v535, %v3576
  %v3578 = vrot.slane %v3521, %v3577
  %v3579 = vlaneseq
  %v3580 = vshrl.u32 %v3579, 7
  %v3581 = vsub.s32 %v535, %v3580
  %v3582 = vrot.slane %v3524, %v3581
  %v3583 = vlaneseq
  %v3584 = vshrl.u32 %v3583, 7
  %v3585 = vsub.s32 %v535, %v3584
  %v3586 = vrot.slane %v3527, %v3585
  %v3587 = vlaneseq
  %v3588 = vshrl.u32 %v3587, 7
  %v3589 = vsub.s32 %v535, %v3588
  %v3590 = vrot.slane %v3530, %v3589
  %v3591 = vlaneseq
  %v3592 = vshrl.u32 %v3591, 7
  %v3593 = vsub.s32 %v535, %v3592
  %v3594 = vrot.slane %v3533, %v3593
  %v3595 = vlaneseq
  %v3596 = vshrl.u32 %v3595, 7
  %v3597 = vsub.s32 %v535, %v3596
  %v3598 = vrot.slane %v3536, %v3597
  %v3599 = vlaneseq
  %v3600 = vshrl.u32 %v3599, 7
  %v3601 = vsub.s32 %v535, %v3600
  %v3602 = vrot.slane %v3539, %v3601
  %v3603 = vlaneseq
  %v3604 = vshrl.u32 %v3603, 7
  %v3605 = vsub.s32 %v535, %v3604
  %v3606 = vrot.slane %v3542, %v3605
  %v3607 = vsel %vm600, %v3550, %v3546
  %v3608 = vsel %vm602, %v3554, %v3607
  %v3609 = vsel %vm604, %v3558, %v3608
  %v3610 = vsel %vm606, %v3562, %v3609
  %v3611 = vsel %vm608, %v3566, %v3610
  %v3612 = vsel %vm610, %v3570, %v3611
  %v3613 = vsel %vm612, %v3574, %v3612
  %v3614 = vsel %vm600, %v3582, %v3578
  %v3615 = vsel %vm602, %v3586, %v3614
  %v3616 = vsel %vm604, %v3590, %v3615
  %v3617 = vsel %vm606, %v3594, %v3616
  %v3618 = vsel %vm608, %v3598, %v3617
  %v3619 = vsel %vm610, %v3602, %v3618
  %v3620 = vsel %vm612, %v3606, %v3619
  %v3623 = vsel %vm123, %v3613, -inf
  %3624 = vmax.xlane.f32.xlu0 %v3623
  %v3625 = vpop.xlane.xlu0 %3624
  %v3626 = vsel %vm123, %v3620, -inf
  %3627 = vmax.xlane.f32.xlu0 %v3626
  %v3628 = vpop.xlane.xlu0 %3627
  %v3631 = vlaneseq
  %v3632 = vshrl.u32 %v3631, 7
  %v3633 = vsub.s32 0, %v3632
  %v3634 = vrot.slane %v3625, %v3633
  %v3635 = vlaneseq
  %v3636 = vshrl.u32 %v3635, 7
  %v3637 = vsub.s32 1, %v3636
  %v3638 = vrot.slane %v3625, %v3637
  %v3639 = vlaneseq
  %v3640 = vshrl.u32 %v3639, 7
  %v3641 = vsub.s32 2, %v3640
  %v3642 = vrot.slane %v3625, %v3641
  %v3643 = vlaneseq
  %v3644 = vshrl.u32 %v3643, 7
  %v3645 = vsub.s32 3, %v3644
  %v3646 = vrot.slane %v3625, %v3645
  %v3647 = vlaneseq
  %v3648 = vshrl.u32 %v3647, 7
  %v3649 = vsub.s32 4, %v3648
  %v3650 = vrot.slane %v3625, %v3649
  %v3651 = vlaneseq
  %v3652 = vshrl.u32 %v3651, 7
  %v3653 = vsub.s32 5, %v3652
  %v3654 = vrot.slane %v3625, %v3653
  %v3655 = vlaneseq
  %v3656 = vshrl.u32 %v3655, 7
  %v3657 = vsub.s32 6, %v3656
  %v3658 = vrot.slane %v3625, %v3657
  %v3659 = vlaneseq
  %v3660 = vshrl.u32 %v3659, 7
  %v3661 = vsub.s32 7, %v3660
  %v3662 = vrot.slane %v3625, %v3661
  %v3663 = vlaneseq
  %v3664 = vshrl.u32 %v3663, 7
  %v3665 = vsub.s32 0, %v3664
  %v3666 = vrot.slane %v3628, %v3665
  %v3667 = vlaneseq
  %v3668 = vshrl.u32 %v3667, 7
  %v3669 = vsub.s32 1, %v3668
  %v3670 = vrot.slane %v3628, %v3669
  %v3671 = vlaneseq
  %v3672 = vshrl.u32 %v3671, 7
  %v3673 = vsub.s32 2, %v3672
  %v3674 = vrot.slane %v3628, %v3673
  %v3675 = vlaneseq
  %v3676 = vshrl.u32 %v3675, 7
  %v3677 = vsub.s32 3, %v3676
  %v3678 = vrot.slane %v3628, %v3677
  %v3679 = vlaneseq
  %v3680 = vshrl.u32 %v3679, 7
  %v3681 = vsub.s32 4, %v3680
  %v3682 = vrot.slane %v3628, %v3681
  %v3683 = vlaneseq
  %v3684 = vshrl.u32 %v3683, 7
  %v3685 = vsub.s32 5, %v3684
  %v3686 = vrot.slane %v3628, %v3685
  %v3687 = vlaneseq
  %v3688 = vshrl.u32 %v3687, 7
  %v3689 = vsub.s32 6, %v3688
  %v3690 = vrot.slane %v3628, %v3689
  %v3691 = vlaneseq
  %v3692 = vshrl.u32 %v3691, 7
  %v3693 = vsub.s32 7, %v3692
  %v3694 = vrot.slane %v3628, %v3693
  %v3711 = vsub.f32 %v3463, %v3634
  %v3712 = vsub.f32 %v3464, %v3638
  %v3713 = vsub.f32 %v3465, %v3642
  %v3714 = vsub.f32 %v3466, %v3646
  %v3715 = vsub.f32 %v3467, %v3650
  %v3716 = vsub.f32 %v3468, %v3654
  %v3717 = vsub.f32 %v3469, %v3658
  %v3718 = vsub.f32 %v3470, %v3662
  %v3719 = vsub.f32 %v3471, %v3666
  %v3720 = vsub.f32 %v3472, %v3670
  %v3721 = vsub.f32 %v3473, %v3674
  %v3722 = vsub.f32 %v3474, %v3678
  %v3723 = vsub.f32 %v3475, %v3682
  %v3724 = vsub.f32 %v3476, %v3686
  %v3725 = vsub.f32 %v3477, %v3690
  %v3726 = vsub.f32 %v3478, %v3694
  %v3727 = vmul.f32 %v3711, 1.442695
  %v3728 = vpow.pop %v3727
  %v3729 = vmul.f32 %v3712, 1.442695
  %v3730 = vpow.pop %v3729
  %v3731 = vmul.f32 %v3713, 1.442695
  %v3732 = vpow.pop %v3731
  %v3733 = vmul.f32 %v3714, 1.442695
  %v3734 = vpow.pop %v3733
  %v3735 = vmul.f32 %v3715, 1.442695
  %v3736 = vpow.pop %v3735
  %v3737 = vmul.f32 %v3716, 1.442695
  %v3738 = vpow.pop %v3737
  %v3739 = vmul.f32 %v3717, 1.442695
  %v3740 = vpow.pop %v3739
  %v3741 = vmul.f32 %v3718, 1.442695
  %v3742 = vpow.pop %v3741
  %v3743 = vmul.f32 %v3719, 1.442695
  %v3744 = vpow.pop %v3743
  %v3745 = vmul.f32 %v3720, 1.442695
  %v3746 = vpow.pop %v3745
  %v3747 = vmul.f32 %v3721, 1.442695
  %v3748 = vpow.pop %v3747
  %v3749 = vmul.f32 %v3722, 1.442695
  %v3750 = vpow.pop %v3749
  %v3751 = vmul.f32 %v3723, 1.442695
  %v3752 = vpow.pop %v3751
  %v3753 = vmul.f32 %v3724, 1.442695
  %v3754 = vpow.pop %v3753
  %v3755 = vmul.f32 %v3725, 1.442695
  %v3756 = vpow.pop %v3755
  %v3757 = vmul.f32 %v3726, 1.442695
  %v3758 = vpow.pop %v3757
  %3775 = vset.pattern.permute.xlu0 0
  %3776 = vperm.xlu0 %3775, %v3728
  %v3777 = vpop.permute.xlu0 %3776
  %3778 = vset.pattern.permute.xlu0 0
  %3779 = vperm.xlu0 %3778, %v3730
  %v3780 = vpop.permute.xlu0 %3779
  %3781 = vset.pattern.permute.xlu0 0
  %3782 = vperm.xlu0 %3781, %v3732
  %v3783 = vpop.permute.xlu0 %3782
  %3784 = vset.pattern.permute.xlu0 0
  %3785 = vperm.xlu0 %3784, %v3734
  %v3786 = vpop.permute.xlu0 %3785
  %3787 = vset.pattern.permute.xlu0 0
  %3788 = vperm.xlu0 %3787, %v3736
  %v3789 = vpop.permute.xlu0 %3788
  %3790 = vset.pattern.permute.xlu0 0
  %3791 = vperm.xlu0 %3790, %v3738
  %v3792 = vpop.permute.xlu0 %3791
  %3793 = vset.pattern.permute.xlu0 0
  %3794 = vperm.xlu0 %3793, %v3740
  %v3795 = vpop.permute.xlu0 %3794
  %3796 = vset.pattern.permute.xlu0 0
  %3797 = vperm.xlu0 %3796, %v3742
  %v3798 = vpop.permute.xlu0 %3797
  %3799 = vset.pattern.permute.xlu0 0
  %3800 = vperm.xlu0 %3799, %v3744
  %v3801 = vpop.permute.xlu0 %3800
  %3802 = vset.pattern.permute.xlu0 0
  %3803 = vperm.xlu0 %3802, %v3746
  %v3804 = vpop.permute.xlu0 %3803
  %3805 = vset.pattern.permute.xlu0 0
  %3806 = vperm.xlu0 %3805, %v3748
  %v3807 = vpop.permute.xlu0 %3806
  %3808 = vset.pattern.permute.xlu0 0
  %3809 = vperm.xlu0 %3808, %v3750
  %v3810 = vpop.permute.xlu0 %3809
  %3811 = vset.pattern.permute.xlu0 0
  %3812 = vperm.xlu0 %3811, %v3752
  %v3813 = vpop.permute.xlu0 %3812
  %3814 = vset.pattern.permute.xlu0 0
  %3815 = vperm.xlu0 %3814, %v3754
  %v3816 = vpop.permute.xlu0 %3815
  %3817 = vset.pattern.permute.xlu0 0
  %3818 = vperm.xlu0 %3817, %v3756
  %v3819 = vpop.permute.xlu0 %3818
  %3820 = vset.pattern.permute.xlu0 0
  %3821 = vperm.xlu0 %3820, %v3758
  %v3822 = vpop.permute.xlu0 %3821
  %v3823 = vlaneseq
  %v3824 = vshrl.u32 %v3823, 7
  %v3825 = vsub.s32 %v535, %v3824
  %v3826 = vrot.slane %v3777, %v3825
  %v3827 = vlaneseq
  %v3828 = vshrl.u32 %v3827, 7
  %v3829 = vsub.s32 %v535, %v3828
  %v3830 = vrot.slane %v3780, %v3829
  %v3831 = vlaneseq
  %v3832 = vshrl.u32 %v3831, 7
  %v3833 = vsub.s32 %v535, %v3832
  %v3834 = vrot.slane %v3783, %v3833
  %v3835 = vlaneseq
  %v3836 = vshrl.u32 %v3835, 7
  %v3837 = vsub.s32 %v535, %v3836
  %v3838 = vrot.slane %v3786, %v3837
  %v3839 = vlaneseq
  %v3840 = vshrl.u32 %v3839, 7
  %v3841 = vsub.s32 %v535, %v3840
  %v3842 = vrot.slane %v3789, %v3841
  %v3843 = vlaneseq
  %v3844 = vshrl.u32 %v3843, 7
  %v3845 = vsub.s32 %v535, %v3844
  %v3846 = vrot.slane %v3792, %v3845
  %v3847 = vlaneseq
  %v3848 = vshrl.u32 %v3847, 7
  %v3849 = vsub.s32 %v535, %v3848
  %v3850 = vrot.slane %v3795, %v3849
  %v3851 = vlaneseq
  %v3852 = vshrl.u32 %v3851, 7
  %v3853 = vsub.s32 %v535, %v3852
  %v3854 = vrot.slane %v3798, %v3853
  %v3855 = vlaneseq
  %v3856 = vshrl.u32 %v3855, 7
  %v3857 = vsub.s32 %v535, %v3856
  %v3858 = vrot.slane %v3801, %v3857
  %v3859 = vlaneseq
  %v3860 = vshrl.u32 %v3859, 7
  %v3861 = vsub.s32 %v535, %v3860
  %v3862 = vrot.slane %v3804, %v3861
  %v3863 = vlaneseq
  %v3864 = vshrl.u32 %v3863, 7
  %v3865 = vsub.s32 %v535, %v3864
  %v3866 = vrot.slane %v3807, %v3865
  %v3867 = vlaneseq
  %v3868 = vshrl.u32 %v3867, 7
  %v3869 = vsub.s32 %v535, %v3868
  %v3870 = vrot.slane %v3810, %v3869
  %v3871 = vlaneseq
  %v3872 = vshrl.u32 %v3871, 7
  %v3873 = vsub.s32 %v535, %v3872
  %v3874 = vrot.slane %v3813, %v3873
  %v3875 = vlaneseq
  %v3876 = vshrl.u32 %v3875, 7
  %v3877 = vsub.s32 %v535, %v3876
  %v3878 = vrot.slane %v3816, %v3877
  %v3879 = vlaneseq
  %v3880 = vshrl.u32 %v3879, 7
  %v3881 = vsub.s32 %v535, %v3880
  %v3882 = vrot.slane %v3819, %v3881
  %v3883 = vlaneseq
  %v3884 = vshrl.u32 %v3883, 7
  %v3885 = vsub.s32 %v535, %v3884
  %v3886 = vrot.slane %v3822, %v3885
  %v3887 = vsel %vm600, %v3830, %v3826
  %v3888 = vsel %vm602, %v3834, %v3887
  %v3889 = vsel %vm604, %v3838, %v3888
  %v3890 = vsel %vm606, %v3842, %v3889
  %v3891 = vsel %vm608, %v3846, %v3890
  %v3892 = vsel %vm610, %v3850, %v3891
  %v3893 = vsel %vm612, %v3854, %v3892
  %v3894 = vsel %vm600, %v3862, %v3858
  %v3895 = vsel %vm602, %v3866, %v3894
  %v3896 = vsel %vm604, %v3870, %v3895
  %v3897 = vsel %vm606, %v3874, %v3896
  %v3898 = vsel %vm608, %v3878, %v3897
  %v3899 = vsel %vm610, %v3882, %v3898
  %v3900 = vsel %vm612, %v3886, %v3899
  %v3903 = vsel %vm123, %v3893, 0.0
  %3904 = vadd.xlane.f32.xlu0 %v3903
  %v3905 = vpop.xlane.xlu0 %3904
  %v3906 = vsel %vm123, %v3900, 0.0
  %3907 = vadd.xlane.f32.xlu0 %v3906
  %v3908 = vpop.xlane.xlu0 %3907
  %v3909 = vlog2.pop %v3905
  %v3910 = vmul.f32 %v3909, 0.6931472
  %v3911 = vlog2.pop %v3908
  %v3912 = vmul.f32 %v3911, 0.6931472
  %v3913 = vadd.f32 %v3910, %v3625
  %v3914 = vadd.f32 %v3912, %v3628
  %v3915 = vld [vmem:[%s3 + $0xe] sm:$0x3]
  %3917 = vset.pattern.permute.xlu0 0
  %3918 = vperm.xlu0 %3917, %v3915
  %v3919 = vpop.permute.xlu0 %3918
  %v3920 = vlaneseq
  %v3921 = vshrl.u32 %v3920, 7
  %v3922 = vsub.s32 0, %v3921
  %v3923 = vrot.slane %v3919, %v3922
  %v3924 = vlaneseq
  %v3925 = vshrl.u32 %v3924, 7
  %v3926 = vsub.s32 1, %v3925
  %v3927 = vrot.slane %v3919, %v3926
  %v3930 = vmul.f32 %v3913, %v3923
  %v3931 = vmul.f32 %v3914, %v3927
  %v3932 = vsub.f32 1.0, %v3915
  %3934 = vset.pattern.permute.xlu0 0
  %3935 = vperm.xlu0 %3934, %v3932
  %v3936 = vpop.permute.xlu0 %3935
  %v3937 = vlaneseq
  %v3938 = vshrl.u32 %v3937, 7
  %v3939 = vsub.s32 0, %v3938
  %v3940 = vrot.slane %v3936, %v3939
  %v3941 = vlaneseq
  %v3942 = vshrl.u32 %v3941, 7
  %v3943 = vsub.s32 1, %v3942
  %v3944 = vrot.slane %v3936, %v3943
  %v3947 = vmul.f32 %v3349, %v3940
  %v3948 = vmul.f32 %v3350, %v3944
  %v3949 = vadd.f32 %v3930, %v3947
  %v3950 = vadd.f32 %v3931, %v3948
  %v3951 = vld [vmem:[%s6] sm:$0x1]
  %v3953 = vlaneseq
  %v3954 = vshrl.u32 %v3953, 7
  %v3955 = vsub.s32 0, %v3954
  %v3956 = vrot.slane %v3951, %v3955
  %3958 = vbcast.lane.b32.xlu0 %v3956, 256
  %v3959 = vpop.permute.xlu0 %3958
  %v3961 = vadd.f32 %v3949, %v3959
  %v3962 = vadd.f32 %v3950, %v3959
  %3965 = vset.pattern.permute.xlu0 0
  %3966 = vperm.xlu0 %3965, %v3961
  %v3967 = vpop.permute.xlu0 %3966
  %3968 = vset.pattern.permute.xlu0 0
  %3969 = vperm.xlu0 %3968, %v3962
  %v3970 = vpop.permute.xlu0 %3969
  %v3971 = vlaneseq
  %v3972 = vshrl.u32 %v3971, 7
  %v3973 = vsub.s32 %v535, %v3972
  %v3974 = vrot.slane %v3967, %v3973
  %v3975 = vlaneseq
  %v3976 = vshrl.u32 %v3975, 7
  %v3977 = vsub.s32 %v535, %v3976
  %v3978 = vrot.slane %v3970, %v3977
  %v3979 = vsel %vm600, %v3978, %v3974
  %vm3981 = vcmask 58368
  %v3982 = vsel %vm3981, %v3979, -inf
  %3983 = vmax.xlane.f32.xlu0 %v3982
  %v3984 = vpop.xlane.xlu0 %3983
  %v3986 = vlaneseq
  %v3987 = vshrl.u32 %v3986, 7
  %v3988 = vsub.s32 0, %v3987
  %v3989 = vrot.slane %v3984, %v3988
  %v3990 = vlaneseq
  %v3991 = vshrl.u32 %v3990, 7
  %v3992 = vsub.s32 1, %v3991
  %v3993 = vrot.slane %v3984, %v3992
  %v3996 = vsub.f32 %v3961, %v3989
  %v3997 = vsub.f32 %v3962, %v3993
  %v3998 = vmul.f32 %v3996, 1.442695
  %v3999 = vpow.pop %v3998
  %v4000 = vmul.f32 %v3997, 1.442695
  %v4001 = vpow.pop %v4000
  %4004 = vset.pattern.permute.xlu0 0
  %4005 = vperm.xlu0 %4004, %v3999
  %v4006 = vpop.permute.xlu0 %4005
  %4007 = vset.pattern.permute.xlu0 0
  %4008 = vperm.xlu0 %4007, %v4001
  %v4009 = vpop.permute.xlu0 %4008
  %v4010 = vlaneseq
  %v4011 = vshrl.u32 %v4010, 7
  %v4012 = vsub.s32 %v535, %v4011
  %v4013 = vrot.slane %v4006, %v4012
  %v4014 = vlaneseq
  %v4015 = vshrl.u32 %v4014, 7
  %v4016 = vsub.s32 %v535, %v4015
  %v4017 = vrot.slane %v4009, %v4016
  %v4018 = vsel %vm600, %v4017, %v4013
  %v4020 = vsel %vm3981, %v4018, 0.0
  %4021 = vadd.xlane.f32.xlu0 %v4020
  %v4022 = vpop.xlane.xlu0 %4021
  %v4023 = vlog2.pop %v4022
  %v4024 = vmul.f32 %v4023, 0.6931472
  %v4025 = vadd.f32 %v4024, %v3984
  %vm4026 = vcmask 1024
  %4027 = vst.msk [vmem:[%s8] sm:$0x3] %vm4026, %v4025
  // Predicated region
  $region30: #{tener_forward.23} parent=0 // pred_check
    _
  $region31: #{tener_forward.23} parent=0 // pred_check_branch
    %4029 = sbr.rel (0) target = $region33
  $region32: #{tener_forward.23} parent=0 // pred_region
    _
  $region33: #{tener_forward.23} parent=0 // pred_fallthru
    _
  // Predicated region
  $region34: #{tener_forward.23} parent=0 // pred_check
    _
  $region35: #{tener_forward.23} parent=0 // pred_check_branch
    %4031 = sbr.rel (0) target = $region37
  $region36: #{tener_forward.23} parent=0 // pred_region
    _
  $region37: #{tener_forward.23} parent=0 // pred_fallthru
    _
  // Predicated region
  $region38: #{tener_forward.23} parent=0 // pred_check
    _
  $region39: #{tener_forward.23} parent=0 // pred_check_branch
    %4033 = sbr.rel (0) target = $region41
  $region40: #{tener_forward.23} parent=0 // pred_region
    _
  $region41: #{tener_forward.23} parent=0 // pred_fallthru
    _
  // Predicated region
  $region42: #{tener_forward.23} parent=0 // pred_check
    _
  $region43: #{tener_forward.23} parent=0 // pred_check_branch
    %4035 = sbr.rel (0) target = $region45
  $region44: #{tener_forward.23} parent=0 // pred_region
    _
  $region45: #{tener_forward.23} parent=0 // pred_fallthru
    _

</llo_original>
